<compile_context>
chip_gen: v5e
topology: v5e:2x2
jax: 0.10.0
libtpu: 0.0.40
codegen_flags: <defaults>
</compile_context>

<pallas_src>
import jax
import jax.numpy as jnp
from jax.experimental import pallas as pl
from jax.experimental.pallas import tpu as pltpu

B, C_IN, H, W = 2, 3, 32, 32          # fc1 expects 32*32*32 -> spatial must be 32x32
C_OUT, KSZ = 32, 3
HW = H * W
K_RAW = KSZ * KSZ * C_IN              # 27
K_PAD = 32                            # sublane-aligned im2col K
FC_IN, FC_OUT = C_OUT * H * W, 10


# ---------------- Pallas kernels ----------------

def _conv_relu_kernel(p_ref, w_ref, b_ref, o_ref):
    # p: (1, K_PAD, HW) im2col^T, w: (C_OUT, K_PAD), b: (C_OUT, 1) -> o: (1, C_OUT, HW)
    acc = jnp.dot(w_ref[...], p_ref[0], preferred_element_type=jnp.float32)  # (32, 1024)
    o_ref[0] = jnp.maximum(acc + b_ref[...], 0.0)


def _fc_kernel(x_ref, w_ref, b_ref, o_ref):
    # x: (B, FC_IN), w: (FC_OUT, FC_IN) lane-dense on K, b: (1, FC_OUT) -> o: (B, FC_OUT)
    acc = jax.lax.dot_general(
        x_ref[...], w_ref[...],
        dimension_numbers=(((1,), (1,)), ((), ())),
        preferred_element_type=jnp.float32)
    o_ref[...] = acc + b_ref[...]


def conv3x3_relu(patches_t, w_mat, b_col):
    b = patches_t.shape[0]
    return pl.pallas_call(
        _conv_relu_kernel,
        out_shape=jax.ShapeDtypeStruct((b, C_OUT, HW), jnp.float32),
        grid=(b,),
        in_specs=[
            pl.BlockSpec((1, K_PAD, HW), lambda i: (i, 0, 0)),
            pl.BlockSpec((C_OUT, K_PAD), lambda i: (0, 0)),
            pl.BlockSpec((C_OUT, 1), lambda i: (0, 0)),
        ],
        out_specs=pl.BlockSpec((1, C_OUT, HW), lambda i: (i, 0, 0)),
        compiler_params=pltpu.CompilerParams(dimension_semantics=("arbitrary",)),
    )(patches_t, w_mat, b_col)


def linear_lane_dense(x, w, b_row):
    m, k = x.shape
    n = w.shape[0]
    return pl.pallas_call(
        _fc_kernel,
        out_shape=jax.ShapeDtypeStruct((m, n), jnp.float32),
        grid=(1,),
        in_specs=[
            pl.BlockSpec((m, k), lambda i: (0, 0)),
            pl.BlockSpec((n, k), lambda i: (0, 0)),
            pl.BlockSpec((1, n), lambda i: (0, 0)),
        ],
        out_specs=pl.BlockSpec((m, n), lambda i: (0, 0)),
        compiler_params=pltpu.CompilerParams(dimension_semantics=("arbitrary",)),
    )(x, w, b_row)


# ---------------- one-time param preprocessing (hoisted out of the hot path) ------

def preprocess_params(params):
    # conv weight (Cout, Cin, Kh, Kw) -> (Cout, Kh*Kw*Cin) with k ordered (kh, kw, cin),
    # zero-padded to K_PAD for sublane alignment.
    w_mat = jnp.transpose(params["w_conv"], (0, 2, 3, 1)).reshape(C_OUT, K_RAW)
    w_mat = jnp.pad(w_mat, ((0, 0), (0, K_PAD - K_RAW)))
    return {
        "w_conv_mat": w_mat,                                   # (32, 32)
        "b_conv_col": params["b_conv"].reshape(C_OUT, 1),      # (32, 1)
        "w_fc": params["w_fc"],                                # (10, 32768) used as-is
        "b_fc_row": params["b_fc"].reshape(1, FC_OUT),         # (1, 10)
    }


# ---------------- wrapper: VictimModel.forward ----------------

def victim_model_forward(x_nchw, prepped):
    b = x_nchw.shape[0]

    # pad=1 ('same' for 3x3 / stride 1) directly in NCHW
    x_pad = jnp.pad(x_nchw, ((0, 0), (0, 0), (1, 1), (1, 1)))

    # im2col transposed: (B, k, hw) with k ordered (kh, kw, cin), hw = h*W + w
    slices = [x_pad[:, :, dh:dh + H, dw:dw + W]
              for dh in range(KSZ) for dw in range(KSZ)]        # 9 x (B, Cin, H, W)
    patches_t = jnp.stack(slices, axis=1).reshape(b, K_RAW, HW)
    patches_t = jnp.pad(patches_t, ((0, 0), (0, K_PAD - K_RAW), (0, 0)))  # K 27 -> 32

    # conv + relu, output (B, Cout, HW): flattening gives PyTorch (c, h, w) order
    conv_out = conv3x3_relu(patches_t, prepped["w_conv_mat"], prepped["b_conv_col"])
    feat = conv_out.reshape(b, FC_IN)                           # free reshape

    # fc1: contract over lane-dense K against the native (10, 32768) weight
    return linear_lane_dense(feat, prepped["w_fc"], prepped["b_fc_row"])


# ---------------- pure-JAX reference with PyTorch NCHW semantics ----------------

def victim_model_ref(x_nchw, params):
    y = jax.lax.conv_general_dilated(
        x_nchw, params["w_conv"], window_strides=(1, 1), padding=((1, 1), (1, 1)),
        dimension_numbers=("NCHW", "OIHW", "NCHW"))
    y = y + params["b_conv"].reshape(1, C_OUT, 1, 1)
    y = jnp.maximum(y, 0.0)
    y = y.reshape(x_nchw.shape[0], -1)
    return y @ params["w_fc"].T + params["b_fc"]


if __name__ == "__main__":
    key = jax.random.PRNGKey(0)
    kx, k1, k2, k3, k4 = jax.random.split(key, 5)

    x = jax.random.normal(kx, (B, C_IN, H, W), dtype=jnp.float32)
    params = {
        "w_conv": 0.05 * jax.random.normal(k1, (C_OUT, C_IN, KSZ, KSZ), dtype=jnp.float32),
        "b_conv": 0.05 * jax.random.normal(k2, (C_OUT,), dtype=jnp.float32),
        "w_fc": 0.01 * jax.random.normal(k3, (FC_OUT, FC_IN), dtype=jnp.float32),
        "b_fc": 0.01 * jax.random.normal(k4, (FC_OUT,), dtype=jnp.float32),
    }

    prepped = preprocess_params(params)          # one-time, outside the jitted forward
    fwd = jax.jit(victim_model_forward)

    out = jax.block_until_ready(fwd(x, prepped))

    ref = victim_model_ref(x, params)
    assert out.shape == (B, FC_OUT)
    max_err = float(jnp.max(jnp.abs(out - ref)))
    assert jnp.allclose(out, ref, atol=1e-3, rtol=1e-3), f"max_err={max_err}"

    print("KERNEL_OK")
</pallas_src>

<mosaic_0001>
module attributes {stable_mosaic.version = 11 : i64} {
  func.func @_conv_relu_kernel(%arg0: i32, %arg1: memref<1x32x1024xf32, #tpu.memory_space<vmem>>, %arg2: memref<32x32xf32, #tpu.memory_space<vmem>>, %arg3: memref<32x1xf32, #tpu.memory_space<vmem>>, %arg4: memref<1x32x1024xf32, #tpu.memory_space<vmem>>) attributes {dimension_semantics = [#tpu.dimension_semantics<arbitrary>], iteration_bounds = array<i64: 2>, scalar_prefetch = 0 : i64, scratch_operands = 0 : i64, tpu.core_type = #tpu.core_type<tc>, window_params = [{transform_indices = @transform_0, window_bounds = array<i64: 1, 32, 1024>}, {pipeline_mode = #tpu.pipeline_mode<synchronous>, transform_indices = @transform_1, window_bounds = array<i64: 32, 32>}, {pipeline_mode = #tpu.pipeline_mode<synchronous>, transform_indices = @transform_2, window_bounds = array<i64: 32, 1>}, {transform_indices = @transform_3, window_bounds = array<i64: 1, 32, 1024>}]} {
    %c0 = arith.constant 0 : index
    %c0_0 = arith.constant 0 : index
    %0 = vector.load %arg2[%c0, %c0_0] : memref<32x32xf32, #tpu.memory_space<vmem>>, vector<32x32xf32>
    %c0_1 = arith.constant 0 : index
    %c0_2 = arith.constant 0 : index
    %c0_3 = arith.constant 0 : index
    %1 = vector.load %arg1[%c0_1, %c0_2, %c0_3] : memref<1x32x1024xf32, #tpu.memory_space<vmem>>, vector<1x32x1024xf32>
    %2 = vector.shape_cast %1 : vector<1x32x1024xf32> to vector<32x1024xf32>
    %cst = arith.constant dense<0.000000e+00> : vector<32x1024xf32>
    %3 = tpu.matmul %0, %2, %cst {dimension_numbers = #tpu.dot_dimension_numbers<[1], [0], [0], [1], [0, 0, 1, 1], [], []>} : vector<32x32xf32>, vector<32x1024xf32>, vector<32x1024xf32> -> vector<32x1024xf32>
    %c0_4 = arith.constant 0 : index
    %c0_5 = arith.constant 0 : index
    %4 = vector.load %arg3[%c0_4, %c0_5] : memref<32x1xf32, #tpu.memory_space<vmem>>, vector<32x1xf32>
    %5 = vector.broadcast %4 : vector<32x1xf32> to vector<32x1024xf32>
    %6 = arith.addf %3, %5 : vector<32x1024xf32>
    %cst_6 = arith.constant 0.000000e+00 : f32
    %7 = vector.broadcast %cst_6 : f32 to vector<32x1024xf32>
    %8 = arith.maximumf %6, %7 : vector<32x1024xf32>
    %c0_7 = arith.constant 0 : index
    %c0_8 = arith.constant 0 : index
    %c0_9 = arith.constant 0 : index
    %9 = vector.load %arg4[%c0_7, %c0_8, %c0_9] : memref<1x32x1024xf32, #tpu.memory_space<vmem>>, vector<1x32x1024xf32>
    %10 = vector.shape_cast %9 : vector<1x32x1024xf32> to vector<32x1024xf32>
    %11 = vector.shape_cast %8 : vector<32x1024xf32> to vector<1x32x1024xf32>
    tpu.vector_store %arg4[%c0_7, %c0_8, %c0_9], %11 {strides = array<i32>} : memref<1x32x1024xf32, #tpu.memory_space<vmem>>, vector<1x32x1024xf32>,
    return
  }
  func.func @transform_0(%arg0: i32) -> (i32, i32, i32) {
    %c0_i32 = arith.constant 0 : i32
    %c0_i32_0 = arith.constant 0 : i32
    %c0_i32_1 = arith.constant 0 : i32
    return %arg0, %c0_i32, %c0_i32_0 : i32, i32, i32
  }
  func.func @transform_1(%arg0: i32) -> (i32, i32) {
    %c0_i32 = arith.constant 0 : i32
    %c0_i32_0 = arith.constant 0 : i32
    %c0_i32_1 = arith.constant 0 : i32
    return %c0_i32, %c0_i32_0 : i32, i32
  }
  func.func @transform_2(%arg0: i32) -> (i32, i32) {
    %c0_i32 = arith.constant 0 : i32
    %c0_i32_0 = arith.constant 0 : i32
    %c0_i32_1 = arith.constant 0 : i32
    return %c0_i32, %c0_i32_0 : i32, i32
  }
  func.func @transform_3(%arg0: i32) -> (i32, i32, i32) {
    %c0_i32 = arith.constant 0 : i32
    %c0_i32_0 = arith.constant 0 : i32
    %c0_i32_1 = arith.constant 0 : i32
    return %arg0, %c0_i32, %c0_i32_0 : i32, i32, i32
  }
}

module attributes {stable_mosaic.version = 11 : i64} {
  func.func @_fc_kernel(%arg0: i32, %arg1: memref<2x32768xf32, #tpu.memory_space<vmem>>, %arg2: memref<10x32768xf32, #tpu.memory_space<vmem>>, %arg3: memref<1x10xf32, #tpu.memory_space<vmem>>, %arg4: memref<2x10xf32, #tpu.memory_space<vmem>>) attributes {dimension_semantics = [#tpu.dimension_semantics<arbitrary>], iteration_bounds = array<i64: 1>, scalar_prefetch = 0 : i64, scratch_operands = 0 : i64, tpu.core_type = #tpu.core_type<tc>, window_params = [{pipeline_mode = #tpu.pipeline_mode<synchronous>, transform_indices = @transform_0, window_bounds = array<i64: 2, 32768>}, {pipeline_mode = #tpu.pipeline_mode<synchronous>, transform_indices = @transform_1, window_bounds = array<i64: 10, 32768>}, {pipeline_mode = #tpu.pipeline_mode<synchronous>, transform_indices = @transform_2, window_bounds = array<i64: 1, 10>}, {pipeline_mode = #tpu.pipeline_mode<synchronous>, transform_indices = @transform_3, window_bounds = array<i64: 2, 10>}]} {
    %c0 = arith.constant 0 : index
    %c0_0 = arith.constant 0 : index
    %0 = vector.load %arg1[%c0, %c0_0] : memref<2x32768xf32, #tpu.memory_space<vmem>>, vector<2x32768xf32>
    %c0_1 = arith.constant 0 : index
    %c0_2 = arith.constant 0 : index
    %1 = vector.load %arg2[%c0_1, %c0_2] : memref<10x32768xf32, #tpu.memory_space<vmem>>, vector<10x32768xf32>
    %cst = arith.constant dense<0.000000e+00> : vector<2x10xf32>
    %2 = tpu.matmul %0, %1, %cst {dimension_numbers = #tpu.dot_dimension_numbers<[1], [1], [0], [0], [0, 0, 1, 0], [], []>} : vector<2x32768xf32>, vector<10x32768xf32>, vector<2x10xf32> -> vector<2x10xf32>
    %c0_3 = arith.constant 0 : index
    %c0_4 = arith.constant 0 : index
    %3 = vector.load %arg3[%c0_3, %c0_4] : memref<1x10xf32, #tpu.memory_space<vmem>>, vector<1x10xf32>
    %4 = vector.broadcast %3 : vector<1x10xf32> to vector<2x10xf32>
    %5 = arith.addf %2, %4 : vector<2x10xf32>
    %c0_5 = arith.constant 0 : index
    %c0_6 = arith.constant 0 : index
    %6 = vector.load %arg4[%c0_5, %c0_6] : memref<2x10xf32, #tpu.memory_space<vmem>>, vector<2x10xf32>
    tpu.vector_store %arg4[%c0_5, %c0_6], %5 {strides = array<i32>} : memref<2x10xf32, #tpu.memory_space<vmem>>, vector<2x10xf32>,
    return
  }
  func.func @transform_0(%arg0: i32) -> (i32, i32) {
    %c0_i32 = arith.constant 0 : i32
    %c0_i32_0 = arith.constant 0 : i32
    %c0_i32_1 = arith.constant 0 : i32
    return %c0_i32, %c0_i32_0 : i32, i32
  }
  func.func @transform_1(%arg0: i32) -> (i32, i32) {
    %c0_i32 = arith.constant 0 : i32
    %c0_i32_0 = arith.constant 0 : i32
    %c0_i32_1 = arith.constant 0 : i32
    return %c0_i32, %c0_i32_0 : i32, i32
  }
  func.func @transform_2(%arg0: i32) -> (i32, i32) {
    %c0_i32 = arith.constant 0 : i32
    %c0_i32_0 = arith.constant 0 : i32
    %c0_i32_1 = arith.constant 0 : i32
    return %c0_i32, %c0_i32_0 : i32, i32
  }
  func.func @transform_3(%arg0: i32) -> (i32, i32) {
    %c0_i32 = arith.constant 0 : i32
    %c0_i32_0 = arith.constant 0 : i32
    %c0_i32_1 = arith.constant 0 : i32
    return %c0_i32, %c0_i32_0 : i32, i32
  }
}

</mosaic_0001>

<llo_original>
// kernel: victim_model_forward.2
$region0: #{victim_model_forward.2}
  #allocation0 [shape = 'u32[]', space=smem, size = 0x4, offset = 0x4, fixed_abs, tag = 'smem constant byte address 0x4 - core index']
  #allocation1 [shape = 'u32[72,128]{1,0:T(1,128)}', space=vmem, size = 0x9000, scoped, tag = 'internal scratch']
  %s0 = inlined_call_operand.vmem [shape: f32[2,32,1024], index: 0, kind: input, shape index: {}]
  %s1 = inlined_call_operand.vmem [shape: f32[32,32], index: 1, kind: input, shape index: {}]
  %s2 = inlined_call_operand.vmem [shape: f32[32,1], index: 2, kind: input, shape index: {}]
  %s3 = inlined_call_operand.vmem [shape: f32[2,32,1024], index: 3, kind: output, shape index: {}]
  %s4 = sld [smem:[#allocation0]]
  $region45: #{victim_model_forward.2} parent=0
    _
  %s6 = ssub.s32 1, %s4
  %s7 = scalar_select 0, %s6, %s4
  loop: start=0, step=1, limit=4
  $region2: #{victim_model_forward.2} parent=0 // loop_pre_header
    _
  $region3: #{victim_model_forward.2} parent=0 // loop_header
    %s9 = sphi 0, %s13
    %p10 = scmp.ge.s32.totalorder %s9, 4
    %s19 = sphi 0, %s21
    %s22 = sphi 0, %s19
    %s23 = sphi 0, %s22
    %s39 = sphi 0, %s23
    %s43 = sphi 0, %s43
    %s45 = sphi 0, %s43
    %s46 = sphi 0, %s45
    %s60 = sphi 0, %s46
    %s64 = sphi 0, %s64
    %s66 = sphi 0, %s64
    %s67 = sphi 0, %s66
    %s81 = sphi 0, %s67
    %s87 = sphi 0, %s89
    %s90 = sphi 0, %s87
    %s91 = sphi 0, %s90
    %s107 = sphi 0, %s91
  $region4: #{victim_model_forward.2} parent=0 // loop_header_branch
    %12 = sbr.rel (%p10) target = $region8
  $region5: #{victim_model_forward.2} parent=0 // loop_body
    %s14 = ssub.s32 %s9, 1
    %s15 = ssub.s32 %s9, 2
    %s16 = sadd.s32 %s9, 1
    %s17 = ssub.s32 %s9, %s16
    %p18 = scmp.eq.s32.totalorder %s17, 0
    %s20 = sadd.s32 %s19, 1
    %s21 = scalar_select %p18, %s19, %s20
    %p24 = pneg %p18
    %p25 = scmp.eq.s32.totalorder %s9, 1
    %p26 = por %p24, %p25
    %p27 = scmp.ne.s32.totalorder %s19, %s22
    %p28 = scmp.eq.s32.totalorder %s9, 0
    %p29 = por %p27, %p28
    %p30 = scmp.ne.s32.totalorder %s19, %s22
    %p31 = scmp.eq.s32.totalorder %s14, 1
    %p32 = por %p30, %p31
    %p33 = scmp.ne.s32.totalorder %s22, %s23
    %p34 = scmp.eq.s32.totalorder %s14, 0
    %p35 = por %p33, %p34
    %p36 = scmp.ne.s32.totalorder %s22, %s23
    %p37 = scmp.eq.s32.totalorder %s15, 1
    %p38 = por %p36, %p37
    %p40 = scmp.ne.s32.totalorder %s23, %s39
    %p41 = scmp.eq.s32.totalorder %s15, 0
    %p42 = por %p40, %p41
    %s44 = sadd.s32 %s43, 1
    %p47 = scmp.eq.s32.totalorder %s9, 1
    %p48 = scmp.ne.s32.totalorder %s43, %s45
    %p49 = scmp.eq.s32.totalorder %s9, 0
    %p50 = por %p48, %p49
    %p51 = scmp.ne.s32.totalorder %s43, %s45
    %p52 = scmp.eq.s32.totalorder %s14, 1
    %p53 = por %p51, %p52
    %p54 = scmp.ne.s32.totalorder %s45, %s46
    %p55 = scmp.eq.s32.totalorder %s14, 0
    %p56 = por %p54, %p55
    %p57 = scmp.ne.s32.totalorder %s45, %s46
    %p58 = scmp.eq.s32.totalorder %s15, 1
    %p59 = por %p57, %p58
    %p61 = scmp.ne.s32.totalorder %s46, %s60
    %p62 = scmp.eq.s32.totalorder %s15, 0
    %p63 = por %p61, %p62
    %s65 = sadd.s32 %s64, 1
    %p68 = scmp.eq.s32.totalorder %s9, 1
    %p69 = scmp.ne.s32.totalorder %s64, %s66
    %p70 = scmp.eq.s32.totalorder %s9, 0
    %p71 = por %p69, %p70
    %p72 = scmp.ne.s32.totalorder %s64, %s66
    %p73 = scmp.eq.s32.totalorder %s14, 1
    %p74 = por %p72, %p73
    %p75 = scmp.ne.s32.totalorder %s66, %s67
    %p76 = scmp.eq.s32.totalorder %s14, 0
    %p77 = por %p75, %p76
    %p78 = scmp.ne.s32.totalorder %s66, %s67
    %p79 = scmp.eq.s32.totalorder %s15, 1
    %p80 = por %p78, %p79
    %p82 = scmp.ne.s32.totalorder %s67, %s81
    %p83 = scmp.eq.s32.totalorder %s15, 0
    %p84 = por %p82, %p83
    %s85 = ssub.s32 %s9, %s16
    %p86 = scmp.eq.s32.totalorder %s85, 0
    %s88 = sadd.s32 %s87, 1
    %s89 = scalar_select %p86, %s87, %s88
    %p92 = pneg %p86
    %p93 = scmp.eq.s32.totalorder %s9, 1
    %p94 = por %p92, %p93
    %p95 = scmp.ne.s32.totalorder %s87, %s90
    %p96 = scmp.eq.s32.totalorder %s9, 0
    %p97 = por %p95, %p96
    %p98 = scmp.ne.s32.totalorder %s87, %s90
    %p99 = scmp.eq.s32.totalorder %s14, 1
    %p100 = por %p98, %p99
    %p101 = scmp.ne.s32.totalorder %s90, %s91
    %p102 = scmp.eq.s32.totalorder %s14, 0
    %p103 = por %p101, %p102
    %p104 = scmp.ne.s32.totalorder %s90, %s91
    %p105 = scmp.eq.s32.totalorder %s15, 1
    %p106 = por %p104, %p105
    %p108 = scmp.ne.s32.totalorder %s91, %s107
    %p109 = scmp.eq.s32.totalorder %s15, 0
    %p110 = por %p108, %p109
    %p111 = scmp.le.s32.totalorder 1, %s9
    %p112 = scmp.lt.s32.totalorder %s9, 3
    %p113 = pnand %p111, %p112
    %p114 = pneg %p113
    // Predicated region
    $region9: #{victim_model_forward.2} parent=5 // pred_check
      _
    $region10: #{victim_model_forward.2} parent=5 // pred_check_branch
      %116 = sbr.rel (%p113) target = $region12
    $region11: #{victim_model_forward.2} parent=5 // pred_region
      %s117 = ssub.s32 %s9, 1
      // Predicated region
      $region13: #{victim_model_forward.2} parent=11 // pred_check
        %p118 = pneg %p56
      $region14: #{victim_model_forward.2} parent=11 // pred_check_branch
        %120 = sbr.rel (%p118) target = $region16
      $region15: #{victim_model_forward.2} parent=11 // pred_region
        _
      $region16: #{victim_model_forward.2} parent=11 // pred_fallthru
        _
      // Predicated region
      $region17: #{victim_model_forward.2} parent=11 // pred_check
        %p121 = pneg %p77
      $region18: #{victim_model_forward.2} parent=11 // pred_check_branch
        %123 = sbr.rel (%p121) target = $region20
      $region19: #{victim_model_forward.2} parent=11 // pred_region
        _
      $region20: #{victim_model_forward.2} parent=11 // pred_fallthru
        _
    $region12: #{victim_model_forward.2} parent=5 // pred_fallthru
      _
    %p124 = scmp.lt.s32.totalorder %s9, 2
    // Predicated region
    $region21: #{victim_model_forward.2} parent=5 // pred_check
      %p125 = pneg %p124
    $region22: #{victim_model_forward.2} parent=5 // pred_check_branch
      %127 = sbr.rel (%p125) target = $region24
    $region23: #{victim_model_forward.2} parent=5 // pred_region
      // Predicated region
      $region25: #{victim_model_forward.2} parent=23 // pred_check
        %p128 = pneg %p29
      $region26: #{victim_model_forward.2} parent=23 // pred_check_branch
        %130 = sbr.rel (%p128) target = $region28
      $region27: #{victim_model_forward.2} parent=23 // pred_region
        %p131 = scmp.lt.s32.totalorder %s9, 1
        %s132 = scalar_select %p131, %s9, 1
        %s133 = smul.addr %s132, 32
        %s134 = smul.addr %s133, 8
        %s135 = scalar_lea.vmem %s0, %s134
      $region28: #{victim_model_forward.2} parent=23 // pred_fallthru
        _
    $region24: #{victim_model_forward.2} parent=5 // pred_fallthru
      _
    %p136 = scmp.le.s32.totalorder 1, %s9
    %p137 = scmp.lt.s32.totalorder %s9, 3
    %p138 = pnand %p136, %p137
    %p139 = pneg %p138
    // Predicated region
    $region29: #{victim_model_forward.2} parent=5 // pred_check
      _
    $region30: #{victim_model_forward.2} parent=5 // pred_check_branch
      %141 = sbr.rel (%p138) target = $region32
    $region31: #{victim_model_forward.2} parent=5 // pred_region
      %s142 = ssub.s32 %s9, 1
      %p143 = scmp.lt.s32.totalorder %s14, 1
      %s144 = scalar_select %p143, %s14, 1
      %s145 = smul.addr %s144, 32
      %s146 = smul.addr %s145, 8
      %s147 = scalar_lea.vmem %s0, %s146
      %p148 = pneg %p35
      %p149 = pneg %p32
      %p150 = pneg %p56
      %p151 = pneg %p53
      %p152 = pneg %p77
      %p153 = pneg %p74
      %p154 = pneg %p103
      %p155 = pneg %p100
      %p156 = scmp.lt.s32.totalorder %s14, 1
      %s157 = scalar_select %p156, %s14, 1
      %s158 = smul.addr %s157, 32
      %s159 = smul.addr %s158, 8
      %s160 = scalar_lea.vmem %s3, %s159
      %p161 = scmp.lt.s32.totalorder %s14, 1
      %s162 = scalar_select %p161, %s14, 1
      %s163 = smul.addr %s162, 32
      %s164 = smul.addr %s163, 8
      %s165 = scalar_lea.vmem %s0, %s164
      %p166 = scmp.lt.s32.totalorder %s14, 1
      %s167 = scalar_select %p166, %s14, 1
      %s168 = smul.addr %s167, 32
      %s169 = smul.addr %s168, 8
      %s170 = scalar_lea.vmem %s3, %s169
      %v171 = vld [vmem:[%s1] sm:$0xff]
      %v172 = vld [vmem:[%s1 + $0x8] sm:$0xff]
      %v173 = vld [vmem:[%s1 + $0x10] sm:$0xff]
      %v174 = vld [vmem:[%s1 + $0x18] sm:$0xff]
      %v175 = vld [vmem:[%s165] sm:$0xff]
      %v176 = vld [vmem:[%s165 + $0x8] sm:$0xff]
      %v177 = vld [vmem:[%s165 + $0x10] sm:$0xff]
      %v178 = vld [vmem:[%s165 + $0x18] sm:$0xff]
      %v179 = vld [vmem:[%s165 + $0x20] sm:$0xff]
      %v180 = vld [vmem:[%s165 + $0x28] sm:$0xff]
      %v181 = vld [vmem:[%s165 + $0x30] sm:$0xff]
      %v182 = vld [vmem:[%s165 + $0x38] sm:$0xff]
      %v183 = vld [vmem:[%s165 + $0x40] sm:$0xff]
      %v184 = vld [vmem:[%s165 + $0x48] sm:$0xff]
      %v185 = vld [vmem:[%s165 + $0x50] sm:$0xff]
      %v186 = vld [vmem:[%s165 + $0x58] sm:$0xff]
      %v187 = vld [vmem:[%s165 + $0x60] sm:$0xff]
      %v188 = vld [vmem:[%s165 + $0x68] sm:$0xff]
      %v189 = vld [vmem:[%s165 + $0x70] sm:$0xff]
      %v190 = vld [vmem:[%s165 + $0x78] sm:$0xff]
      %v191 = vld [vmem:[%s165 + $0x80] sm:$0xff]
      %v192 = vld [vmem:[%s165 + $0x88] sm:$0xff]
      %v193 = vld [vmem:[%s165 + $0x90] sm:$0xff]
      %v194 = vld [vmem:[%s165 + $0x98] sm:$0xff]
      %v195 = vld [vmem:[%s165 + $0xa0] sm:$0xff]
      %v196 = vld [vmem:[%s165 + $0xa8] sm:$0xff]
      %v197 = vld [vmem:[%s165 + $0xb0] sm:$0xff]
      %v198 = vld [vmem:[%s165 + $0xb8] sm:$0xff]
      %v199 = vld [vmem:[%s165 + $0xc0] sm:$0xff]
      %v200 = vld [vmem:[%s165 + $0xc8] sm:$0xff]
      %v201 = vld [vmem:[%s165 + $0xd0] sm:$0xff]
      %v202 = vld [vmem:[%s165 + $0xd8] sm:$0xff]
      %v203 = vld [vmem:[%s165 + $0xe0] sm:$0xff]
      %v204 = vld [vmem:[%s165 + $0xe8] sm:$0xff]
      %v205 = vld [vmem:[%s165 + $0xf0] sm:$0xff]
      %v206 = vld [vmem:[%s165 + $0xf8] sm:$0xff]
      %v207 = vld [vmem:[%s2] sm:$0xff]
      %v208 = vld [vmem:[%s2 + $0x8] sm:$0xff]
      %v209 = vld [vmem:[%s2 + $0x10] sm:$0xff]
      %v210 = vld [vmem:[%s2 + $0x18] sm:$0xff]
      %212 = vset.pattern.permute.xlu0 0
      %213 = vperm.xlu0 %212, %v207
      %v214 = vpop.permute.xlu0 %213
      %217 = vset.pattern.permute.xlu0 0
      %218 = vperm.xlu0 %217, %v208
      %v219 = vpop.permute.xlu0 %218
      %222 = vset.pattern.permute.xlu0 0
      %223 = vperm.xlu0 %222, %v209
      %v224 = vpop.permute.xlu0 %223
      %227 = vset.pattern.permute.xlu0 0
      %228 = vperm.xlu0 %227, %v210
      %v229 = vpop.permute.xlu0 %228
      %vm231 = vcmask 261120
      %v233 = vsel %vm231, %v171, 0
      %v236 = vsel %vm231, %v172, 0
      %v239 = vsel %vm231, %v173, 0
      %v242 = vsel %vm231, %v174, 0
      %244 = vmatpush.msra.mxu0 0.0
      %245 = vmatpush.msra.mxu0 0.0
      %246 = vmatpush.msra.mxu0 0.0
      %247 = vmatpush.msra.mxu0 0.0
      %248 = vmatpush.msra.mxu0 0.0
      %249 = vmatpush.msra.mxu0 0.0
      %250 = vmatpush.msra.mxu0 0.0
      %251 = vmatpush.msra.mxu0 0.0
      %252 = vmatpush.msra.mxu0 0.0
      %253 = vmatpush.msra.mxu0 0.0
      %254 = vmatpush.msra.mxu0 0.0
      %255 = vmatpush.msra.mxu0 0.0
      %256 = vmatpush.msra.mxu0 %v199
      %257 = vmatpush.msra.mxu0 %v191
      %258 = vmatpush.msra.mxu0 %v183
      %259 = vmatpush.msra.mxu0 %v175
      %260 = vmatmul.f32.gmra.mxu0 %v233
      %v261 = vpop.f32.mrf.mxu0
      %v262 = vadd.f32 %v214, %v261
      %263 = vmatmul.f32.gmra.mxu0 %v236
      %v264 = vpop.f32.mrf.mxu0
      %v265 = vadd.f32 %v219, %v264
      %266 = vmatmul.f32.gmra.mxu0 %v239
      %v267 = vpop.f32.mrf.mxu0
      %v268 = vadd.f32 %v224, %v267
      %269 = vmatmul.f32.gmra.mxu0 %v242
      %v270 = vpop.f32.mrf.mxu0
      %v271 = vadd.f32 %v229, %v270
      %272 = vdwg.mxu0
      %273 = vmatpush.msra.mxu0 0.0
      %274 = vmatpush.msra.mxu0 0.0
      %275 = vmatpush.msra.mxu0 0.0
      %276 = vmatpush.msra.mxu0 0.0
      %277 = vmatpush.msra.mxu0 0.0
      %278 = vmatpush.msra.mxu0 0.0
      %279 = vmatpush.msra.mxu0 0.0
      %280 = vmatpush.msra.mxu0 0.0
      %281 = vmatpush.msra.mxu0 0.0
      %282 = vmatpush.msra.mxu0 0.0
      %283 = vmatpush.msra.mxu0 0.0
      %284 = vmatpush.msra.mxu0 0.0
      %285 = vmatpush.msra.mxu0 %v200
      %286 = vmatpush.msra.mxu0 %v192
      %287 = vmatpush.msra.mxu0 %v184
      %288 = vmatpush.msra.mxu0 %v176
      %289 = vmatmul.f32.gmra.mxu0 %v233
      %v290 = vpop.f32.mrf.mxu0
      %v291 = vadd.f32 %v214, %v290
      %292 = vmatmul.f32.gmra.mxu0 %v236
      %v293 = vpop.f32.mrf.mxu0
      %v294 = vadd.f32 %v219, %v293
      %295 = vmatmul.f32.gmra.mxu0 %v239
      %v296 = vpop.f32.mrf.mxu0
      %v297 = vadd.f32 %v224, %v296
      %298 = vmatmul.f32.gmra.mxu0 %v242
      %v299 = vpop.f32.mrf.mxu0
      %v300 = vadd.f32 %v229, %v299
      %301 = vdwg.mxu0
      %302 = vmatpush.msra.mxu0 0.0
      %303 = vmatpush.msra.mxu0 0.0
      %304 = vmatpush.msra.mxu0 0.0
      %305 = vmatpush.msra.mxu0 0.0
      %306 = vmatpush.msra.mxu0 0.0
      %307 = vmatpush.msra.mxu0 0.0
      %308 = vmatpush.msra.mxu0 0.0
      %309 = vmatpush.msra.mxu0 0.0
      %310 = vmatpush.msra.mxu0 0.0
      %311 = vmatpush.msra.mxu0 0.0
      %312 = vmatpush.msra.mxu0 0.0
      %313 = vmatpush.msra.mxu0 0.0
      %314 = vmatpush.msra.mxu0 %v201
      %315 = vmatpush.msra.mxu0 %v193
      %316 = vmatpush.msra.mxu0 %v185
      %317 = vmatpush.msra.mxu0 %v177
      %318 = vmatmul.f32.gmra.mxu0 %v233
      %v319 = vpop.f32.mrf.mxu0
      %v320 = vadd.f32 %v214, %v319
      %321 = vmatmul.f32.gmra.mxu0 %v236
      %v322 = vpop.f32.mrf.mxu0
      %v323 = vadd.f32 %v219, %v322
      %324 = vmatmul.f32.gmra.mxu0 %v239
      %v325 = vpop.f32.mrf.mxu0
      %v326 = vadd.f32 %v224, %v325
      %327 = vmatmul.f32.gmra.mxu0 %v242
      %v328 = vpop.f32.mrf.mxu0
      %v329 = vadd.f32 %v229, %v328
      %330 = vdwg.mxu0
      %331 = vmatpush.msra.mxu0 0.0
      %332 = vmatpush.msra.mxu0 0.0
      %333 = vmatpush.msra.mxu0 0.0
      %334 = vmatpush.msra.mxu0 0.0
      %335 = vmatpush.msra.mxu0 0.0
      %336 = vmatpush.msra.mxu0 0.0
      %337 = vmatpush.msra.mxu0 0.0
      %338 = vmatpush.msra.mxu0 0.0
      %339 = vmatpush.msra.mxu0 0.0
      %340 = vmatpush.msra.mxu0 0.0
      %341 = vmatpush.msra.mxu0 0.0
      %342 = vmatpush.msra.mxu0 0.0
      %343 = vmatpush.msra.mxu0 %v202
      %344 = vmatpush.msra.mxu0 %v194
      %345 = vmatpush.msra.mxu0 %v186
      %346 = vmatpush.msra.mxu0 %v178
      %347 = vmatmul.f32.gmra.mxu0 %v233
      %v348 = vpop.f32.mrf.mxu0
      %v349 = vadd.f32 %v214, %v348
      %350 = vmatmul.f32.gmra.mxu0 %v236
      %v351 = vpop.f32.mrf.mxu0
      %v352 = vadd.f32 %v219, %v351
      %353 = vmatmul.f32.gmra.mxu0 %v239
      %v354 = vpop.f32.mrf.mxu0
      %v355 = vadd.f32 %v224, %v354
      %356 = vmatmul.f32.gmra.mxu0 %v242
      %v357 = vpop.f32.mrf.mxu0
      %v358 = vadd.f32 %v229, %v357
      %359 = vdwg.mxu0
      %360 = vmatpush.msra.mxu0 0.0
      %361 = vmatpush.msra.mxu0 0.0
      %362 = vmatpush.msra.mxu0 0.0
      %363 = vmatpush.msra.mxu0 0.0
      %364 = vmatpush.msra.mxu0 0.0
      %365 = vmatpush.msra.mxu0 0.0
      %366 = vmatpush.msra.mxu0 0.0
      %367 = vmatpush.msra.mxu0 0.0
      %368 = vmatpush.msra.mxu0 0.0
      %369 = vmatpush.msra.mxu0 0.0
      %370 = vmatpush.msra.mxu0 0.0
      %371 = vmatpush.msra.mxu0 0.0
      %372 = vmatpush.msra.mxu0 %v203
      %373 = vmatpush.msra.mxu0 %v195
      %374 = vmatpush.msra.mxu0 %v187
      %375 = vmatpush.msra.mxu0 %v179
      %376 = vmatmul.f32.gmra.mxu0 %v233
      %v377 = vpop.f32.mrf.mxu0
      %v378 = vadd.f32 %v214, %v377
      %379 = vmatmul.f32.gmra.mxu0 %v236
      %v380 = vpop.f32.mrf.mxu0
      %v381 = vadd.f32 %v219, %v380
      %382 = vmatmul.f32.gmra.mxu0 %v239
      %v383 = vpop.f32.mrf.mxu0
      %v384 = vadd.f32 %v224, %v383
      %385 = vmatmul.f32.gmra.mxu0 %v242
      %v386 = vpop.f32.mrf.mxu0
      %v387 = vadd.f32 %v229, %v386
      %388 = vdwg.mxu0
      %389 = vmatpush.msra.mxu0 0.0
      %390 = vmatpush.msra.mxu0 0.0
      %391 = vmatpush.msra.mxu0 0.0
      %392 = vmatpush.msra.mxu0 0.0
      %393 = vmatpush.msra.mxu0 0.0
      %394 = vmatpush.msra.mxu0 0.0
      %395 = vmatpush.msra.mxu0 0.0
      %396 = vmatpush.msra.mxu0 0.0
      %397 = vmatpush.msra.mxu0 0.0
      %398 = vmatpush.msra.mxu0 0.0
      %399 = vmatpush.msra.mxu0 0.0
      %400 = vmatpush.msra.mxu0 0.0
      %401 = vmatpush.msra.mxu0 %v204
      %402 = vmatpush.msra.mxu0 %v196
      %403 = vmatpush.msra.mxu0 %v188
      %404 = vmatpush.msra.mxu0 %v180
      %405 = vmatmul.f32.gmra.mxu0 %v233
      %v406 = vpop.f32.mrf.mxu0
      %v407 = vadd.f32 %v214, %v406
      %408 = vmatmul.f32.gmra.mxu0 %v236
      %v409 = vpop.f32.mrf.mxu0
      %v410 = vadd.f32 %v219, %v409
      %411 = vmatmul.f32.gmra.mxu0 %v239
      %v412 = vpop.f32.mrf.mxu0
      %v413 = vadd.f32 %v224, %v412
      %414 = vmatmul.f32.gmra.mxu0 %v242
      %v415 = vpop.f32.mrf.mxu0
      %v416 = vadd.f32 %v229, %v415
      %417 = vdwg.mxu0
      %418 = vmatpush.msra.mxu0 0.0
      %419 = vmatpush.msra.mxu0 0.0
      %420 = vmatpush.msra.mxu0 0.0
      %421 = vmatpush.msra.mxu0 0.0
      %422 = vmatpush.msra.mxu0 0.0
      %423 = vmatpush.msra.mxu0 0.0
      %424 = vmatpush.msra.mxu0 0.0
      %425 = vmatpush.msra.mxu0 0.0
      %426 = vmatpush.msra.mxu0 0.0
      %427 = vmatpush.msra.mxu0 0.0
      %428 = vmatpush.msra.mxu0 0.0
      %429 = vmatpush.msra.mxu0 0.0
      %430 = vmatpush.msra.mxu0 %v205
      %431 = vmatpush.msra.mxu0 %v197
      %432 = vmatpush.msra.mxu0 %v189
      %433 = vmatpush.msra.mxu0 %v181
      %434 = vmatmul.f32.gmra.mxu0 %v233
      %v435 = vpop.f32.mrf.mxu0
      %v436 = vadd.f32 %v214, %v435
      %437 = vmatmul.f32.gmra.mxu0 %v236
      %v438 = vpop.f32.mrf.mxu0
      %v439 = vadd.f32 %v219, %v438
      %440 = vmatmul.f32.gmra.mxu0 %v239
      %v441 = vpop.f32.mrf.mxu0
      %v442 = vadd.f32 %v224, %v441
      %443 = vmatmul.f32.gmra.mxu0 %v242
      %v444 = vpop.f32.mrf.mxu0
      %v445 = vadd.f32 %v229, %v444
      %446 = vdwg.mxu0
      %447 = vmatpush.msra.mxu0 0.0
      %448 = vmatpush.msra.mxu0 0.0
      %449 = vmatpush.msra.mxu0 0.0
      %450 = vmatpush.msra.mxu0 0.0
      %451 = vmatpush.msra.mxu0 0.0
      %452 = vmatpush.msra.mxu0 0.0
      %453 = vmatpush.msra.mxu0 0.0
      %454 = vmatpush.msra.mxu0 0.0
      %455 = vmatpush.msra.mxu0 0.0
      %456 = vmatpush.msra.mxu0 0.0
      %457 = vmatpush.msra.mxu0 0.0
      %458 = vmatpush.msra.mxu0 0.0
      %459 = vmatpush.msra.mxu0 %v206
      %460 = vmatpush.msra.mxu0 %v198
      %461 = vmatpush.msra.mxu0 %v190
      %462 = vmatpush.msra.mxu0 %v182
      %463 = vmatmul.f32.gmra.mxu0 %v233
      %v464 = vpop.f32.mrf.mxu0
      %v465 = vadd.f32 %v214, %v464
      %466 = vmatmul.f32.gmra.mxu0 %v236
      %v467 = vpop.f32.mrf.mxu0
      %v468 = vadd.f32 %v219, %v467
      %469 = vmatmul.f32.gmra.mxu0 %v239
      %v470 = vpop.f32.mrf.mxu0
      %v471 = vadd.f32 %v224, %v470
      %472 = vmatmul.f32.gmra.mxu0 %v242
      %v473 = vpop.f32.mrf.mxu0
      %v474 = vadd.f32 %v229, %v473
      %475 = vdwg.mxu0
      %v476 = vmax.f32 %v262, 0.0
      %v477 = vmax.f32 %v291, 0.0
      %v478 = vmax.f32 %v320, 0.0
      %v479 = vmax.f32 %v349, 0.0
      %v480 = vmax.f32 %v378, 0.0
      %v481 = vmax.f32 %v407, 0.0
      %v482 = vmax.f32 %v436, 0.0
      %v483 = vmax.f32 %v465, 0.0
      %v484 = vmax.f32 %v265, 0.0
      %v485 = vmax.f32 %v294, 0.0
      %v486 = vmax.f32 %v323, 0.0
      %v487 = vmax.f32 %v352, 0.0
      %v488 = vmax.f32 %v381, 0.0
      %v489 = vmax.f32 %v410, 0.0
      %v490 = vmax.f32 %v439, 0.0
      %v491 = vmax.f32 %v468, 0.0
      %v492 = vmax.f32 %v268, 0.0
      %v493 = vmax.f32 %v297, 0.0
      %v494 = vmax.f32 %v326, 0.0
      %v495 = vmax.f32 %v355, 0.0
      %v496 = vmax.f32 %v384, 0.0
      %v497 = vmax.f32 %v413, 0.0
      %v498 = vmax.f32 %v442, 0.0
      %v499 = vmax.f32 %v471, 0.0
      %v500 = vmax.f32 %v271, 0.0
      %v501 = vmax.f32 %v300, 0.0
      %v502 = vmax.f32 %v329, 0.0
      %v503 = vmax.f32 %v358, 0.0
      %v504 = vmax.f32 %v387, 0.0
      %v505 = vmax.f32 %v416, 0.0
      %v506 = vmax.f32 %v445, 0.0
      %v507 = vmax.f32 %v474, 0.0
      %508 = vst [vmem:[%s170] sm:$0xff] %v476
      %509 = vst [vmem:[%s170 + $0x8] sm:$0xff] %v477
      %510 = vst [vmem:[%s170 + $0x10] sm:$0xff] %v478
      %511 = vst [vmem:[%s170 + $0x18] sm:$0xff] %v479
      %512 = vst [vmem:[%s170 + $0x20] sm:$0xff] %v480
      %513 = vst [vmem:[%s170 + $0x28] sm:$0xff] %v481
      %514 = vst [vmem:[%s170 + $0x30] sm:$0xff] %v482
      %515 = vst [vmem:[%s170 + $0x38] sm:$0xff] %v483
      %516 = vst [vmem:[%s170 + $0x40] sm:$0xff] %v484
      %517 = vst [vmem:[%s170 + $0x48] sm:$0xff] %v485
      %518 = vst [vmem:[%s170 + $0x50] sm:$0xff] %v486
      %519 = vst [vmem:[%s170 + $0x58] sm:$0xff] %v487
      %520 = vst [vmem:[%s170 + $0x60] sm:$0xff] %v488
      %521 = vst [vmem:[%s170 + $0x68] sm:$0xff] %v489
      %522 = vst [vmem:[%s170 + $0x70] sm:$0xff] %v490
      %523 = vst [vmem:[%s170 + $0x78] sm:$0xff] %v491
      %524 = vst [vmem:[%s170 + $0x80] sm:$0xff] %v492
      %525 = vst [vmem:[%s170 + $0x88] sm:$0xff] %v493
      %526 = vst [vmem:[%s170 + $0x90] sm:$0xff] %v494
      %527 = vst [vmem:[%s170 + $0x98] sm:$0xff] %v495
      %528 = vst [vmem:[%s170 + $0xa0] sm:$0xff] %v496
      %529 = vst [vmem:[%s170 + $0xa8] sm:$0xff] %v497
      %530 = vst [vmem:[%s170 + $0xb0] sm:$0xff] %v498
      %531 = vst [vmem:[%s170 + $0xb8] sm:$0xff] %v499
      %532 = vst [vmem:[%s170 + $0xc0] sm:$0xff] %v500
      %533 = vst [vmem:[%s170 + $0xc8] sm:$0xff] %v501
      %534 = vst [vmem:[%s170 + $0xd0] sm:$0xff] %v502
      %535 = vst [vmem:[%s170 + $0xd8] sm:$0xff] %v503
      %536 = vst [vmem:[%s170 + $0xe0] sm:$0xff] %v504
      %537 = vst [vmem:[%s170 + $0xe8] sm:$0xff] %v505
      %538 = vst [vmem:[%s170 + $0xf0] sm:$0xff] %v506
      %539 = vst [vmem:[%s170 + $0xf8] sm:$0xff] %v507
      %p540 = scmp.lt.s32.totalorder %s14, 1
      %s541 = scalar_select %p540, %s14, 1
      %s542 = smul.addr %s541, 32
      %s543 = smul.addr %s542, 8
      %s544 = scalar_lea.vmem %s3, %s543
      // Predicated region
      $region33: #{victim_model_forward.2} parent=31 // pred_check
        %p545 = pneg %p100
      $region34: #{victim_model_forward.2} parent=31 // pred_check_branch
        %547 = sbr.rel (%p545) target = $region36
      $region35: #{victim_model_forward.2} parent=31 // pred_region
        _
      $region36: #{victim_model_forward.2} parent=31 // pred_fallthru
        _
    $region32: #{victim_model_forward.2} parent=5 // pred_fallthru
      _
    %p548 = scmp.le.s32.totalorder 2, %s9
    // Predicated region
    $region37: #{victim_model_forward.2} parent=5 // pred_check
      %p549 = pneg %p548
    $region38: #{victim_model_forward.2} parent=5 // pred_check_branch
      %551 = sbr.rel (%p549) target = $region40
    $region39: #{victim_model_forward.2} parent=5 // pred_region
      %s552 = ssub.s32 %s9, 2
      // Predicated region
      $region41: #{victim_model_forward.2} parent=39 // pred_check
        %p553 = pneg %p106
      $region42: #{victim_model_forward.2} parent=39 // pred_check_branch
        %555 = sbr.rel (%p553) target = $region44
      $region43: #{victim_model_forward.2} parent=39 // pred_region
        %p556 = scmp.lt.s32.totalorder %s15, 1
        %s557 = scalar_select %p556, %s15, 1
        %s558 = smul.addr %s557, 32
        %s559 = smul.addr %s558, 8
        %s560 = scalar_lea.vmem %s3, %s559
      $region44: #{victim_model_forward.2} parent=39 // pred_fallthru
        _
    $region40: #{victim_model_forward.2} parent=5 // pred_fallthru
      _
  $region6: #{victim_model_forward.2} parent=0 // loop_footer
    %s13 = sadd.s32 1, %s9
  $region7: #{victim_model_forward.2} parent=0 // loop_footer_branch
    %8 = sbr.rel target = $region3
  $region8: #{victim_model_forward.2} parent=0 // loop_exit
    _

// kernel: victim_model_forward.3
$region0: #{victim_model_forward.3}
  #allocation0 [shape = 'u32[]', space=smem, size = 0x4, offset = 0x4, fixed_abs, tag = 'smem constant byte address 0x4 - core index']
  #allocation1 [shape = 'u32[72,128]{1,0:T(1,128)}', space=vmem, size = 0x9000, scoped, tag = 'internal scratch']
  %s0 = inlined_call_operand.vmem [shape: f32[2,32768], index: 0, kind: input, shape index: {}]
  %s1 = inlined_call_operand.vmem [shape: f32[10,32768], index: 1, kind: input, shape index: {}]
  %s2 = inlined_call_operand.vmem [shape: f32[1,10], index: 2, kind: input, shape index: {}]
  %s3 = inlined_call_operand.hbm [shape: f32[2,10], index: 3, kind: output, shape index: {}]
  %s4 = sld [smem:[#allocation0]]
  $region22: #{victim_model_forward.3} parent=0
    _
  %s6 = ssub.s32 1, %s4
  %s7 = scalar_select 0, %s6, %s4
  $region1: #{victim_model_forward.3} parent=0
    #allocation2 [shape = 'u8[1024]{0}', space=vmem, size = 0x400, scoped, tag = 'output window, operand 0, single buffered']
    #allocation3 [shape = 's32[1]{0}', space=sflag, size = 0x4, scoped, tag = 'scoped memory for victim_model_forward.3']
    %8 = vsyncpa [#allocation3], 0
    // Predicated region
    $region2: #{victim_model_forward.3} parent=1 // pred_check
      _
    $region3: #{victim_model_forward.3} parent=1 // pred_check_branch
      %10 = sbr.rel (0) target = $region5
    $region4: #{victim_model_forward.3} parent=1 // pred_region
      _
    $region5: #{victim_model_forward.3} parent=1 // pred_fallthru
      _
    // Predicated region
    $region6: #{victim_model_forward.3} parent=1 // pred_check
      _
    $region7: #{victim_model_forward.3} parent=1 // pred_check_branch
      %12 = sbr.rel (0) target = $region9
    $region8: #{victim_model_forward.3} parent=1 // pred_region
      _
    $region9: #{victim_model_forward.3} parent=1 // pred_fallthru
      _
    // Predicated region
    $region10: #{victim_model_forward.3} parent=1 // pred_check
      _
    $region11: #{victim_model_forward.3} parent=1 // pred_check_branch
      %14 = sbr.rel (0) target = $region13
    $region12: #{victim_model_forward.3} parent=1 // pred_region
      _
    $region13: #{victim_model_forward.3} parent=1 // pred_fallthru
      _
    %v15 = vld [vmem:[%s0] sm:$0xff]
    %v16 = vld [vmem:[%s0 + $0x8] sm:$0xff]
    %v17 = vld [vmem:[%s0 + $0x10] sm:$0xff]
    %v18 = vld [vmem:[%s0 + $0x18] sm:$0xff]
    %v19 = vld [vmem:[%s0 + $0x20] sm:$0xff]
    %v20 = vld [vmem:[%s0 + $0x28] sm:$0xff]
    %v21 = vld [vmem:[%s0 + $0x30] sm:$0xff]
    %v22 = vld [vmem:[%s0 + $0x38] sm:$0xff]
    %v23 = vld [vmem:[%s0 + $0x40] sm:$0xff]
    %v24 = vld [vmem:[%s0 + $0x48] sm:$0xff]
    %v25 = vld [vmem:[%s0 + $0x50] sm:$0xff]
    %v26 = vld [vmem:[%s0 + $0x58] sm:$0xff]
    %v27 = vld [vmem:[%s0 + $0x60] sm:$0xff]
    %v28 = vld [vmem:[%s0 + $0x68] sm:$0xff]
    %v29 = vld [vmem:[%s0 + $0x70] sm:$0xff]
    %v30 = vld [vmem:[%s0 + $0x78] sm:$0xff]
    %v31 = vld [vmem:[%s0 + $0x80] sm:$0xff]
    %v32 = vld [vmem:[%s0 + $0x88] sm:$0xff]
    %v33 = vld [vmem:[%s0 + $0x90] sm:$0xff]
    %v34 = vld [vmem:[%s0 + $0x98] sm:$0xff]
    %v35 = vld [vmem:[%s0 + $0xa0] sm:$0xff]
    %v36 = vld [vmem:[%s0 + $0xa8] sm:$0xff]
    %v37 = vld [vmem:[%s0 + $0xb0] sm:$0xff]
    %v38 = vld [vmem:[%s0 + $0xb8] sm:$0xff]
    %v39 = vld [vmem:[%s0 + $0xc0] sm:$0xff]
    %v40 = vld [vmem:[%s0 + $0xc8] sm:$0xff]
    %v41 = vld [vmem:[%s0 + $0xd0] sm:$0xff]
    %v42 = vld [vmem:[%s0 + $0xd8] sm:$0xff]
    %v43 = vld [vmem:[%s0 + $0xe0] sm:$0xff]
    %v44 = vld [vmem:[%s0 + $0xe8] sm:$0xff]
    %v45 = vld [vmem:[%s0 + $0xf0] sm:$0xff]
    %v46 = vld [vmem:[%s0 + $0xf8] sm:$0xff]
    %v47 = vld [vmem:[%s0 + $0x100] sm:$0xff]
    %v48 = vld [vmem:[%s0 + $0x108] sm:$0xff]
    %v49 = vld [vmem:[%s0 + $0x110] sm:$0xff]
    %v50 = vld [vmem:[%s0 + $0x118] sm:$0xff]
    %v51 = vld [vmem:[%s0 + $0x120] sm:$0xff]
    %v52 = vld [vmem:[%s0 + $0x128] sm:$0xff]
    %v53 = vld [vmem:[%s0 + $0x130] sm:$0xff]
    %v54 = vld [vmem:[%s0 + $0x138] sm:$0xff]
    %v55 = vld [vmem:[%s0 + $0x140] sm:$0xff]
    %v56 = vld [vmem:[%s0 + $0x148] sm:$0xff]
    %v57 = vld [vmem:[%s0 + $0x150] sm:$0xff]
    %v58 = vld [vmem:[%s0 + $0x158] sm:$0xff]
    %v59 = vld [vmem:[%s0 + $0x160] sm:$0xff]
    %v60 = vld [vmem:[%s0 + $0x168] sm:$0xff]
    %v61 = vld [vmem:[%s0 + $0x170] sm:$0xff]
    %v62 = vld [vmem:[%s0 + $0x178] sm:$0xff]
    %v63 = vld [vmem:[%s0 + $0x180] sm:$0xff]
    %v64 = vld [vmem:[%s0 + $0x188] sm:$0xff]
    %v65 = vld [vmem:[%s0 + $0x190] sm:$0xff]
    %v66 = vld [vmem:[%s0 + $0x198] sm:$0xff]
    %v67 = vld [vmem:[%s0 + $0x1a0] sm:$0xff]
    %v68 = vld [vmem:[%s0 + $0x1a8] sm:$0xff]
    %v69 = vld [vmem:[%s0 + $0x1b0] sm:$0xff]
    %v70 = vld [vmem:[%s0 + $0x1b8] sm:$0xff]
    %v71 = vld [vmem:[%s0 + $0x1c0] sm:$0xff]
    %v72 = vld [vmem:[%s0 + $0x1c8] sm:$0xff]
    %v73 = vld [vmem:[%s0 + $0x1d0] sm:$0xff]
    %v74 = vld [vmem:[%s0 + $0x1d8] sm:$0xff]
    %v75 = vld [vmem:[%s0 + $0x1e0] sm:$0xff]
    %v76 = vld [vmem:[%s0 + $0x1e8] sm:$0xff]
    %v77 = vld [vmem:[%s0 + $0x1f0] sm:$0xff]
    %v78 = vld [vmem:[%s0 + $0x1f8] sm:$0xff]
    %v79 = vld [vmem:[%s1] sm:$0xff]
    %v80 = vld [vmem:[%s1 + $0x8] sm:$0xff]
    %v81 = vld [vmem:[%s1 + $0x10] sm:$0xff]
    %v82 = vld [vmem:[%s1 + $0x18] sm:$0xff]
    %v83 = vld [vmem:[%s1 + $0x20] sm:$0xff]
    %v84 = vld [vmem:[%s1 + $0x28] sm:$0xff]
    %v85 = vld [vmem:[%s1 + $0x30] sm:$0xff]
    %v86 = vld [vmem:[%s1 + $0x38] sm:$0xff]
    %v87 = vld [vmem:[%s1 + $0x40] sm:$0xff]
    %v88 = vld [vmem:[%s1 + $0x48] sm:$0xff]
    %v89 = vld [vmem:[%s1 + $0x50] sm:$0xff]
    %v90 = vld [vmem:[%s1 + $0x58] sm:$0xff]
    %v91 = vld [vmem:[%s1 + $0x60] sm:$0xff]
    %v92 = vld [vmem:[%s1 + $0x68] sm:$0xff]
    %v93 = vld [vmem:[%s1 + $0x70] sm:$0xff]
    %v94 = vld [vmem:[%s1 + $0x78] sm:$0xff]
    %v95 = vld [vmem:[%s1 + $0x80] sm:$0xff]
    %v96 = vld [vmem:[%s1 + $0x88] sm:$0xff]
    %v97 = vld [vmem:[%s1 + $0x90] sm:$0xff]
    %v98 = vld [vmem:[%s1 + $0x98] sm:$0xff]
    %v99 = vld [vmem:[%s1 + $0xa0] sm:$0xff]
    %v100 = vld [vmem:[%s1 + $0xa8] sm:$0xff]
    %v101 = vld [vmem:[%s1 + $0xb0] sm:$0xff]
    %v102 = vld [vmem:[%s1 + $0xb8] sm:$0xff]
    %v103 = vld [vmem:[%s1 + $0xc0] sm:$0xff]
    %v104 = vld [vmem:[%s1 + $0xc8] sm:$0xff]
    %v105 = vld [vmem:[%s1 + $0xd0] sm:$0xff]
    %v106 = vld [vmem:[%s1 + $0xd8] sm:$0xff]
    %v107 = vld [vmem:[%s1 + $0xe0] sm:$0xff]
    %v108 = vld [vmem:[%s1 + $0xe8] sm:$0xff]
    %v109 = vld [vmem:[%s1 + $0xf0] sm:$0xff]
    %v110 = vld [vmem:[%s1 + $0xf8] sm:$0xff]
    %v111 = vld [vmem:[%s1 + $0x100] sm:$0xff]
    %v112 = vld [vmem:[%s1 + $0x108] sm:$0xff]
    %v113 = vld [vmem:[%s1 + $0x110] sm:$0xff]
    %v114 = vld [vmem:[%s1 + $0x118] sm:$0xff]
    %v115 = vld [vmem:[%s1 + $0x120] sm:$0xff]
    %v116 = vld [vmem:[%s1 + $0x128] sm:$0xff]
    %v117 = vld [vmem:[%s1 + $0x130] sm:$0xff]
    %v118 = vld [vmem:[%s1 + $0x138] sm:$0xff]
    %v119 = vld [vmem:[%s1 + $0x140] sm:$0xff]
    %v120 = vld [vmem:[%s1 + $0x148] sm:$0xff]
    %v121 = vld [vmem:[%s1 + $0x150] sm:$0xff]
    %v122 = vld [vmem:[%s1 + $0x158] sm:$0xff]
    %v123 = vld [vmem:[%s1 + $0x160] sm:$0xff]
    %v124 = vld [vmem:[%s1 + $0x168] sm:$0xff]
    %v125 = vld [vmem:[%s1 + $0x170] sm:$0xff]
    %v126 = vld [vmem:[%s1 + $0x178] sm:$0xff]
    %v127 = vld [vmem:[%s1 + $0x180] sm:$0xff]
    %v128 = vld [vmem:[%s1 + $0x188] sm:$0xff]
    %v129 = vld [vmem:[%s1 + $0x190] sm:$0xff]
    %v130 = vld [vmem:[%s1 + $0x198] sm:$0xff]
    %v131 = vld [vmem:[%s1 + $0x1a0] sm:$0xff]
    %v132 = vld [vmem:[%s1 + $0x1a8] sm:$0xff]
    %v133 = vld [vmem:[%s1 + $0x1b0] sm:$0xff]
    %v134 = vld [vmem:[%s1 + $0x1b8] sm:$0xff]
    %v135 = vld [vmem:[%s1 + $0x1c0] sm:$0xff]
    %v136 = vld [vmem:[%s1 + $0x1c8] sm:$0xff]
    %v137 = vld [vmem:[%s1 + $0x1d0] sm:$0xff]
    %v138 = vld [vmem:[%s1 + $0x1d8] sm:$0xff]
    %v139 = vld [vmem:[%s1 + $0x1e0] sm:$0xff]
    %v140 = vld [vmem:[%s1 + $0x1e8] sm:$0xff]
    %v141 = vld [vmem:[%s1 + $0x1f0] sm:$0xff]
    %v142 = vld [vmem:[%s1 + $0x1f8] sm:$0xff]
    %v143 = vld [vmem:[%s1 + $0x200] sm:$0xff]
    %v144 = vld [vmem:[%s1 + $0x208] sm:$0xff]
    %v145 = vld [vmem:[%s1 + $0x210] sm:$0xff]
    %v146 = vld [vmem:[%s1 + $0x218] sm:$0xff]
    %v147 = vld [vmem:[%s1 + $0x220] sm:$0xff]
    %v148 = vld [vmem:[%s1 + $0x228] sm:$0xff]
    %v149 = vld [vmem:[%s1 + $0x230] sm:$0xff]
    %v150 = vld [vmem:[%s1 + $0x238] sm:$0xff]
    %v151 = vld [vmem:[%s1 + $0x240] sm:$0xff]
    %v152 = vld [vmem:[%s1 + $0x248] sm:$0xff]
    %v153 = vld [vmem:[%s1 + $0x250] sm:$0xff]
    %v154 = vld [vmem:[%s1 + $0x258] sm:$0xff]
    %v155 = vld [vmem:[%s1 + $0x260] sm:$0xff]
    %v156 = vld [vmem:[%s1 + $0x268] sm:$0xff]
    %v157 = vld [vmem:[%s1 + $0x270] sm:$0xff]
    %v158 = vld [vmem:[%s1 + $0x278] sm:$0xff]
    %v159 = vld [vmem:[%s1 + $0x280] sm:$0xff]
    %v160 = vld [vmem:[%s1 + $0x288] sm:$0xff]
    %v161 = vld [vmem:[%s1 + $0x290] sm:$0xff]
    %v162 = vld [vmem:[%s1 + $0x298] sm:$0xff]
    %v163 = vld [vmem:[%s1 + $0x2a0] sm:$0xff]
    %v164 = vld [vmem:[%s1 + $0x2a8] sm:$0xff]
    %v165 = vld [vmem:[%s1 + $0x2b0] sm:$0xff]
    %v166 = vld [vmem:[%s1 + $0x2b8] sm:$0xff]
    %v167 = vld [vmem:[%s1 + $0x2c0] sm:$0xff]
    %v168 = vld [vmem:[%s1 + $0x2c8] sm:$0xff]
    %v169 = vld [vmem:[%s1 + $0x2d0] sm:$0xff]
    %v170 = vld [vmem:[%s1 + $0x2d8] sm:$0xff]
    %v171 = vld [vmem:[%s1 + $0x2e0] sm:$0xff]
    %v172 = vld [vmem:[%s1 + $0x2e8] sm:$0xff]
    %v173 = vld [vmem:[%s1 + $0x2f0] sm:$0xff]
    %v174 = vld [vmem:[%s1 + $0x2f8] sm:$0xff]
    %v175 = vld [vmem:[%s1 + $0x300] sm:$0xff]
    %v176 = vld [vmem:[%s1 + $0x308] sm:$0xff]
    %v177 = vld [vmem:[%s1 + $0x310] sm:$0xff]
    %v178 = vld [vmem:[%s1 + $0x318] sm:$0xff]
    %v179 = vld [vmem:[%s1 + $0x320] sm:$0xff]
    %v180 = vld [vmem:[%s1 + $0x328] sm:$0xff]
    %v181 = vld [vmem:[%s1 + $0x330] sm:$0xff]
    %v182 = vld [vmem:[%s1 + $0x338] sm:$0xff]
    %v183 = vld [vmem:[%s1 + $0x340] sm:$0xff]
    %v184 = vld [vmem:[%s1 + $0x348] sm:$0xff]
    %v185 = vld [vmem:[%s1 + $0x350] sm:$0xff]
    %v186 = vld [vmem:[%s1 + $0x358] sm:$0xff]
    %v187 = vld [vmem:[%s1 + $0x360] sm:$0xff]
    %v188 = vld [vmem:[%s1 + $0x368] sm:$0xff]
    %v189 = vld [vmem:[%s1 + $0x370] sm:$0xff]
    %v190 = vld [vmem:[%s1 + $0x378] sm:$0xff]
    %v191 = vld [vmem:[%s1 + $0x380] sm:$0xff]
    %v192 = vld [vmem:[%s1 + $0x388] sm:$0xff]
    %v193 = vld [vmem:[%s1 + $0x390] sm:$0xff]
    %v194 = vld [vmem:[%s1 + $0x398] sm:$0xff]
    %v195 = vld [vmem:[%s1 + $0x3a0] sm:$0xff]
    %v196 = vld [vmem:[%s1 + $0x3a8] sm:$0xff]
    %v197 = vld [vmem:[%s1 + $0x3b0] sm:$0xff]
    %v198 = vld [vmem:[%s1 + $0x3b8] sm:$0xff]
    %v199 = vld [vmem:[%s1 + $0x3c0] sm:$0xff]
    %v200 = vld [vmem:[%s1 + $0x3c8] sm:$0xff]
    %v201 = vld [vmem:[%s1 + $0x3d0] sm:$0xff]
    %v202 = vld [vmem:[%s1 + $0x3d8] sm:$0xff]
    %v203 = vld [vmem:[%s1 + $0x3e0] sm:$0xff]
    %v204 = vld [vmem:[%s1 + $0x3e8] sm:$0xff]
    %v205 = vld [vmem:[%s1 + $0x3f0] sm:$0xff]
    %v206 = vld [vmem:[%s1 + $0x3f8] sm:$0xff]
    %v207 = vld [vmem:[%s1 + $0x400] sm:$0xff]
    %v208 = vld [vmem:[%s1 + $0x408] sm:$0xff]
    %v209 = vld [vmem:[%s1 + $0x410] sm:$0xff]
    %v210 = vld [vmem:[%s1 + $0x418] sm:$0xff]
    %v211 = vld [vmem:[%s1 + $0x420] sm:$0xff]
    %v212 = vld [vmem:[%s1 + $0x428] sm:$0xff]
    %v213 = vld [vmem:[%s1 + $0x430] sm:$0xff]
    %v214 = vld [vmem:[%s1 + $0x438] sm:$0xff]
    %v215 = vld [vmem:[%s1 + $0x440] sm:$0xff]
    %v216 = vld [vmem:[%s1 + $0x448] sm:$0xff]
    %v217 = vld [vmem:[%s1 + $0x450] sm:$0xff]
    %v218 = vld [vmem:[%s1 + $0x458] sm:$0xff]
    %v219 = vld [vmem:[%s1 + $0x460] sm:$0xff]
    %v220 = vld [vmem:[%s1 + $0x468] sm:$0xff]
    %v221 = vld [vmem:[%s1 + $0x470] sm:$0xff]
    %v222 = vld [vmem:[%s1 + $0x478] sm:$0xff]
    %v223 = vld [vmem:[%s1 + $0x480] sm:$0xff]
    %v224 = vld [vmem:[%s1 + $0x488] sm:$0xff]
    %v225 = vld [vmem:[%s1 + $0x490] sm:$0xff]
    %v226 = vld [vmem:[%s1 + $0x498] sm:$0xff]
    %v227 = vld [vmem:[%s1 + $0x4a0] sm:$0xff]
    %v228 = vld [vmem:[%s1 + $0x4a8] sm:$0xff]
    %v229 = vld [vmem:[%s1 + $0x4b0] sm:$0xff]
    %v230 = vld [vmem:[%s1 + $0x4b8] sm:$0xff]
    %v231 = vld [vmem:[%s1 + $0x4c0] sm:$0xff]
    %v232 = vld [vmem:[%s1 + $0x4c8] sm:$0xff]
    %v233 = vld [vmem:[%s1 + $0x4d0] sm:$0xff]
    %v234 = vld [vmem:[%s1 + $0x4d8] sm:$0xff]
    %v235 = vld [vmem:[%s1 + $0x4e0] sm:$0xff]
    %v236 = vld [vmem:[%s1 + $0x4e8] sm:$0xff]
    %v237 = vld [vmem:[%s1 + $0x4f0] sm:$0xff]
    %v238 = vld [vmem:[%s1 + $0x4f8] sm:$0xff]
    %v239 = vld [vmem:[%s1 + $0x500] sm:$0xff]
    %v240 = vld [vmem:[%s1 + $0x508] sm:$0xff]
    %v241 = vld [vmem:[%s1 + $0x510] sm:$0xff]
    %v242 = vld [vmem:[%s1 + $0x518] sm:$0xff]
    %v243 = vld [vmem:[%s1 + $0x520] sm:$0xff]
    %v244 = vld [vmem:[%s1 + $0x528] sm:$0xff]
    %v245 = vld [vmem:[%s1 + $0x530] sm:$0xff]
    %v246 = vld [vmem:[%s1 + $0x538] sm:$0xff]
    %v247 = vld [vmem:[%s1 + $0x540] sm:$0xff]
    %v248 = vld [vmem:[%s1 + $0x548] sm:$0xff]
    %v249 = vld [vmem:[%s1 + $0x550] sm:$0xff]
    %v250 = vld [vmem:[%s1 + $0x558] sm:$0xff]
    %v251 = vld [vmem:[%s1 + $0x560] sm:$0xff]
    %v252 = vld [vmem:[%s1 + $0x568] sm:$0xff]
    %v253 = vld [vmem:[%s1 + $0x570] sm:$0xff]
    %v254 = vld [vmem:[%s1 + $0x578] sm:$0xff]
    %v255 = vld [vmem:[%s1 + $0x580] sm:$0xff]
    %v256 = vld [vmem:[%s1 + $0x588] sm:$0xff]
    %v257 = vld [vmem:[%s1 + $0x590] sm:$0xff]
    %v258 = vld [vmem:[%s1 + $0x598] sm:$0xff]
    %v259 = vld [vmem:[%s1 + $0x5a0] sm:$0xff]
    %v260 = vld [vmem:[%s1 + $0x5a8] sm:$0xff]
    %v261 = vld [vmem:[%s1 + $0x5b0] sm:$0xff]
    %v262 = vld [vmem:[%s1 + $0x5b8] sm:$0xff]
    %v263 = vld [vmem:[%s1 + $0x5c0] sm:$0xff]
    %v264 = vld [vmem:[%s1 + $0x5c8] sm:$0xff]
    %v265 = vld [vmem:[%s1 + $0x5d0] sm:$0xff]
    %v266 = vld [vmem:[%s1 + $0x5d8] sm:$0xff]
    %v267 = vld [vmem:[%s1 + $0x5e0] sm:$0xff]
    %v268 = vld [vmem:[%s1 + $0x5e8] sm:$0xff]
    %v269 = vld [vmem:[%s1 + $0x5f0] sm:$0xff]
    %v270 = vld [vmem:[%s1 + $0x5f8] sm:$0xff]
    %v271 = vld [vmem:[%s1 + $0x600] sm:$0xff]
    %v272 = vld [vmem:[%s1 + $0x608] sm:$0xff]
    %v273 = vld [vmem:[%s1 + $0x610] sm:$0xff]
    %v274 = vld [vmem:[%s1 + $0x618] sm:$0xff]
    %v275 = vld [vmem:[%s1 + $0x620] sm:$0xff]
    %v276 = vld [vmem:[%s1 + $0x628] sm:$0xff]
    %v277 = vld [vmem:[%s1 + $0x630] sm:$0xff]
    %v278 = vld [vmem:[%s1 + $0x638] sm:$0xff]
    %v279 = vld [vmem:[%s1 + $0x640] sm:$0xff]
    %v280 = vld [vmem:[%s1 + $0x648] sm:$0xff]
    %v281 = vld [vmem:[%s1 + $0x650] sm:$0xff]
    %v282 = vld [vmem:[%s1 + $0x658] sm:$0xff]
    %v283 = vld [vmem:[%s1 + $0x660] sm:$0xff]
    %v284 = vld [vmem:[%s1 + $0x668] sm:$0xff]
    %v285 = vld [vmem:[%s1 + $0x670] sm:$0xff]
    %v286 = vld [vmem:[%s1 + $0x678] sm:$0xff]
    %v287 = vld [vmem:[%s1 + $0x680] sm:$0xff]
    %v288 = vld [vmem:[%s1 + $0x688] sm:$0xff]
    %v289 = vld [vmem:[%s1 + $0x690] sm:$0xff]
    %v290 = vld [vmem:[%s1 + $0x698] sm:$0xff]
    %v291 = vld [vmem:[%s1 + $0x6a0] sm:$0xff]
    %v292 = vld [vmem:[%s1 + $0x6a8] sm:$0xff]
    %v293 = vld [vmem:[%s1 + $0x6b0] sm:$0xff]
    %v294 = vld [vmem:[%s1 + $0x6b8] sm:$0xff]
    %v295 = vld [vmem:[%s1 + $0x6c0] sm:$0xff]
    %v296 = vld [vmem:[%s1 + $0x6c8] sm:$0xff]
    %v297 = vld [vmem:[%s1 + $0x6d0] sm:$0xff]
    %v298 = vld [vmem:[%s1 + $0x6d8] sm:$0xff]
    %v299 = vld [vmem:[%s1 + $0x6e0] sm:$0xff]
    %v300 = vld [vmem:[%s1 + $0x6e8] sm:$0xff]
    %v301 = vld [vmem:[%s1 + $0x6f0] sm:$0xff]
    %v302 = vld [vmem:[%s1 + $0x6f8] sm:$0xff]
    %v303 = vld [vmem:[%s1 + $0x700] sm:$0xff]
    %v304 = vld [vmem:[%s1 + $0x708] sm:$0xff]
    %v305 = vld [vmem:[%s1 + $0x710] sm:$0xff]
    %v306 = vld [vmem:[%s1 + $0x718] sm:$0xff]
    %v307 = vld [vmem:[%s1 + $0x720] sm:$0xff]
    %v308 = vld [vmem:[%s1 + $0x728] sm:$0xff]
    %v309 = vld [vmem:[%s1 + $0x730] sm:$0xff]
    %v310 = vld [vmem:[%s1 + $0x738] sm:$0xff]
    %v311 = vld [vmem:[%s1 + $0x740] sm:$0xff]
    %v312 = vld [vmem:[%s1 + $0x748] sm:$0xff]
    %v313 = vld [vmem:[%s1 + $0x750] sm:$0xff]
    %v314 = vld [vmem:[%s1 + $0x758] sm:$0xff]
    %v315 = vld [vmem:[%s1 + $0x760] sm:$0xff]
    %v316 = vld [vmem:[%s1 + $0x768] sm:$0xff]
    %v317 = vld [vmem:[%s1 + $0x770] sm:$0xff]
    %v318 = vld [vmem:[%s1 + $0x778] sm:$0xff]
    %v319 = vld [vmem:[%s1 + $0x780] sm:$0xff]
    %v320 = vld [vmem:[%s1 + $0x788] sm:$0xff]
    %v321 = vld [vmem:[%s1 + $0x790] sm:$0xff]
    %v322 = vld [vmem:[%s1 + $0x798] sm:$0xff]
    %v323 = vld [vmem:[%s1 + $0x7a0] sm:$0xff]
    %v324 = vld [vmem:[%s1 + $0x7a8] sm:$0xff]
    %v325 = vld [vmem:[%s1 + $0x7b0] sm:$0xff]
    %v326 = vld [vmem:[%s1 + $0x7b8] sm:$0xff]
    %v327 = vld [vmem:[%s1 + $0x7c0] sm:$0xff]
    %v328 = vld [vmem:[%s1 + $0x7c8] sm:$0xff]
    %v329 = vld [vmem:[%s1 + $0x7d0] sm:$0xff]
    %v330 = vld [vmem:[%s1 + $0x7d8] sm:$0xff]
    %v331 = vld [vmem:[%s1 + $0x7e0] sm:$0xff]
    %v332 = vld [vmem:[%s1 + $0x7e8] sm:$0xff]
    %v333 = vld [vmem:[%s1 + $0x7f0] sm:$0xff]
    %v334 = vld [vmem:[%s1 + $0x7f8] sm:$0xff]
    %v335 = vld [vmem:[%s1 + $0x800] sm:$0x3]
    %v336 = vld [vmem:[%s1 + $0x808] sm:$0x3]
    %v337 = vld [vmem:[%s1 + $0x810] sm:$0x3]
    %v338 = vld [vmem:[%s1 + $0x818] sm:$0x3]
    %v339 = vld [vmem:[%s1 + $0x820] sm:$0x3]
    %v340 = vld [vmem:[%s1 + $0x828] sm:$0x3]
    %v341 = vld [vmem:[%s1 + $0x830] sm:$0x3]
    %v342 = vld [vmem:[%s1 + $0x838] sm:$0x3]
    %v343 = vld [vmem:[%s1 + $0x840] sm:$0x3]
    %v344 = vld [vmem:[%s1 + $0x848] sm:$0x3]
    %v345 = vld [vmem:[%s1 + $0x850] sm:$0x3]
    %v346 = vld [vmem:[%s1 + $0x858] sm:$0x3]
    %v347 = vld [vmem:[%s1 + $0x860] sm:$0x3]
    %v348 = vld [vmem:[%s1 + $0x868] sm:$0x3]
    %v349 = vld [vmem:[%s1 + $0x870] sm:$0x3]
    %v350 = vld [vmem:[%s1 + $0x878] sm:$0x3]
    %v351 = vld [vmem:[%s1 + $0x880] sm:$0x3]
    %v352 = vld [vmem:[%s1 + $0x888] sm:$0x3]
    %v353 = vld [vmem:[%s1 + $0x890] sm:$0x3]
    %v354 = vld [vmem:[%s1 + $0x898] sm:$0x3]
    %v355 = vld [vmem:[%s1 + $0x8a0] sm:$0x3]
    %v356 = vld [vmem:[%s1 + $0x8a8] sm:$0x3]
    %v357 = vld [vmem:[%s1 + $0x8b0] sm:$0x3]
    %v358 = vld [vmem:[%s1 + $0x8b8] sm:$0x3]
    %v359 = vld [vmem:[%s1 + $0x8c0] sm:$0x3]
    %v360 = vld [vmem:[%s1 + $0x8c8] sm:$0x3]
    %v361 = vld [vmem:[%s1 + $0x8d0] sm:$0x3]
    %v362 = vld [vmem:[%s1 + $0x8d8] sm:$0x3]
    %v363 = vld [vmem:[%s1 + $0x8e0] sm:$0x3]
    %v364 = vld [vmem:[%s1 + $0x8e8] sm:$0x3]
    %v365 = vld [vmem:[%s1 + $0x8f0] sm:$0x3]
    %v366 = vld [vmem:[%s1 + $0x8f8] sm:$0x3]
    %v367 = vld [vmem:[%s1 + $0x900] sm:$0x3]
    %v368 = vld [vmem:[%s1 + $0x908] sm:$0x3]
    %v369 = vld [vmem:[%s1 + $0x910] sm:$0x3]
    %v370 = vld [vmem:[%s1 + $0x918] sm:$0x3]
    %v371 = vld [vmem:[%s1 + $0x920] sm:$0x3]
    %v372 = vld [vmem:[%s1 + $0x928] sm:$0x3]
    %v373 = vld [vmem:[%s1 + $0x930] sm:$0x3]
    %v374 = vld [vmem:[%s1 + $0x938] sm:$0x3]
    %v375 = vld [vmem:[%s1 + $0x940] sm:$0x3]
    %v376 = vld [vmem:[%s1 + $0x948] sm:$0x3]
    %v377 = vld [vmem:[%s1 + $0x950] sm:$0x3]
    %v378 = vld [vmem:[%s1 + $0x958] sm:$0x3]
    %v379 = vld [vmem:[%s1 + $0x960] sm:$0x3]
    %v380 = vld [vmem:[%s1 + $0x968] sm:$0x3]
    %v381 = vld [vmem:[%s1 + $0x970] sm:$0x3]
    %v382 = vld [vmem:[%s1 + $0x978] sm:$0x3]
    %v383 = vld [vmem:[%s1 + $0x980] sm:$0x3]
    %v384 = vld [vmem:[%s1 + $0x988] sm:$0x3]
    %v385 = vld [vmem:[%s1 + $0x990] sm:$0x3]
    %v386 = vld [vmem:[%s1 + $0x998] sm:$0x3]
    %v387 = vld [vmem:[%s1 + $0x9a0] sm:$0x3]
    %v388 = vld [vmem:[%s1 + $0x9a8] sm:$0x3]
    %v389 = vld [vmem:[%s1 + $0x9b0] sm:$0x3]
    %v390 = vld [vmem:[%s1 + $0x9b8] sm:$0x3]
    %v391 = vld [vmem:[%s1 + $0x9c0] sm:$0x3]
    %v392 = vld [vmem:[%s1 + $0x9c8] sm:$0x3]
    %v393 = vld [vmem:[%s1 + $0x9d0] sm:$0x3]
    %v394 = vld [vmem:[%s1 + $0x9d8] sm:$0x3]
    %v395 = vld [vmem:[%s1 + $0x9e0] sm:$0x3]
    %v396 = vld [vmem:[%s1 + $0x9e8] sm:$0x3]
    %v397 = vld [vmem:[%s1 + $0x9f0] sm:$0x3]
    %v398 = vld [vmem:[%s1 + $0x9f8] sm:$0x3]
    %v399 = vld [vmem:[%s1 + $0xa00] sm:$0x3]
    %v400 = vld [vmem:[%s1 + $0xa08] sm:$0x3]
    %v401 = vld [vmem:[%s1 + $0xa10] sm:$0x3]
    %v402 = vld [vmem:[%s1 + $0xa18] sm:$0x3]
    %v403 = vld [vmem:[%s1 + $0xa20] sm:$0x3]
    %v404 = vld [vmem:[%s1 + $0xa28] sm:$0x3]
    %v405 = vld [vmem:[%s1 + $0xa30] sm:$0x3]
    %v406 = vld [vmem:[%s1 + $0xa38] sm:$0x3]
    %v407 = vld [vmem:[%s1 + $0xa40] sm:$0x3]
    %v408 = vld [vmem:[%s1 + $0xa48] sm:$0x3]
    %v409 = vld [vmem:[%s1 + $0xa50] sm:$0x3]
    %v410 = vld [vmem:[%s1 + $0xa58] sm:$0x3]
    %v411 = vld [vmem:[%s1 + $0xa60] sm:$0x3]
    %v412 = vld [vmem:[%s1 + $0xa68] sm:$0x3]
    %v413 = vld [vmem:[%s1 + $0xa70] sm:$0x3]
    %v414 = vld [vmem:[%s1 + $0xa78] sm:$0x3]
    %v415 = vld [vmem:[%s1 + $0xa80] sm:$0x3]
    %v416 = vld [vmem:[%s1 + $0xa88] sm:$0x3]
    %v417 = vld [vmem:[%s1 + $0xa90] sm:$0x3]
    %v418 = vld [vmem:[%s1 + $0xa98] sm:$0x3]
    %v419 = vld [vmem:[%s1 + $0xaa0] sm:$0x3]
    %v420 = vld [vmem:[%s1 + $0xaa8] sm:$0x3]
    %v421 = vld [vmem:[%s1 + $0xab0] sm:$0x3]
    %v422 = vld [vmem:[%s1 + $0xab8] sm:$0x3]
    %v423 = vld [vmem:[%s1 + $0xac0] sm:$0x3]
    %v424 = vld [vmem:[%s1 + $0xac8] sm:$0x3]
    %v425 = vld [vmem:[%s1 + $0xad0] sm:$0x3]
    %v426 = vld [vmem:[%s1 + $0xad8] sm:$0x3]
    %v427 = vld [vmem:[%s1 + $0xae0] sm:$0x3]
    %v428 = vld [vmem:[%s1 + $0xae8] sm:$0x3]
    %v429 = vld [vmem:[%s1 + $0xaf0] sm:$0x3]
    %v430 = vld [vmem:[%s1 + $0xaf8] sm:$0x3]
    %v431 = vld [vmem:[%s1 + $0xb00] sm:$0x3]
    %v432 = vld [vmem:[%s1 + $0xb08] sm:$0x3]
    %v433 = vld [vmem:[%s1 + $0xb10] sm:$0x3]
    %v434 = vld [vmem:[%s1 + $0xb18] sm:$0x3]
    %v435 = vld [vmem:[%s1 + $0xb20] sm:$0x3]
    %v436 = vld [vmem:[%s1 + $0xb28] sm:$0x3]
    %v437 = vld [vmem:[%s1 + $0xb30] sm:$0x3]
    %v438 = vld [vmem:[%s1 + $0xb38] sm:$0x3]
    %v439 = vld [vmem:[%s1 + $0xb40] sm:$0x3]
    %v440 = vld [vmem:[%s1 + $0xb48] sm:$0x3]
    %v441 = vld [vmem:[%s1 + $0xb50] sm:$0x3]
    %v442 = vld [vmem:[%s1 + $0xb58] sm:$0x3]
    %v443 = vld [vmem:[%s1 + $0xb60] sm:$0x3]
    %v444 = vld [vmem:[%s1 + $0xb68] sm:$0x3]
    %v445 = vld [vmem:[%s1 + $0xb70] sm:$0x3]
    %v446 = vld [vmem:[%s1 + $0xb78] sm:$0x3]
    %v447 = vld [vmem:[%s1 + $0xb80] sm:$0x3]
    %v448 = vld [vmem:[%s1 + $0xb88] sm:$0x3]
    %v449 = vld [vmem:[%s1 + $0xb90] sm:$0x3]
    %v450 = vld [vmem:[%s1 + $0xb98] sm:$0x3]
    %v451 = vld [vmem:[%s1 + $0xba0] sm:$0x3]
    %v452 = vld [vmem:[%s1 + $0xba8] sm:$0x3]
    %v453 = vld [vmem:[%s1 + $0xbb0] sm:$0x3]
    %v454 = vld [vmem:[%s1 + $0xbb8] sm:$0x3]
    %v455 = vld [vmem:[%s1 + $0xbc0] sm:$0x3]
    %v456 = vld [vmem:[%s1 + $0xbc8] sm:$0x3]
    %v457 = vld [vmem:[%s1 + $0xbd0] sm:$0x3]
    %v458 = vld [vmem:[%s1 + $0xbd8] sm:$0x3]
    %v459 = vld [vmem:[%s1 + $0xbe0] sm:$0x3]
    %v460 = vld [vmem:[%s1 + $0xbe8] sm:$0x3]
    %v461 = vld [vmem:[%s1 + $0xbf0] sm:$0x3]
    %v462 = vld [vmem:[%s1 + $0xbf8] sm:$0x3]
    %v463 = vld [vmem:[%s1 + $0xc00] sm:$0x3]
    %v464 = vld [vmem:[%s1 + $0xc08] sm:$0x3]
    %v465 = vld [vmem:[%s1 + $0xc10] sm:$0x3]
    %v466 = vld [vmem:[%s1 + $0xc18] sm:$0x3]
    %v467 = vld [vmem:[%s1 + $0xc20] sm:$0x3]
    %v468 = vld [vmem:[%s1 + $0xc28] sm:$0x3]
    %v469 = vld [vmem:[%s1 + $0xc30] sm:$0x3]
    %v470 = vld [vmem:[%s1 + $0xc38] sm:$0x3]
    %v471 = vld [vmem:[%s1 + $0xc40] sm:$0x3]
    %v472 = vld [vmem:[%s1 + $0xc48] sm:$0x3]
    %v473 = vld [vmem:[%s1 + $0xc50] sm:$0x3]
    %v474 = vld [vmem:[%s1 + $0xc58] sm:$0x3]
    %v475 = vld [vmem:[%s1 + $0xc60] sm:$0x3]
    %v476 = vld [vmem:[%s1 + $0xc68] sm:$0x3]
    %v477 = vld [vmem:[%s1 + $0xc70] sm:$0x3]
    %v478 = vld [vmem:[%s1 + $0xc78] sm:$0x3]
    %v479 = vld [vmem:[%s1 + $0xc80] sm:$0x3]
    %v480 = vld [vmem:[%s1 + $0xc88] sm:$0x3]
    %v481 = vld [vmem:[%s1 + $0xc90] sm:$0x3]
    %v482 = vld [vmem:[%s1 + $0xc98] sm:$0x3]
    %v483 = vld [vmem:[%s1 + $0xca0] sm:$0x3]
    %v484 = vld [vmem:[%s1 + $0xca8] sm:$0x3]
    %v485 = vld [vmem:[%s1 + $0xcb0] sm:$0x3]
    %v486 = vld [vmem:[%s1 + $0xcb8] sm:$0x3]
    %v487 = vld [vmem:[%s1 + $0xcc0] sm:$0x3]
    %v488 = vld [vmem:[%s1 + $0xcc8] sm:$0x3]
    %v489 = vld [vmem:[%s1 + $0xcd0] sm:$0x3]
    %v490 = vld [vmem:[%s1 + $0xcd8] sm:$0x3]
    %v491 = vld [vmem:[%s1 + $0xce0] sm:$0x3]
    %v492 = vld [vmem:[%s1 + $0xce8] sm:$0x3]
    %v493 = vld [vmem:[%s1 + $0xcf0] sm:$0x3]
    %v494 = vld [vmem:[%s1 + $0xcf8] sm:$0x3]
    %v495 = vld [vmem:[%s1 + $0xd00] sm:$0x3]
    %v496 = vld [vmem:[%s1 + $0xd08] sm:$0x3]
    %v497 = vld [vmem:[%s1 + $0xd10] sm:$0x3]
    %v498 = vld [vmem:[%s1 + $0xd18] sm:$0x3]
    %v499 = vld [vmem:[%s1 + $0xd20] sm:$0x3]
    %v500 = vld [vmem:[%s1 + $0xd28] sm:$0x3]
    %v501 = vld [vmem:[%s1 + $0xd30] sm:$0x3]
    %v502 = vld [vmem:[%s1 + $0xd38] sm:$0x3]
    %v503 = vld [vmem:[%s1 + $0xd40] sm:$0x3]
    %v504 = vld [vmem:[%s1 + $0xd48] sm:$0x3]
    %v505 = vld [vmem:[%s1 + $0xd50] sm:$0x3]
    %v506 = vld [vmem:[%s1 + $0xd58] sm:$0x3]
    %v507 = vld [vmem:[%s1 + $0xd60] sm:$0x3]
    %v508 = vld [vmem:[%s1 + $0xd68] sm:$0x3]
    %v509 = vld [vmem:[%s1 + $0xd70] sm:$0x3]
    %v510 = vld [vmem:[%s1 + $0xd78] sm:$0x3]
    %v511 = vld [vmem:[%s1 + $0xd80] sm:$0x3]
    %v512 = vld [vmem:[%s1 + $0xd88] sm:$0x3]
    %v513 = vld [vmem:[%s1 + $0xd90] sm:$0x3]
    %v514 = vld [vmem:[%s1 + $0xd98] sm:$0x3]
    %v515 = vld [vmem:[%s1 + $0xda0] sm:$0x3]
    %v516 = vld [vmem:[%s1 + $0xda8] sm:$0x3]
    %v517 = vld [vmem:[%s1 + $0xdb0] sm:$0x3]
    %v518 = vld [vmem:[%s1 + $0xdb8] sm:$0x3]
    %v519 = vld [vmem:[%s1 + $0xdc0] sm:$0x3]
    %v520 = vld [vmem:[%s1 + $0xdc8] sm:$0x3]
    %v521 = vld [vmem:[%s1 + $0xdd0] sm:$0x3]
    %v522 = vld [vmem:[%s1 + $0xdd8] sm:$0x3]
    %v523 = vld [vmem:[%s1 + $0xde0] sm:$0x3]
    %v524 = vld [vmem:[%s1 + $0xde8] sm:$0x3]
    %v525 = vld [vmem:[%s1 + $0xdf0] sm:$0x3]
    %v526 = vld [vmem:[%s1 + $0xdf8] sm:$0x3]
    %v527 = vld [vmem:[%s1 + $0xe00] sm:$0x3]
    %v528 = vld [vmem:[%s1 + $0xe08] sm:$0x3]
    %v529 = vld [vmem:[%s1 + $0xe10] sm:$0x3]
    %v530 = vld [vmem:[%s1 + $0xe18] sm:$0x3]
    %v531 = vld [vmem:[%s1 + $0xe20] sm:$0x3]
    %v532 = vld [vmem:[%s1 + $0xe28] sm:$0x3]
    %v533 = vld [vmem:[%s1 + $0xe30] sm:$0x3]
    %v534 = vld [vmem:[%s1 + $0xe38] sm:$0x3]
    %v535 = vld [vmem:[%s1 + $0xe40] sm:$0x3]
    %v536 = vld [vmem:[%s1 + $0xe48] sm:$0x3]
    %v537 = vld [vmem:[%s1 + $0xe50] sm:$0x3]
    %v538 = vld [vmem:[%s1 + $0xe58] sm:$0x3]
    %v539 = vld [vmem:[%s1 + $0xe60] sm:$0x3]
    %v540 = vld [vmem:[%s1 + $0xe68] sm:$0x3]
    %v541 = vld [vmem:[%s1 + $0xe70] sm:$0x3]
    %v542 = vld [vmem:[%s1 + $0xe78] sm:$0x3]
    %v543 = vld [vmem:[%s1 + $0xe80] sm:$0x3]
    %v544 = vld [vmem:[%s1 + $0xe88] sm:$0x3]
    %v545 = vld [vmem:[%s1 + $0xe90] sm:$0x3]
    %v546 = vld [vmem:[%s1 + $0xe98] sm:$0x3]
    %v547 = vld [vmem:[%s1 + $0xea0] sm:$0x3]
    %v548 = vld [vmem:[%s1 + $0xea8] sm:$0x3]
    %v549 = vld [vmem:[%s1 + $0xeb0] sm:$0x3]
    %v550 = vld [vmem:[%s1 + $0xeb8] sm:$0x3]
    %v551 = vld [vmem:[%s1 + $0xec0] sm:$0x3]
    %v552 = vld [vmem:[%s1 + $0xec8] sm:$0x3]
    %v553 = vld [vmem:[%s1 + $0xed0] sm:$0x3]
    %v554 = vld [vmem:[%s1 + $0xed8] sm:$0x3]
    %v555 = vld [vmem:[%s1 + $0xee0] sm:$0x3]
    %v556 = vld [vmem:[%s1 + $0xee8] sm:$0x3]
    %v557 = vld [vmem:[%s1 + $0xef0] sm:$0x3]
    %v558 = vld [vmem:[%s1 + $0xef8] sm:$0x3]
    %v559 = vld [vmem:[%s1 + $0xf00] sm:$0x3]
    %v560 = vld [vmem:[%s1 + $0xf08] sm:$0x3]
    %v561 = vld [vmem:[%s1 + $0xf10] sm:$0x3]
    %v562 = vld [vmem:[%s1 + $0xf18] sm:$0x3]
    %v563 = vld [vmem:[%s1 + $0xf20] sm:$0x3]
    %v564 = vld [vmem:[%s1 + $0xf28] sm:$0x3]
    %v565 = vld [vmem:[%s1 + $0xf30] sm:$0x3]
    %v566 = vld [vmem:[%s1 + $0xf38] sm:$0x3]
    %v567 = vld [vmem:[%s1 + $0xf40] sm:$0x3]
    %v568 = vld [vmem:[%s1 + $0xf48] sm:$0x3]
    %v569 = vld [vmem:[%s1 + $0xf50] sm:$0x3]
    %v570 = vld [vmem:[%s1 + $0xf58] sm:$0x3]
    %v571 = vld [vmem:[%s1 + $0xf60] sm:$0x3]
    %v572 = vld [vmem:[%s1 + $0xf68] sm:$0x3]
    %v573 = vld [vmem:[%s1 + $0xf70] sm:$0x3]
    %v574 = vld [vmem:[%s1 + $0xf78] sm:$0x3]
    %v575 = vld [vmem:[%s1 + $0xf80] sm:$0x3]
    %v576 = vld [vmem:[%s1 + $0xf88] sm:$0x3]
    %v577 = vld [vmem:[%s1 + $0xf90] sm:$0x3]
    %v578 = vld [vmem:[%s1 + $0xf98] sm:$0x3]
    %v579 = vld [vmem:[%s1 + $0xfa0] sm:$0x3]
    %v580 = vld [vmem:[%s1 + $0xfa8] sm:$0x3]
    %v581 = vld [vmem:[%s1 + $0xfb0] sm:$0x3]
    %v582 = vld [vmem:[%s1 + $0xfb8] sm:$0x3]
    %v583 = vld [vmem:[%s1 + $0xfc0] sm:$0x3]
    %v584 = vld [vmem:[%s1 + $0xfc8] sm:$0x3]
    %v585 = vld [vmem:[%s1 + $0xfd0] sm:$0x3]
    %v586 = vld [vmem:[%s1 + $0xfd8] sm:$0x3]
    %v587 = vld [vmem:[%s1 + $0xfe0] sm:$0x3]
    %v588 = vld [vmem:[%s1 + $0xfe8] sm:$0x3]
    %v589 = vld [vmem:[%s1 + $0xff0] sm:$0x3]
    %v590 = vld [vmem:[%s1 + $0xff8] sm:$0x3]
    %v591 = vld [vmem:[%s2] sm:$0x1]
    %v593 = vperm.slane %v591, 0
    %659 = vst [vmem:[#allocation1] ss:$4 sm:$0xff] %v15
    %s660 = scalar_lea.vmem [#allocation1], 32
    %661 = vst [vmem:[%s660] ss:$4 sm:$0xff] %v16
    %v662 = vld.sshfl [vmem:[#allocation1] sm:$0xff pattern:$0x73625140]
    %v663 = vld.sshfl [vmem:[#allocation1 + $0x8] sm:$0xff pattern:$0x73625140]
    %v664 = vld.sshfl [vmem:[#allocation1 + $0x10] sm:$0xff pattern:$0x73625140]
    %v665 = vld.sshfl [vmem:[#allocation1 + $0x18] sm:$0xff pattern:$0x73625140]
    %v666 = vld.sshfl [vmem:[#allocation1 + $0x20] sm:$0xff pattern:$0x73625140]
    %v667 = vld.sshfl [vmem:[#allocation1 + $0x28] sm:$0xff pattern:$0x73625140]
    %v668 = vld.sshfl [vmem:[#allocation1 + $0x30] sm:$0xff pattern:$0x73625140]
    %v669 = vld.sshfl [vmem:[#allocation1 + $0x38] sm:$0xff pattern:$0x73625140]
    %670 = vst [vmem:[#allocation1] ss:$4 sm:$0xff] %v17
    %671 = vst [vmem:[%s660] ss:$4 sm:$0xff] %v18
    %v672 = vld.sshfl [vmem:[#allocation1] sm:$0xff pattern:$0x73625140]
    %v673 = vld.sshfl [vmem:[#allocation1 + $0x8] sm:$0xff pattern:$0x73625140]
    %v674 = vld.sshfl [vmem:[#allocation1 + $0x10] sm:$0xff pattern:$0x73625140]
    %v675 = vld.sshfl [vmem:[#allocation1 + $0x18] sm:$0xff pattern:$0x73625140]
    %v676 = vld.sshfl [vmem:[#allocation1 + $0x20] sm:$0xff pattern:$0x73625140]
    %v677 = vld.sshfl [vmem:[#allocation1 + $0x28] sm:$0xff pattern:$0x73625140]
    %v678 = vld.sshfl [vmem:[#allocation1 + $0x30] sm:$0xff pattern:$0x73625140]
    %v679 = vld.sshfl [vmem:[#allocation1 + $0x38] sm:$0xff pattern:$0x73625140]
    %680 = vst [vmem:[#allocation1] ss:$4 sm:$0xff] %v19
    %681 = vst [vmem:[%s660] ss:$4 sm:$0xff] %v20
    %v682 = vld.sshfl [vmem:[#allocation1] sm:$0xff pattern:$0x73625140]
    %v683 = vld.sshfl [vmem:[#allocation1 + $0x8] sm:$0xff pattern:$0x73625140]
    %v684 = vld.sshfl [vmem:[#allocation1 + $0x10] sm:$0xff pattern:$0x73625140]
    %v685 = vld.sshfl [vmem:[#allocation1 + $0x18] sm:$0xff pattern:$0x73625140]
    %v686 = vld.sshfl [vmem:[#allocation1 + $0x20] sm:$0xff pattern:$0x73625140]
    %v687 = vld.sshfl [vmem:[#allocation1 + $0x28] sm:$0xff pattern:$0x73625140]
    %v688 = vld.sshfl [vmem:[#allocation1 + $0x30] sm:$0xff pattern:$0x73625140]
    %v689 = vld.sshfl [vmem:[#allocation1 + $0x38] sm:$0xff pattern:$0x73625140]
    %690 = vst [vmem:[#allocation1] ss:$4 sm:$0xff] %v21
    %691 = vst [vmem:[%s660] ss:$4 sm:$0xff] %v22
    %v692 = vld.sshfl [vmem:[#allocation1] sm:$0xff pattern:$0x73625140]
    %v693 = vld.sshfl [vmem:[#allocation1 + $0x8] sm:$0xff pattern:$0x73625140]
    %v694 = vld.sshfl [vmem:[#allocation1 + $0x10] sm:$0xff pattern:$0x73625140]
    %v695 = vld.sshfl [vmem:[#allocation1 + $0x18] sm:$0xff pattern:$0x73625140]
    %v696 = vld.sshfl [vmem:[#allocation1 + $0x20] sm:$0xff pattern:$0x73625140]
    %v697 = vld.sshfl [vmem:[#allocation1 + $0x28] sm:$0xff pattern:$0x73625140]
    %v698 = vld.sshfl [vmem:[#allocation1 + $0x30] sm:$0xff pattern:$0x73625140]
    %v699 = vld.sshfl [vmem:[#allocation1 + $0x38] sm:$0xff pattern:$0x73625140]
    %700 = vst [vmem:[#allocation1] ss:$4 sm:$0xff] %v23
    %701 = vst [vmem:[%s660] ss:$4 sm:$0xff] %v24
    %v702 = vld.sshfl [vmem:[#allocation1] sm:$0xff pattern:$0x73625140]
    %v703 = vld.sshfl [vmem:[#allocation1 + $0x8] sm:$0xff pattern:$0x73625140]
    %v704 = vld.sshfl [vmem:[#allocation1 + $0x10] sm:$0xff pattern:$0x73625140]
    %v705 = vld.sshfl [vmem:[#allocation1 + $0x18] sm:$0xff pattern:$0x73625140]
    %v706 = vld.sshfl [vmem:[#allocation1 + $0x20] sm:$0xff pattern:$0x73625140]
    %v707 = vld.sshfl [vmem:[#allocation1 + $0x28] sm:$0xff pattern:$0x73625140]
    %v708 = vld.sshfl [vmem:[#allocation1 + $0x30] sm:$0xff pattern:$0x73625140]
    %v709 = vld.sshfl [vmem:[#allocation1 + $0x38] sm:$0xff pattern:$0x73625140]
    %710 = vst [vmem:[#allocation1] ss:$4 sm:$0xff] %v25
    %711 = vst [vmem:[%s660] ss:$4 sm:$0xff] %v26
    %v712 = vld.sshfl [vmem:[#allocation1] sm:$0xff pattern:$0x73625140]
    %v713 = vld.sshfl [vmem:[#allocation1 + $0x8] sm:$0xff pattern:$0x73625140]
    %v714 = vld.sshfl [vmem:[#allocation1 + $0x10] sm:$0xff pattern:$0x73625140]
    %v715 = vld.sshfl [vmem:[#allocation1 + $0x18] sm:$0xff pattern:$0x73625140]
    %v716 = vld.sshfl [vmem:[#allocation1 + $0x20] sm:$0xff pattern:$0x73625140]
    %v717 = vld.sshfl [vmem:[#allocation1 + $0x28] sm:$0xff pattern:$0x73625140]
    %v718 = vld.sshfl [vmem:[#allocation1 + $0x30] sm:$0xff pattern:$0x73625140]
    %v719 = vld.sshfl [vmem:[#allocation1 + $0x38] sm:$0xff pattern:$0x73625140]
    %720 = vst [vmem:[#allocation1] ss:$4 sm:$0xff] %v27
    %721 = vst [vmem:[%s660] ss:$4 sm:$0xff] %v28
    %v722 = vld.sshfl [vmem:[#allocation1] sm:$0xff pattern:$0x73625140]
    %v723 = vld.sshfl [vmem:[#allocation1 + $0x8] sm:$0xff pattern:$0x73625140]
    %v724 = vld.sshfl [vmem:[#allocation1 + $0x10] sm:$0xff pattern:$0x73625140]
    %v725 = vld.sshfl [vmem:[#allocation1 + $0x18] sm:$0xff pattern:$0x73625140]
    %v726 = vld.sshfl [vmem:[#allocation1 + $0x20] sm:$0xff pattern:$0x73625140]
    %v727 = vld.sshfl [vmem:[#allocation1 + $0x28] sm:$0xff pattern:$0x73625140]
    %v728 = vld.sshfl [vmem:[#allocation1 + $0x30] sm:$0xff pattern:$0x73625140]
    %v729 = vld.sshfl [vmem:[#allocation1 + $0x38] sm:$0xff pattern:$0x73625140]
    %730 = vst [vmem:[#allocation1] ss:$4 sm:$0xff] %v29
    %731 = vst [vmem:[%s660] ss:$4 sm:$0xff] %v30
    %v732 = vld.sshfl [vmem:[#allocation1] sm:$0xff pattern:$0x73625140]
    %v733 = vld.sshfl [vmem:[#allocation1 + $0x8] sm:$0xff pattern:$0x73625140]
    %v734 = vld.sshfl [vmem:[#allocation1 + $0x10] sm:$0xff pattern:$0x73625140]
    %v735 = vld.sshfl [vmem:[#allocation1 + $0x18] sm:$0xff pattern:$0x73625140]
    %v736 = vld.sshfl [vmem:[#allocation1 + $0x20] sm:$0xff pattern:$0x73625140]
    %v737 = vld.sshfl [vmem:[#allocation1 + $0x28] sm:$0xff pattern:$0x73625140]
    %v738 = vld.sshfl [vmem:[#allocation1 + $0x30] sm:$0xff pattern:$0x73625140]
    %v739 = vld.sshfl [vmem:[#allocation1 + $0x38] sm:$0xff pattern:$0x73625140]
    %740 = vst [vmem:[#allocation1] ss:$4 sm:$0xff] %v31
    %741 = vst [vmem:[%s660] ss:$4 sm:$0xff] %v32
    %v742 = vld.sshfl [vmem:[#allocation1] sm:$0xff pattern:$0x73625140]
    %v743 = vld.sshfl [vmem:[#allocation1 + $0x8] sm:$0xff pattern:$0x73625140]
    %v744 = vld.sshfl [vmem:[#allocation1 + $0x10] sm:$0xff pattern:$0x73625140]
    %v745 = vld.sshfl [vmem:[#allocation1 + $0x18] sm:$0xff pattern:$0x73625140]
    %v746 = vld.sshfl [vmem:[#allocation1 + $0x20] sm:$0xff pattern:$0x73625140]
    %v747 = vld.sshfl [vmem:[#allocation1 + $0x28] sm:$0xff pattern:$0x73625140]
    %v748 = vld.sshfl [vmem:[#allocation1 + $0x30] sm:$0xff pattern:$0x73625140]
    %v749 = vld.sshfl [vmem:[#allocation1 + $0x38] sm:$0xff pattern:$0x73625140]
    %750 = vst [vmem:[#allocation1] ss:$4 sm:$0xff] %v33
    %751 = vst [vmem:[%s660] ss:$4 sm:$0xff] %v34
    %v752 = vld.sshfl [vmem:[#allocation1] sm:$0xff pattern:$0x73625140]
    %v753 = vld.sshfl [vmem:[#allocation1 + $0x8] sm:$0xff pattern:$0x73625140]
    %v754 = vld.sshfl [vmem:[#allocation1 + $0x10] sm:$0xff pattern:$0x73625140]
    %v755 = vld.sshfl [vmem:[#allocation1 + $0x18] sm:$0xff pattern:$0x73625140]
    %v756 = vld.sshfl [vmem:[#allocation1 + $0x20] sm:$0xff pattern:$0x73625140]
    %v757 = vld.sshfl [vmem:[#allocation1 + $0x28] sm:$0xff pattern:$0x73625140]
    %v758 = vld.sshfl [vmem:[#allocation1 + $0x30] sm:$0xff pattern:$0x73625140]
    %v759 = vld.sshfl [vmem:[#allocation1 + $0x38] sm:$0xff pattern:$0x73625140]
    %760 = vst [vmem:[#allocation1] ss:$4 sm:$0xff] %v35
    %761 = vst [vmem:[%s660] ss:$4 sm:$0xff] %v36
    %v762 = vld.sshfl [vmem:[#allocation1] sm:$0xff pattern:$0x73625140]
    %v763 = vld.sshfl [vmem:[#allocation1 + $0x8] sm:$0xff pattern:$0x73625140]
    %v764 = vld.sshfl [vmem:[#allocation1 + $0x10] sm:$0xff pattern:$0x73625140]
    %v765 = vld.sshfl [vmem:[#allocation1 + $0x18] sm:$0xff pattern:$0x73625140]
    %v766 = vld.sshfl [vmem:[#allocation1 + $0x20] sm:$0xff pattern:$0x73625140]
    %v767 = vld.sshfl [vmem:[#allocation1 + $0x28] sm:$0xff pattern:$0x73625140]
    %v768 = vld.sshfl [vmem:[#allocation1 + $0x30] sm:$0xff pattern:$0x73625140]
    %v769 = vld.sshfl [vmem:[#allocation1 + $0x38] sm:$0xff pattern:$0x73625140]
    %770 = vst [vmem:[#allocation1] ss:$4 sm:$0xff] %v37
    %771 = vst [vmem:[%s660] ss:$4 sm:$0xff] %v38
    %v772 = vld.sshfl [vmem:[#allocation1] sm:$0xff pattern:$0x73625140]
    %v773 = vld.sshfl [vmem:[#allocation1 + $0x8] sm:$0xff pattern:$0x73625140]
    %v774 = vld.sshfl [vmem:[#allocation1 + $0x10] sm:$0xff pattern:$0x73625140]
    %v775 = vld.sshfl [vmem:[#allocation1 + $0x18] sm:$0xff pattern:$0x73625140]
    %v776 = vld.sshfl [vmem:[#allocation1 + $0x20] sm:$0xff pattern:$0x73625140]
    %v777 = vld.sshfl [vmem:[#allocation1 + $0x28] sm:$0xff pattern:$0x73625140]
    %v778 = vld.sshfl [vmem:[#allocation1 + $0x30] sm:$0xff pattern:$0x73625140]
    %v779 = vld.sshfl [vmem:[#allocation1 + $0x38] sm:$0xff pattern:$0x73625140]
    %780 = vst [vmem:[#allocation1] ss:$4 sm:$0xff] %v39
    %781 = vst [vmem:[%s660] ss:$4 sm:$0xff] %v40
    %v782 = vld.sshfl [vmem:[#allocation1] sm:$0xff pattern:$0x73625140]
    %v783 = vld.sshfl [vmem:[#allocation1 + $0x8] sm:$0xff pattern:$0x73625140]
    %v784 = vld.sshfl [vmem:[#allocation1 + $0x10] sm:$0xff pattern:$0x73625140]
    %v785 = vld.sshfl [vmem:[#allocation1 + $0x18] sm:$0xff pattern:$0x73625140]
    %v786 = vld.sshfl [vmem:[#allocation1 + $0x20] sm:$0xff pattern:$0x73625140]
    %v787 = vld.sshfl [vmem:[#allocation1 + $0x28] sm:$0xff pattern:$0x73625140]
    %v788 = vld.sshfl [vmem:[#allocation1 + $0x30] sm:$0xff pattern:$0x73625140]
    %v789 = vld.sshfl [vmem:[#allocation1 + $0x38] sm:$0xff pattern:$0x73625140]
    %790 = vst [vmem:[#allocation1] ss:$4 sm:$0xff] %v41
    %791 = vst [vmem:[%s660] ss:$4 sm:$0xff] %v42
    %v792 = vld.sshfl [vmem:[#allocation1] sm:$0xff pattern:$0x73625140]
    %v793 = vld.sshfl [vmem:[#allocation1 + $0x8] sm:$0xff pattern:$0x73625140]
    %v794 = vld.sshfl [vmem:[#allocation1 + $0x10] sm:$0xff pattern:$0x73625140]
    %v795 = vld.sshfl [vmem:[#allocation1 + $0x18] sm:$0xff pattern:$0x73625140]
    %v796 = vld.sshfl [vmem:[#allocation1 + $0x20] sm:$0xff pattern:$0x73625140]
    %v797 = vld.sshfl [vmem:[#allocation1 + $0x28] sm:$0xff pattern:$0x73625140]
    %v798 = vld.sshfl [vmem:[#allocation1 + $0x30] sm:$0xff pattern:$0x73625140]
    %v799 = vld.sshfl [vmem:[#allocation1 + $0x38] sm:$0xff pattern:$0x73625140]
    %800 = vst [vmem:[#allocation1] ss:$4 sm:$0xff] %v43
    %801 = vst [vmem:[%s660] ss:$4 sm:$0xff] %v44
    %v802 = vld.sshfl [vmem:[#allocation1] sm:$0xff pattern:$0x73625140]
    %v803 = vld.sshfl [vmem:[#allocation1 + $0x8] sm:$0xff pattern:$0x73625140]
    %v804 = vld.sshfl [vmem:[#allocation1 + $0x10] sm:$0xff pattern:$0x73625140]
    %v805 = vld.sshfl [vmem:[#allocation1 + $0x18] sm:$0xff pattern:$0x73625140]
    %v806 = vld.sshfl [vmem:[#allocation1 + $0x20] sm:$0xff pattern:$0x73625140]
    %v807 = vld.sshfl [vmem:[#allocation1 + $0x28] sm:$0xff pattern:$0x73625140]
    %v808 = vld.sshfl [vmem:[#allocation1 + $0x30] sm:$0xff pattern:$0x73625140]
    %v809 = vld.sshfl [vmem:[#allocation1 + $0x38] sm:$0xff pattern:$0x73625140]
    %810 = vst [vmem:[#allocation1] ss:$4 sm:$0xff] %v45
    %811 = vst [vmem:[%s660] ss:$4 sm:$0xff] %v46
    %v812 = vld.sshfl [vmem:[#allocation1] sm:$0xff pattern:$0x73625140]
    %v813 = vld.sshfl [vmem:[#allocation1 + $0x8] sm:$0xff pattern:$0x73625140]
    %v814 = vld.sshfl [vmem:[#allocation1 + $0x10] sm:$0xff pattern:$0x73625140]
    %v815 = vld.sshfl [vmem:[#allocation1 + $0x18] sm:$0xff pattern:$0x73625140]
    %v816 = vld.sshfl [vmem:[#allocation1 + $0x20] sm:$0xff pattern:$0x73625140]
    %v817 = vld.sshfl [vmem:[#allocation1 + $0x28] sm:$0xff pattern:$0x73625140]
    %v818 = vld.sshfl [vmem:[#allocation1 + $0x30] sm:$0xff pattern:$0x73625140]
    %v819 = vld.sshfl [vmem:[#allocation1 + $0x38] sm:$0xff pattern:$0x73625140]
    %820 = vst [vmem:[#allocation1] ss:$4 sm:$0xff] %v47
    %821 = vst [vmem:[%s660] ss:$4 sm:$0xff] %v48
    %v822 = vld.sshfl [vmem:[#allocation1] sm:$0xff pattern:$0x73625140]
    %v823 = vld.sshfl [vmem:[#allocation1 + $0x8] sm:$0xff pattern:$0x73625140]
    %v824 = vld.sshfl [vmem:[#allocation1 + $0x10] sm:$0xff pattern:$0x73625140]
    %v825 = vld.sshfl [vmem:[#allocation1 + $0x18] sm:$0xff pattern:$0x73625140]
    %v826 = vld.sshfl [vmem:[#allocation1 + $0x20] sm:$0xff pattern:$0x73625140]
    %v827 = vld.sshfl [vmem:[#allocation1 + $0x28] sm:$0xff pattern:$0x73625140]
    %v828 = vld.sshfl [vmem:[#allocation1 + $0x30] sm:$0xff pattern:$0x73625140]
    %v829 = vld.sshfl [vmem:[#allocation1 + $0x38] sm:$0xff pattern:$0x73625140]
    %830 = vst [vmem:[#allocation1] ss:$4 sm:$0xff] %v49
    %831 = vst [vmem:[%s660] ss:$4 sm:$0xff] %v50
    %v832 = vld.sshfl [vmem:[#allocation1] sm:$0xff pattern:$0x73625140]
    %v833 = vld.sshfl [vmem:[#allocation1 + $0x8] sm:$0xff pattern:$0x73625140]
    %v834 = vld.sshfl [vmem:[#allocation1 + $0x10] sm:$0xff pattern:$0x73625140]
    %v835 = vld.sshfl [vmem:[#allocation1 + $0x18] sm:$0xff pattern:$0x73625140]
    %v836 = vld.sshfl [vmem:[#allocation1 + $0x20] sm:$0xff pattern:$0x73625140]
    %v837 = vld.sshfl [vmem:[#allocation1 + $0x28] sm:$0xff pattern:$0x73625140]
    %v838 = vld.sshfl [vmem:[#allocation1 + $0x30] sm:$0xff pattern:$0x73625140]
    %v839 = vld.sshfl [vmem:[#allocation1 + $0x38] sm:$0xff pattern:$0x73625140]
    %840 = vst [vmem:[#allocation1] ss:$4 sm:$0xff] %v51
    %841 = vst [vmem:[%s660] ss:$4 sm:$0xff] %v52
    %v842 = vld.sshfl [vmem:[#allocation1] sm:$0xff pattern:$0x73625140]
    %v843 = vld.sshfl [vmem:[#allocation1 + $0x8] sm:$0xff pattern:$0x73625140]
    %v844 = vld.sshfl [vmem:[#allocation1 + $0x10] sm:$0xff pattern:$0x73625140]
    %v845 = vld.sshfl [vmem:[#allocation1 + $0x18] sm:$0xff pattern:$0x73625140]
    %v846 = vld.sshfl [vmem:[#allocation1 + $0x20] sm:$0xff pattern:$0x73625140]
    %v847 = vld.sshfl [vmem:[#allocation1 + $0x28] sm:$0xff pattern:$0x73625140]
    %v848 = vld.sshfl [vmem:[#allocation1 + $0x30] sm:$0xff pattern:$0x73625140]
    %v849 = vld.sshfl [vmem:[#allocation1 + $0x38] sm:$0xff pattern:$0x73625140]
    %850 = vst [vmem:[#allocation1] ss:$4 sm:$0xff] %v53
    %851 = vst [vmem:[%s660] ss:$4 sm:$0xff] %v54
    %v852 = vld.sshfl [vmem:[#allocation1] sm:$0xff pattern:$0x73625140]
    %v853 = vld.sshfl [vmem:[#allocation1 + $0x8] sm:$0xff pattern:$0x73625140]
    %v854 = vld.sshfl [vmem:[#allocation1 + $0x10] sm:$0xff pattern:$0x73625140]
    %v855 = vld.sshfl [vmem:[#allocation1 + $0x18] sm:$0xff pattern:$0x73625140]
    %v856 = vld.sshfl [vmem:[#allocation1 + $0x20] sm:$0xff pattern:$0x73625140]
    %v857 = vld.sshfl [vmem:[#allocation1 + $0x28] sm:$0xff pattern:$0x73625140]
    %v858 = vld.sshfl [vmem:[#allocation1 + $0x30] sm:$0xff pattern:$0x73625140]
    %v859 = vld.sshfl [vmem:[#allocation1 + $0x38] sm:$0xff pattern:$0x73625140]
    %860 = vst [vmem:[#allocation1] ss:$4 sm:$0xff] %v55
    %861 = vst [vmem:[%s660] ss:$4 sm:$0xff] %v56
    %v862 = vld.sshfl [vmem:[#allocation1] sm:$0xff pattern:$0x73625140]
    %v863 = vld.sshfl [vmem:[#allocation1 + $0x8] sm:$0xff pattern:$0x73625140]
    %v864 = vld.sshfl [vmem:[#allocation1 + $0x10] sm:$0xff pattern:$0x73625140]
    %v865 = vld.sshfl [vmem:[#allocation1 + $0x18] sm:$0xff pattern:$0x73625140]
    %v866 = vld.sshfl [vmem:[#allocation1 + $0x20] sm:$0xff pattern:$0x73625140]
    %v867 = vld.sshfl [vmem:[#allocation1 + $0x28] sm:$0xff pattern:$0x73625140]
    %v868 = vld.sshfl [vmem:[#allocation1 + $0x30] sm:$0xff pattern:$0x73625140]
    %v869 = vld.sshfl [vmem:[#allocation1 + $0x38] sm:$0xff pattern:$0x73625140]
    %870 = vst [vmem:[#allocation1] ss:$4 sm:$0xff] %v57
    %871 = vst [vmem:[%s660] ss:$4 sm:$0xff] %v58
    %v872 = vld.sshfl [vmem:[#allocation1] sm:$0xff pattern:$0x73625140]
    %v873 = vld.sshfl [vmem:[#allocation1 + $0x8] sm:$0xff pattern:$0x73625140]
    %v874 = vld.sshfl [vmem:[#allocation1 + $0x10] sm:$0xff pattern:$0x73625140]
    %v875 = vld.sshfl [vmem:[#allocation1 + $0x18] sm:$0xff pattern:$0x73625140]
    %v876 = vld.sshfl [vmem:[#allocation1 + $0x20] sm:$0xff pattern:$0x73625140]
    %v877 = vld.sshfl [vmem:[#allocation1 + $0x28] sm:$0xff pattern:$0x73625140]
    %v878 = vld.sshfl [vmem:[#allocation1 + $0x30] sm:$0xff pattern:$0x73625140]
    %v879 = vld.sshfl [vmem:[#allocation1 + $0x38] sm:$0xff pattern:$0x73625140]
    %880 = vst [vmem:[#allocation1] ss:$4 sm:$0xff] %v59
    %881 = vst [vmem:[%s660] ss:$4 sm:$0xff] %v60
    %v882 = vld.sshfl [vmem:[#allocation1] sm:$0xff pattern:$0x73625140]
    %v883 = vld.sshfl [vmem:[#allocation1 + $0x8] sm:$0xff pattern:$0x73625140]
    %v884 = vld.sshfl [vmem:[#allocation1 + $0x10] sm:$0xff pattern:$0x73625140]
    %v885 = vld.sshfl [vmem:[#allocation1 + $0x18] sm:$0xff pattern:$0x73625140]
    %v886 = vld.sshfl [vmem:[#allocation1 + $0x20] sm:$0xff pattern:$0x73625140]
    %v887 = vld.sshfl [vmem:[#allocation1 + $0x28] sm:$0xff pattern:$0x73625140]
    %v888 = vld.sshfl [vmem:[#allocation1 + $0x30] sm:$0xff pattern:$0x73625140]
    %v889 = vld.sshfl [vmem:[#allocation1 + $0x38] sm:$0xff pattern:$0x73625140]
    %890 = vst [vmem:[#allocation1] ss:$4 sm:$0xff] %v61
    %891 = vst [vmem:[%s660] ss:$4 sm:$0xff] %v62
    %v892 = vld.sshfl [vmem:[#allocation1] sm:$0xff pattern:$0x73625140]
    %v893 = vld.sshfl [vmem:[#allocation1 + $0x8] sm:$0xff pattern:$0x73625140]
    %v894 = vld.sshfl [vmem:[#allocation1 + $0x10] sm:$0xff pattern:$0x73625140]
    %v895 = vld.sshfl [vmem:[#allocation1 + $0x18] sm:$0xff pattern:$0x73625140]
    %v896 = vld.sshfl [vmem:[#allocation1 + $0x20] sm:$0xff pattern:$0x73625140]
    %v897 = vld.sshfl [vmem:[#allocation1 + $0x28] sm:$0xff pattern:$0x73625140]
    %v898 = vld.sshfl [vmem:[#allocation1 + $0x30] sm:$0xff pattern:$0x73625140]
    %v899 = vld.sshfl [vmem:[#allocation1 + $0x38] sm:$0xff pattern:$0x73625140]
    %900 = vst [vmem:[#allocation1] ss:$4 sm:$0xff] %v63
    %901 = vst [vmem:[%s660] ss:$4 sm:$0xff] %v64
    %v902 = vld.sshfl [vmem:[#allocation1] sm:$0xff pattern:$0x73625140]
    %v903 = vld.sshfl [vmem:[#allocation1 + $0x8] sm:$0xff pattern:$0x73625140]
    %v904 = vld.sshfl [vmem:[#allocation1 + $0x10] sm:$0xff pattern:$0x73625140]
    %v905 = vld.sshfl [vmem:[#allocation1 + $0x18] sm:$0xff pattern:$0x73625140]
    %v906 = vld.sshfl [vmem:[#allocation1 + $0x20] sm:$0xff pattern:$0x73625140]
    %v907 = vld.sshfl [vmem:[#allocation1 + $0x28] sm:$0xff pattern:$0x73625140]
    %v908 = vld.sshfl [vmem:[#allocation1 + $0x30] sm:$0xff pattern:$0x73625140]
    %v909 = vld.sshfl [vmem:[#allocation1 + $0x38] sm:$0xff pattern:$0x73625140]
    %910 = vst [vmem:[#allocation1] ss:$4 sm:$0xff] %v65
    %911 = vst [vmem:[%s660] ss:$4 sm:$0xff] %v66
    %v912 = vld.sshfl [vmem:[#allocation1] sm:$0xff pattern:$0x73625140]
    %v913 = vld.sshfl [vmem:[#allocation1 + $0x8] sm:$0xff pattern:$0x73625140]
    %v914 = vld.sshfl [vmem:[#allocation1 + $0x10] sm:$0xff pattern:$0x73625140]
    %v915 = vld.sshfl [vmem:[#allocation1 + $0x18] sm:$0xff pattern:$0x73625140]
    %v916 = vld.sshfl [vmem:[#allocation1 + $0x20] sm:$0xff pattern:$0x73625140]
    %v917 = vld.sshfl [vmem:[#allocation1 + $0x28] sm:$0xff pattern:$0x73625140]
    %v918 = vld.sshfl [vmem:[#allocation1 + $0x30] sm:$0xff pattern:$0x73625140]
    %v919 = vld.sshfl [vmem:[#allocation1 + $0x38] sm:$0xff pattern:$0x73625140]
    %920 = vst [vmem:[#allocation1] ss:$4 sm:$0xff] %v67
    %921 = vst [vmem:[%s660] ss:$4 sm:$0xff] %v68
    %v922 = vld.sshfl [vmem:[#allocation1] sm:$0xff pattern:$0x73625140]
    %v923 = vld.sshfl [vmem:[#allocation1 + $0x8] sm:$0xff pattern:$0x73625140]
    %v924 = vld.sshfl [vmem:[#allocation1 + $0x10] sm:$0xff pattern:$0x73625140]
    %v925 = vld.sshfl [vmem:[#allocation1 + $0x18] sm:$0xff pattern:$0x73625140]
    %v926 = vld.sshfl [vmem:[#allocation1 + $0x20] sm:$0xff pattern:$0x73625140]
    %v927 = vld.sshfl [vmem:[#allocation1 + $0x28] sm:$0xff pattern:$0x73625140]
    %v928 = vld.sshfl [vmem:[#allocation1 + $0x30] sm:$0xff pattern:$0x73625140]
    %v929 = vld.sshfl [vmem:[#allocation1 + $0x38] sm:$0xff pattern:$0x73625140]
    %930 = vst [vmem:[#allocation1] ss:$4 sm:$0xff] %v69
    %931 = vst [vmem:[%s660] ss:$4 sm:$0xff] %v70
    %v932 = vld.sshfl [vmem:[#allocation1] sm:$0xff pattern:$0x73625140]
    %v933 = vld.sshfl [vmem:[#allocation1 + $0x8] sm:$0xff pattern:$0x73625140]
    %v934 = vld.sshfl [vmem:[#allocation1 + $0x10] sm:$0xff pattern:$0x73625140]
    %v935 = vld.sshfl [vmem:[#allocation1 + $0x18] sm:$0xff pattern:$0x73625140]
    %v936 = vld.sshfl [vmem:[#allocation1 + $0x20] sm:$0xff pattern:$0x73625140]
    %v937 = vld.sshfl [vmem:[#allocation1 + $0x28] sm:$0xff pattern:$0x73625140]
    %v938 = vld.sshfl [vmem:[#allocation1 + $0x30] sm:$0xff pattern:$0x73625140]
    %v939 = vld.sshfl [vmem:[#allocation1 + $0x38] sm:$0xff pattern:$0x73625140]
    %940 = vst [vmem:[#allocation1] ss:$4 sm:$0xff] %v71
    %941 = vst [vmem:[%s660] ss:$4 sm:$0xff] %v72
    %v942 = vld.sshfl [vmem:[#allocation1] sm:$0xff pattern:$0x73625140]
    %v943 = vld.sshfl [vmem:[#allocation1 + $0x8] sm:$0xff pattern:$0x73625140]
    %v944 = vld.sshfl [vmem:[#allocation1 + $0x10] sm:$0xff pattern:$0x73625140]
    %v945 = vld.sshfl [vmem:[#allocation1 + $0x18] sm:$0xff pattern:$0x73625140]
    %v946 = vld.sshfl [vmem:[#allocation1 + $0x20] sm:$0xff pattern:$0x73625140]
    %v947 = vld.sshfl [vmem:[#allocation1 + $0x28] sm:$0xff pattern:$0x73625140]
    %v948 = vld.sshfl [vmem:[#allocation1 + $0x30] sm:$0xff pattern:$0x73625140]
    %v949 = vld.sshfl [vmem:[#allocation1 + $0x38] sm:$0xff pattern:$0x73625140]
    %950 = vst [vmem:[#allocation1] ss:$4 sm:$0xff] %v73
    %951 = vst [vmem:[%s660] ss:$4 sm:$0xff] %v74
    %v952 = vld.sshfl [vmem:[#allocation1] sm:$0xff pattern:$0x73625140]
    %v953 = vld.sshfl [vmem:[#allocation1 + $0x8] sm:$0xff pattern:$0x73625140]
    %v954 = vld.sshfl [vmem:[#allocation1 + $0x10] sm:$0xff pattern:$0x73625140]
    %v955 = vld.sshfl [vmem:[#allocation1 + $0x18] sm:$0xff pattern:$0x73625140]
    %v956 = vld.sshfl [vmem:[#allocation1 + $0x20] sm:$0xff pattern:$0x73625140]
    %v957 = vld.sshfl [vmem:[#allocation1 + $0x28] sm:$0xff pattern:$0x73625140]
    %v958 = vld.sshfl [vmem:[#allocation1 + $0x30] sm:$0xff pattern:$0x73625140]
    %v959 = vld.sshfl [vmem:[#allocation1 + $0x38] sm:$0xff pattern:$0x73625140]
    %960 = vst [vmem:[#allocation1] ss:$4 sm:$0xff] %v75
    %961 = vst [vmem:[%s660] ss:$4 sm:$0xff] %v76
    %v962 = vld.sshfl [vmem:[#allocation1] sm:$0xff pattern:$0x73625140]
    %v963 = vld.sshfl [vmem:[#allocation1 + $0x8] sm:$0xff pattern:$0x73625140]
    %v964 = vld.sshfl [vmem:[#allocation1 + $0x10] sm:$0xff pattern:$0x73625140]
    %v965 = vld.sshfl [vmem:[#allocation1 + $0x18] sm:$0xff pattern:$0x73625140]
    %v966 = vld.sshfl [vmem:[#allocation1 + $0x20] sm:$0xff pattern:$0x73625140]
    %v967 = vld.sshfl [vmem:[#allocation1 + $0x28] sm:$0xff pattern:$0x73625140]
    %v968 = vld.sshfl [vmem:[#allocation1 + $0x30] sm:$0xff pattern:$0x73625140]
    %v969 = vld.sshfl [vmem:[#allocation1 + $0x38] sm:$0xff pattern:$0x73625140]
    %970 = vst [vmem:[#allocation1] ss:$4 sm:$0xff] %v77
    %971 = vst [vmem:[%s660] ss:$4 sm:$0xff] %v78
    %v972 = vld.sshfl [vmem:[#allocation1] sm:$0xff pattern:$0x73625140]
    %v973 = vld.sshfl [vmem:[#allocation1 + $0x8] sm:$0xff pattern:$0x73625140]
    %v974 = vld.sshfl [vmem:[#allocation1 + $0x10] sm:$0xff pattern:$0x73625140]
    %v975 = vld.sshfl [vmem:[#allocation1 + $0x18] sm:$0xff pattern:$0x73625140]
    %v976 = vld.sshfl [vmem:[#allocation1 + $0x20] sm:$0xff pattern:$0x73625140]
    %v977 = vld.sshfl [vmem:[#allocation1 + $0x28] sm:$0xff pattern:$0x73625140]
    %v978 = vld.sshfl [vmem:[#allocation1 + $0x30] sm:$0xff pattern:$0x73625140]
    %v979 = vld.sshfl [vmem:[#allocation1 + $0x38] sm:$0xff pattern:$0x73625140]
    %1236 = vmatpush.xpose.msra.mxu0 0.0
    %1237 = vmatpush.xpose.msra.mxu0 0.0
    %1238 = vmatpush.xpose.msra.mxu0 0.0
    %1239 = vmatpush.xpose.msra.mxu0 0.0
    %1240 = vmatpush.xpose.msra.mxu0 0.0
    %1241 = vmatpush.xpose.msra.mxu0 0.0
    %1242 = vmatpush.xpose.msra.mxu0 0.0
    %1243 = vmatpush.xpose.msra.mxu0 0.0
    %1244 = vmatpush.xpose.msra.mxu0 0.0
    %1245 = vmatpush.xpose.msra.mxu0 0.0
    %1246 = vmatpush.xpose.msra.mxu0 0.0
    %1247 = vmatpush.xpose.msra.mxu0 0.0
    %1248 = vmatpush.xpose.msra.mxu0 0.0
    %1249 = vmatpush.xpose.msra.mxu0 0.0
    %1250 = vmatpush.xpose.msra.mxu0 %v335
    %1251 = vmatpush.xpose.msra.mxu0 %v79
    %1252 = vmatmul.f32.gmra.mxu0 %v662
    %v1253 = vpop.f32.mrf.mxu0
    %v1254 = vadd.f32 %v593, %v1253
    %1255 = vdwg.mxu0
    %1256 = vmatpush.xpose.msra.mxu0 0.0
    %1257 = vmatpush.xpose.msra.mxu0 0.0
    %1258 = vmatpush.xpose.msra.mxu0 0.0
    %1259 = vmatpush.xpose.msra.mxu0 0.0
    %1260 = vmatpush.xpose.msra.mxu0 0.0
    %1261 = vmatpush.xpose.msra.mxu0 0.0
    %1262 = vmatpush.xpose.msra.mxu0 0.0
    %1263 = vmatpush.xpose.msra.mxu0 0.0
    %1264 = vmatpush.xpose.msra.mxu0 0.0
    %1265 = vmatpush.xpose.msra.mxu0 0.0
    %1266 = vmatpush.xpose.msra.mxu0 0.0
    %1267 = vmatpush.xpose.msra.mxu0 0.0
    %1268 = vmatpush.xpose.msra.mxu0 0.0
    %1269 = vmatpush.xpose.msra.mxu0 0.0
    %1270 = vmatpush.xpose.msra.mxu0 %v336
    %1271 = vmatpush.xpose.msra.mxu0 %v80
    %1272 = vmatmul.f32.gmra.mxu0 %v663
    %v1273 = vpop.f32.mrf.mxu0
    %v1274 = vadd.f32 %v1254, %v1273
    %1275 = vdwg.mxu0
    %1276 = vmatpush.xpose.msra.mxu0 0.0
    %1277 = vmatpush.xpose.msra.mxu0 0.0
    %1278 = vmatpush.xpose.msra.mxu0 0.0
    %1279 = vmatpush.xpose.msra.mxu0 0.0
    %1280 = vmatpush.xpose.msra.mxu0 0.0
    %1281 = vmatpush.xpose.msra.mxu0 0.0
    %1282 = vmatpush.xpose.msra.mxu0 0.0
    %1283 = vmatpush.xpose.msra.mxu0 0.0
    %1284 = vmatpush.xpose.msra.mxu0 0.0
    %1285 = vmatpush.xpose.msra.mxu0 0.0
    %1286 = vmatpush.xpose.msra.mxu0 0.0
    %1287 = vmatpush.xpose.msra.mxu0 0.0
    %1288 = vmatpush.xpose.msra.mxu0 0.0
    %1289 = vmatpush.xpose.msra.mxu0 0.0
    %1290 = vmatpush.xpose.msra.mxu0 %v337
    %1291 = vmatpush.xpose.msra.mxu0 %v81
    %1292 = vmatmul.f32.gmra.mxu0 %v664
    %v1293 = vpop.f32.mrf.mxu0
    %v1294 = vadd.f32 %v1274, %v1293
    %1295 = vdwg.mxu0
    %1296 = vmatpush.xpose.msra.mxu0 0.0
    %1297 = vmatpush.xpose.msra.mxu0 0.0
    %1298 = vmatpush.xpose.msra.mxu0 0.0
    %1299 = vmatpush.xpose.msra.mxu0 0.0
    %1300 = vmatpush.xpose.msra.mxu0 0.0
    %1301 = vmatpush.xpose.msra.mxu0 0.0
    %1302 = vmatpush.xpose.msra.mxu0 0.0
    %1303 = vmatpush.xpose.msra.mxu0 0.0
    %1304 = vmatpush.xpose.msra.mxu0 0.0
    %1305 = vmatpush.xpose.msra.mxu0 0.0
    %1306 = vmatpush.xpose.msra.mxu0 0.0
    %1307 = vmatpush.xpose.msra.mxu0 0.0
    %1308 = vmatpush.xpose.msra.mxu0 0.0
    %1309 = vmatpush.xpose.msra.mxu0 0.0
    %1310 = vmatpush.xpose.msra.mxu0 %v338
    %1311 = vmatpush.xpose.msra.mxu0 %v82
    %1312 = vmatmul.f32.gmra.mxu0 %v665
    %v1313 = vpop.f32.mrf.mxu0
    %v1314 = vadd.f32 %v1294, %v1313
    %1315 = vdwg.mxu0
    %1316 = vmatpush.xpose.msra.mxu0 0.0
    %1317 = vmatpush.xpose.msra.mxu0 0.0
    %1318 = vmatpush.xpose.msra.mxu0 0.0
    %1319 = vmatpush.xpose.msra.mxu0 0.0
    %1320 = vmatpush.xpose.msra.mxu0 0.0
    %1321 = vmatpush.xpose.msra.mxu0 0.0
    %1322 = vmatpush.xpose.msra.mxu0 0.0
    %1323 = vmatpush.xpose.msra.mxu0 0.0
    %1324 = vmatpush.xpose.msra.mxu0 0.0
    %1325 = vmatpush.xpose.msra.mxu0 0.0
    %1326 = vmatpush.xpose.msra.mxu0 0.0
    %1327 = vmatpush.xpose.msra.mxu0 0.0
    %1328 = vmatpush.xpose.msra.mxu0 0.0
    %1329 = vmatpush.xpose.msra.mxu0 0.0
    %1330 = vmatpush.xpose.msra.mxu0 %v339
    %1331 = vmatpush.xpose.msra.mxu0 %v83
    %1332 = vmatmul.f32.gmra.mxu0 %v666
    %v1333 = vpop.f32.mrf.mxu0
    %v1334 = vadd.f32 %v1314, %v1333
    %1335 = vdwg.mxu0
    %1336 = vmatpush.xpose.msra.mxu0 0.0
    %1337 = vmatpush.xpose.msra.mxu0 0.0
    %1338 = vmatpush.xpose.msra.mxu0 0.0
    %1339 = vmatpush.xpose.msra.mxu0 0.0
    %1340 = vmatpush.xpose.msra.mxu0 0.0
    %1341 = vmatpush.xpose.msra.mxu0 0.0
    %1342 = vmatpush.xpose.msra.mxu0 0.0
    %1343 = vmatpush.xpose.msra.mxu0 0.0
    %1344 = vmatpush.xpose.msra.mxu0 0.0
    %1345 = vmatpush.xpose.msra.mxu0 0.0
    %1346 = vmatpush.xpose.msra.mxu0 0.0
    %1347 = vmatpush.xpose.msra.mxu0 0.0
    %1348 = vmatpush.xpose.msra.mxu0 0.0
    %1349 = vmatpush.xpose.msra.mxu0 0.0
    %1350 = vmatpush.xpose.msra.mxu0 %v340
    %1351 = vmatpush.xpose.msra.mxu0 %v84
    %1352 = vmatmul.f32.gmra.mxu0 %v667
    %v1353 = vpop.f32.mrf.mxu0
    %v1354 = vadd.f32 %v1334, %v1353
    %1355 = vdwg.mxu0
    %1356 = vmatpush.xpose.msra.mxu0 0.0
    %1357 = vmatpush.xpose.msra.mxu0 0.0
    %1358 = vmatpush.xpose.msra.mxu0 0.0
    %1359 = vmatpush.xpose.msra.mxu0 0.0
    %1360 = vmatpush.xpose.msra.mxu0 0.0
    %1361 = vmatpush.xpose.msra.mxu0 0.0
    %1362 = vmatpush.xpose.msra.mxu0 0.0
    %1363 = vmatpush.xpose.msra.mxu0 0.0
    %1364 = vmatpush.xpose.msra.mxu0 0.0
    %1365 = vmatpush.xpose.msra.mxu0 0.0
    %1366 = vmatpush.xpose.msra.mxu0 0.0
    %1367 = vmatpush.xpose.msra.mxu0 0.0
    %1368 = vmatpush.xpose.msra.mxu0 0.0
    %1369 = vmatpush.xpose.msra.mxu0 0.0
    %1370 = vmatpush.xpose.msra.mxu0 %v341
    %1371 = vmatpush.xpose.msra.mxu0 %v85
    %1372 = vmatmul.f32.gmra.mxu0 %v668
    %v1373 = vpop.f32.mrf.mxu0
    %v1374 = vadd.f32 %v1354, %v1373
    %1375 = vdwg.mxu0
    %1376 = vmatpush.xpose.msra.mxu0 0.0
    %1377 = vmatpush.xpose.msra.mxu0 0.0
    %1378 = vmatpush.xpose.msra.mxu0 0.0
    %1379 = vmatpush.xpose.msra.mxu0 0.0
    %1380 = vmatpush.xpose.msra.mxu0 0.0
    %1381 = vmatpush.xpose.msra.mxu0 0.0
    %1382 = vmatpush.xpose.msra.mxu0 0.0
    %1383 = vmatpush.xpose.msra.mxu0 0.0
    %1384 = vmatpush.xpose.msra.mxu0 0.0
    %1385 = vmatpush.xpose.msra.mxu0 0.0
    %1386 = vmatpush.xpose.msra.mxu0 0.0
    %1387 = vmatpush.xpose.msra.mxu0 0.0
    %1388 = vmatpush.xpose.msra.mxu0 0.0
    %1389 = vmatpush.xpose.msra.mxu0 0.0
    %1390 = vmatpush.xpose.msra.mxu0 %v342
    %1391 = vmatpush.xpose.msra.mxu0 %v86
    %1392 = vmatmul.f32.gmra.mxu0 %v669
    %v1393 = vpop.f32.mrf.mxu0
    %v1394 = vadd.f32 %v1374, %v1393
    %1395 = vdwg.mxu0
    %1396 = vmatpush.xpose.msra.mxu0 0.0
    %1397 = vmatpush.xpose.msra.mxu0 0.0
    %1398 = vmatpush.xpose.msra.mxu0 0.0
    %1399 = vmatpush.xpose.msra.mxu0 0.0
    %1400 = vmatpush.xpose.msra.mxu0 0.0
    %1401 = vmatpush.xpose.msra.mxu0 0.0
    %1402 = vmatpush.xpose.msra.mxu0 0.0
    %1403 = vmatpush.xpose.msra.mxu0 0.0
    %1404 = vmatpush.xpose.msra.mxu0 0.0
    %1405 = vmatpush.xpose.msra.mxu0 0.0
    %1406 = vmatpush.xpose.msra.mxu0 0.0
    %1407 = vmatpush.xpose.msra.mxu0 0.0
    %1408 = vmatpush.xpose.msra.mxu0 0.0
    %1409 = vmatpush.xpose.msra.mxu0 0.0
    %1410 = vmatpush.xpose.msra.mxu0 %v343
    %1411 = vmatpush.xpose.msra.mxu0 %v87
    %1412 = vmatmul.f32.gmra.mxu0 %v672
    %v1413 = vpop.f32.mrf.mxu0
    %v1414 = vadd.f32 %v1394, %v1413
    %1415 = vdwg.mxu0
    %1416 = vmatpush.xpose.msra.mxu0 0.0
    %1417 = vmatpush.xpose.msra.mxu0 0.0
    %1418 = vmatpush.xpose.msra.mxu0 0.0
    %1419 = vmatpush.xpose.msra.mxu0 0.0
    %1420 = vmatpush.xpose.msra.mxu0 0.0
    %1421 = vmatpush.xpose.msra.mxu0 0.0
    %1422 = vmatpush.xpose.msra.mxu0 0.0
    %1423 = vmatpush.xpose.msra.mxu0 0.0
    %1424 = vmatpush.xpose.msra.mxu0 0.0
    %1425 = vmatpush.xpose.msra.mxu0 0.0
    %1426 = vmatpush.xpose.msra.mxu0 0.0
    %1427 = vmatpush.xpose.msra.mxu0 0.0
    %1428 = vmatpush.xpose.msra.mxu0 0.0
    %1429 = vmatpush.xpose.msra.mxu0 0.0
    %1430 = vmatpush.xpose.msra.mxu0 %v344
    %1431 = vmatpush.xpose.msra.mxu0 %v88
    %1432 = vmatmul.f32.gmra.mxu0 %v673
    %v1433 = vpop.f32.mrf.mxu0
    %v1434 = vadd.f32 %v1414, %v1433
    %1435 = vdwg.mxu0
    %1436 = vmatpush.xpose.msra.mxu0 0.0
    %1437 = vmatpush.xpose.msra.mxu0 0.0
    %1438 = vmatpush.xpose.msra.mxu0 0.0
    %1439 = vmatpush.xpose.msra.mxu0 0.0
    %1440 = vmatpush.xpose.msra.mxu0 0.0
    %1441 = vmatpush.xpose.msra.mxu0 0.0
    %1442 = vmatpush.xpose.msra.mxu0 0.0
    %1443 = vmatpush.xpose.msra.mxu0 0.0
    %1444 = vmatpush.xpose.msra.mxu0 0.0
    %1445 = vmatpush.xpose.msra.mxu0 0.0
    %1446 = vmatpush.xpose.msra.mxu0 0.0
    %1447 = vmatpush.xpose.msra.mxu0 0.0
    %1448 = vmatpush.xpose.msra.mxu0 0.0
    %1449 = vmatpush.xpose.msra.mxu0 0.0
    %1450 = vmatpush.xpose.msra.mxu0 %v345
    %1451 = vmatpush.xpose.msra.mxu0 %v89
    %1452 = vmatmul.f32.gmra.mxu0 %v674
    %v1453 = vpop.f32.mrf.mxu0
    %v1454 = vadd.f32 %v1434, %v1453
    %1455 = vdwg.mxu0
    %1456 = vmatpush.xpose.msra.mxu0 0.0
    %1457 = vmatpush.xpose.msra.mxu0 0.0
    %1458 = vmatpush.xpose.msra.mxu0 0.0
    %1459 = vmatpush.xpose.msra.mxu0 0.0
    %1460 = vmatpush.xpose.msra.mxu0 0.0
    %1461 = vmatpush.xpose.msra.mxu0 0.0
    %1462 = vmatpush.xpose.msra.mxu0 0.0
    %1463 = vmatpush.xpose.msra.mxu0 0.0
    %1464 = vmatpush.xpose.msra.mxu0 0.0
    %1465 = vmatpush.xpose.msra.mxu0 0.0
    %1466 = vmatpush.xpose.msra.mxu0 0.0
    %1467 = vmatpush.xpose.msra.mxu0 0.0
    %1468 = vmatpush.xpose.msra.mxu0 0.0
    %1469 = vmatpush.xpose.msra.mxu0 0.0
    %1470 = vmatpush.xpose.msra.mxu0 %v346
    %1471 = vmatpush.xpose.msra.mxu0 %v90
    %1472 = vmatmul.f32.gmra.mxu0 %v675
    %v1473 = vpop.f32.mrf.mxu0
    %v1474 = vadd.f32 %v1454, %v1473
    %1475 = vdwg.mxu0
    %1476 = vmatpush.xpose.msra.mxu0 0.0
    %1477 = vmatpush.xpose.msra.mxu0 0.0
    %1478 = vmatpush.xpose.msra.mxu0 0.0
    %1479 = vmatpush.xpose.msra.mxu0 0.0
    %1480 = vmatpush.xpose.msra.mxu0 0.0
    %1481 = vmatpush.xpose.msra.mxu0 0.0
    %1482 = vmatpush.xpose.msra.mxu0 0.0
    %1483 = vmatpush.xpose.msra.mxu0 0.0
    %1484 = vmatpush.xpose.msra.mxu0 0.0
    %1485 = vmatpush.xpose.msra.mxu0 0.0
    %1486 = vmatpush.xpose.msra.mxu0 0.0
    %1487 = vmatpush.xpose.msra.mxu0 0.0
    %1488 = vmatpush.xpose.msra.mxu0 0.0
    %1489 = vmatpush.xpose.msra.mxu0 0.0
    %1490 = vmatpush.xpose.msra.mxu0 %v347
    %1491 = vmatpush.xpose.msra.mxu0 %v91
    %1492 = vmatmul.f32.gmra.mxu0 %v676
    %v1493 = vpop.f32.mrf.mxu0
    %v1494 = vadd.f32 %v1474, %v1493
    %1495 = vdwg.mxu0
    %1496 = vmatpush.xpose.msra.mxu0 0.0
    %1497 = vmatpush.xpose.msra.mxu0 0.0
    %1498 = vmatpush.xpose.msra.mxu0 0.0
    %1499 = vmatpush.xpose.msra.mxu0 0.0
    %1500 = vmatpush.xpose.msra.mxu0 0.0
    %1501 = vmatpush.xpose.msra.mxu0 0.0
    %1502 = vmatpush.xpose.msra.mxu0 0.0
    %1503 = vmatpush.xpose.msra.mxu0 0.0
    %1504 = vmatpush.xpose.msra.mxu0 0.0
    %1505 = vmatpush.xpose.msra.mxu0 0.0
    %1506 = vmatpush.xpose.msra.mxu0 0.0
    %1507 = vmatpush.xpose.msra.mxu0 0.0
    %1508 = vmatpush.xpose.msra.mxu0 0.0
    %1509 = vmatpush.xpose.msra.mxu0 0.0
    %1510 = vmatpush.xpose.msra.mxu0 %v348
    %1511 = vmatpush.xpose.msra.mxu0 %v92
    %1512 = vmatmul.f32.gmra.mxu0 %v677
    %v1513 = vpop.f32.mrf.mxu0
    %v1514 = vadd.f32 %v1494, %v1513
    %1515 = vdwg.mxu0
    %1516 = vmatpush.xpose.msra.mxu0 0.0
    %1517 = vmatpush.xpose.msra.mxu0 0.0
    %1518 = vmatpush.xpose.msra.mxu0 0.0
    %1519 = vmatpush.xpose.msra.mxu0 0.0
    %1520 = vmatpush.xpose.msra.mxu0 0.0
    %1521 = vmatpush.xpose.msra.mxu0 0.0
    %1522 = vmatpush.xpose.msra.mxu0 0.0
    %1523 = vmatpush.xpose.msra.mxu0 0.0
    %1524 = vmatpush.xpose.msra.mxu0 0.0
    %1525 = vmatpush.xpose.msra.mxu0 0.0
    %1526 = vmatpush.xpose.msra.mxu0 0.0
    %1527 = vmatpush.xpose.msra.mxu0 0.0
    %1528 = vmatpush.xpose.msra.mxu0 0.0
    %1529 = vmatpush.xpose.msra.mxu0 0.0
    %1530 = vmatpush.xpose.msra.mxu0 %v349
    %1531 = vmatpush.xpose.msra.mxu0 %v93
    %1532 = vmatmul.f32.gmra.mxu0 %v678
    %v1533 = vpop.f32.mrf.mxu0
    %v1534 = vadd.f32 %v1514, %v1533
    %1535 = vdwg.mxu0
    %1536 = vmatpush.xpose.msra.mxu0 0.0
    %1537 = vmatpush.xpose.msra.mxu0 0.0
    %1538 = vmatpush.xpose.msra.mxu0 0.0
    %1539 = vmatpush.xpose.msra.mxu0 0.0
    %1540 = vmatpush.xpose.msra.mxu0 0.0
    %1541 = vmatpush.xpose.msra.mxu0 0.0
    %1542 = vmatpush.xpose.msra.mxu0 0.0
    %1543 = vmatpush.xpose.msra.mxu0 0.0
    %1544 = vmatpush.xpose.msra.mxu0 0.0
    %1545 = vmatpush.xpose.msra.mxu0 0.0
    %1546 = vmatpush.xpose.msra.mxu0 0.0
    %1547 = vmatpush.xpose.msra.mxu0 0.0
    %1548 = vmatpush.xpose.msra.mxu0 0.0
    %1549 = vmatpush.xpose.msra.mxu0 0.0
    %1550 = vmatpush.xpose.msra.mxu0 %v350
    %1551 = vmatpush.xpose.msra.mxu0 %v94
    %1552 = vmatmul.f32.gmra.mxu0 %v679
    %v1553 = vpop.f32.mrf.mxu0
    %v1554 = vadd.f32 %v1534, %v1553
    %1555 = vdwg.mxu0
    %1556 = vmatpush.xpose.msra.mxu0 0.0
    %1557 = vmatpush.xpose.msra.mxu0 0.0
    %1558 = vmatpush.xpose.msra.mxu0 0.0
    %1559 = vmatpush.xpose.msra.mxu0 0.0
    %1560 = vmatpush.xpose.msra.mxu0 0.0
    %1561 = vmatpush.xpose.msra.mxu0 0.0
    %1562 = vmatpush.xpose.msra.mxu0 0.0
    %1563 = vmatpush.xpose.msra.mxu0 0.0
    %1564 = vmatpush.xpose.msra.mxu0 0.0
    %1565 = vmatpush.xpose.msra.mxu0 0.0
    %1566 = vmatpush.xpose.msra.mxu0 0.0
    %1567 = vmatpush.xpose.msra.mxu0 0.0
    %1568 = vmatpush.xpose.msra.mxu0 0.0
    %1569 = vmatpush.xpose.msra.mxu0 0.0
    %1570 = vmatpush.xpose.msra.mxu0 %v351
    %1571 = vmatpush.xpose.msra.mxu0 %v95
    %1572 = vmatmul.f32.gmra.mxu0 %v682
    %v1573 = vpop.f32.mrf.mxu0
    %v1574 = vadd.f32 %v1554, %v1573
    %1575 = vdwg.mxu0
    %1576 = vmatpush.xpose.msra.mxu0 0.0
    %1577 = vmatpush.xpose.msra.mxu0 0.0
    %1578 = vmatpush.xpose.msra.mxu0 0.0
    %1579 = vmatpush.xpose.msra.mxu0 0.0
    %1580 = vmatpush.xpose.msra.mxu0 0.0
    %1581 = vmatpush.xpose.msra.mxu0 0.0
    %1582 = vmatpush.xpose.msra.mxu0 0.0
    %1583 = vmatpush.xpose.msra.mxu0 0.0
    %1584 = vmatpush.xpose.msra.mxu0 0.0
    %1585 = vmatpush.xpose.msra.mxu0 0.0
    %1586 = vmatpush.xpose.msra.mxu0 0.0
    %1587 = vmatpush.xpose.msra.mxu0 0.0
    %1588 = vmatpush.xpose.msra.mxu0 0.0
    %1589 = vmatpush.xpose.msra.mxu0 0.0
    %1590 = vmatpush.xpose.msra.mxu0 %v352
    %1591 = vmatpush.xpose.msra.mxu0 %v96
    %1592 = vmatmul.f32.gmra.mxu0 %v683
    %v1593 = vpop.f32.mrf.mxu0
    %v1594 = vadd.f32 %v1574, %v1593
    %1595 = vdwg.mxu0
    %1596 = vmatpush.xpose.msra.mxu0 0.0
    %1597 = vmatpush.xpose.msra.mxu0 0.0
    %1598 = vmatpush.xpose.msra.mxu0 0.0
    %1599 = vmatpush.xpose.msra.mxu0 0.0
    %1600 = vmatpush.xpose.msra.mxu0 0.0
    %1601 = vmatpush.xpose.msra.mxu0 0.0
    %1602 = vmatpush.xpose.msra.mxu0 0.0
    %1603 = vmatpush.xpose.msra.mxu0 0.0
    %1604 = vmatpush.xpose.msra.mxu0 0.0
    %1605 = vmatpush.xpose.msra.mxu0 0.0
    %1606 = vmatpush.xpose.msra.mxu0 0.0
    %1607 = vmatpush.xpose.msra.mxu0 0.0
    %1608 = vmatpush.xpose.msra.mxu0 0.0
    %1609 = vmatpush.xpose.msra.mxu0 0.0
    %1610 = vmatpush.xpose.msra.mxu0 %v353
    %1611 = vmatpush.xpose.msra.mxu0 %v97
    %1612 = vmatmul.f32.gmra.mxu0 %v684
    %v1613 = vpop.f32.mrf.mxu0
    %v1614 = vadd.f32 %v1594, %v1613
    %1615 = vdwg.mxu0
    %1616 = vmatpush.xpose.msra.mxu0 0.0
    %1617 = vmatpush.xpose.msra.mxu0 0.0
    %1618 = vmatpush.xpose.msra.mxu0 0.0
    %1619 = vmatpush.xpose.msra.mxu0 0.0
    %1620 = vmatpush.xpose.msra.mxu0 0.0
    %1621 = vmatpush.xpose.msra.mxu0 0.0
    %1622 = vmatpush.xpose.msra.mxu0 0.0
    %1623 = vmatpush.xpose.msra.mxu0 0.0
    %1624 = vmatpush.xpose.msra.mxu0 0.0
    %1625 = vmatpush.xpose.msra.mxu0 0.0
    %1626 = vmatpush.xpose.msra.mxu0 0.0
    %1627 = vmatpush.xpose.msra.mxu0 0.0
    %1628 = vmatpush.xpose.msra.mxu0 0.0
    %1629 = vmatpush.xpose.msra.mxu0 0.0
    %1630 = vmatpush.xpose.msra.mxu0 %v354
    %1631 = vmatpush.xpose.msra.mxu0 %v98
    %1632 = vmatmul.f32.gmra.mxu0 %v685
    %v1633 = vpop.f32.mrf.mxu0
    %v1634 = vadd.f32 %v1614, %v1633
    %1635 = vdwg.mxu0
    %1636 = vmatpush.xpose.msra.mxu0 0.0
    %1637 = vmatpush.xpose.msra.mxu0 0.0
    %1638 = vmatpush.xpose.msra.mxu0 0.0
    %1639 = vmatpush.xpose.msra.mxu0 0.0
    %1640 = vmatpush.xpose.msra.mxu0 0.0
    %1641 = vmatpush.xpose.msra.mxu0 0.0
    %1642 = vmatpush.xpose.msra.mxu0 0.0
    %1643 = vmatpush.xpose.msra.mxu0 0.0
    %1644 = vmatpush.xpose.msra.mxu0 0.0
    %1645 = vmatpush.xpose.msra.mxu0 0.0
    %1646 = vmatpush.xpose.msra.mxu0 0.0
    %1647 = vmatpush.xpose.msra.mxu0 0.0
    %1648 = vmatpush.xpose.msra.mxu0 0.0
    %1649 = vmatpush.xpose.msra.mxu0 0.0
    %1650 = vmatpush.xpose.msra.mxu0 %v355
    %1651 = vmatpush.xpose.msra.mxu0 %v99
    %1652 = vmatmul.f32.gmra.mxu0 %v686
    %v1653 = vpop.f32.mrf.mxu0
    %v1654 = vadd.f32 %v1634, %v1653
    %1655 = vdwg.mxu0
    %1656 = vmatpush.xpose.msra.mxu0 0.0
    %1657 = vmatpush.xpose.msra.mxu0 0.0
    %1658 = vmatpush.xpose.msra.mxu0 0.0
    %1659 = vmatpush.xpose.msra.mxu0 0.0
    %1660 = vmatpush.xpose.msra.mxu0 0.0
    %1661 = vmatpush.xpose.msra.mxu0 0.0
    %1662 = vmatpush.xpose.msra.mxu0 0.0
    %1663 = vmatpush.xpose.msra.mxu0 0.0
    %1664 = vmatpush.xpose.msra.mxu0 0.0
    %1665 = vmatpush.xpose.msra.mxu0 0.0
    %1666 = vmatpush.xpose.msra.mxu0 0.0
    %1667 = vmatpush.xpose.msra.mxu0 0.0
    %1668 = vmatpush.xpose.msra.mxu0 0.0
    %1669 = vmatpush.xpose.msra.mxu0 0.0
    %1670 = vmatpush.xpose.msra.mxu0 %v356
    %1671 = vmatpush.xpose.msra.mxu0 %v100
    %1672 = vmatmul.f32.gmra.mxu0 %v687
    %v1673 = vpop.f32.mrf.mxu0
    %v1674 = vadd.f32 %v1654, %v1673
    %1675 = vdwg.mxu0
    %1676 = vmatpush.xpose.msra.mxu0 0.0
    %1677 = vmatpush.xpose.msra.mxu0 0.0
    %1678 = vmatpush.xpose.msra.mxu0 0.0
    %1679 = vmatpush.xpose.msra.mxu0 0.0
    %1680 = vmatpush.xpose.msra.mxu0 0.0
    %1681 = vmatpush.xpose.msra.mxu0 0.0
    %1682 = vmatpush.xpose.msra.mxu0 0.0
    %1683 = vmatpush.xpose.msra.mxu0 0.0
    %1684 = vmatpush.xpose.msra.mxu0 0.0
    %1685 = vmatpush.xpose.msra.mxu0 0.0
    %1686 = vmatpush.xpose.msra.mxu0 0.0
    %1687 = vmatpush.xpose.msra.mxu0 0.0
    %1688 = vmatpush.xpose.msra.mxu0 0.0
    %1689 = vmatpush.xpose.msra.mxu0 0.0
    %1690 = vmatpush.xpose.msra.mxu0 %v357
    %1691 = vmatpush.xpose.msra.mxu0 %v101
    %1692 = vmatmul.f32.gmra.mxu0 %v688
    %v1693 = vpop.f32.mrf.mxu0
    %v1694 = vadd.f32 %v1674, %v1693
    %1695 = vdwg.mxu0
    %1696 = vmatpush.xpose.msra.mxu0 0.0
    %1697 = vmatpush.xpose.msra.mxu0 0.0
    %1698 = vmatpush.xpose.msra.mxu0 0.0
    %1699 = vmatpush.xpose.msra.mxu0 0.0
    %1700 = vmatpush.xpose.msra.mxu0 0.0
    %1701 = vmatpush.xpose.msra.mxu0 0.0
    %1702 = vmatpush.xpose.msra.mxu0 0.0
    %1703 = vmatpush.xpose.msra.mxu0 0.0
    %1704 = vmatpush.xpose.msra.mxu0 0.0
    %1705 = vmatpush.xpose.msra.mxu0 0.0
    %1706 = vmatpush.xpose.msra.mxu0 0.0
    %1707 = vmatpush.xpose.msra.mxu0 0.0
    %1708 = vmatpush.xpose.msra.mxu0 0.0
    %1709 = vmatpush.xpose.msra.mxu0 0.0
    %1710 = vmatpush.xpose.msra.mxu0 %v358
    %1711 = vmatpush.xpose.msra.mxu0 %v102
    %1712 = vmatmul.f32.gmra.mxu0 %v689
    %v1713 = vpop.f32.mrf.mxu0
    %v1714 = vadd.f32 %v1694, %v1713
    %1715 = vdwg.mxu0
    %1716 = vmatpush.xpose.msra.mxu0 0.0
    %1717 = vmatpush.xpose.msra.mxu0 0.0
    %1718 = vmatpush.xpose.msra.mxu0 0.0
    %1719 = vmatpush.xpose.msra.mxu0 0.0
    %1720 = vmatpush.xpose.msra.mxu0 0.0
    %1721 = vmatpush.xpose.msra.mxu0 0.0
    %1722 = vmatpush.xpose.msra.mxu0 0.0
    %1723 = vmatpush.xpose.msra.mxu0 0.0
    %1724 = vmatpush.xpose.msra.mxu0 0.0
    %1725 = vmatpush.xpose.msra.mxu0 0.0
    %1726 = vmatpush.xpose.msra.mxu0 0.0
    %1727 = vmatpush.xpose.msra.mxu0 0.0
    %1728 = vmatpush.xpose.msra.mxu0 0.0
    %1729 = vmatpush.xpose.msra.mxu0 0.0
    %1730 = vmatpush.xpose.msra.mxu0 %v359
    %1731 = vmatpush.xpose.msra.mxu0 %v103
    %1732 = vmatmul.f32.gmra.mxu0 %v692
    %v1733 = vpop.f32.mrf.mxu0
    %v1734 = vadd.f32 %v1714, %v1733
    %1735 = vdwg.mxu0
    %1736 = vmatpush.xpose.msra.mxu0 0.0
    %1737 = vmatpush.xpose.msra.mxu0 0.0
    %1738 = vmatpush.xpose.msra.mxu0 0.0
    %1739 = vmatpush.xpose.msra.mxu0 0.0
    %1740 = vmatpush.xpose.msra.mxu0 0.0
    %1741 = vmatpush.xpose.msra.mxu0 0.0
    %1742 = vmatpush.xpose.msra.mxu0 0.0
    %1743 = vmatpush.xpose.msra.mxu0 0.0
    %1744 = vmatpush.xpose.msra.mxu0 0.0
    %1745 = vmatpush.xpose.msra.mxu0 0.0
    %1746 = vmatpush.xpose.msra.mxu0 0.0
    %1747 = vmatpush.xpose.msra.mxu0 0.0
    %1748 = vmatpush.xpose.msra.mxu0 0.0
    %1749 = vmatpush.xpose.msra.mxu0 0.0
    %1750 = vmatpush.xpose.msra.mxu0 %v360
    %1751 = vmatpush.xpose.msra.mxu0 %v104
    %1752 = vmatmul.f32.gmra.mxu0 %v693
    %v1753 = vpop.f32.mrf.mxu0
    %v1754 = vadd.f32 %v1734, %v1753
    %1755 = vdwg.mxu0
    %1756 = vmatpush.xpose.msra.mxu0 0.0
    %1757 = vmatpush.xpose.msra.mxu0 0.0
    %1758 = vmatpush.xpose.msra.mxu0 0.0
    %1759 = vmatpush.xpose.msra.mxu0 0.0
    %1760 = vmatpush.xpose.msra.mxu0 0.0
    %1761 = vmatpush.xpose.msra.mxu0 0.0
    %1762 = vmatpush.xpose.msra.mxu0 0.0
    %1763 = vmatpush.xpose.msra.mxu0 0.0
    %1764 = vmatpush.xpose.msra.mxu0 0.0
    %1765 = vmatpush.xpose.msra.mxu0 0.0
    %1766 = vmatpush.xpose.msra.mxu0 0.0
    %1767 = vmatpush.xpose.msra.mxu0 0.0
    %1768 = vmatpush.xpose.msra.mxu0 0.0
    %1769 = vmatpush.xpose.msra.mxu0 0.0
    %1770 = vmatpush.xpose.msra.mxu0 %v361
    %1771 = vmatpush.xpose.msra.mxu0 %v105
    %1772 = vmatmul.f32.gmra.mxu0 %v694
    %v1773 = vpop.f32.mrf.mxu0
    %v1774 = vadd.f32 %v1754, %v1773
    %1775 = vdwg.mxu0
    %1776 = vmatpush.xpose.msra.mxu0 0.0
    %1777 = vmatpush.xpose.msra.mxu0 0.0
    %1778 = vmatpush.xpose.msra.mxu0 0.0
    %1779 = vmatpush.xpose.msra.mxu0 0.0
    %1780 = vmatpush.xpose.msra.mxu0 0.0
    %1781 = vmatpush.xpose.msra.mxu0 0.0
    %1782 = vmatpush.xpose.msra.mxu0 0.0
    %1783 = vmatpush.xpose.msra.mxu0 0.0
    %1784 = vmatpush.xpose.msra.mxu0 0.0
    %1785 = vmatpush.xpose.msra.mxu0 0.0
    %1786 = vmatpush.xpose.msra.mxu0 0.0
    %1787 = vmatpush.xpose.msra.mxu0 0.0
    %1788 = vmatpush.xpose.msra.mxu0 0.0
    %1789 = vmatpush.xpose.msra.mxu0 0.0
    %1790 = vmatpush.xpose.msra.mxu0 %v362
    %1791 = vmatpush.xpose.msra.mxu0 %v106
    %1792 = vmatmul.f32.gmra.mxu0 %v695
    %v1793 = vpop.f32.mrf.mxu0
    %v1794 = vadd.f32 %v1774, %v1793
    %1795 = vdwg.mxu0
    %1796 = vmatpush.xpose.msra.mxu0 0.0
    %1797 = vmatpush.xpose.msra.mxu0 0.0
    %1798 = vmatpush.xpose.msra.mxu0 0.0
    %1799 = vmatpush.xpose.msra.mxu0 0.0
    %1800 = vmatpush.xpose.msra.mxu0 0.0
    %1801 = vmatpush.xpose.msra.mxu0 0.0
    %1802 = vmatpush.xpose.msra.mxu0 0.0
    %1803 = vmatpush.xpose.msra.mxu0 0.0
    %1804 = vmatpush.xpose.msra.mxu0 0.0
    %1805 = vmatpush.xpose.msra.mxu0 0.0
    %1806 = vmatpush.xpose.msra.mxu0 0.0
    %1807 = vmatpush.xpose.msra.mxu0 0.0
    %1808 = vmatpush.xpose.msra.mxu0 0.0
    %1809 = vmatpush.xpose.msra.mxu0 0.0
    %1810 = vmatpush.xpose.msra.mxu0 %v363
    %1811 = vmatpush.xpose.msra.mxu0 %v107
    %1812 = vmatmul.f32.gmra.mxu0 %v696
    %v1813 = vpop.f32.mrf.mxu0
    %v1814 = vadd.f32 %v1794, %v1813
    %1815 = vdwg.mxu0
    %1816 = vmatpush.xpose.msra.mxu0 0.0
    %1817 = vmatpush.xpose.msra.mxu0 0.0
    %1818 = vmatpush.xpose.msra.mxu0 0.0
    %1819 = vmatpush.xpose.msra.mxu0 0.0
    %1820 = vmatpush.xpose.msra.mxu0 0.0
    %1821 = vmatpush.xpose.msra.mxu0 0.0
    %1822 = vmatpush.xpose.msra.mxu0 0.0
    %1823 = vmatpush.xpose.msra.mxu0 0.0
    %1824 = vmatpush.xpose.msra.mxu0 0.0
    %1825 = vmatpush.xpose.msra.mxu0 0.0
    %1826 = vmatpush.xpose.msra.mxu0 0.0
    %1827 = vmatpush.xpose.msra.mxu0 0.0
    %1828 = vmatpush.xpose.msra.mxu0 0.0
    %1829 = vmatpush.xpose.msra.mxu0 0.0
    %1830 = vmatpush.xpose.msra.mxu0 %v364
    %1831 = vmatpush.xpose.msra.mxu0 %v108
    %1832 = vmatmul.f32.gmra.mxu0 %v697
    %v1833 = vpop.f32.mrf.mxu0
    %v1834 = vadd.f32 %v1814, %v1833
    %1835 = vdwg.mxu0
    %1836 = vmatpush.xpose.msra.mxu0 0.0
    %1837 = vmatpush.xpose.msra.mxu0 0.0
    %1838 = vmatpush.xpose.msra.mxu0 0.0
    %1839 = vmatpush.xpose.msra.mxu0 0.0
    %1840 = vmatpush.xpose.msra.mxu0 0.0
    %1841 = vmatpush.xpose.msra.mxu0 0.0
    %1842 = vmatpush.xpose.msra.mxu0 0.0
    %1843 = vmatpush.xpose.msra.mxu0 0.0
    %1844 = vmatpush.xpose.msra.mxu0 0.0
    %1845 = vmatpush.xpose.msra.mxu0 0.0
    %1846 = vmatpush.xpose.msra.mxu0 0.0
    %1847 = vmatpush.xpose.msra.mxu0 0.0
    %1848 = vmatpush.xpose.msra.mxu0 0.0
    %1849 = vmatpush.xpose.msra.mxu0 0.0
    %1850 = vmatpush.xpose.msra.mxu0 %v365
    %1851 = vmatpush.xpose.msra.mxu0 %v109
    %1852 = vmatmul.f32.gmra.mxu0 %v698
    %v1853 = vpop.f32.mrf.mxu0
    %v1854 = vadd.f32 %v1834, %v1853
    %1855 = vdwg.mxu0
    %1856 = vmatpush.xpose.msra.mxu0 0.0
    %1857 = vmatpush.xpose.msra.mxu0 0.0
    %1858 = vmatpush.xpose.msra.mxu0 0.0
    %1859 = vmatpush.xpose.msra.mxu0 0.0
    %1860 = vmatpush.xpose.msra.mxu0 0.0
    %1861 = vmatpush.xpose.msra.mxu0 0.0
    %1862 = vmatpush.xpose.msra.mxu0 0.0
    %1863 = vmatpush.xpose.msra.mxu0 0.0
    %1864 = vmatpush.xpose.msra.mxu0 0.0
    %1865 = vmatpush.xpose.msra.mxu0 0.0
    %1866 = vmatpush.xpose.msra.mxu0 0.0
    %1867 = vmatpush.xpose.msra.mxu0 0.0
    %1868 = vmatpush.xpose.msra.mxu0 0.0
    %1869 = vmatpush.xpose.msra.mxu0 0.0
    %1870 = vmatpush.xpose.msra.mxu0 %v366
    %1871 = vmatpush.xpose.msra.mxu0 %v110
    %1872 = vmatmul.f32.gmra.mxu0 %v699
    %v1873 = vpop.f32.mrf.mxu0
    %v1874 = vadd.f32 %v1854, %v1873
    %1875 = vdwg.mxu0
    %1876 = vmatpush.xpose.msra.mxu0 0.0
    %1877 = vmatpush.xpose.msra.mxu0 0.0
    %1878 = vmatpush.xpose.msra.mxu0 0.0
    %1879 = vmatpush.xpose.msra.mxu0 0.0
    %1880 = vmatpush.xpose.msra.mxu0 0.0
    %1881 = vmatpush.xpose.msra.mxu0 0.0
    %1882 = vmatpush.xpose.msra.mxu0 0.0
    %1883 = vmatpush.xpose.msra.mxu0 0.0
    %1884 = vmatpush.xpose.msra.mxu0 0.0
    %1885 = vmatpush.xpose.msra.mxu0 0.0
    %1886 = vmatpush.xpose.msra.mxu0 0.0
    %1887 = vmatpush.xpose.msra.mxu0 0.0
    %1888 = vmatpush.xpose.msra.mxu0 0.0
    %1889 = vmatpush.xpose.msra.mxu0 0.0
    %1890 = vmatpush.xpose.msra.mxu0 %v367
    %1891 = vmatpush.xpose.msra.mxu0 %v111
    %1892 = vmatmul.f32.gmra.mxu0 %v702
    %v1893 = vpop.f32.mrf.mxu0
    %v1894 = vadd.f32 %v1874, %v1893
    %1895 = vdwg.mxu0
    %1896 = vmatpush.xpose.msra.mxu0 0.0
    %1897 = vmatpush.xpose.msra.mxu0 0.0
    %1898 = vmatpush.xpose.msra.mxu0 0.0
    %1899 = vmatpush.xpose.msra.mxu0 0.0
    %1900 = vmatpush.xpose.msra.mxu0 0.0
    %1901 = vmatpush.xpose.msra.mxu0 0.0
    %1902 = vmatpush.xpose.msra.mxu0 0.0
    %1903 = vmatpush.xpose.msra.mxu0 0.0
    %1904 = vmatpush.xpose.msra.mxu0 0.0
    %1905 = vmatpush.xpose.msra.mxu0 0.0
    %1906 = vmatpush.xpose.msra.mxu0 0.0
    %1907 = vmatpush.xpose.msra.mxu0 0.0
    %1908 = vmatpush.xpose.msra.mxu0 0.0
    %1909 = vmatpush.xpose.msra.mxu0 0.0
    %1910 = vmatpush.xpose.msra.mxu0 %v368
    %1911 = vmatpush.xpose.msra.mxu0 %v112
    %1912 = vmatmul.f32.gmra.mxu0 %v703
    %v1913 = vpop.f32.mrf.mxu0
    %v1914 = vadd.f32 %v1894, %v1913
    %1915 = vdwg.mxu0
    %1916 = vmatpush.xpose.msra.mxu0 0.0
    %1917 = vmatpush.xpose.msra.mxu0 0.0
    %1918 = vmatpush.xpose.msra.mxu0 0.0
    %1919 = vmatpush.xpose.msra.mxu0 0.0
    %1920 = vmatpush.xpose.msra.mxu0 0.0
    %1921 = vmatpush.xpose.msra.mxu0 0.0
    %1922 = vmatpush.xpose.msra.mxu0 0.0
    %1923 = vmatpush.xpose.msra.mxu0 0.0
    %1924 = vmatpush.xpose.msra.mxu0 0.0
    %1925 = vmatpush.xpose.msra.mxu0 0.0
    %1926 = vmatpush.xpose.msra.mxu0 0.0
    %1927 = vmatpush.xpose.msra.mxu0 0.0
    %1928 = vmatpush.xpose.msra.mxu0 0.0
    %1929 = vmatpush.xpose.msra.mxu0 0.0
    %1930 = vmatpush.xpose.msra.mxu0 %v369
    %1931 = vmatpush.xpose.msra.mxu0 %v113
    %1932 = vmatmul.f32.gmra.mxu0 %v704
    %v1933 = vpop.f32.mrf.mxu0
    %v1934 = vadd.f32 %v1914, %v1933
    %1935 = vdwg.mxu0
    %1936 = vmatpush.xpose.msra.mxu0 0.0
    %1937 = vmatpush.xpose.msra.mxu0 0.0
    %1938 = vmatpush.xpose.msra.mxu0 0.0
    %1939 = vmatpush.xpose.msra.mxu0 0.0
    %1940 = vmatpush.xpose.msra.mxu0 0.0
    %1941 = vmatpush.xpose.msra.mxu0 0.0
    %1942 = vmatpush.xpose.msra.mxu0 0.0
    %1943 = vmatpush.xpose.msra.mxu0 0.0
    %1944 = vmatpush.xpose.msra.mxu0 0.0
    %1945 = vmatpush.xpose.msra.mxu0 0.0
    %1946 = vmatpush.xpose.msra.mxu0 0.0
    %1947 = vmatpush.xpose.msra.mxu0 0.0
    %1948 = vmatpush.xpose.msra.mxu0 0.0
    %1949 = vmatpush.xpose.msra.mxu0 0.0
    %1950 = vmatpush.xpose.msra.mxu0 %v370
    %1951 = vmatpush.xpose.msra.mxu0 %v114
    %1952 = vmatmul.f32.gmra.mxu0 %v705
    %v1953 = vpop.f32.mrf.mxu0
    %v1954 = vadd.f32 %v1934, %v1953
    %1955 = vdwg.mxu0
    %1956 = vmatpush.xpose.msra.mxu0 0.0
    %1957 = vmatpush.xpose.msra.mxu0 0.0
    %1958 = vmatpush.xpose.msra.mxu0 0.0
    %1959 = vmatpush.xpose.msra.mxu0 0.0
    %1960 = vmatpush.xpose.msra.mxu0 0.0
    %1961 = vmatpush.xpose.msra.mxu0 0.0
    %1962 = vmatpush.xpose.msra.mxu0 0.0
    %1963 = vmatpush.xpose.msra.mxu0 0.0
    %1964 = vmatpush.xpose.msra.mxu0 0.0
    %1965 = vmatpush.xpose.msra.mxu0 0.0
    %1966 = vmatpush.xpose.msra.mxu0 0.0
    %1967 = vmatpush.xpose.msra.mxu0 0.0
    %1968 = vmatpush.xpose.msra.mxu0 0.0
    %1969 = vmatpush.xpose.msra.mxu0 0.0
    %1970 = vmatpush.xpose.msra.mxu0 %v371
    %1971 = vmatpush.xpose.msra.mxu0 %v115
    %1972 = vmatmul.f32.gmra.mxu0 %v706
    %v1973 = vpop.f32.mrf.mxu0
    %v1974 = vadd.f32 %v1954, %v1973
    %1975 = vdwg.mxu0
    %1976 = vmatpush.xpose.msra.mxu0 0.0
    %1977 = vmatpush.xpose.msra.mxu0 0.0
    %1978 = vmatpush.xpose.msra.mxu0 0.0
    %1979 = vmatpush.xpose.msra.mxu0 0.0
    %1980 = vmatpush.xpose.msra.mxu0 0.0
    %1981 = vmatpush.xpose.msra.mxu0 0.0
    %1982 = vmatpush.xpose.msra.mxu0 0.0
    %1983 = vmatpush.xpose.msra.mxu0 0.0
    %1984 = vmatpush.xpose.msra.mxu0 0.0
    %1985 = vmatpush.xpose.msra.mxu0 0.0
    %1986 = vmatpush.xpose.msra.mxu0 0.0
    %1987 = vmatpush.xpose.msra.mxu0 0.0
    %1988 = vmatpush.xpose.msra.mxu0 0.0
    %1989 = vmatpush.xpose.msra.mxu0 0.0
    %1990 = vmatpush.xpose.msra.mxu0 %v372
    %1991 = vmatpush.xpose.msra.mxu0 %v116
    %1992 = vmatmul.f32.gmra.mxu0 %v707
    %v1993 = vpop.f32.mrf.mxu0
    %v1994 = vadd.f32 %v1974, %v1993
    %1995 = vdwg.mxu0
    %1996 = vmatpush.xpose.msra.mxu0 0.0
    %1997 = vmatpush.xpose.msra.mxu0 0.0
    %1998 = vmatpush.xpose.msra.mxu0 0.0
    %1999 = vmatpush.xpose.msra.mxu0 0.0
    %2000 = vmatpush.xpose.msra.mxu0 0.0
    %2001 = vmatpush.xpose.msra.mxu0 0.0
    %2002 = vmatpush.xpose.msra.mxu0 0.0
    %2003 = vmatpush.xpose.msra.mxu0 0.0
    %2004 = vmatpush.xpose.msra.mxu0 0.0
    %2005 = vmatpush.xpose.msra.mxu0 0.0
    %2006 = vmatpush.xpose.msra.mxu0 0.0
    %2007 = vmatpush.xpose.msra.mxu0 0.0
    %2008 = vmatpush.xpose.msra.mxu0 0.0
    %2009 = vmatpush.xpose.msra.mxu0 0.0
    %2010 = vmatpush.xpose.msra.mxu0 %v373
    %2011 = vmatpush.xpose.msra.mxu0 %v117
    %2012 = vmatmul.f32.gmra.mxu0 %v708
    %v2013 = vpop.f32.mrf.mxu0
    %v2014 = vadd.f32 %v1994, %v2013
    %2015 = vdwg.mxu0
    %2016 = vmatpush.xpose.msra.mxu0 0.0
    %2017 = vmatpush.xpose.msra.mxu0 0.0
    %2018 = vmatpush.xpose.msra.mxu0 0.0
    %2019 = vmatpush.xpose.msra.mxu0 0.0
    %2020 = vmatpush.xpose.msra.mxu0 0.0
    %2021 = vmatpush.xpose.msra.mxu0 0.0
    %2022 = vmatpush.xpose.msra.mxu0 0.0
    %2023 = vmatpush.xpose.msra.mxu0 0.0
    %2024 = vmatpush.xpose.msra.mxu0 0.0
    %2025 = vmatpush.xpose.msra.mxu0 0.0
    %2026 = vmatpush.xpose.msra.mxu0 0.0
    %2027 = vmatpush.xpose.msra.mxu0 0.0
    %2028 = vmatpush.xpose.msra.mxu0 0.0
    %2029 = vmatpush.xpose.msra.mxu0 0.0
    %2030 = vmatpush.xpose.msra.mxu0 %v374
    %2031 = vmatpush.xpose.msra.mxu0 %v118
    %2032 = vmatmul.f32.gmra.mxu0 %v709
    %v2033 = vpop.f32.mrf.mxu0
    %v2034 = vadd.f32 %v2014, %v2033
    %2035 = vdwg.mxu0
    %2036 = vmatpush.xpose.msra.mxu0 0.0
    %2037 = vmatpush.xpose.msra.mxu0 0.0
    %2038 = vmatpush.xpose.msra.mxu0 0.0
    %2039 = vmatpush.xpose.msra.mxu0 0.0
    %2040 = vmatpush.xpose.msra.mxu0 0.0
    %2041 = vmatpush.xpose.msra.mxu0 0.0
    %2042 = vmatpush.xpose.msra.mxu0 0.0
    %2043 = vmatpush.xpose.msra.mxu0 0.0
    %2044 = vmatpush.xpose.msra.mxu0 0.0
    %2045 = vmatpush.xpose.msra.mxu0 0.0
    %2046 = vmatpush.xpose.msra.mxu0 0.0
    %2047 = vmatpush.xpose.msra.mxu0 0.0
    %2048 = vmatpush.xpose.msra.mxu0 0.0
    %2049 = vmatpush.xpose.msra.mxu0 0.0
    %2050 = vmatpush.xpose.msra.mxu0 %v375
    %2051 = vmatpush.xpose.msra.mxu0 %v119
    %2052 = vmatmul.f32.gmra.mxu0 %v712
    %v2053 = vpop.f32.mrf.mxu0
    %v2054 = vadd.f32 %v2034, %v2053
    %2055 = vdwg.mxu0
    %2056 = vmatpush.xpose.msra.mxu0 0.0
    %2057 = vmatpush.xpose.msra.mxu0 0.0
    %2058 = vmatpush.xpose.msra.mxu0 0.0
    %2059 = vmatpush.xpose.msra.mxu0 0.0
    %2060 = vmatpush.xpose.msra.mxu0 0.0
    %2061 = vmatpush.xpose.msra.mxu0 0.0
    %2062 = vmatpush.xpose.msra.mxu0 0.0
    %2063 = vmatpush.xpose.msra.mxu0 0.0
    %2064 = vmatpush.xpose.msra.mxu0 0.0
    %2065 = vmatpush.xpose.msra.mxu0 0.0
    %2066 = vmatpush.xpose.msra.mxu0 0.0
    %2067 = vmatpush.xpose.msra.mxu0 0.0
    %2068 = vmatpush.xpose.msra.mxu0 0.0
    %2069 = vmatpush.xpose.msra.mxu0 0.0
    %2070 = vmatpush.xpose.msra.mxu0 %v376
    %2071 = vmatpush.xpose.msra.mxu0 %v120
    %2072 = vmatmul.f32.gmra.mxu0 %v713
    %v2073 = vpop.f32.mrf.mxu0
    %v2074 = vadd.f32 %v2054, %v2073
    %2075 = vdwg.mxu0
    %2076 = vmatpush.xpose.msra.mxu0 0.0
    %2077 = vmatpush.xpose.msra.mxu0 0.0
    %2078 = vmatpush.xpose.msra.mxu0 0.0
    %2079 = vmatpush.xpose.msra.mxu0 0.0
    %2080 = vmatpush.xpose.msra.mxu0 0.0
    %2081 = vmatpush.xpose.msra.mxu0 0.0
    %2082 = vmatpush.xpose.msra.mxu0 0.0
    %2083 = vmatpush.xpose.msra.mxu0 0.0
    %2084 = vmatpush.xpose.msra.mxu0 0.0
    %2085 = vmatpush.xpose.msra.mxu0 0.0
    %2086 = vmatpush.xpose.msra.mxu0 0.0
    %2087 = vmatpush.xpose.msra.mxu0 0.0
    %2088 = vmatpush.xpose.msra.mxu0 0.0
    %2089 = vmatpush.xpose.msra.mxu0 0.0
    %2090 = vmatpush.xpose.msra.mxu0 %v377
    %2091 = vmatpush.xpose.msra.mxu0 %v121
    %2092 = vmatmul.f32.gmra.mxu0 %v714
    %v2093 = vpop.f32.mrf.mxu0
    %v2094 = vadd.f32 %v2074, %v2093
    %2095 = vdwg.mxu0
    %2096 = vmatpush.xpose.msra.mxu0 0.0
    %2097 = vmatpush.xpose.msra.mxu0 0.0
    %2098 = vmatpush.xpose.msra.mxu0 0.0
    %2099 = vmatpush.xpose.msra.mxu0 0.0
    %2100 = vmatpush.xpose.msra.mxu0 0.0
    %2101 = vmatpush.xpose.msra.mxu0 0.0
    %2102 = vmatpush.xpose.msra.mxu0 0.0
    %2103 = vmatpush.xpose.msra.mxu0 0.0
    %2104 = vmatpush.xpose.msra.mxu0 0.0
    %2105 = vmatpush.xpose.msra.mxu0 0.0
    %2106 = vmatpush.xpose.msra.mxu0 0.0
    %2107 = vmatpush.xpose.msra.mxu0 0.0
    %2108 = vmatpush.xpose.msra.mxu0 0.0
    %2109 = vmatpush.xpose.msra.mxu0 0.0
    %2110 = vmatpush.xpose.msra.mxu0 %v378
    %2111 = vmatpush.xpose.msra.mxu0 %v122
    %2112 = vmatmul.f32.gmra.mxu0 %v715
    %v2113 = vpop.f32.mrf.mxu0
    %v2114 = vadd.f32 %v2094, %v2113
    %2115 = vdwg.mxu0
    %2116 = vmatpush.xpose.msra.mxu0 0.0
    %2117 = vmatpush.xpose.msra.mxu0 0.0
    %2118 = vmatpush.xpose.msra.mxu0 0.0
    %2119 = vmatpush.xpose.msra.mxu0 0.0
    %2120 = vmatpush.xpose.msra.mxu0 0.0
    %2121 = vmatpush.xpose.msra.mxu0 0.0
    %2122 = vmatpush.xpose.msra.mxu0 0.0
    %2123 = vmatpush.xpose.msra.mxu0 0.0
    %2124 = vmatpush.xpose.msra.mxu0 0.0
    %2125 = vmatpush.xpose.msra.mxu0 0.0
    %2126 = vmatpush.xpose.msra.mxu0 0.0
    %2127 = vmatpush.xpose.msra.mxu0 0.0
    %2128 = vmatpush.xpose.msra.mxu0 0.0
    %2129 = vmatpush.xpose.msra.mxu0 0.0
    %2130 = vmatpush.xpose.msra.mxu0 %v379
    %2131 = vmatpush.xpose.msra.mxu0 %v123
    %2132 = vmatmul.f32.gmra.mxu0 %v716
    %v2133 = vpop.f32.mrf.mxu0
    %v2134 = vadd.f32 %v2114, %v2133
    %2135 = vdwg.mxu0
    %2136 = vmatpush.xpose.msra.mxu0 0.0
    %2137 = vmatpush.xpose.msra.mxu0 0.0
    %2138 = vmatpush.xpose.msra.mxu0 0.0
    %2139 = vmatpush.xpose.msra.mxu0 0.0
    %2140 = vmatpush.xpose.msra.mxu0 0.0
    %2141 = vmatpush.xpose.msra.mxu0 0.0
    %2142 = vmatpush.xpose.msra.mxu0 0.0
    %2143 = vmatpush.xpose.msra.mxu0 0.0
    %2144 = vmatpush.xpose.msra.mxu0 0.0
    %2145 = vmatpush.xpose.msra.mxu0 0.0
    %2146 = vmatpush.xpose.msra.mxu0 0.0
    %2147 = vmatpush.xpose.msra.mxu0 0.0
    %2148 = vmatpush.xpose.msra.mxu0 0.0
    %2149 = vmatpush.xpose.msra.mxu0 0.0
    %2150 = vmatpush.xpose.msra.mxu0 %v380
    %2151 = vmatpush.xpose.msra.mxu0 %v124
    %2152 = vmatmul.f32.gmra.mxu0 %v717
    %v2153 = vpop.f32.mrf.mxu0
    %v2154 = vadd.f32 %v2134, %v2153
    %2155 = vdwg.mxu0
    %2156 = vmatpush.xpose.msra.mxu0 0.0
    %2157 = vmatpush.xpose.msra.mxu0 0.0
    %2158 = vmatpush.xpose.msra.mxu0 0.0
    %2159 = vmatpush.xpose.msra.mxu0 0.0
    %2160 = vmatpush.xpose.msra.mxu0 0.0
    %2161 = vmatpush.xpose.msra.mxu0 0.0
    %2162 = vmatpush.xpose.msra.mxu0 0.0
    %2163 = vmatpush.xpose.msra.mxu0 0.0
    %2164 = vmatpush.xpose.msra.mxu0 0.0
    %2165 = vmatpush.xpose.msra.mxu0 0.0
    %2166 = vmatpush.xpose.msra.mxu0 0.0
    %2167 = vmatpush.xpose.msra.mxu0 0.0
    %2168 = vmatpush.xpose.msra.mxu0 0.0
    %2169 = vmatpush.xpose.msra.mxu0 0.0
    %2170 = vmatpush.xpose.msra.mxu0 %v381
    %2171 = vmatpush.xpose.msra.mxu0 %v125
    %2172 = vmatmul.f32.gmra.mxu0 %v718
    %v2173 = vpop.f32.mrf.mxu0
    %v2174 = vadd.f32 %v2154, %v2173
    %2175 = vdwg.mxu0
    %2176 = vmatpush.xpose.msra.mxu0 0.0
    %2177 = vmatpush.xpose.msra.mxu0 0.0
    %2178 = vmatpush.xpose.msra.mxu0 0.0
    %2179 = vmatpush.xpose.msra.mxu0 0.0
    %2180 = vmatpush.xpose.msra.mxu0 0.0
    %2181 = vmatpush.xpose.msra.mxu0 0.0
    %2182 = vmatpush.xpose.msra.mxu0 0.0
    %2183 = vmatpush.xpose.msra.mxu0 0.0
    %2184 = vmatpush.xpose.msra.mxu0 0.0
    %2185 = vmatpush.xpose.msra.mxu0 0.0
    %2186 = vmatpush.xpose.msra.mxu0 0.0
    %2187 = vmatpush.xpose.msra.mxu0 0.0
    %2188 = vmatpush.xpose.msra.mxu0 0.0
    %2189 = vmatpush.xpose.msra.mxu0 0.0
    %2190 = vmatpush.xpose.msra.mxu0 %v382
    %2191 = vmatpush.xpose.msra.mxu0 %v126
    %2192 = vmatmul.f32.gmra.mxu0 %v719
    %v2193 = vpop.f32.mrf.mxu0
    %v2194 = vadd.f32 %v2174, %v2193
    %2195 = vdwg.mxu0
    %2196 = vmatpush.xpose.msra.mxu0 0.0
    %2197 = vmatpush.xpose.msra.mxu0 0.0
    %2198 = vmatpush.xpose.msra.mxu0 0.0
    %2199 = vmatpush.xpose.msra.mxu0 0.0
    %2200 = vmatpush.xpose.msra.mxu0 0.0
    %2201 = vmatpush.xpose.msra.mxu0 0.0
    %2202 = vmatpush.xpose.msra.mxu0 0.0
    %2203 = vmatpush.xpose.msra.mxu0 0.0
    %2204 = vmatpush.xpose.msra.mxu0 0.0
    %2205 = vmatpush.xpose.msra.mxu0 0.0
    %2206 = vmatpush.xpose.msra.mxu0 0.0
    %2207 = vmatpush.xpose.msra.mxu0 0.0
    %2208 = vmatpush.xpose.msra.mxu0 0.0
    %2209 = vmatpush.xpose.msra.mxu0 0.0
    %2210 = vmatpush.xpose.msra.mxu0 %v383
    %2211 = vmatpush.xpose.msra.mxu0 %v127
    %2212 = vmatmul.f32.gmra.mxu0 %v722
    %v2213 = vpop.f32.mrf.mxu0
    %v2214 = vadd.f32 %v2194, %v2213
    %2215 = vdwg.mxu0
    %2216 = vmatpush.xpose.msra.mxu0 0.0
    %2217 = vmatpush.xpose.msra.mxu0 0.0
    %2218 = vmatpush.xpose.msra.mxu0 0.0
    %2219 = vmatpush.xpose.msra.mxu0 0.0
    %2220 = vmatpush.xpose.msra.mxu0 0.0
    %2221 = vmatpush.xpose.msra.mxu0 0.0
    %2222 = vmatpush.xpose.msra.mxu0 0.0
    %2223 = vmatpush.xpose.msra.mxu0 0.0
    %2224 = vmatpush.xpose.msra.mxu0 0.0
    %2225 = vmatpush.xpose.msra.mxu0 0.0
    %2226 = vmatpush.xpose.msra.mxu0 0.0
    %2227 = vmatpush.xpose.msra.mxu0 0.0
    %2228 = vmatpush.xpose.msra.mxu0 0.0
    %2229 = vmatpush.xpose.msra.mxu0 0.0
    %2230 = vmatpush.xpose.msra.mxu0 %v384
    %2231 = vmatpush.xpose.msra.mxu0 %v128
    %2232 = vmatmul.f32.gmra.mxu0 %v723
    %v2233 = vpop.f32.mrf.mxu0
    %v2234 = vadd.f32 %v2214, %v2233
    %2235 = vdwg.mxu0
    %2236 = vmatpush.xpose.msra.mxu0 0.0
    %2237 = vmatpush.xpose.msra.mxu0 0.0
    %2238 = vmatpush.xpose.msra.mxu0 0.0
    %2239 = vmatpush.xpose.msra.mxu0 0.0
    %2240 = vmatpush.xpose.msra.mxu0 0.0
    %2241 = vmatpush.xpose.msra.mxu0 0.0
    %2242 = vmatpush.xpose.msra.mxu0 0.0
    %2243 = vmatpush.xpose.msra.mxu0 0.0
    %2244 = vmatpush.xpose.msra.mxu0 0.0
    %2245 = vmatpush.xpose.msra.mxu0 0.0
    %2246 = vmatpush.xpose.msra.mxu0 0.0
    %2247 = vmatpush.xpose.msra.mxu0 0.0
    %2248 = vmatpush.xpose.msra.mxu0 0.0
    %2249 = vmatpush.xpose.msra.mxu0 0.0
    %2250 = vmatpush.xpose.msra.mxu0 %v385
    %2251 = vmatpush.xpose.msra.mxu0 %v129
    %2252 = vmatmul.f32.gmra.mxu0 %v724
    %v2253 = vpop.f32.mrf.mxu0
    %v2254 = vadd.f32 %v2234, %v2253
    %2255 = vdwg.mxu0
    %2256 = vmatpush.xpose.msra.mxu0 0.0
    %2257 = vmatpush.xpose.msra.mxu0 0.0
    %2258 = vmatpush.xpose.msra.mxu0 0.0
    %2259 = vmatpush.xpose.msra.mxu0 0.0
    %2260 = vmatpush.xpose.msra.mxu0 0.0
    %2261 = vmatpush.xpose.msra.mxu0 0.0
    %2262 = vmatpush.xpose.msra.mxu0 0.0
    %2263 = vmatpush.xpose.msra.mxu0 0.0
    %2264 = vmatpush.xpose.msra.mxu0 0.0
    %2265 = vmatpush.xpose.msra.mxu0 0.0
    %2266 = vmatpush.xpose.msra.mxu0 0.0
    %2267 = vmatpush.xpose.msra.mxu0 0.0
    %2268 = vmatpush.xpose.msra.mxu0 0.0
    %2269 = vmatpush.xpose.msra.mxu0 0.0
    %2270 = vmatpush.xpose.msra.mxu0 %v386
    %2271 = vmatpush.xpose.msra.mxu0 %v130
    %2272 = vmatmul.f32.gmra.mxu0 %v725
    %v2273 = vpop.f32.mrf.mxu0
    %v2274 = vadd.f32 %v2254, %v2273
    %2275 = vdwg.mxu0
    %2276 = vmatpush.xpose.msra.mxu0 0.0
    %2277 = vmatpush.xpose.msra.mxu0 0.0
    %2278 = vmatpush.xpose.msra.mxu0 0.0
    %2279 = vmatpush.xpose.msra.mxu0 0.0
    %2280 = vmatpush.xpose.msra.mxu0 0.0
    %2281 = vmatpush.xpose.msra.mxu0 0.0
    %2282 = vmatpush.xpose.msra.mxu0 0.0
    %2283 = vmatpush.xpose.msra.mxu0 0.0
    %2284 = vmatpush.xpose.msra.mxu0 0.0
    %2285 = vmatpush.xpose.msra.mxu0 0.0
    %2286 = vmatpush.xpose.msra.mxu0 0.0
    %2287 = vmatpush.xpose.msra.mxu0 0.0
    %2288 = vmatpush.xpose.msra.mxu0 0.0
    %2289 = vmatpush.xpose.msra.mxu0 0.0
    %2290 = vmatpush.xpose.msra.mxu0 %v387
    %2291 = vmatpush.xpose.msra.mxu0 %v131
    %2292 = vmatmul.f32.gmra.mxu0 %v726
    %v2293 = vpop.f32.mrf.mxu0
    %v2294 = vadd.f32 %v2274, %v2293
    %2295 = vdwg.mxu0
    %2296 = vmatpush.xpose.msra.mxu0 0.0
    %2297 = vmatpush.xpose.msra.mxu0 0.0
    %2298 = vmatpush.xpose.msra.mxu0 0.0
    %2299 = vmatpush.xpose.msra.mxu0 0.0
    %2300 = vmatpush.xpose.msra.mxu0 0.0
    %2301 = vmatpush.xpose.msra.mxu0 0.0
    %2302 = vmatpush.xpose.msra.mxu0 0.0
    %2303 = vmatpush.xpose.msra.mxu0 0.0
    %2304 = vmatpush.xpose.msra.mxu0 0.0
    %2305 = vmatpush.xpose.msra.mxu0 0.0
    %2306 = vmatpush.xpose.msra.mxu0 0.0
    %2307 = vmatpush.xpose.msra.mxu0 0.0
    %2308 = vmatpush.xpose.msra.mxu0 0.0
    %2309 = vmatpush.xpose.msra.mxu0 0.0
    %2310 = vmatpush.xpose.msra.mxu0 %v388
    %2311 = vmatpush.xpose.msra.mxu0 %v132
    %2312 = vmatmul.f32.gmra.mxu0 %v727
    %v2313 = vpop.f32.mrf.mxu0
    %v2314 = vadd.f32 %v2294, %v2313
    %2315 = vdwg.mxu0
    %2316 = vmatpush.xpose.msra.mxu0 0.0
    %2317 = vmatpush.xpose.msra.mxu0 0.0
    %2318 = vmatpush.xpose.msra.mxu0 0.0
    %2319 = vmatpush.xpose.msra.mxu0 0.0
    %2320 = vmatpush.xpose.msra.mxu0 0.0
    %2321 = vmatpush.xpose.msra.mxu0 0.0
    %2322 = vmatpush.xpose.msra.mxu0 0.0
    %2323 = vmatpush.xpose.msra.mxu0 0.0
    %2324 = vmatpush.xpose.msra.mxu0 0.0
    %2325 = vmatpush.xpose.msra.mxu0 0.0
    %2326 = vmatpush.xpose.msra.mxu0 0.0
    %2327 = vmatpush.xpose.msra.mxu0 0.0
    %2328 = vmatpush.xpose.msra.mxu0 0.0
    %2329 = vmatpush.xpose.msra.mxu0 0.0
    %2330 = vmatpush.xpose.msra.mxu0 %v389
    %2331 = vmatpush.xpose.msra.mxu0 %v133
    %2332 = vmatmul.f32.gmra.mxu0 %v728
    %v2333 = vpop.f32.mrf.mxu0
    %v2334 = vadd.f32 %v2314, %v2333
    %2335 = vdwg.mxu0
    %2336 = vmatpush.xpose.msra.mxu0 0.0
    %2337 = vmatpush.xpose.msra.mxu0 0.0
    %2338 = vmatpush.xpose.msra.mxu0 0.0
    %2339 = vmatpush.xpose.msra.mxu0 0.0
    %2340 = vmatpush.xpose.msra.mxu0 0.0
    %2341 = vmatpush.xpose.msra.mxu0 0.0
    %2342 = vmatpush.xpose.msra.mxu0 0.0
    %2343 = vmatpush.xpose.msra.mxu0 0.0
    %2344 = vmatpush.xpose.msra.mxu0 0.0
    %2345 = vmatpush.xpose.msra.mxu0 0.0
    %2346 = vmatpush.xpose.msra.mxu0 0.0
    %2347 = vmatpush.xpose.msra.mxu0 0.0
    %2348 = vmatpush.xpose.msra.mxu0 0.0
    %2349 = vmatpush.xpose.msra.mxu0 0.0
    %2350 = vmatpush.xpose.msra.mxu0 %v390
    %2351 = vmatpush.xpose.msra.mxu0 %v134
    %2352 = vmatmul.f32.gmra.mxu0 %v729
    %v2353 = vpop.f32.mrf.mxu0
    %v2354 = vadd.f32 %v2334, %v2353
    %2355 = vdwg.mxu0
    %2356 = vmatpush.xpose.msra.mxu0 0.0
    %2357 = vmatpush.xpose.msra.mxu0 0.0
    %2358 = vmatpush.xpose.msra.mxu0 0.0
    %2359 = vmatpush.xpose.msra.mxu0 0.0
    %2360 = vmatpush.xpose.msra.mxu0 0.0
    %2361 = vmatpush.xpose.msra.mxu0 0.0
    %2362 = vmatpush.xpose.msra.mxu0 0.0
    %2363 = vmatpush.xpose.msra.mxu0 0.0
    %2364 = vmatpush.xpose.msra.mxu0 0.0
    %2365 = vmatpush.xpose.msra.mxu0 0.0
    %2366 = vmatpush.xpose.msra.mxu0 0.0
    %2367 = vmatpush.xpose.msra.mxu0 0.0
    %2368 = vmatpush.xpose.msra.mxu0 0.0
    %2369 = vmatpush.xpose.msra.mxu0 0.0
    %2370 = vmatpush.xpose.msra.mxu0 %v391
    %2371 = vmatpush.xpose.msra.mxu0 %v135
    %2372 = vmatmul.f32.gmra.mxu0 %v732
    %v2373 = vpop.f32.mrf.mxu0
    %v2374 = vadd.f32 %v2354, %v2373
    %2375 = vdwg.mxu0
    %2376 = vmatpush.xpose.msra.mxu0 0.0
    %2377 = vmatpush.xpose.msra.mxu0 0.0
    %2378 = vmatpush.xpose.msra.mxu0 0.0
    %2379 = vmatpush.xpose.msra.mxu0 0.0
    %2380 = vmatpush.xpose.msra.mxu0 0.0
    %2381 = vmatpush.xpose.msra.mxu0 0.0
    %2382 = vmatpush.xpose.msra.mxu0 0.0
    %2383 = vmatpush.xpose.msra.mxu0 0.0
    %2384 = vmatpush.xpose.msra.mxu0 0.0
    %2385 = vmatpush.xpose.msra.mxu0 0.0
    %2386 = vmatpush.xpose.msra.mxu0 0.0
    %2387 = vmatpush.xpose.msra.mxu0 0.0
    %2388 = vmatpush.xpose.msra.mxu0 0.0
    %2389 = vmatpush.xpose.msra.mxu0 0.0
    %2390 = vmatpush.xpose.msra.mxu0 %v392
    %2391 = vmatpush.xpose.msra.mxu0 %v136
    %2392 = vmatmul.f32.gmra.mxu0 %v733
    %v2393 = vpop.f32.mrf.mxu0
    %v2394 = vadd.f32 %v2374, %v2393
    %2395 = vdwg.mxu0
    %2396 = vmatpush.xpose.msra.mxu0 0.0
    %2397 = vmatpush.xpose.msra.mxu0 0.0
    %2398 = vmatpush.xpose.msra.mxu0 0.0
    %2399 = vmatpush.xpose.msra.mxu0 0.0
    %2400 = vmatpush.xpose.msra.mxu0 0.0
    %2401 = vmatpush.xpose.msra.mxu0 0.0
    %2402 = vmatpush.xpose.msra.mxu0 0.0
    %2403 = vmatpush.xpose.msra.mxu0 0.0
    %2404 = vmatpush.xpose.msra.mxu0 0.0
    %2405 = vmatpush.xpose.msra.mxu0 0.0
    %2406 = vmatpush.xpose.msra.mxu0 0.0
    %2407 = vmatpush.xpose.msra.mxu0 0.0
    %2408 = vmatpush.xpose.msra.mxu0 0.0
    %2409 = vmatpush.xpose.msra.mxu0 0.0
    %2410 = vmatpush.xpose.msra.mxu0 %v393
    %2411 = vmatpush.xpose.msra.mxu0 %v137
    %2412 = vmatmul.f32.gmra.mxu0 %v734
    %v2413 = vpop.f32.mrf.mxu0
    %v2414 = vadd.f32 %v2394, %v2413
    %2415 = vdwg.mxu0
    %2416 = vmatpush.xpose.msra.mxu0 0.0
    %2417 = vmatpush.xpose.msra.mxu0 0.0
    %2418 = vmatpush.xpose.msra.mxu0 0.0
    %2419 = vmatpush.xpose.msra.mxu0 0.0
    %2420 = vmatpush.xpose.msra.mxu0 0.0
    %2421 = vmatpush.xpose.msra.mxu0 0.0
    %2422 = vmatpush.xpose.msra.mxu0 0.0
    %2423 = vmatpush.xpose.msra.mxu0 0.0
    %2424 = vmatpush.xpose.msra.mxu0 0.0
    %2425 = vmatpush.xpose.msra.mxu0 0.0
    %2426 = vmatpush.xpose.msra.mxu0 0.0
    %2427 = vmatpush.xpose.msra.mxu0 0.0
    %2428 = vmatpush.xpose.msra.mxu0 0.0
    %2429 = vmatpush.xpose.msra.mxu0 0.0
    %2430 = vmatpush.xpose.msra.mxu0 %v394
    %2431 = vmatpush.xpose.msra.mxu0 %v138
    %2432 = vmatmul.f32.gmra.mxu0 %v735
    %v2433 = vpop.f32.mrf.mxu0
    %v2434 = vadd.f32 %v2414, %v2433
    %2435 = vdwg.mxu0
    %2436 = vmatpush.xpose.msra.mxu0 0.0
    %2437 = vmatpush.xpose.msra.mxu0 0.0
    %2438 = vmatpush.xpose.msra.mxu0 0.0
    %2439 = vmatpush.xpose.msra.mxu0 0.0
    %2440 = vmatpush.xpose.msra.mxu0 0.0
    %2441 = vmatpush.xpose.msra.mxu0 0.0
    %2442 = vmatpush.xpose.msra.mxu0 0.0
    %2443 = vmatpush.xpose.msra.mxu0 0.0
    %2444 = vmatpush.xpose.msra.mxu0 0.0
    %2445 = vmatpush.xpose.msra.mxu0 0.0
    %2446 = vmatpush.xpose.msra.mxu0 0.0
    %2447 = vmatpush.xpose.msra.mxu0 0.0
    %2448 = vmatpush.xpose.msra.mxu0 0.0
    %2449 = vmatpush.xpose.msra.mxu0 0.0
    %2450 = vmatpush.xpose.msra.mxu0 %v395
    %2451 = vmatpush.xpose.msra.mxu0 %v139
    %2452 = vmatmul.f32.gmra.mxu0 %v736
    %v2453 = vpop.f32.mrf.mxu0
    %v2454 = vadd.f32 %v2434, %v2453
    %2455 = vdwg.mxu0
    %2456 = vmatpush.xpose.msra.mxu0 0.0
    %2457 = vmatpush.xpose.msra.mxu0 0.0
    %2458 = vmatpush.xpose.msra.mxu0 0.0
    %2459 = vmatpush.xpose.msra.mxu0 0.0
    %2460 = vmatpush.xpose.msra.mxu0 0.0
    %2461 = vmatpush.xpose.msra.mxu0 0.0
    %2462 = vmatpush.xpose.msra.mxu0 0.0
    %2463 = vmatpush.xpose.msra.mxu0 0.0
    %2464 = vmatpush.xpose.msra.mxu0 0.0
    %2465 = vmatpush.xpose.msra.mxu0 0.0
    %2466 = vmatpush.xpose.msra.mxu0 0.0
    %2467 = vmatpush.xpose.msra.mxu0 0.0
    %2468 = vmatpush.xpose.msra.mxu0 0.0
    %2469 = vmatpush.xpose.msra.mxu0 0.0
    %2470 = vmatpush.xpose.msra.mxu0 %v396
    %2471 = vmatpush.xpose.msra.mxu0 %v140
    %2472 = vmatmul.f32.gmra.mxu0 %v737
    %v2473 = vpop.f32.mrf.mxu0
    %v2474 = vadd.f32 %v2454, %v2473
    %2475 = vdwg.mxu0
    %2476 = vmatpush.xpose.msra.mxu0 0.0
    %2477 = vmatpush.xpose.msra.mxu0 0.0
    %2478 = vmatpush.xpose.msra.mxu0 0.0
    %2479 = vmatpush.xpose.msra.mxu0 0.0
    %2480 = vmatpush.xpose.msra.mxu0 0.0
    %2481 = vmatpush.xpose.msra.mxu0 0.0
    %2482 = vmatpush.xpose.msra.mxu0 0.0
    %2483 = vmatpush.xpose.msra.mxu0 0.0
    %2484 = vmatpush.xpose.msra.mxu0 0.0
    %2485 = vmatpush.xpose.msra.mxu0 0.0
    %2486 = vmatpush.xpose.msra.mxu0 0.0
    %2487 = vmatpush.xpose.msra.mxu0 0.0
    %2488 = vmatpush.xpose.msra.mxu0 0.0
    %2489 = vmatpush.xpose.msra.mxu0 0.0
    %2490 = vmatpush.xpose.msra.mxu0 %v397
    %2491 = vmatpush.xpose.msra.mxu0 %v141
    %2492 = vmatmul.f32.gmra.mxu0 %v738
    %v2493 = vpop.f32.mrf.mxu0
    %v2494 = vadd.f32 %v2474, %v2493
    %2495 = vdwg.mxu0
    %2496 = vmatpush.xpose.msra.mxu0 0.0
    %2497 = vmatpush.xpose.msra.mxu0 0.0
    %2498 = vmatpush.xpose.msra.mxu0 0.0
    %2499 = vmatpush.xpose.msra.mxu0 0.0
    %2500 = vmatpush.xpose.msra.mxu0 0.0
    %2501 = vmatpush.xpose.msra.mxu0 0.0
    %2502 = vmatpush.xpose.msra.mxu0 0.0
    %2503 = vmatpush.xpose.msra.mxu0 0.0
    %2504 = vmatpush.xpose.msra.mxu0 0.0
    %2505 = vmatpush.xpose.msra.mxu0 0.0
    %2506 = vmatpush.xpose.msra.mxu0 0.0
    %2507 = vmatpush.xpose.msra.mxu0 0.0
    %2508 = vmatpush.xpose.msra.mxu0 0.0
    %2509 = vmatpush.xpose.msra.mxu0 0.0
    %2510 = vmatpush.xpose.msra.mxu0 %v398
    %2511 = vmatpush.xpose.msra.mxu0 %v142
    %2512 = vmatmul.f32.gmra.mxu0 %v739
    %v2513 = vpop.f32.mrf.mxu0
    %v2514 = vadd.f32 %v2494, %v2513
    %2515 = vdwg.mxu0
    %2516 = vmatpush.xpose.msra.mxu0 0.0
    %2517 = vmatpush.xpose.msra.mxu0 0.0
    %2518 = vmatpush.xpose.msra.mxu0 0.0
    %2519 = vmatpush.xpose.msra.mxu0 0.0
    %2520 = vmatpush.xpose.msra.mxu0 0.0
    %2521 = vmatpush.xpose.msra.mxu0 0.0
    %2522 = vmatpush.xpose.msra.mxu0 0.0
    %2523 = vmatpush.xpose.msra.mxu0 0.0
    %2524 = vmatpush.xpose.msra.mxu0 0.0
    %2525 = vmatpush.xpose.msra.mxu0 0.0
    %2526 = vmatpush.xpose.msra.mxu0 0.0
    %2527 = vmatpush.xpose.msra.mxu0 0.0
    %2528 = vmatpush.xpose.msra.mxu0 0.0
    %2529 = vmatpush.xpose.msra.mxu0 0.0
    %2530 = vmatpush.xpose.msra.mxu0 %v399
    %2531 = vmatpush.xpose.msra.mxu0 %v143
    %2532 = vmatmul.f32.gmra.mxu0 %v742
    %v2533 = vpop.f32.mrf.mxu0
    %v2534 = vadd.f32 %v2514, %v2533
    %2535 = vdwg.mxu0
    %2536 = vmatpush.xpose.msra.mxu0 0.0
    %2537 = vmatpush.xpose.msra.mxu0 0.0
    %2538 = vmatpush.xpose.msra.mxu0 0.0
    %2539 = vmatpush.xpose.msra.mxu0 0.0
    %2540 = vmatpush.xpose.msra.mxu0 0.0
    %2541 = vmatpush.xpose.msra.mxu0 0.0
    %2542 = vmatpush.xpose.msra.mxu0 0.0
    %2543 = vmatpush.xpose.msra.mxu0 0.0
    %2544 = vmatpush.xpose.msra.mxu0 0.0
    %2545 = vmatpush.xpose.msra.mxu0 0.0
    %2546 = vmatpush.xpose.msra.mxu0 0.0
    %2547 = vmatpush.xpose.msra.mxu0 0.0
    %2548 = vmatpush.xpose.msra.mxu0 0.0
    %2549 = vmatpush.xpose.msra.mxu0 0.0
    %2550 = vmatpush.xpose.msra.mxu0 %v400
    %2551 = vmatpush.xpose.msra.mxu0 %v144
    %2552 = vmatmul.f32.gmra.mxu0 %v743
    %v2553 = vpop.f32.mrf.mxu0
    %v2554 = vadd.f32 %v2534, %v2553
    %2555 = vdwg.mxu0
    %2556 = vmatpush.xpose.msra.mxu0 0.0
    %2557 = vmatpush.xpose.msra.mxu0 0.0
    %2558 = vmatpush.xpose.msra.mxu0 0.0
    %2559 = vmatpush.xpose.msra.mxu0 0.0
    %2560 = vmatpush.xpose.msra.mxu0 0.0
    %2561 = vmatpush.xpose.msra.mxu0 0.0
    %2562 = vmatpush.xpose.msra.mxu0 0.0
    %2563 = vmatpush.xpose.msra.mxu0 0.0
    %2564 = vmatpush.xpose.msra.mxu0 0.0
    %2565 = vmatpush.xpose.msra.mxu0 0.0
    %2566 = vmatpush.xpose.msra.mxu0 0.0
    %2567 = vmatpush.xpose.msra.mxu0 0.0
    %2568 = vmatpush.xpose.msra.mxu0 0.0
    %2569 = vmatpush.xpose.msra.mxu0 0.0
    %2570 = vmatpush.xpose.msra.mxu0 %v401
    %2571 = vmatpush.xpose.msra.mxu0 %v145
    %2572 = vmatmul.f32.gmra.mxu0 %v744
    %v2573 = vpop.f32.mrf.mxu0
    %v2574 = vadd.f32 %v2554, %v2573
    %2575 = vdwg.mxu0
    %2576 = vmatpush.xpose.msra.mxu0 0.0
    %2577 = vmatpush.xpose.msra.mxu0 0.0
    %2578 = vmatpush.xpose.msra.mxu0 0.0
    %2579 = vmatpush.xpose.msra.mxu0 0.0
    %2580 = vmatpush.xpose.msra.mxu0 0.0
    %2581 = vmatpush.xpose.msra.mxu0 0.0
    %2582 = vmatpush.xpose.msra.mxu0 0.0
    %2583 = vmatpush.xpose.msra.mxu0 0.0
    %2584 = vmatpush.xpose.msra.mxu0 0.0
    %2585 = vmatpush.xpose.msra.mxu0 0.0
    %2586 = vmatpush.xpose.msra.mxu0 0.0
    %2587 = vmatpush.xpose.msra.mxu0 0.0
    %2588 = vmatpush.xpose.msra.mxu0 0.0
    %2589 = vmatpush.xpose.msra.mxu0 0.0
    %2590 = vmatpush.xpose.msra.mxu0 %v402
    %2591 = vmatpush.xpose.msra.mxu0 %v146
    %2592 = vmatmul.f32.gmra.mxu0 %v745
    %v2593 = vpop.f32.mrf.mxu0
    %v2594 = vadd.f32 %v2574, %v2593
    %2595 = vdwg.mxu0
    %2596 = vmatpush.xpose.msra.mxu0 0.0
    %2597 = vmatpush.xpose.msra.mxu0 0.0
    %2598 = vmatpush.xpose.msra.mxu0 0.0
    %2599 = vmatpush.xpose.msra.mxu0 0.0
    %2600 = vmatpush.xpose.msra.mxu0 0.0
    %2601 = vmatpush.xpose.msra.mxu0 0.0
    %2602 = vmatpush.xpose.msra.mxu0 0.0
    %2603 = vmatpush.xpose.msra.mxu0 0.0
    %2604 = vmatpush.xpose.msra.mxu0 0.0
    %2605 = vmatpush.xpose.msra.mxu0 0.0
    %2606 = vmatpush.xpose.msra.mxu0 0.0
    %2607 = vmatpush.xpose.msra.mxu0 0.0
    %2608 = vmatpush.xpose.msra.mxu0 0.0
    %2609 = vmatpush.xpose.msra.mxu0 0.0
    %2610 = vmatpush.xpose.msra.mxu0 %v403
    %2611 = vmatpush.xpose.msra.mxu0 %v147
    %2612 = vmatmul.f32.gmra.mxu0 %v746
    %v2613 = vpop.f32.mrf.mxu0
    %v2614 = vadd.f32 %v2594, %v2613
    %2615 = vdwg.mxu0
    %2616 = vmatpush.xpose.msra.mxu0 0.0
    %2617 = vmatpush.xpose.msra.mxu0 0.0
    %2618 = vmatpush.xpose.msra.mxu0 0.0
    %2619 = vmatpush.xpose.msra.mxu0 0.0
    %2620 = vmatpush.xpose.msra.mxu0 0.0
    %2621 = vmatpush.xpose.msra.mxu0 0.0
    %2622 = vmatpush.xpose.msra.mxu0 0.0
    %2623 = vmatpush.xpose.msra.mxu0 0.0
    %2624 = vmatpush.xpose.msra.mxu0 0.0
    %2625 = vmatpush.xpose.msra.mxu0 0.0
    %2626 = vmatpush.xpose.msra.mxu0 0.0
    %2627 = vmatpush.xpose.msra.mxu0 0.0
    %2628 = vmatpush.xpose.msra.mxu0 0.0
    %2629 = vmatpush.xpose.msra.mxu0 0.0
    %2630 = vmatpush.xpose.msra.mxu0 %v404
    %2631 = vmatpush.xpose.msra.mxu0 %v148
    %2632 = vmatmul.f32.gmra.mxu0 %v747
    %v2633 = vpop.f32.mrf.mxu0
    %v2634 = vadd.f32 %v2614, %v2633
    %2635 = vdwg.mxu0
    %2636 = vmatpush.xpose.msra.mxu0 0.0
    %2637 = vmatpush.xpose.msra.mxu0 0.0
    %2638 = vmatpush.xpose.msra.mxu0 0.0
    %2639 = vmatpush.xpose.msra.mxu0 0.0
    %2640 = vmatpush.xpose.msra.mxu0 0.0
    %2641 = vmatpush.xpose.msra.mxu0 0.0
    %2642 = vmatpush.xpose.msra.mxu0 0.0
    %2643 = vmatpush.xpose.msra.mxu0 0.0
    %2644 = vmatpush.xpose.msra.mxu0 0.0
    %2645 = vmatpush.xpose.msra.mxu0 0.0
    %2646 = vmatpush.xpose.msra.mxu0 0.0
    %2647 = vmatpush.xpose.msra.mxu0 0.0
    %2648 = vmatpush.xpose.msra.mxu0 0.0
    %2649 = vmatpush.xpose.msra.mxu0 0.0
    %2650 = vmatpush.xpose.msra.mxu0 %v405
    %2651 = vmatpush.xpose.msra.mxu0 %v149
    %2652 = vmatmul.f32.gmra.mxu0 %v748
    %v2653 = vpop.f32.mrf.mxu0
    %v2654 = vadd.f32 %v2634, %v2653
    %2655 = vdwg.mxu0
    %2656 = vmatpush.xpose.msra.mxu0 0.0
    %2657 = vmatpush.xpose.msra.mxu0 0.0
    %2658 = vmatpush.xpose.msra.mxu0 0.0
    %2659 = vmatpush.xpose.msra.mxu0 0.0
    %2660 = vmatpush.xpose.msra.mxu0 0.0
    %2661 = vmatpush.xpose.msra.mxu0 0.0
    %2662 = vmatpush.xpose.msra.mxu0 0.0
    %2663 = vmatpush.xpose.msra.mxu0 0.0
    %2664 = vmatpush.xpose.msra.mxu0 0.0
    %2665 = vmatpush.xpose.msra.mxu0 0.0
    %2666 = vmatpush.xpose.msra.mxu0 0.0
    %2667 = vmatpush.xpose.msra.mxu0 0.0
    %2668 = vmatpush.xpose.msra.mxu0 0.0
    %2669 = vmatpush.xpose.msra.mxu0 0.0
    %2670 = vmatpush.xpose.msra.mxu0 %v406
    %2671 = vmatpush.xpose.msra.mxu0 %v150
    %2672 = vmatmul.f32.gmra.mxu0 %v749
    %v2673 = vpop.f32.mrf.mxu0
    %v2674 = vadd.f32 %v2654, %v2673
    %2675 = vdwg.mxu0
    %2676 = vmatpush.xpose.msra.mxu0 0.0
    %2677 = vmatpush.xpose.msra.mxu0 0.0
    %2678 = vmatpush.xpose.msra.mxu0 0.0
    %2679 = vmatpush.xpose.msra.mxu0 0.0
    %2680 = vmatpush.xpose.msra.mxu0 0.0
    %2681 = vmatpush.xpose.msra.mxu0 0.0
    %2682 = vmatpush.xpose.msra.mxu0 0.0
    %2683 = vmatpush.xpose.msra.mxu0 0.0
    %2684 = vmatpush.xpose.msra.mxu0 0.0
    %2685 = vmatpush.xpose.msra.mxu0 0.0
    %2686 = vmatpush.xpose.msra.mxu0 0.0
    %2687 = vmatpush.xpose.msra.mxu0 0.0
    %2688 = vmatpush.xpose.msra.mxu0 0.0
    %2689 = vmatpush.xpose.msra.mxu0 0.0
    %2690 = vmatpush.xpose.msra.mxu0 %v407
    %2691 = vmatpush.xpose.msra.mxu0 %v151
    %2692 = vmatmul.f32.gmra.mxu0 %v752
    %v2693 = vpop.f32.mrf.mxu0
    %v2694 = vadd.f32 %v2674, %v2693
    %2695 = vdwg.mxu0
    %2696 = vmatpush.xpose.msra.mxu0 0.0
    %2697 = vmatpush.xpose.msra.mxu0 0.0
    %2698 = vmatpush.xpose.msra.mxu0 0.0
    %2699 = vmatpush.xpose.msra.mxu0 0.0
    %2700 = vmatpush.xpose.msra.mxu0 0.0
    %2701 = vmatpush.xpose.msra.mxu0 0.0
    %2702 = vmatpush.xpose.msra.mxu0 0.0
    %2703 = vmatpush.xpose.msra.mxu0 0.0
    %2704 = vmatpush.xpose.msra.mxu0 0.0
    %2705 = vmatpush.xpose.msra.mxu0 0.0
    %2706 = vmatpush.xpose.msra.mxu0 0.0
    %2707 = vmatpush.xpose.msra.mxu0 0.0
    %2708 = vmatpush.xpose.msra.mxu0 0.0
    %2709 = vmatpush.xpose.msra.mxu0 0.0
    %2710 = vmatpush.xpose.msra.mxu0 %v408
    %2711 = vmatpush.xpose.msra.mxu0 %v152
    %2712 = vmatmul.f32.gmra.mxu0 %v753
    %v2713 = vpop.f32.mrf.mxu0
    %v2714 = vadd.f32 %v2694, %v2713
    %2715 = vdwg.mxu0
    %2716 = vmatpush.xpose.msra.mxu0 0.0
    %2717 = vmatpush.xpose.msra.mxu0 0.0
    %2718 = vmatpush.xpose.msra.mxu0 0.0
    %2719 = vmatpush.xpose.msra.mxu0 0.0
    %2720 = vmatpush.xpose.msra.mxu0 0.0
    %2721 = vmatpush.xpose.msra.mxu0 0.0
    %2722 = vmatpush.xpose.msra.mxu0 0.0
    %2723 = vmatpush.xpose.msra.mxu0 0.0
    %2724 = vmatpush.xpose.msra.mxu0 0.0
    %2725 = vmatpush.xpose.msra.mxu0 0.0
    %2726 = vmatpush.xpose.msra.mxu0 0.0
    %2727 = vmatpush.xpose.msra.mxu0 0.0
    %2728 = vmatpush.xpose.msra.mxu0 0.0
    %2729 = vmatpush.xpose.msra.mxu0 0.0
    %2730 = vmatpush.xpose.msra.mxu0 %v409
    %2731 = vmatpush.xpose.msra.mxu0 %v153
    %2732 = vmatmul.f32.gmra.mxu0 %v754
    %v2733 = vpop.f32.mrf.mxu0
    %v2734 = vadd.f32 %v2714, %v2733
    %2735 = vdwg.mxu0
    %2736 = vmatpush.xpose.msra.mxu0 0.0
    %2737 = vmatpush.xpose.msra.mxu0 0.0
    %2738 = vmatpush.xpose.msra.mxu0 0.0
    %2739 = vmatpush.xpose.msra.mxu0 0.0
    %2740 = vmatpush.xpose.msra.mxu0 0.0
    %2741 = vmatpush.xpose.msra.mxu0 0.0
    %2742 = vmatpush.xpose.msra.mxu0 0.0
    %2743 = vmatpush.xpose.msra.mxu0 0.0
    %2744 = vmatpush.xpose.msra.mxu0 0.0
    %2745 = vmatpush.xpose.msra.mxu0 0.0
    %2746 = vmatpush.xpose.msra.mxu0 0.0
    %2747 = vmatpush.xpose.msra.mxu0 0.0
    %2748 = vmatpush.xpose.msra.mxu0 0.0
    %2749 = vmatpush.xpose.msra.mxu0 0.0
    %2750 = vmatpush.xpose.msra.mxu0 %v410
    %2751 = vmatpush.xpose.msra.mxu0 %v154
    %2752 = vmatmul.f32.gmra.mxu0 %v755
    %v2753 = vpop.f32.mrf.mxu0
    %v2754 = vadd.f32 %v2734, %v2753
    %2755 = vdwg.mxu0
    %2756 = vmatpush.xpose.msra.mxu0 0.0
    %2757 = vmatpush.xpose.msra.mxu0 0.0
    %2758 = vmatpush.xpose.msra.mxu0 0.0
    %2759 = vmatpush.xpose.msra.mxu0 0.0
    %2760 = vmatpush.xpose.msra.mxu0 0.0
    %2761 = vmatpush.xpose.msra.mxu0 0.0
    %2762 = vmatpush.xpose.msra.mxu0 0.0
    %2763 = vmatpush.xpose.msra.mxu0 0.0
    %2764 = vmatpush.xpose.msra.mxu0 0.0
    %2765 = vmatpush.xpose.msra.mxu0 0.0
    %2766 = vmatpush.xpose.msra.mxu0 0.0
    %2767 = vmatpush.xpose.msra.mxu0 0.0
    %2768 = vmatpush.xpose.msra.mxu0 0.0
    %2769 = vmatpush.xpose.msra.mxu0 0.0
    %2770 = vmatpush.xpose.msra.mxu0 %v411
    %2771 = vmatpush.xpose.msra.mxu0 %v155
    %2772 = vmatmul.f32.gmra.mxu0 %v756
    %v2773 = vpop.f32.mrf.mxu0
    %v2774 = vadd.f32 %v2754, %v2773
    %2775 = vdwg.mxu0
    %2776 = vmatpush.xpose.msra.mxu0 0.0
    %2777 = vmatpush.xpose.msra.mxu0 0.0
    %2778 = vmatpush.xpose.msra.mxu0 0.0
    %2779 = vmatpush.xpose.msra.mxu0 0.0
    %2780 = vmatpush.xpose.msra.mxu0 0.0
    %2781 = vmatpush.xpose.msra.mxu0 0.0
    %2782 = vmatpush.xpose.msra.mxu0 0.0
    %2783 = vmatpush.xpose.msra.mxu0 0.0
    %2784 = vmatpush.xpose.msra.mxu0 0.0
    %2785 = vmatpush.xpose.msra.mxu0 0.0
    %2786 = vmatpush.xpose.msra.mxu0 0.0
    %2787 = vmatpush.xpose.msra.mxu0 0.0
    %2788 = vmatpush.xpose.msra.mxu0 0.0
    %2789 = vmatpush.xpose.msra.mxu0 0.0
    %2790 = vmatpush.xpose.msra.mxu0 %v412
    %2791 = vmatpush.xpose.msra.mxu0 %v156
    %2792 = vmatmul.f32.gmra.mxu0 %v757
    %v2793 = vpop.f32.mrf.mxu0
    %v2794 = vadd.f32 %v2774, %v2793
    %2795 = vdwg.mxu0
    %2796 = vmatpush.xpose.msra.mxu0 0.0
    %2797 = vmatpush.xpose.msra.mxu0 0.0
    %2798 = vmatpush.xpose.msra.mxu0 0.0
    %2799 = vmatpush.xpose.msra.mxu0 0.0
    %2800 = vmatpush.xpose.msra.mxu0 0.0
    %2801 = vmatpush.xpose.msra.mxu0 0.0
    %2802 = vmatpush.xpose.msra.mxu0 0.0
    %2803 = vmatpush.xpose.msra.mxu0 0.0
    %2804 = vmatpush.xpose.msra.mxu0 0.0
    %2805 = vmatpush.xpose.msra.mxu0 0.0
    %2806 = vmatpush.xpose.msra.mxu0 0.0
    %2807 = vmatpush.xpose.msra.mxu0 0.0
    %2808 = vmatpush.xpose.msra.mxu0 0.0
    %2809 = vmatpush.xpose.msra.mxu0 0.0
    %2810 = vmatpush.xpose.msra.mxu0 %v413
    %2811 = vmatpush.xpose.msra.mxu0 %v157
    %2812 = vmatmul.f32.gmra.mxu0 %v758
    %v2813 = vpop.f32.mrf.mxu0
    %v2814 = vadd.f32 %v2794, %v2813
    %2815 = vdwg.mxu0
    %2816 = vmatpush.xpose.msra.mxu0 0.0
    %2817 = vmatpush.xpose.msra.mxu0 0.0
    %2818 = vmatpush.xpose.msra.mxu0 0.0
    %2819 = vmatpush.xpose.msra.mxu0 0.0
    %2820 = vmatpush.xpose.msra.mxu0 0.0
    %2821 = vmatpush.xpose.msra.mxu0 0.0
    %2822 = vmatpush.xpose.msra.mxu0 0.0
    %2823 = vmatpush.xpose.msra.mxu0 0.0
    %2824 = vmatpush.xpose.msra.mxu0 0.0
    %2825 = vmatpush.xpose.msra.mxu0 0.0
    %2826 = vmatpush.xpose.msra.mxu0 0.0
    %2827 = vmatpush.xpose.msra.mxu0 0.0
    %2828 = vmatpush.xpose.msra.mxu0 0.0
    %2829 = vmatpush.xpose.msra.mxu0 0.0
    %2830 = vmatpush.xpose.msra.mxu0 %v414
    %2831 = vmatpush.xpose.msra.mxu0 %v158
    %2832 = vmatmul.f32.gmra.mxu0 %v759
    %v2833 = vpop.f32.mrf.mxu0
    %v2834 = vadd.f32 %v2814, %v2833
    %2835 = vdwg.mxu0
    %2836 = vmatpush.xpose.msra.mxu0 0.0
    %2837 = vmatpush.xpose.msra.mxu0 0.0
    %2838 = vmatpush.xpose.msra.mxu0 0.0
    %2839 = vmatpush.xpose.msra.mxu0 0.0
    %2840 = vmatpush.xpose.msra.mxu0 0.0
    %2841 = vmatpush.xpose.msra.mxu0 0.0
    %2842 = vmatpush.xpose.msra.mxu0 0.0
    %2843 = vmatpush.xpose.msra.mxu0 0.0
    %2844 = vmatpush.xpose.msra.mxu0 0.0
    %2845 = vmatpush.xpose.msra.mxu0 0.0
    %2846 = vmatpush.xpose.msra.mxu0 0.0
    %2847 = vmatpush.xpose.msra.mxu0 0.0
    %2848 = vmatpush.xpose.msra.mxu0 0.0
    %2849 = vmatpush.xpose.msra.mxu0 0.0
    %2850 = vmatpush.xpose.msra.mxu0 %v415
    %2851 = vmatpush.xpose.msra.mxu0 %v159
    %2852 = vmatmul.f32.gmra.mxu0 %v762
    %v2853 = vpop.f32.mrf.mxu0
    %v2854 = vadd.f32 %v2834, %v2853
    %2855 = vdwg.mxu0
    %2856 = vmatpush.xpose.msra.mxu0 0.0
    %2857 = vmatpush.xpose.msra.mxu0 0.0
    %2858 = vmatpush.xpose.msra.mxu0 0.0
    %2859 = vmatpush.xpose.msra.mxu0 0.0
    %2860 = vmatpush.xpose.msra.mxu0 0.0
    %2861 = vmatpush.xpose.msra.mxu0 0.0
    %2862 = vmatpush.xpose.msra.mxu0 0.0
    %2863 = vmatpush.xpose.msra.mxu0 0.0
    %2864 = vmatpush.xpose.msra.mxu0 0.0
    %2865 = vmatpush.xpose.msra.mxu0 0.0
    %2866 = vmatpush.xpose.msra.mxu0 0.0
    %2867 = vmatpush.xpose.msra.mxu0 0.0
    %2868 = vmatpush.xpose.msra.mxu0 0.0
    %2869 = vmatpush.xpose.msra.mxu0 0.0
    %2870 = vmatpush.xpose.msra.mxu0 %v416
    %2871 = vmatpush.xpose.msra.mxu0 %v160
    %2872 = vmatmul.f32.gmra.mxu0 %v763
    %v2873 = vpop.f32.mrf.mxu0
    %v2874 = vadd.f32 %v2854, %v2873
    %2875 = vdwg.mxu0
    %2876 = vmatpush.xpose.msra.mxu0 0.0
    %2877 = vmatpush.xpose.msra.mxu0 0.0
    %2878 = vmatpush.xpose.msra.mxu0 0.0
    %2879 = vmatpush.xpose.msra.mxu0 0.0
    %2880 = vmatpush.xpose.msra.mxu0 0.0
    %2881 = vmatpush.xpose.msra.mxu0 0.0
    %2882 = vmatpush.xpose.msra.mxu0 0.0
    %2883 = vmatpush.xpose.msra.mxu0 0.0
    %2884 = vmatpush.xpose.msra.mxu0 0.0
    %2885 = vmatpush.xpose.msra.mxu0 0.0
    %2886 = vmatpush.xpose.msra.mxu0 0.0
    %2887 = vmatpush.xpose.msra.mxu0 0.0
    %2888 = vmatpush.xpose.msra.mxu0 0.0
    %2889 = vmatpush.xpose.msra.mxu0 0.0
    %2890 = vmatpush.xpose.msra.mxu0 %v417
    %2891 = vmatpush.xpose.msra.mxu0 %v161
    %2892 = vmatmul.f32.gmra.mxu0 %v764
    %v2893 = vpop.f32.mrf.mxu0
    %v2894 = vadd.f32 %v2874, %v2893
    %2895 = vdwg.mxu0
    %2896 = vmatpush.xpose.msra.mxu0 0.0
    %2897 = vmatpush.xpose.msra.mxu0 0.0
    %2898 = vmatpush.xpose.msra.mxu0 0.0
    %2899 = vmatpush.xpose.msra.mxu0 0.0
    %2900 = vmatpush.xpose.msra.mxu0 0.0
    %2901 = vmatpush.xpose.msra.mxu0 0.0
    %2902 = vmatpush.xpose.msra.mxu0 0.0
    %2903 = vmatpush.xpose.msra.mxu0 0.0
    %2904 = vmatpush.xpose.msra.mxu0 0.0
    %2905 = vmatpush.xpose.msra.mxu0 0.0
    %2906 = vmatpush.xpose.msra.mxu0 0.0
    %2907 = vmatpush.xpose.msra.mxu0 0.0
    %2908 = vmatpush.xpose.msra.mxu0 0.0
    %2909 = vmatpush.xpose.msra.mxu0 0.0
    %2910 = vmatpush.xpose.msra.mxu0 %v418
    %2911 = vmatpush.xpose.msra.mxu0 %v162
    %2912 = vmatmul.f32.gmra.mxu0 %v765
    %v2913 = vpop.f32.mrf.mxu0
    %v2914 = vadd.f32 %v2894, %v2913
    %2915 = vdwg.mxu0
    %2916 = vmatpush.xpose.msra.mxu0 0.0
    %2917 = vmatpush.xpose.msra.mxu0 0.0
    %2918 = vmatpush.xpose.msra.mxu0 0.0
    %2919 = vmatpush.xpose.msra.mxu0 0.0
    %2920 = vmatpush.xpose.msra.mxu0 0.0
    %2921 = vmatpush.xpose.msra.mxu0 0.0
    %2922 = vmatpush.xpose.msra.mxu0 0.0
    %2923 = vmatpush.xpose.msra.mxu0 0.0
    %2924 = vmatpush.xpose.msra.mxu0 0.0
    %2925 = vmatpush.xpose.msra.mxu0 0.0
    %2926 = vmatpush.xpose.msra.mxu0 0.0
    %2927 = vmatpush.xpose.msra.mxu0 0.0
    %2928 = vmatpush.xpose.msra.mxu0 0.0
    %2929 = vmatpush.xpose.msra.mxu0 0.0
    %2930 = vmatpush.xpose.msra.mxu0 %v419
    %2931 = vmatpush.xpose.msra.mxu0 %v163
    %2932 = vmatmul.f32.gmra.mxu0 %v766
    %v2933 = vpop.f32.mrf.mxu0
    %v2934 = vadd.f32 %v2914, %v2933
    %2935 = vdwg.mxu0
    %2936 = vmatpush.xpose.msra.mxu0 0.0
    %2937 = vmatpush.xpose.msra.mxu0 0.0
    %2938 = vmatpush.xpose.msra.mxu0 0.0
    %2939 = vmatpush.xpose.msra.mxu0 0.0
    %2940 = vmatpush.xpose.msra.mxu0 0.0
    %2941 = vmatpush.xpose.msra.mxu0 0.0
    %2942 = vmatpush.xpose.msra.mxu0 0.0
    %2943 = vmatpush.xpose.msra.mxu0 0.0
    %2944 = vmatpush.xpose.msra.mxu0 0.0
    %2945 = vmatpush.xpose.msra.mxu0 0.0
    %2946 = vmatpush.xpose.msra.mxu0 0.0
    %2947 = vmatpush.xpose.msra.mxu0 0.0
    %2948 = vmatpush.xpose.msra.mxu0 0.0
    %2949 = vmatpush.xpose.msra.mxu0 0.0
    %2950 = vmatpush.xpose.msra.mxu0 %v420
    %2951 = vmatpush.xpose.msra.mxu0 %v164
    %2952 = vmatmul.f32.gmra.mxu0 %v767
    %v2953 = vpop.f32.mrf.mxu0
    %v2954 = vadd.f32 %v2934, %v2953
    %2955 = vdwg.mxu0
    %2956 = vmatpush.xpose.msra.mxu0 0.0
    %2957 = vmatpush.xpose.msra.mxu0 0.0
    %2958 = vmatpush.xpose.msra.mxu0 0.0
    %2959 = vmatpush.xpose.msra.mxu0 0.0
    %2960 = vmatpush.xpose.msra.mxu0 0.0
    %2961 = vmatpush.xpose.msra.mxu0 0.0
    %2962 = vmatpush.xpose.msra.mxu0 0.0
    %2963 = vmatpush.xpose.msra.mxu0 0.0
    %2964 = vmatpush.xpose.msra.mxu0 0.0
    %2965 = vmatpush.xpose.msra.mxu0 0.0
    %2966 = vmatpush.xpose.msra.mxu0 0.0
    %2967 = vmatpush.xpose.msra.mxu0 0.0
    %2968 = vmatpush.xpose.msra.mxu0 0.0
    %2969 = vmatpush.xpose.msra.mxu0 0.0
    %2970 = vmatpush.xpose.msra.mxu0 %v421
    %2971 = vmatpush.xpose.msra.mxu0 %v165
    %2972 = vmatmul.f32.gmra.mxu0 %v768
    %v2973 = vpop.f32.mrf.mxu0
    %v2974 = vadd.f32 %v2954, %v2973
    %2975 = vdwg.mxu0
    %2976 = vmatpush.xpose.msra.mxu0 0.0
    %2977 = vmatpush.xpose.msra.mxu0 0.0
    %2978 = vmatpush.xpose.msra.mxu0 0.0
    %2979 = vmatpush.xpose.msra.mxu0 0.0
    %2980 = vmatpush.xpose.msra.mxu0 0.0
    %2981 = vmatpush.xpose.msra.mxu0 0.0
    %2982 = vmatpush.xpose.msra.mxu0 0.0
    %2983 = vmatpush.xpose.msra.mxu0 0.0
    %2984 = vmatpush.xpose.msra.mxu0 0.0
    %2985 = vmatpush.xpose.msra.mxu0 0.0
    %2986 = vmatpush.xpose.msra.mxu0 0.0
    %2987 = vmatpush.xpose.msra.mxu0 0.0
    %2988 = vmatpush.xpose.msra.mxu0 0.0
    %2989 = vmatpush.xpose.msra.mxu0 0.0
    %2990 = vmatpush.xpose.msra.mxu0 %v422
    %2991 = vmatpush.xpose.msra.mxu0 %v166
    %2992 = vmatmul.f32.gmra.mxu0 %v769
    %v2993 = vpop.f32.mrf.mxu0
    %v2994 = vadd.f32 %v2974, %v2993
    %2995 = vdwg.mxu0
    %2996 = vmatpush.xpose.msra.mxu0 0.0
    %2997 = vmatpush.xpose.msra.mxu0 0.0
    %2998 = vmatpush.xpose.msra.mxu0 0.0
    %2999 = vmatpush.xpose.msra.mxu0 0.0
    %3000 = vmatpush.xpose.msra.mxu0 0.0
    %3001 = vmatpush.xpose.msra.mxu0 0.0
    %3002 = vmatpush.xpose.msra.mxu0 0.0
    %3003 = vmatpush.xpose.msra.mxu0 0.0
    %3004 = vmatpush.xpose.msra.mxu0 0.0
    %3005 = vmatpush.xpose.msra.mxu0 0.0
    %3006 = vmatpush.xpose.msra.mxu0 0.0
    %3007 = vmatpush.xpose.msra.mxu0 0.0
    %3008 = vmatpush.xpose.msra.mxu0 0.0
    %3009 = vmatpush.xpose.msra.mxu0 0.0
    %3010 = vmatpush.xpose.msra.mxu0 %v423
    %3011 = vmatpush.xpose.msra.mxu0 %v167
    %3012 = vmatmul.f32.gmra.mxu0 %v772
    %v3013 = vpop.f32.mrf.mxu0
    %v3014 = vadd.f32 %v2994, %v3013
    %3015 = vdwg.mxu0
    %3016 = vmatpush.xpose.msra.mxu0 0.0
    %3017 = vmatpush.xpose.msra.mxu0 0.0
    %3018 = vmatpush.xpose.msra.mxu0 0.0
    %3019 = vmatpush.xpose.msra.mxu0 0.0
    %3020 = vmatpush.xpose.msra.mxu0 0.0
    %3021 = vmatpush.xpose.msra.mxu0 0.0
    %3022 = vmatpush.xpose.msra.mxu0 0.0
    %3023 = vmatpush.xpose.msra.mxu0 0.0
    %3024 = vmatpush.xpose.msra.mxu0 0.0
    %3025 = vmatpush.xpose.msra.mxu0 0.0
    %3026 = vmatpush.xpose.msra.mxu0 0.0
    %3027 = vmatpush.xpose.msra.mxu0 0.0
    %3028 = vmatpush.xpose.msra.mxu0 0.0
    %3029 = vmatpush.xpose.msra.mxu0 0.0
    %3030 = vmatpush.xpose.msra.mxu0 %v424
    %3031 = vmatpush.xpose.msra.mxu0 %v168
    %3032 = vmatmul.f32.gmra.mxu0 %v773
    %v3033 = vpop.f32.mrf.mxu0
    %v3034 = vadd.f32 %v3014, %v3033
    %3035 = vdwg.mxu0
    %3036 = vmatpush.xpose.msra.mxu0 0.0
    %3037 = vmatpush.xpose.msra.mxu0 0.0
    %3038 = vmatpush.xpose.msra.mxu0 0.0
    %3039 = vmatpush.xpose.msra.mxu0 0.0
    %3040 = vmatpush.xpose.msra.mxu0 0.0
    %3041 = vmatpush.xpose.msra.mxu0 0.0
    %3042 = vmatpush.xpose.msra.mxu0 0.0
    %3043 = vmatpush.xpose.msra.mxu0 0.0
    %3044 = vmatpush.xpose.msra.mxu0 0.0
    %3045 = vmatpush.xpose.msra.mxu0 0.0
    %3046 = vmatpush.xpose.msra.mxu0 0.0
    %3047 = vmatpush.xpose.msra.mxu0 0.0
    %3048 = vmatpush.xpose.msra.mxu0 0.0
    %3049 = vmatpush.xpose.msra.mxu0 0.0
    %3050 = vmatpush.xpose.msra.mxu0 %v425
    %3051 = vmatpush.xpose.msra.mxu0 %v169
    %3052 = vmatmul.f32.gmra.mxu0 %v774
    %v3053 = vpop.f32.mrf.mxu0
    %v3054 = vadd.f32 %v3034, %v3053
    %3055 = vdwg.mxu0
    %3056 = vmatpush.xpose.msra.mxu0 0.0
    %3057 = vmatpush.xpose.msra.mxu0 0.0
    %3058 = vmatpush.xpose.msra.mxu0 0.0
    %3059 = vmatpush.xpose.msra.mxu0 0.0
    %3060 = vmatpush.xpose.msra.mxu0 0.0
    %3061 = vmatpush.xpose.msra.mxu0 0.0
    %3062 = vmatpush.xpose.msra.mxu0 0.0
    %3063 = vmatpush.xpose.msra.mxu0 0.0
    %3064 = vmatpush.xpose.msra.mxu0 0.0
    %3065 = vmatpush.xpose.msra.mxu0 0.0
    %3066 = vmatpush.xpose.msra.mxu0 0.0
    %3067 = vmatpush.xpose.msra.mxu0 0.0
    %3068 = vmatpush.xpose.msra.mxu0 0.0
    %3069 = vmatpush.xpose.msra.mxu0 0.0
    %3070 = vmatpush.xpose.msra.mxu0 %v426
    %3071 = vmatpush.xpose.msra.mxu0 %v170
    %3072 = vmatmul.f32.gmra.mxu0 %v775
    %v3073 = vpop.f32.mrf.mxu0
    %v3074 = vadd.f32 %v3054, %v3073
    %3075 = vdwg.mxu0
    %3076 = vmatpush.xpose.msra.mxu0 0.0
    %3077 = vmatpush.xpose.msra.mxu0 0.0
    %3078 = vmatpush.xpose.msra.mxu0 0.0
    %3079 = vmatpush.xpose.msra.mxu0 0.0
    %3080 = vmatpush.xpose.msra.mxu0 0.0
    %3081 = vmatpush.xpose.msra.mxu0 0.0
    %3082 = vmatpush.xpose.msra.mxu0 0.0
    %3083 = vmatpush.xpose.msra.mxu0 0.0
    %3084 = vmatpush.xpose.msra.mxu0 0.0
    %3085 = vmatpush.xpose.msra.mxu0 0.0
    %3086 = vmatpush.xpose.msra.mxu0 0.0
    %3087 = vmatpush.xpose.msra.mxu0 0.0
    %3088 = vmatpush.xpose.msra.mxu0 0.0
    %3089 = vmatpush.xpose.msra.mxu0 0.0
    %3090 = vmatpush.xpose.msra.mxu0 %v427
    %3091 = vmatpush.xpose.msra.mxu0 %v171
    %3092 = vmatmul.f32.gmra.mxu0 %v776
    %v3093 = vpop.f32.mrf.mxu0
    %v3094 = vadd.f32 %v3074, %v3093
    %3095 = vdwg.mxu0
    %3096 = vmatpush.xpose.msra.mxu0 0.0
    %3097 = vmatpush.xpose.msra.mxu0 0.0
    %3098 = vmatpush.xpose.msra.mxu0 0.0
    %3099 = vmatpush.xpose.msra.mxu0 0.0
    %3100 = vmatpush.xpose.msra.mxu0 0.0
    %3101 = vmatpush.xpose.msra.mxu0 0.0
    %3102 = vmatpush.xpose.msra.mxu0 0.0
    %3103 = vmatpush.xpose.msra.mxu0 0.0
    %3104 = vmatpush.xpose.msra.mxu0 0.0
    %3105 = vmatpush.xpose.msra.mxu0 0.0
    %3106 = vmatpush.xpose.msra.mxu0 0.0
    %3107 = vmatpush.xpose.msra.mxu0 0.0
    %3108 = vmatpush.xpose.msra.mxu0 0.0
    %3109 = vmatpush.xpose.msra.mxu0 0.0
    %3110 = vmatpush.xpose.msra.mxu0 %v428
    %3111 = vmatpush.xpose.msra.mxu0 %v172
    %3112 = vmatmul.f32.gmra.mxu0 %v777
    %v3113 = vpop.f32.mrf.mxu0
    %v3114 = vadd.f32 %v3094, %v3113
    %3115 = vdwg.mxu0
    %3116 = vmatpush.xpose.msra.mxu0 0.0
    %3117 = vmatpush.xpose.msra.mxu0 0.0
    %3118 = vmatpush.xpose.msra.mxu0 0.0
    %3119 = vmatpush.xpose.msra.mxu0 0.0
    %3120 = vmatpush.xpose.msra.mxu0 0.0
    %3121 = vmatpush.xpose.msra.mxu0 0.0
    %3122 = vmatpush.xpose.msra.mxu0 0.0
    %3123 = vmatpush.xpose.msra.mxu0 0.0
    %3124 = vmatpush.xpose.msra.mxu0 0.0
    %3125 = vmatpush.xpose.msra.mxu0 0.0
    %3126 = vmatpush.xpose.msra.mxu0 0.0
    %3127 = vmatpush.xpose.msra.mxu0 0.0
    %3128 = vmatpush.xpose.msra.mxu0 0.0
    %3129 = vmatpush.xpose.msra.mxu0 0.0
    %3130 = vmatpush.xpose.msra.mxu0 %v429
    %3131 = vmatpush.xpose.msra.mxu0 %v173
    %3132 = vmatmul.f32.gmra.mxu0 %v778
    %v3133 = vpop.f32.mrf.mxu0
    %v3134 = vadd.f32 %v3114, %v3133
    %3135 = vdwg.mxu0
    %3136 = vmatpush.xpose.msra.mxu0 0.0
    %3137 = vmatpush.xpose.msra.mxu0 0.0
    %3138 = vmatpush.xpose.msra.mxu0 0.0
    %3139 = vmatpush.xpose.msra.mxu0 0.0
    %3140 = vmatpush.xpose.msra.mxu0 0.0
    %3141 = vmatpush.xpose.msra.mxu0 0.0
    %3142 = vmatpush.xpose.msra.mxu0 0.0
    %3143 = vmatpush.xpose.msra.mxu0 0.0
    %3144 = vmatpush.xpose.msra.mxu0 0.0
    %3145 = vmatpush.xpose.msra.mxu0 0.0
    %3146 = vmatpush.xpose.msra.mxu0 0.0
    %3147 = vmatpush.xpose.msra.mxu0 0.0
    %3148 = vmatpush.xpose.msra.mxu0 0.0
    %3149 = vmatpush.xpose.msra.mxu0 0.0
    %3150 = vmatpush.xpose.msra.mxu0 %v430
    %3151 = vmatpush.xpose.msra.mxu0 %v174
    %3152 = vmatmul.f32.gmra.mxu0 %v779
    %v3153 = vpop.f32.mrf.mxu0
    %v3154 = vadd.f32 %v3134, %v3153
    %3155 = vdwg.mxu0
    %3156 = vmatpush.xpose.msra.mxu0 0.0
    %3157 = vmatpush.xpose.msra.mxu0 0.0
    %3158 = vmatpush.xpose.msra.mxu0 0.0
    %3159 = vmatpush.xpose.msra.mxu0 0.0
    %3160 = vmatpush.xpose.msra.mxu0 0.0
    %3161 = vmatpush.xpose.msra.mxu0 0.0
    %3162 = vmatpush.xpose.msra.mxu0 0.0
    %3163 = vmatpush.xpose.msra.mxu0 0.0
    %3164 = vmatpush.xpose.msra.mxu0 0.0
    %3165 = vmatpush.xpose.msra.mxu0 0.0
    %3166 = vmatpush.xpose.msra.mxu0 0.0
    %3167 = vmatpush.xpose.msra.mxu0 0.0
    %3168 = vmatpush.xpose.msra.mxu0 0.0
    %3169 = vmatpush.xpose.msra.mxu0 0.0
    %3170 = vmatpush.xpose.msra.mxu0 %v431
    %3171 = vmatpush.xpose.msra.mxu0 %v175
    %3172 = vmatmul.f32.gmra.mxu0 %v782
    %v3173 = vpop.f32.mrf.mxu0
    %v3174 = vadd.f32 %v3154, %v3173
    %3175 = vdwg.mxu0
    %3176 = vmatpush.xpose.msra.mxu0 0.0
    %3177 = vmatpush.xpose.msra.mxu0 0.0
    %3178 = vmatpush.xpose.msra.mxu0 0.0
    %3179 = vmatpush.xpose.msra.mxu0 0.0
    %3180 = vmatpush.xpose.msra.mxu0 0.0
    %3181 = vmatpush.xpose.msra.mxu0 0.0
    %3182 = vmatpush.xpose.msra.mxu0 0.0
    %3183 = vmatpush.xpose.msra.mxu0 0.0
    %3184 = vmatpush.xpose.msra.mxu0 0.0
    %3185 = vmatpush.xpose.msra.mxu0 0.0
    %3186 = vmatpush.xpose.msra.mxu0 0.0
    %3187 = vmatpush.xpose.msra.mxu0 0.0
    %3188 = vmatpush.xpose.msra.mxu0 0.0
    %3189 = vmatpush.xpose.msra.mxu0 0.0
    %3190 = vmatpush.xpose.msra.mxu0 %v432
    %3191 = vmatpush.xpose.msra.mxu0 %v176
    %3192 = vmatmul.f32.gmra.mxu0 %v783
    %v3193 = vpop.f32.mrf.mxu0
    %v3194 = vadd.f32 %v3174, %v3193
    %3195 = vdwg.mxu0
    %3196 = vmatpush.xpose.msra.mxu0 0.0
    %3197 = vmatpush.xpose.msra.mxu0 0.0
    %3198 = vmatpush.xpose.msra.mxu0 0.0
    %3199 = vmatpush.xpose.msra.mxu0 0.0
    %3200 = vmatpush.xpose.msra.mxu0 0.0
    %3201 = vmatpush.xpose.msra.mxu0 0.0
    %3202 = vmatpush.xpose.msra.mxu0 0.0
    %3203 = vmatpush.xpose.msra.mxu0 0.0
    %3204 = vmatpush.xpose.msra.mxu0 0.0
    %3205 = vmatpush.xpose.msra.mxu0 0.0
    %3206 = vmatpush.xpose.msra.mxu0 0.0
    %3207 = vmatpush.xpose.msra.mxu0 0.0
    %3208 = vmatpush.xpose.msra.mxu0 0.0
    %3209 = vmatpush.xpose.msra.mxu0 0.0
    %3210 = vmatpush.xpose.msra.mxu0 %v433
    %3211 = vmatpush.xpose.msra.mxu0 %v177
    %3212 = vmatmul.f32.gmra.mxu0 %v784
    %v3213 = vpop.f32.mrf.mxu0
    %v3214 = vadd.f32 %v3194, %v3213
    %3215 = vdwg.mxu0
    %3216 = vmatpush.xpose.msra.mxu0 0.0
    %3217 = vmatpush.xpose.msra.mxu0 0.0
    %3218 = vmatpush.xpose.msra.mxu0 0.0
    %3219 = vmatpush.xpose.msra.mxu0 0.0
    %3220 = vmatpush.xpose.msra.mxu0 0.0
    %3221 = vmatpush.xpose.msra.mxu0 0.0
    %3222 = vmatpush.xpose.msra.mxu0 0.0
    %3223 = vmatpush.xpose.msra.mxu0 0.0
    %3224 = vmatpush.xpose.msra.mxu0 0.0
    %3225 = vmatpush.xpose.msra.mxu0 0.0
    %3226 = vmatpush.xpose.msra.mxu0 0.0
    %3227 = vmatpush.xpose.msra.mxu0 0.0
    %3228 = vmatpush.xpose.msra.mxu0 0.0
    %3229 = vmatpush.xpose.msra.mxu0 0.0
    %3230 = vmatpush.xpose.msra.mxu0 %v434
    %3231 = vmatpush.xpose.msra.mxu0 %v178
    %3232 = vmatmul.f32.gmra.mxu0 %v785
    %v3233 = vpop.f32.mrf.mxu0
    %v3234 = vadd.f32 %v3214, %v3233
    %3235 = vdwg.mxu0
    %3236 = vmatpush.xpose.msra.mxu0 0.0
    %3237 = vmatpush.xpose.msra.mxu0 0.0
    %3238 = vmatpush.xpose.msra.mxu0 0.0
    %3239 = vmatpush.xpose.msra.mxu0 0.0
    %3240 = vmatpush.xpose.msra.mxu0 0.0
    %3241 = vmatpush.xpose.msra.mxu0 0.0
    %3242 = vmatpush.xpose.msra.mxu0 0.0
    %3243 = vmatpush.xpose.msra.mxu0 0.0
    %3244 = vmatpush.xpose.msra.mxu0 0.0
    %3245 = vmatpush.xpose.msra.mxu0 0.0
    %3246 = vmatpush.xpose.msra.mxu0 0.0
    %3247 = vmatpush.xpose.msra.mxu0 0.0
    %3248 = vmatpush.xpose.msra.mxu0 0.0
    %3249 = vmatpush.xpose.msra.mxu0 0.0
    %3250 = vmatpush.xpose.msra.mxu0 %v435
    %3251 = vmatpush.xpose.msra.mxu0 %v179
    %3252 = vmatmul.f32.gmra.mxu0 %v786
    %v3253 = vpop.f32.mrf.mxu0
    %v3254 = vadd.f32 %v3234, %v3253
    %3255 = vdwg.mxu0
    %3256 = vmatpush.xpose.msra.mxu0 0.0
    %3257 = vmatpush.xpose.msra.mxu0 0.0
    %3258 = vmatpush.xpose.msra.mxu0 0.0
    %3259 = vmatpush.xpose.msra.mxu0 0.0
    %3260 = vmatpush.xpose.msra.mxu0 0.0
    %3261 = vmatpush.xpose.msra.mxu0 0.0
    %3262 = vmatpush.xpose.msra.mxu0 0.0
    %3263 = vmatpush.xpose.msra.mxu0 0.0
    %3264 = vmatpush.xpose.msra.mxu0 0.0
    %3265 = vmatpush.xpose.msra.mxu0 0.0
    %3266 = vmatpush.xpose.msra.mxu0 0.0
    %3267 = vmatpush.xpose.msra.mxu0 0.0
    %3268 = vmatpush.xpose.msra.mxu0 0.0
    %3269 = vmatpush.xpose.msra.mxu0 0.0
    %3270 = vmatpush.xpose.msra.mxu0 %v436
    %3271 = vmatpush.xpose.msra.mxu0 %v180
    %3272 = vmatmul.f32.gmra.mxu0 %v787
    %v3273 = vpop.f32.mrf.mxu0
    %v3274 = vadd.f32 %v3254, %v3273
    %3275 = vdwg.mxu0
    %3276 = vmatpush.xpose.msra.mxu0 0.0
    %3277 = vmatpush.xpose.msra.mxu0 0.0
    %3278 = vmatpush.xpose.msra.mxu0 0.0
    %3279 = vmatpush.xpose.msra.mxu0 0.0
    %3280 = vmatpush.xpose.msra.mxu0 0.0
    %3281 = vmatpush.xpose.msra.mxu0 0.0
    %3282 = vmatpush.xpose.msra.mxu0 0.0
    %3283 = vmatpush.xpose.msra.mxu0 0.0
    %3284 = vmatpush.xpose.msra.mxu0 0.0
    %3285 = vmatpush.xpose.msra.mxu0 0.0
    %3286 = vmatpush.xpose.msra.mxu0 0.0
    %3287 = vmatpush.xpose.msra.mxu0 0.0
    %3288 = vmatpush.xpose.msra.mxu0 0.0
    %3289 = vmatpush.xpose.msra.mxu0 0.0
    %3290 = vmatpush.xpose.msra.mxu0 %v437
    %3291 = vmatpush.xpose.msra.mxu0 %v181
    %3292 = vmatmul.f32.gmra.mxu0 %v788
    %v3293 = vpop.f32.mrf.mxu0
    %v3294 = vadd.f32 %v3274, %v3293
    %3295 = vdwg.mxu0
    %3296 = vmatpush.xpose.msra.mxu0 0.0
    %3297 = vmatpush.xpose.msra.mxu0 0.0
    %3298 = vmatpush.xpose.msra.mxu0 0.0
    %3299 = vmatpush.xpose.msra.mxu0 0.0
    %3300 = vmatpush.xpose.msra.mxu0 0.0
    %3301 = vmatpush.xpose.msra.mxu0 0.0
    %3302 = vmatpush.xpose.msra.mxu0 0.0
    %3303 = vmatpush.xpose.msra.mxu0 0.0
    %3304 = vmatpush.xpose.msra.mxu0 0.0
    %3305 = vmatpush.xpose.msra.mxu0 0.0
    %3306 = vmatpush.xpose.msra.mxu0 0.0
    %3307 = vmatpush.xpose.msra.mxu0 0.0
    %3308 = vmatpush.xpose.msra.mxu0 0.0
    %3309 = vmatpush.xpose.msra.mxu0 0.0
    %3310 = vmatpush.xpose.msra.mxu0 %v438
    %3311 = vmatpush.xpose.msra.mxu0 %v182
    %3312 = vmatmul.f32.gmra.mxu0 %v789
    %v3313 = vpop.f32.mrf.mxu0
    %v3314 = vadd.f32 %v3294, %v3313
    %3315 = vdwg.mxu0
    %3316 = vmatpush.xpose.msra.mxu0 0.0
    %3317 = vmatpush.xpose.msra.mxu0 0.0
    %3318 = vmatpush.xpose.msra.mxu0 0.0
    %3319 = vmatpush.xpose.msra.mxu0 0.0
    %3320 = vmatpush.xpose.msra.mxu0 0.0
    %3321 = vmatpush.xpose.msra.mxu0 0.0
    %3322 = vmatpush.xpose.msra.mxu0 0.0
    %3323 = vmatpush.xpose.msra.mxu0 0.0
    %3324 = vmatpush.xpose.msra.mxu0 0.0
    %3325 = vmatpush.xpose.msra.mxu0 0.0
    %3326 = vmatpush.xpose.msra.mxu0 0.0
    %3327 = vmatpush.xpose.msra.mxu0 0.0
    %3328 = vmatpush.xpose.msra.mxu0 0.0
    %3329 = vmatpush.xpose.msra.mxu0 0.0
    %3330 = vmatpush.xpose.msra.mxu0 %v439
    %3331 = vmatpush.xpose.msra.mxu0 %v183
    %3332 = vmatmul.f32.gmra.mxu0 %v792
    %v3333 = vpop.f32.mrf.mxu0
    %v3334 = vadd.f32 %v3314, %v3333
    %3335 = vdwg.mxu0
    %3336 = vmatpush.xpose.msra.mxu0 0.0
    %3337 = vmatpush.xpose.msra.mxu0 0.0
    %3338 = vmatpush.xpose.msra.mxu0 0.0
    %3339 = vmatpush.xpose.msra.mxu0 0.0
    %3340 = vmatpush.xpose.msra.mxu0 0.0
    %3341 = vmatpush.xpose.msra.mxu0 0.0
    %3342 = vmatpush.xpose.msra.mxu0 0.0
    %3343 = vmatpush.xpose.msra.mxu0 0.0
    %3344 = vmatpush.xpose.msra.mxu0 0.0
    %3345 = vmatpush.xpose.msra.mxu0 0.0
    %3346 = vmatpush.xpose.msra.mxu0 0.0
    %3347 = vmatpush.xpose.msra.mxu0 0.0
    %3348 = vmatpush.xpose.msra.mxu0 0.0
    %3349 = vmatpush.xpose.msra.mxu0 0.0
    %3350 = vmatpush.xpose.msra.mxu0 %v440
    %3351 = vmatpush.xpose.msra.mxu0 %v184
    %3352 = vmatmul.f32.gmra.mxu0 %v793
    %v3353 = vpop.f32.mrf.mxu0
    %v3354 = vadd.f32 %v3334, %v3353
    %3355 = vdwg.mxu0
    %3356 = vmatpush.xpose.msra.mxu0 0.0
    %3357 = vmatpush.xpose.msra.mxu0 0.0
    %3358 = vmatpush.xpose.msra.mxu0 0.0
    %3359 = vmatpush.xpose.msra.mxu0 0.0
    %3360 = vmatpush.xpose.msra.mxu0 0.0
    %3361 = vmatpush.xpose.msra.mxu0 0.0
    %3362 = vmatpush.xpose.msra.mxu0 0.0
    %3363 = vmatpush.xpose.msra.mxu0 0.0
    %3364 = vmatpush.xpose.msra.mxu0 0.0
    %3365 = vmatpush.xpose.msra.mxu0 0.0
    %3366 = vmatpush.xpose.msra.mxu0 0.0
    %3367 = vmatpush.xpose.msra.mxu0 0.0
    %3368 = vmatpush.xpose.msra.mxu0 0.0
    %3369 = vmatpush.xpose.msra.mxu0 0.0
    %3370 = vmatpush.xpose.msra.mxu0 %v441
    %3371 = vmatpush.xpose.msra.mxu0 %v185
    %3372 = vmatmul.f32.gmra.mxu0 %v794
    %v3373 = vpop.f32.mrf.mxu0
    %v3374 = vadd.f32 %v3354, %v3373
    %3375 = vdwg.mxu0
    %3376 = vmatpush.xpose.msra.mxu0 0.0
    %3377 = vmatpush.xpose.msra.mxu0 0.0
    %3378 = vmatpush.xpose.msra.mxu0 0.0
    %3379 = vmatpush.xpose.msra.mxu0 0.0
    %3380 = vmatpush.xpose.msra.mxu0 0.0
    %3381 = vmatpush.xpose.msra.mxu0 0.0
    %3382 = vmatpush.xpose.msra.mxu0 0.0
    %3383 = vmatpush.xpose.msra.mxu0 0.0
    %3384 = vmatpush.xpose.msra.mxu0 0.0
    %3385 = vmatpush.xpose.msra.mxu0 0.0
    %3386 = vmatpush.xpose.msra.mxu0 0.0
    %3387 = vmatpush.xpose.msra.mxu0 0.0
    %3388 = vmatpush.xpose.msra.mxu0 0.0
    %3389 = vmatpush.xpose.msra.mxu0 0.0
    %3390 = vmatpush.xpose.msra.mxu0 %v442
    %3391 = vmatpush.xpose.msra.mxu0 %v186
    %3392 = vmatmul.f32.gmra.mxu0 %v795
    %v3393 = vpop.f32.mrf.mxu0
    %v3394 = vadd.f32 %v3374, %v3393
    %3395 = vdwg.mxu0
    %3396 = vmatpush.xpose.msra.mxu0 0.0
    %3397 = vmatpush.xpose.msra.mxu0 0.0
    %3398 = vmatpush.xpose.msra.mxu0 0.0
    %3399 = vmatpush.xpose.msra.mxu0 0.0
    %3400 = vmatpush.xpose.msra.mxu0 0.0
    %3401 = vmatpush.xpose.msra.mxu0 0.0
    %3402 = vmatpush.xpose.msra.mxu0 0.0
    %3403 = vmatpush.xpose.msra.mxu0 0.0
    %3404 = vmatpush.xpose.msra.mxu0 0.0
    %3405 = vmatpush.xpose.msra.mxu0 0.0
    %3406 = vmatpush.xpose.msra.mxu0 0.0
    %3407 = vmatpush.xpose.msra.mxu0 0.0
    %3408 = vmatpush.xpose.msra.mxu0 0.0
    %3409 = vmatpush.xpose.msra.mxu0 0.0
    %3410 = vmatpush.xpose.msra.mxu0 %v443
    %3411 = vmatpush.xpose.msra.mxu0 %v187
    %3412 = vmatmul.f32.gmra.mxu0 %v796
    %v3413 = vpop.f32.mrf.mxu0
    %v3414 = vadd.f32 %v3394, %v3413
    %3415 = vdwg.mxu0
    %3416 = vmatpush.xpose.msra.mxu0 0.0
    %3417 = vmatpush.xpose.msra.mxu0 0.0
    %3418 = vmatpush.xpose.msra.mxu0 0.0
    %3419 = vmatpush.xpose.msra.mxu0 0.0
    %3420 = vmatpush.xpose.msra.mxu0 0.0
    %3421 = vmatpush.xpose.msra.mxu0 0.0
    %3422 = vmatpush.xpose.msra.mxu0 0.0
    %3423 = vmatpush.xpose.msra.mxu0 0.0
    %3424 = vmatpush.xpose.msra.mxu0 0.0
    %3425 = vmatpush.xpose.msra.mxu0 0.0
    %3426 = vmatpush.xpose.msra.mxu0 0.0
    %3427 = vmatpush.xpose.msra.mxu0 0.0
    %3428 = vmatpush.xpose.msra.mxu0 0.0
    %3429 = vmatpush.xpose.msra.mxu0 0.0
    %3430 = vmatpush.xpose.msra.mxu0 %v444
    %3431 = vmatpush.xpose.msra.mxu0 %v188
    %3432 = vmatmul.f32.gmra.mxu0 %v797
    %v3433 = vpop.f32.mrf.mxu0
    %v3434 = vadd.f32 %v3414, %v3433
    %3435 = vdwg.mxu0
    %3436 = vmatpush.xpose.msra.mxu0 0.0
    %3437 = vmatpush.xpose.msra.mxu0 0.0
    %3438 = vmatpush.xpose.msra.mxu0 0.0
    %3439 = vmatpush.xpose.msra.mxu0 0.0
    %3440 = vmatpush.xpose.msra.mxu0 0.0
    %3441 = vmatpush.xpose.msra.mxu0 0.0
    %3442 = vmatpush.xpose.msra.mxu0 0.0
    %3443 = vmatpush.xpose.msra.mxu0 0.0
    %3444 = vmatpush.xpose.msra.mxu0 0.0
    %3445 = vmatpush.xpose.msra.mxu0 0.0
    %3446 = vmatpush.xpose.msra.mxu0 0.0
    %3447 = vmatpush.xpose.msra.mxu0 0.0
    %3448 = vmatpush.xpose.msra.mxu0 0.0
    %3449 = vmatpush.xpose.msra.mxu0 0.0
    %3450 = vmatpush.xpose.msra.mxu0 %v445
    %3451 = vmatpush.xpose.msra.mxu0 %v189
    %3452 = vmatmul.f32.gmra.mxu0 %v798
    %v3453 = vpop.f32.mrf.mxu0
    %v3454 = vadd.f32 %v3434, %v3453
    %3455 = vdwg.mxu0
    %3456 = vmatpush.xpose.msra.mxu0 0.0
    %3457 = vmatpush.xpose.msra.mxu0 0.0
    %3458 = vmatpush.xpose.msra.mxu0 0.0
    %3459 = vmatpush.xpose.msra.mxu0 0.0
    %3460 = vmatpush.xpose.msra.mxu0 0.0
    %3461 = vmatpush.xpose.msra.mxu0 0.0
    %3462 = vmatpush.xpose.msra.mxu0 0.0
    %3463 = vmatpush.xpose.msra.mxu0 0.0
    %3464 = vmatpush.xpose.msra.mxu0 0.0
    %3465 = vmatpush.xpose.msra.mxu0 0.0
    %3466 = vmatpush.xpose.msra.mxu0 0.0
    %3467 = vmatpush.xpose.msra.mxu0 0.0
    %3468 = vmatpush.xpose.msra.mxu0 0.0
    %3469 = vmatpush.xpose.msra.mxu0 0.0
    %3470 = vmatpush.xpose.msra.mxu0 %v446
    %3471 = vmatpush.xpose.msra.mxu0 %v190
    %3472 = vmatmul.f32.gmra.mxu0 %v799
    %v3473 = vpop.f32.mrf.mxu0
    %v3474 = vadd.f32 %v3454, %v3473
    %3475 = vdwg.mxu0
    %3476 = vmatpush.xpose.msra.mxu0 0.0
    %3477 = vmatpush.xpose.msra.mxu0 0.0
    %3478 = vmatpush.xpose.msra.mxu0 0.0
    %3479 = vmatpush.xpose.msra.mxu0 0.0
    %3480 = vmatpush.xpose.msra.mxu0 0.0
    %3481 = vmatpush.xpose.msra.mxu0 0.0
    %3482 = vmatpush.xpose.msra.mxu0 0.0
    %3483 = vmatpush.xpose.msra.mxu0 0.0
    %3484 = vmatpush.xpose.msra.mxu0 0.0
    %3485 = vmatpush.xpose.msra.mxu0 0.0
    %3486 = vmatpush.xpose.msra.mxu0 0.0
    %3487 = vmatpush.xpose.msra.mxu0 0.0
    %3488 = vmatpush.xpose.msra.mxu0 0.0
    %3489 = vmatpush.xpose.msra.mxu0 0.0
    %3490 = vmatpush.xpose.msra.mxu0 %v447
    %3491 = vmatpush.xpose.msra.mxu0 %v191
    %3492 = vmatmul.f32.gmra.mxu0 %v802
    %v3493 = vpop.f32.mrf.mxu0
    %v3494 = vadd.f32 %v3474, %v3493
    %3495 = vdwg.mxu0
    %3496 = vmatpush.xpose.msra.mxu0 0.0
    %3497 = vmatpush.xpose.msra.mxu0 0.0
    %3498 = vmatpush.xpose.msra.mxu0 0.0
    %3499 = vmatpush.xpose.msra.mxu0 0.0
    %3500 = vmatpush.xpose.msra.mxu0 0.0
    %3501 = vmatpush.xpose.msra.mxu0 0.0
    %3502 = vmatpush.xpose.msra.mxu0 0.0
    %3503 = vmatpush.xpose.msra.mxu0 0.0
    %3504 = vmatpush.xpose.msra.mxu0 0.0
    %3505 = vmatpush.xpose.msra.mxu0 0.0
    %3506 = vmatpush.xpose.msra.mxu0 0.0
    %3507 = vmatpush.xpose.msra.mxu0 0.0
    %3508 = vmatpush.xpose.msra.mxu0 0.0
    %3509 = vmatpush.xpose.msra.mxu0 0.0
    %3510 = vmatpush.xpose.msra.mxu0 %v448
    %3511 = vmatpush.xpose.msra.mxu0 %v192
    %3512 = vmatmul.f32.gmra.mxu0 %v803
    %v3513 = vpop.f32.mrf.mxu0
    %v3514 = vadd.f32 %v3494, %v3513
    %3515 = vdwg.mxu0
    %3516 = vmatpush.xpose.msra.mxu0 0.0
    %3517 = vmatpush.xpose.msra.mxu0 0.0
    %3518 = vmatpush.xpose.msra.mxu0 0.0
    %3519 = vmatpush.xpose.msra.mxu0 0.0
    %3520 = vmatpush.xpose.msra.mxu0 0.0
    %3521 = vmatpush.xpose.msra.mxu0 0.0
    %3522 = vmatpush.xpose.msra.mxu0 0.0
    %3523 = vmatpush.xpose.msra.mxu0 0.0
    %3524 = vmatpush.xpose.msra.mxu0 0.0
    %3525 = vmatpush.xpose.msra.mxu0 0.0
    %3526 = vmatpush.xpose.msra.mxu0 0.0
    %3527 = vmatpush.xpose.msra.mxu0 0.0
    %3528 = vmatpush.xpose.msra.mxu0 0.0
    %3529 = vmatpush.xpose.msra.mxu0 0.0
    %3530 = vmatpush.xpose.msra.mxu0 %v449
    %3531 = vmatpush.xpose.msra.mxu0 %v193
    %3532 = vmatmul.f32.gmra.mxu0 %v804
    %v3533 = vpop.f32.mrf.mxu0
    %v3534 = vadd.f32 %v3514, %v3533
    %3535 = vdwg.mxu0
    %3536 = vmatpush.xpose.msra.mxu0 0.0
    %3537 = vmatpush.xpose.msra.mxu0 0.0
    %3538 = vmatpush.xpose.msra.mxu0 0.0
    %3539 = vmatpush.xpose.msra.mxu0 0.0
    %3540 = vmatpush.xpose.msra.mxu0 0.0
    %3541 = vmatpush.xpose.msra.mxu0 0.0
    %3542 = vmatpush.xpose.msra.mxu0 0.0
    %3543 = vmatpush.xpose.msra.mxu0 0.0
    %3544 = vmatpush.xpose.msra.mxu0 0.0
    %3545 = vmatpush.xpose.msra.mxu0 0.0
    %3546 = vmatpush.xpose.msra.mxu0 0.0
    %3547 = vmatpush.xpose.msra.mxu0 0.0
    %3548 = vmatpush.xpose.msra.mxu0 0.0
    %3549 = vmatpush.xpose.msra.mxu0 0.0
    %3550 = vmatpush.xpose.msra.mxu0 %v450
    %3551 = vmatpush.xpose.msra.mxu0 %v194
    %3552 = vmatmul.f32.gmra.mxu0 %v805
    %v3553 = vpop.f32.mrf.mxu0
    %v3554 = vadd.f32 %v3534, %v3553
    %3555 = vdwg.mxu0
    %3556 = vmatpush.xpose.msra.mxu0 0.0
    %3557 = vmatpush.xpose.msra.mxu0 0.0
    %3558 = vmatpush.xpose.msra.mxu0 0.0
    %3559 = vmatpush.xpose.msra.mxu0 0.0
    %3560 = vmatpush.xpose.msra.mxu0 0.0
    %3561 = vmatpush.xpose.msra.mxu0 0.0
    %3562 = vmatpush.xpose.msra.mxu0 0.0
    %3563 = vmatpush.xpose.msra.mxu0 0.0
    %3564 = vmatpush.xpose.msra.mxu0 0.0
    %3565 = vmatpush.xpose.msra.mxu0 0.0
    %3566 = vmatpush.xpose.msra.mxu0 0.0
    %3567 = vmatpush.xpose.msra.mxu0 0.0
    %3568 = vmatpush.xpose.msra.mxu0 0.0
    %3569 = vmatpush.xpose.msra.mxu0 0.0
    %3570 = vmatpush.xpose.msra.mxu0 %v451
    %3571 = vmatpush.xpose.msra.mxu0 %v195
    %3572 = vmatmul.f32.gmra.mxu0 %v806
    %v3573 = vpop.f32.mrf.mxu0
    %v3574 = vadd.f32 %v3554, %v3573
    %3575 = vdwg.mxu0
    %3576 = vmatpush.xpose.msra.mxu0 0.0
    %3577 = vmatpush.xpose.msra.mxu0 0.0
    %3578 = vmatpush.xpose.msra.mxu0 0.0
    %3579 = vmatpush.xpose.msra.mxu0 0.0
    %3580 = vmatpush.xpose.msra.mxu0 0.0
    %3581 = vmatpush.xpose.msra.mxu0 0.0
    %3582 = vmatpush.xpose.msra.mxu0 0.0
    %3583 = vmatpush.xpose.msra.mxu0 0.0
    %3584 = vmatpush.xpose.msra.mxu0 0.0
    %3585 = vmatpush.xpose.msra.mxu0 0.0
    %3586 = vmatpush.xpose.msra.mxu0 0.0
    %3587 = vmatpush.xpose.msra.mxu0 0.0
    %3588 = vmatpush.xpose.msra.mxu0 0.0
    %3589 = vmatpush.xpose.msra.mxu0 0.0
    %3590 = vmatpush.xpose.msra.mxu0 %v452
    %3591 = vmatpush.xpose.msra.mxu0 %v196
    %3592 = vmatmul.f32.gmra.mxu0 %v807
    %v3593 = vpop.f32.mrf.mxu0
    %v3594 = vadd.f32 %v3574, %v3593
    %3595 = vdwg.mxu0
    %3596 = vmatpush.xpose.msra.mxu0 0.0
    %3597 = vmatpush.xpose.msra.mxu0 0.0
    %3598 = vmatpush.xpose.msra.mxu0 0.0
    %3599 = vmatpush.xpose.msra.mxu0 0.0
    %3600 = vmatpush.xpose.msra.mxu0 0.0
    %3601 = vmatpush.xpose.msra.mxu0 0.0
    %3602 = vmatpush.xpose.msra.mxu0 0.0
    %3603 = vmatpush.xpose.msra.mxu0 0.0
    %3604 = vmatpush.xpose.msra.mxu0 0.0
    %3605 = vmatpush.xpose.msra.mxu0 0.0
    %3606 = vmatpush.xpose.msra.mxu0 0.0
    %3607 = vmatpush.xpose.msra.mxu0 0.0
    %3608 = vmatpush.xpose.msra.mxu0 0.0
    %3609 = vmatpush.xpose.msra.mxu0 0.0
    %3610 = vmatpush.xpose.msra.mxu0 %v453
    %3611 = vmatpush.xpose.msra.mxu0 %v197
    %3612 = vmatmul.f32.gmra.mxu0 %v808
    %v3613 = vpop.f32.mrf.mxu0
    %v3614 = vadd.f32 %v3594, %v3613
    %3615 = vdwg.mxu0
    %3616 = vmatpush.xpose.msra.mxu0 0.0
    %3617 = vmatpush.xpose.msra.mxu0 0.0
    %3618 = vmatpush.xpose.msra.mxu0 0.0
    %3619 = vmatpush.xpose.msra.mxu0 0.0
    %3620 = vmatpush.xpose.msra.mxu0 0.0
    %3621 = vmatpush.xpose.msra.mxu0 0.0
    %3622 = vmatpush.xpose.msra.mxu0 0.0
    %3623 = vmatpush.xpose.msra.mxu0 0.0
    %3624 = vmatpush.xpose.msra.mxu0 0.0
    %3625 = vmatpush.xpose.msra.mxu0 0.0
    %3626 = vmatpush.xpose.msra.mxu0 0.0
    %3627 = vmatpush.xpose.msra.mxu0 0.0
    %3628 = vmatpush.xpose.msra.mxu0 0.0
    %3629 = vmatpush.xpose.msra.mxu0 0.0
    %3630 = vmatpush.xpose.msra.mxu0 %v454
    %3631 = vmatpush.xpose.msra.mxu0 %v198
    %3632 = vmatmul.f32.gmra.mxu0 %v809
    %v3633 = vpop.f32.mrf.mxu0
    %v3634 = vadd.f32 %v3614, %v3633
    %3635 = vdwg.mxu0
    %3636 = vmatpush.xpose.msra.mxu0 0.0
    %3637 = vmatpush.xpose.msra.mxu0 0.0
    %3638 = vmatpush.xpose.msra.mxu0 0.0
    %3639 = vmatpush.xpose.msra.mxu0 0.0
    %3640 = vmatpush.xpose.msra.mxu0 0.0
    %3641 = vmatpush.xpose.msra.mxu0 0.0
    %3642 = vmatpush.xpose.msra.mxu0 0.0
    %3643 = vmatpush.xpose.msra.mxu0 0.0
    %3644 = vmatpush.xpose.msra.mxu0 0.0
    %3645 = vmatpush.xpose.msra.mxu0 0.0
    %3646 = vmatpush.xpose.msra.mxu0 0.0
    %3647 = vmatpush.xpose.msra.mxu0 0.0
    %3648 = vmatpush.xpose.msra.mxu0 0.0
    %3649 = vmatpush.xpose.msra.mxu0 0.0
    %3650 = vmatpush.xpose.msra.mxu0 %v455
    %3651 = vmatpush.xpose.msra.mxu0 %v199
    %3652 = vmatmul.f32.gmra.mxu0 %v812
    %v3653 = vpop.f32.mrf.mxu0
    %v3654 = vadd.f32 %v3634, %v3653
    %3655 = vdwg.mxu0
    %3656 = vmatpush.xpose.msra.mxu0 0.0
    %3657 = vmatpush.xpose.msra.mxu0 0.0
    %3658 = vmatpush.xpose.msra.mxu0 0.0
    %3659 = vmatpush.xpose.msra.mxu0 0.0
    %3660 = vmatpush.xpose.msra.mxu0 0.0
    %3661 = vmatpush.xpose.msra.mxu0 0.0
    %3662 = vmatpush.xpose.msra.mxu0 0.0
    %3663 = vmatpush.xpose.msra.mxu0 0.0
    %3664 = vmatpush.xpose.msra.mxu0 0.0
    %3665 = vmatpush.xpose.msra.mxu0 0.0
    %3666 = vmatpush.xpose.msra.mxu0 0.0
    %3667 = vmatpush.xpose.msra.mxu0 0.0
    %3668 = vmatpush.xpose.msra.mxu0 0.0
    %3669 = vmatpush.xpose.msra.mxu0 0.0
    %3670 = vmatpush.xpose.msra.mxu0 %v456
    %3671 = vmatpush.xpose.msra.mxu0 %v200
    %3672 = vmatmul.f32.gmra.mxu0 %v813
    %v3673 = vpop.f32.mrf.mxu0
    %v3674 = vadd.f32 %v3654, %v3673
    %3675 = vdwg.mxu0
    %3676 = vmatpush.xpose.msra.mxu0 0.0
    %3677 = vmatpush.xpose.msra.mxu0 0.0
    %3678 = vmatpush.xpose.msra.mxu0 0.0
    %3679 = vmatpush.xpose.msra.mxu0 0.0
    %3680 = vmatpush.xpose.msra.mxu0 0.0
    %3681 = vmatpush.xpose.msra.mxu0 0.0
    %3682 = vmatpush.xpose.msra.mxu0 0.0
    %3683 = vmatpush.xpose.msra.mxu0 0.0
    %3684 = vmatpush.xpose.msra.mxu0 0.0
    %3685 = vmatpush.xpose.msra.mxu0 0.0
    %3686 = vmatpush.xpose.msra.mxu0 0.0
    %3687 = vmatpush.xpose.msra.mxu0 0.0
    %3688 = vmatpush.xpose.msra.mxu0 0.0
    %3689 = vmatpush.xpose.msra.mxu0 0.0
    %3690 = vmatpush.xpose.msra.mxu0 %v457
    %3691 = vmatpush.xpose.msra.mxu0 %v201
    %3692 = vmatmul.f32.gmra.mxu0 %v814
    %v3693 = vpop.f32.mrf.mxu0
    %v3694 = vadd.f32 %v3674, %v3693
    %3695 = vdwg.mxu0
    %3696 = vmatpush.xpose.msra.mxu0 0.0
    %3697 = vmatpush.xpose.msra.mxu0 0.0
    %3698 = vmatpush.xpose.msra.mxu0 0.0
    %3699 = vmatpush.xpose.msra.mxu0 0.0
    %3700 = vmatpush.xpose.msra.mxu0 0.0
    %3701 = vmatpush.xpose.msra.mxu0 0.0
    %3702 = vmatpush.xpose.msra.mxu0 0.0
    %3703 = vmatpush.xpose.msra.mxu0 0.0
    %3704 = vmatpush.xpose.msra.mxu0 0.0
    %3705 = vmatpush.xpose.msra.mxu0 0.0
    %3706 = vmatpush.xpose.msra.mxu0 0.0
    %3707 = vmatpush.xpose.msra.mxu0 0.0
    %3708 = vmatpush.xpose.msra.mxu0 0.0
    %3709 = vmatpush.xpose.msra.mxu0 0.0
    %3710 = vmatpush.xpose.msra.mxu0 %v458
    %3711 = vmatpush.xpose.msra.mxu0 %v202
    %3712 = vmatmul.f32.gmra.mxu0 %v815
    %v3713 = vpop.f32.mrf.mxu0
    %v3714 = vadd.f32 %v3694, %v3713
    %3715 = vdwg.mxu0
    %3716 = vmatpush.xpose.msra.mxu0 0.0
    %3717 = vmatpush.xpose.msra.mxu0 0.0
    %3718 = vmatpush.xpose.msra.mxu0 0.0
    %3719 = vmatpush.xpose.msra.mxu0 0.0
    %3720 = vmatpush.xpose.msra.mxu0 0.0
    %3721 = vmatpush.xpose.msra.mxu0 0.0
    %3722 = vmatpush.xpose.msra.mxu0 0.0
    %3723 = vmatpush.xpose.msra.mxu0 0.0
    %3724 = vmatpush.xpose.msra.mxu0 0.0
    %3725 = vmatpush.xpose.msra.mxu0 0.0
    %3726 = vmatpush.xpose.msra.mxu0 0.0
    %3727 = vmatpush.xpose.msra.mxu0 0.0
    %3728 = vmatpush.xpose.msra.mxu0 0.0
    %3729 = vmatpush.xpose.msra.mxu0 0.0
    %3730 = vmatpush.xpose.msra.mxu0 %v459
    %3731 = vmatpush.xpose.msra.mxu0 %v203
    %3732 = vmatmul.f32.gmra.mxu0 %v816
    %v3733 = vpop.f32.mrf.mxu0
    %v3734 = vadd.f32 %v3714, %v3733
    %3735 = vdwg.mxu0
    %3736 = vmatpush.xpose.msra.mxu0 0.0
    %3737 = vmatpush.xpose.msra.mxu0 0.0
    %3738 = vmatpush.xpose.msra.mxu0 0.0
    %3739 = vmatpush.xpose.msra.mxu0 0.0
    %3740 = vmatpush.xpose.msra.mxu0 0.0
    %3741 = vmatpush.xpose.msra.mxu0 0.0
    %3742 = vmatpush.xpose.msra.mxu0 0.0
    %3743 = vmatpush.xpose.msra.mxu0 0.0
    %3744 = vmatpush.xpose.msra.mxu0 0.0
    %3745 = vmatpush.xpose.msra.mxu0 0.0
    %3746 = vmatpush.xpose.msra.mxu0 0.0
    %3747 = vmatpush.xpose.msra.mxu0 0.0
    %3748 = vmatpush.xpose.msra.mxu0 0.0
    %3749 = vmatpush.xpose.msra.mxu0 0.0
    %3750 = vmatpush.xpose.msra.mxu0 %v460
    %3751 = vmatpush.xpose.msra.mxu0 %v204
    %3752 = vmatmul.f32.gmra.mxu0 %v817
    %v3753 = vpop.f32.mrf.mxu0
    %v3754 = vadd.f32 %v3734, %v3753
    %3755 = vdwg.mxu0
    %3756 = vmatpush.xpose.msra.mxu0 0.0
    %3757 = vmatpush.xpose.msra.mxu0 0.0
    %3758 = vmatpush.xpose.msra.mxu0 0.0
    %3759 = vmatpush.xpose.msra.mxu0 0.0
    %3760 = vmatpush.xpose.msra.mxu0 0.0
    %3761 = vmatpush.xpose.msra.mxu0 0.0
    %3762 = vmatpush.xpose.msra.mxu0 0.0
    %3763 = vmatpush.xpose.msra.mxu0 0.0
    %3764 = vmatpush.xpose.msra.mxu0 0.0
    %3765 = vmatpush.xpose.msra.mxu0 0.0
    %3766 = vmatpush.xpose.msra.mxu0 0.0
    %3767 = vmatpush.xpose.msra.mxu0 0.0
    %3768 = vmatpush.xpose.msra.mxu0 0.0
    %3769 = vmatpush.xpose.msra.mxu0 0.0
    %3770 = vmatpush.xpose.msra.mxu0 %v461
    %3771 = vmatpush.xpose.msra.mxu0 %v205
    %3772 = vmatmul.f32.gmra.mxu0 %v818
    %v3773 = vpop.f32.mrf.mxu0
    %v3774 = vadd.f32 %v3754, %v3773
    %3775 = vdwg.mxu0
    %3776 = vmatpush.xpose.msra.mxu0 0.0
    %3777 = vmatpush.xpose.msra.mxu0 0.0
    %3778 = vmatpush.xpose.msra.mxu0 0.0
    %3779 = vmatpush.xpose.msra.mxu0 0.0
    %3780 = vmatpush.xpose.msra.mxu0 0.0
    %3781 = vmatpush.xpose.msra.mxu0 0.0
    %3782 = vmatpush.xpose.msra.mxu0 0.0
    %3783 = vmatpush.xpose.msra.mxu0 0.0
    %3784 = vmatpush.xpose.msra.mxu0 0.0
    %3785 = vmatpush.xpose.msra.mxu0 0.0
    %3786 = vmatpush.xpose.msra.mxu0 0.0
    %3787 = vmatpush.xpose.msra.mxu0 0.0
    %3788 = vmatpush.xpose.msra.mxu0 0.0
    %3789 = vmatpush.xpose.msra.mxu0 0.0
    %3790 = vmatpush.xpose.msra.mxu0 %v462
    %3791 = vmatpush.xpose.msra.mxu0 %v206
    %3792 = vmatmul.f32.gmra.mxu0 %v819
    %v3793 = vpop.f32.mrf.mxu0
    %v3794 = vadd.f32 %v3774, %v3793
    %3795 = vdwg.mxu0
    %3796 = vmatpush.xpose.msra.mxu0 0.0
    %3797 = vmatpush.xpose.msra.mxu0 0.0
    %3798 = vmatpush.xpose.msra.mxu0 0.0
    %3799 = vmatpush.xpose.msra.mxu0 0.0
    %3800 = vmatpush.xpose.msra.mxu0 0.0
    %3801 = vmatpush.xpose.msra.mxu0 0.0
    %3802 = vmatpush.xpose.msra.mxu0 0.0
    %3803 = vmatpush.xpose.msra.mxu0 0.0
    %3804 = vmatpush.xpose.msra.mxu0 0.0
    %3805 = vmatpush.xpose.msra.mxu0 0.0
    %3806 = vmatpush.xpose.msra.mxu0 0.0
    %3807 = vmatpush.xpose.msra.mxu0 0.0
    %3808 = vmatpush.xpose.msra.mxu0 0.0
    %3809 = vmatpush.xpose.msra.mxu0 0.0
    %3810 = vmatpush.xpose.msra.mxu0 %v463
    %3811 = vmatpush.xpose.msra.mxu0 %v207
    %3812 = vmatmul.f32.gmra.mxu0 %v822
    %v3813 = vpop.f32.mrf.mxu0
    %v3814 = vadd.f32 %v3794, %v3813
    %3815 = vdwg.mxu0
    %3816 = vmatpush.xpose.msra.mxu0 0.0
    %3817 = vmatpush.xpose.msra.mxu0 0.0
    %3818 = vmatpush.xpose.msra.mxu0 0.0
    %3819 = vmatpush.xpose.msra.mxu0 0.0
    %3820 = vmatpush.xpose.msra.mxu0 0.0
    %3821 = vmatpush.xpose.msra.mxu0 0.0
    %3822 = vmatpush.xpose.msra.mxu0 0.0
    %3823 = vmatpush.xpose.msra.mxu0 0.0
    %3824 = vmatpush.xpose.msra.mxu0 0.0
    %3825 = vmatpush.xpose.msra.mxu0 0.0
    %3826 = vmatpush.xpose.msra.mxu0 0.0
    %3827 = vmatpush.xpose.msra.mxu0 0.0
    %3828 = vmatpush.xpose.msra.mxu0 0.0
    %3829 = vmatpush.xpose.msra.mxu0 0.0
    %3830 = vmatpush.xpose.msra.mxu0 %v464
    %3831 = vmatpush.xpose.msra.mxu0 %v208
    %3832 = vmatmul.f32.gmra.mxu0 %v823
    %v3833 = vpop.f32.mrf.mxu0
    %v3834 = vadd.f32 %v3814, %v3833
    %3835 = vdwg.mxu0
    %3836 = vmatpush.xpose.msra.mxu0 0.0
    %3837 = vmatpush.xpose.msra.mxu0 0.0
    %3838 = vmatpush.xpose.msra.mxu0 0.0
    %3839 = vmatpush.xpose.msra.mxu0 0.0
    %3840 = vmatpush.xpose.msra.mxu0 0.0
    %3841 = vmatpush.xpose.msra.mxu0 0.0
    %3842 = vmatpush.xpose.msra.mxu0 0.0
    %3843 = vmatpush.xpose.msra.mxu0 0.0
    %3844 = vmatpush.xpose.msra.mxu0 0.0
    %3845 = vmatpush.xpose.msra.mxu0 0.0
    %3846 = vmatpush.xpose.msra.mxu0 0.0
    %3847 = vmatpush.xpose.msra.mxu0 0.0
    %3848 = vmatpush.xpose.msra.mxu0 0.0
    %3849 = vmatpush.xpose.msra.mxu0 0.0
    %3850 = vmatpush.xpose.msra.mxu0 %v465
    %3851 = vmatpush.xpose.msra.mxu0 %v209
    %3852 = vmatmul.f32.gmra.mxu0 %v824
    %v3853 = vpop.f32.mrf.mxu0
    %v3854 = vadd.f32 %v3834, %v3853
    %3855 = vdwg.mxu0
    %3856 = vmatpush.xpose.msra.mxu0 0.0
    %3857 = vmatpush.xpose.msra.mxu0 0.0
    %3858 = vmatpush.xpose.msra.mxu0 0.0
    %3859 = vmatpush.xpose.msra.mxu0 0.0
    %3860 = vmatpush.xpose.msra.mxu0 0.0
    %3861 = vmatpush.xpose.msra.mxu0 0.0
    %3862 = vmatpush.xpose.msra.mxu0 0.0
    %3863 = vmatpush.xpose.msra.mxu0 0.0
    %3864 = vmatpush.xpose.msra.mxu0 0.0
    %3865 = vmatpush.xpose.msra.mxu0 0.0
    %3866 = vmatpush.xpose.msra.mxu0 0.0
    %3867 = vmatpush.xpose.msra.mxu0 0.0
    %3868 = vmatpush.xpose.msra.mxu0 0.0
    %3869 = vmatpush.xpose.msra.mxu0 0.0
    %3870 = vmatpush.xpose.msra.mxu0 %v466
    %3871 = vmatpush.xpose.msra.mxu0 %v210
    %3872 = vmatmul.f32.gmra.mxu0 %v825
    %v3873 = vpop.f32.mrf.mxu0
    %v3874 = vadd.f32 %v3854, %v3873
    %3875 = vdwg.mxu0
    %3876 = vmatpush.xpose.msra.mxu0 0.0
    %3877 = vmatpush.xpose.msra.mxu0 0.0
    %3878 = vmatpush.xpose.msra.mxu0 0.0
    %3879 = vmatpush.xpose.msra.mxu0 0.0
    %3880 = vmatpush.xpose.msra.mxu0 0.0
    %3881 = vmatpush.xpose.msra.mxu0 0.0
    %3882 = vmatpush.xpose.msra.mxu0 0.0
    %3883 = vmatpush.xpose.msra.mxu0 0.0
    %3884 = vmatpush.xpose.msra.mxu0 0.0
    %3885 = vmatpush.xpose.msra.mxu0 0.0
    %3886 = vmatpush.xpose.msra.mxu0 0.0
    %3887 = vmatpush.xpose.msra.mxu0 0.0
    %3888 = vmatpush.xpose.msra.mxu0 0.0
    %3889 = vmatpush.xpose.msra.mxu0 0.0
    %3890 = vmatpush.xpose.msra.mxu0 %v467
    %3891 = vmatpush.xpose.msra.mxu0 %v211
    %3892 = vmatmul.f32.gmra.mxu0 %v826
    %v3893 = vpop.f32.mrf.mxu0
    %v3894 = vadd.f32 %v3874, %v3893
    %3895 = vdwg.mxu0
    %3896 = vmatpush.xpose.msra.mxu0 0.0
    %3897 = vmatpush.xpose.msra.mxu0 0.0
    %3898 = vmatpush.xpose.msra.mxu0 0.0
    %3899 = vmatpush.xpose.msra.mxu0 0.0
    %3900 = vmatpush.xpose.msra.mxu0 0.0
    %3901 = vmatpush.xpose.msra.mxu0 0.0
    %3902 = vmatpush.xpose.msra.mxu0 0.0
    %3903 = vmatpush.xpose.msra.mxu0 0.0
    %3904 = vmatpush.xpose.msra.mxu0 0.0
    %3905 = vmatpush.xpose.msra.mxu0 0.0
    %3906 = vmatpush.xpose.msra.mxu0 0.0
    %3907 = vmatpush.xpose.msra.mxu0 0.0
    %3908 = vmatpush.xpose.msra.mxu0 0.0
    %3909 = vmatpush.xpose.msra.mxu0 0.0
    %3910 = vmatpush.xpose.msra.mxu0 %v468
    %3911 = vmatpush.xpose.msra.mxu0 %v212
    %3912 = vmatmul.f32.gmra.mxu0 %v827
    %v3913 = vpop.f32.mrf.mxu0
    %v3914 = vadd.f32 %v3894, %v3913
    %3915 = vdwg.mxu0
    %3916 = vmatpush.xpose.msra.mxu0 0.0
    %3917 = vmatpush.xpose.msra.mxu0 0.0
    %3918 = vmatpush.xpose.msra.mxu0 0.0
    %3919 = vmatpush.xpose.msra.mxu0 0.0
    %3920 = vmatpush.xpose.msra.mxu0 0.0
    %3921 = vmatpush.xpose.msra.mxu0 0.0
    %3922 = vmatpush.xpose.msra.mxu0 0.0
    %3923 = vmatpush.xpose.msra.mxu0 0.0
    %3924 = vmatpush.xpose.msra.mxu0 0.0
    %3925 = vmatpush.xpose.msra.mxu0 0.0
    %3926 = vmatpush.xpose.msra.mxu0 0.0
    %3927 = vmatpush.xpose.msra.mxu0 0.0
    %3928 = vmatpush.xpose.msra.mxu0 0.0
    %3929 = vmatpush.xpose.msra.mxu0 0.0
    %3930 = vmatpush.xpose.msra.mxu0 %v469
    %3931 = vmatpush.xpose.msra.mxu0 %v213
    %3932 = vmatmul.f32.gmra.mxu0 %v828
    %v3933 = vpop.f32.mrf.mxu0
    %v3934 = vadd.f32 %v3914, %v3933
    %3935 = vdwg.mxu0
    %3936 = vmatpush.xpose.msra.mxu0 0.0
    %3937 = vmatpush.xpose.msra.mxu0 0.0
    %3938 = vmatpush.xpose.msra.mxu0 0.0
    %3939 = vmatpush.xpose.msra.mxu0 0.0
    %3940 = vmatpush.xpose.msra.mxu0 0.0
    %3941 = vmatpush.xpose.msra.mxu0 0.0
    %3942 = vmatpush.xpose.msra.mxu0 0.0
    %3943 = vmatpush.xpose.msra.mxu0 0.0
    %3944 = vmatpush.xpose.msra.mxu0 0.0
    %3945 = vmatpush.xpose.msra.mxu0 0.0
    %3946 = vmatpush.xpose.msra.mxu0 0.0
    %3947 = vmatpush.xpose.msra.mxu0 0.0
    %3948 = vmatpush.xpose.msra.mxu0 0.0
    %3949 = vmatpush.xpose.msra.mxu0 0.0
    %3950 = vmatpush.xpose.msra.mxu0 %v470
    %3951 = vmatpush.xpose.msra.mxu0 %v214
    %3952 = vmatmul.f32.gmra.mxu0 %v829
    %v3953 = vpop.f32.mrf.mxu0
    %v3954 = vadd.f32 %v3934, %v3953
    %3955 = vdwg.mxu0
    %3956 = vmatpush.xpose.msra.mxu0 0.0
    %3957 = vmatpush.xpose.msra.mxu0 0.0
    %3958 = vmatpush.xpose.msra.mxu0 0.0
    %3959 = vmatpush.xpose.msra.mxu0 0.0
    %3960 = vmatpush.xpose.msra.mxu0 0.0
    %3961 = vmatpush.xpose.msra.mxu0 0.0
    %3962 = vmatpush.xpose.msra.mxu0 0.0
    %3963 = vmatpush.xpose.msra.mxu0 0.0
    %3964 = vmatpush.xpose.msra.mxu0 0.0
    %3965 = vmatpush.xpose.msra.mxu0 0.0
    %3966 = vmatpush.xpose.msra.mxu0 0.0
    %3967 = vmatpush.xpose.msra.mxu0 0.0
    %3968 = vmatpush.xpose.msra.mxu0 0.0
    %3969 = vmatpush.xpose.msra.mxu0 0.0
    %3970 = vmatpush.xpose.msra.mxu0 %v471
    %3971 = vmatpush.xpose.msra.mxu0 %v215
    %3972 = vmatmul.f32.gmra.mxu0 %v832
    %v3973 = vpop.f32.mrf.mxu0
    %v3974 = vadd.f32 %v3954, %v3973
    %3975 = vdwg.mxu0
    %3976 = vmatpush.xpose.msra.mxu0 0.0
    %3977 = vmatpush.xpose.msra.mxu0 0.0
    %3978 = vmatpush.xpose.msra.mxu0 0.0
    %3979 = vmatpush.xpose.msra.mxu0 0.0
    %3980 = vmatpush.xpose.msra.mxu0 0.0
    %3981 = vmatpush.xpose.msra.mxu0 0.0
    %3982 = vmatpush.xpose.msra.mxu0 0.0
    %3983 = vmatpush.xpose.msra.mxu0 0.0
    %3984 = vmatpush.xpose.msra.mxu0 0.0
    %3985 = vmatpush.xpose.msra.mxu0 0.0
    %3986 = vmatpush.xpose.msra.mxu0 0.0
    %3987 = vmatpush.xpose.msra.mxu0 0.0
    %3988 = vmatpush.xpose.msra.mxu0 0.0
    %3989 = vmatpush.xpose.msra.mxu0 0.0
    %3990 = vmatpush.xpose.msra.mxu0 %v472
    %3991 = vmatpush.xpose.msra.mxu0 %v216
    %3992 = vmatmul.f32.gmra.mxu0 %v833
    %v3993 = vpop.f32.mrf.mxu0
    %v3994 = vadd.f32 %v3974, %v3993
    %3995 = vdwg.mxu0
    %3996 = vmatpush.xpose.msra.mxu0 0.0
    %3997 = vmatpush.xpose.msra.mxu0 0.0
    %3998 = vmatpush.xpose.msra.mxu0 0.0
    %3999 = vmatpush.xpose.msra.mxu0 0.0
    %4000 = vmatpush.xpose.msra.mxu0 0.0
    %4001 = vmatpush.xpose.msra.mxu0 0.0
    %4002 = vmatpush.xpose.msra.mxu0 0.0
    %4003 = vmatpush.xpose.msra.mxu0 0.0
    %4004 = vmatpush.xpose.msra.mxu0 0.0
    %4005 = vmatpush.xpose.msra.mxu0 0.0
    %4006 = vmatpush.xpose.msra.mxu0 0.0
    %4007 = vmatpush.xpose.msra.mxu0 0.0
    %4008 = vmatpush.xpose.msra.mxu0 0.0
    %4009 = vmatpush.xpose.msra.mxu0 0.0
    %4010 = vmatpush.xpose.msra.mxu0 %v473
    %4011 = vmatpush.xpose.msra.mxu0 %v217
    %4012 = vmatmul.f32.gmra.mxu0 %v834
    %v4013 = vpop.f32.mrf.mxu0
    %v4014 = vadd.f32 %v3994, %v4013
    %4015 = vdwg.mxu0
    %4016 = vmatpush.xpose.msra.mxu0 0.0
    %4017 = vmatpush.xpose.msra.mxu0 0.0
    %4018 = vmatpush.xpose.msra.mxu0 0.0
    %4019 = vmatpush.xpose.msra.mxu0 0.0
    %4020 = vmatpush.xpose.msra.mxu0 0.0
    %4021 = vmatpush.xpose.msra.mxu0 0.0
    %4022 = vmatpush.xpose.msra.mxu0 0.0
    %4023 = vmatpush.xpose.msra.mxu0 0.0
    %4024 = vmatpush.xpose.msra.mxu0 0.0
    %4025 = vmatpush.xpose.msra.mxu0 0.0
    %4026 = vmatpush.xpose.msra.mxu0 0.0
    %4027 = vmatpush.xpose.msra.mxu0 0.0
    %4028 = vmatpush.xpose.msra.mxu0 0.0
    %4029 = vmatpush.xpose.msra.mxu0 0.0
    %4030 = vmatpush.xpose.msra.mxu0 %v474
    %4031 = vmatpush.xpose.msra.mxu0 %v218
    %4032 = vmatmul.f32.gmra.mxu0 %v835
    %v4033 = vpop.f32.mrf.mxu0
    %v4034 = vadd.f32 %v4014, %v4033
    %4035 = vdwg.mxu0
    %4036 = vmatpush.xpose.msra.mxu0 0.0
    %4037 = vmatpush.xpose.msra.mxu0 0.0
    %4038 = vmatpush.xpose.msra.mxu0 0.0
    %4039 = vmatpush.xpose.msra.mxu0 0.0
    %4040 = vmatpush.xpose.msra.mxu0 0.0
    %4041 = vmatpush.xpose.msra.mxu0 0.0
    %4042 = vmatpush.xpose.msra.mxu0 0.0
    %4043 = vmatpush.xpose.msra.mxu0 0.0
    %4044 = vmatpush.xpose.msra.mxu0 0.0
    %4045 = vmatpush.xpose.msra.mxu0 0.0
    %4046 = vmatpush.xpose.msra.mxu0 0.0
    %4047 = vmatpush.xpose.msra.mxu0 0.0
    %4048 = vmatpush.xpose.msra.mxu0 0.0
    %4049 = vmatpush.xpose.msra.mxu0 0.0
    %4050 = vmatpush.xpose.msra.mxu0 %v475
    %4051 = vmatpush.xpose.msra.mxu0 %v219
    %4052 = vmatmul.f32.gmra.mxu0 %v836
    %v4053 = vpop.f32.mrf.mxu0
    %v4054 = vadd.f32 %v4034, %v4053
    %4055 = vdwg.mxu0
    %4056 = vmatpush.xpose.msra.mxu0 0.0
    %4057 = vmatpush.xpose.msra.mxu0 0.0
    %4058 = vmatpush.xpose.msra.mxu0 0.0
    %4059 = vmatpush.xpose.msra.mxu0 0.0
    %4060 = vmatpush.xpose.msra.mxu0 0.0
    %4061 = vmatpush.xpose.msra.mxu0 0.0
    %4062 = vmatpush.xpose.msra.mxu0 0.0
    %4063 = vmatpush.xpose.msra.mxu0 0.0
    %4064 = vmatpush.xpose.msra.mxu0 0.0
    %4065 = vmatpush.xpose.msra.mxu0 0.0
    %4066 = vmatpush.xpose.msra.mxu0 0.0
    %4067 = vmatpush.xpose.msra.mxu0 0.0
    %4068 = vmatpush.xpose.msra.mxu0 0.0
    %4069 = vmatpush.xpose.msra.mxu0 0.0
    %4070 = vmatpush.xpose.msra.mxu0 %v476
    %4071 = vmatpush.xpose.msra.mxu0 %v220
    %4072 = vmatmul.f32.gmra.mxu0 %v837
    %v4073 = vpop.f32.mrf.mxu0
    %v4074 = vadd.f32 %v4054, %v4073
    %4075 = vdwg.mxu0
    %4076 = vmatpush.xpose.msra.mxu0 0.0
    %4077 = vmatpush.xpose.msra.mxu0 0.0
    %4078 = vmatpush.xpose.msra.mxu0 0.0
    %4079 = vmatpush.xpose.msra.mxu0 0.0
    %4080 = vmatpush.xpose.msra.mxu0 0.0
    %4081 = vmatpush.xpose.msra.mxu0 0.0
    %4082 = vmatpush.xpose.msra.mxu0 0.0
    %4083 = vmatpush.xpose.msra.mxu0 0.0
    %4084 = vmatpush.xpose.msra.mxu0 0.0
    %4085 = vmatpush.xpose.msra.mxu0 0.0
    %4086 = vmatpush.xpose.msra.mxu0 0.0
    %4087 = vmatpush.xpose.msra.mxu0 0.0
    %4088 = vmatpush.xpose.msra.mxu0 0.0
    %4089 = vmatpush.xpose.msra.mxu0 0.0
    %4090 = vmatpush.xpose.msra.mxu0 %v477
    %4091 = vmatpush.xpose.msra.mxu0 %v221
    %4092 = vmatmul.f32.gmra.mxu0 %v838
    %v4093 = vpop.f32.mrf.mxu0
    %v4094 = vadd.f32 %v4074, %v4093
    %4095 = vdwg.mxu0
    %4096 = vmatpush.xpose.msra.mxu0 0.0
    %4097 = vmatpush.xpose.msra.mxu0 0.0
    %4098 = vmatpush.xpose.msra.mxu0 0.0
    %4099 = vmatpush.xpose.msra.mxu0 0.0
    %4100 = vmatpush.xpose.msra.mxu0 0.0
    %4101 = vmatpush.xpose.msra.mxu0 0.0
    %4102 = vmatpush.xpose.msra.mxu0 0.0
    %4103 = vmatpush.xpose.msra.mxu0 0.0
    %4104 = vmatpush.xpose.msra.mxu0 0.0
    %4105 = vmatpush.xpose.msra.mxu0 0.0
    %4106 = vmatpush.xpose.msra.mxu0 0.0
    %4107 = vmatpush.xpose.msra.mxu0 0.0
    %4108 = vmatpush.xpose.msra.mxu0 0.0
    %4109 = vmatpush.xpose.msra.mxu0 0.0
    %4110 = vmatpush.xpose.msra.mxu0 %v478
    %4111 = vmatpush.xpose.msra.mxu0 %v222
    %4112 = vmatmul.f32.gmra.mxu0 %v839
    %v4113 = vpop.f32.mrf.mxu0
    %v4114 = vadd.f32 %v4094, %v4113
    %4115 = vdwg.mxu0
    %4116 = vmatpush.xpose.msra.mxu0 0.0
    %4117 = vmatpush.xpose.msra.mxu0 0.0
    %4118 = vmatpush.xpose.msra.mxu0 0.0
    %4119 = vmatpush.xpose.msra.mxu0 0.0
    %4120 = vmatpush.xpose.msra.mxu0 0.0
    %4121 = vmatpush.xpose.msra.mxu0 0.0
    %4122 = vmatpush.xpose.msra.mxu0 0.0
    %4123 = vmatpush.xpose.msra.mxu0 0.0
    %4124 = vmatpush.xpose.msra.mxu0 0.0
    %4125 = vmatpush.xpose.msra.mxu0 0.0
    %4126 = vmatpush.xpose.msra.mxu0 0.0
    %4127 = vmatpush.xpose.msra.mxu0 0.0
    %4128 = vmatpush.xpose.msra.mxu0 0.0
    %4129 = vmatpush.xpose.msra.mxu0 0.0
    %4130 = vmatpush.xpose.msra.mxu0 %v479
    %4131 = vmatpush.xpose.msra.mxu0 %v223
    %4132 = vmatmul.f32.gmra.mxu0 %v842
    %v4133 = vpop.f32.mrf.mxu0
    %v4134 = vadd.f32 %v4114, %v4133
    %4135 = vdwg.mxu0
    %4136 = vmatpush.xpose.msra.mxu0 0.0
    %4137 = vmatpush.xpose.msra.mxu0 0.0
    %4138 = vmatpush.xpose.msra.mxu0 0.0
    %4139 = vmatpush.xpose.msra.mxu0 0.0
    %4140 = vmatpush.xpose.msra.mxu0 0.0
    %4141 = vmatpush.xpose.msra.mxu0 0.0
    %4142 = vmatpush.xpose.msra.mxu0 0.0
    %4143 = vmatpush.xpose.msra.mxu0 0.0
    %4144 = vmatpush.xpose.msra.mxu0 0.0
    %4145 = vmatpush.xpose.msra.mxu0 0.0
    %4146 = vmatpush.xpose.msra.mxu0 0.0
    %4147 = vmatpush.xpose.msra.mxu0 0.0
    %4148 = vmatpush.xpose.msra.mxu0 0.0
    %4149 = vmatpush.xpose.msra.mxu0 0.0
    %4150 = vmatpush.xpose.msra.mxu0 %v480
    %4151 = vmatpush.xpose.msra.mxu0 %v224
    %4152 = vmatmul.f32.gmra.mxu0 %v843
    %v4153 = vpop.f32.mrf.mxu0
    %v4154 = vadd.f32 %v4134, %v4153
    %4155 = vdwg.mxu0
    %4156 = vmatpush.xpose.msra.mxu0 0.0
    %4157 = vmatpush.xpose.msra.mxu0 0.0
    %4158 = vmatpush.xpose.msra.mxu0 0.0
    %4159 = vmatpush.xpose.msra.mxu0 0.0
    %4160 = vmatpush.xpose.msra.mxu0 0.0
    %4161 = vmatpush.xpose.msra.mxu0 0.0
    %4162 = vmatpush.xpose.msra.mxu0 0.0
    %4163 = vmatpush.xpose.msra.mxu0 0.0
    %4164 = vmatpush.xpose.msra.mxu0 0.0
    %4165 = vmatpush.xpose.msra.mxu0 0.0
    %4166 = vmatpush.xpose.msra.mxu0 0.0
    %4167 = vmatpush.xpose.msra.mxu0 0.0
    %4168 = vmatpush.xpose.msra.mxu0 0.0
    %4169 = vmatpush.xpose.msra.mxu0 0.0
    %4170 = vmatpush.xpose.msra.mxu0 %v481
    %4171 = vmatpush.xpose.msra.mxu0 %v225
    %4172 = vmatmul.f32.gmra.mxu0 %v844
    %v4173 = vpop.f32.mrf.mxu0
    %v4174 = vadd.f32 %v4154, %v4173
    %4175 = vdwg.mxu0
    %4176 = vmatpush.xpose.msra.mxu0 0.0
    %4177 = vmatpush.xpose.msra.mxu0 0.0
    %4178 = vmatpush.xpose.msra.mxu0 0.0
    %4179 = vmatpush.xpose.msra.mxu0 0.0
    %4180 = vmatpush.xpose.msra.mxu0 0.0
    %4181 = vmatpush.xpose.msra.mxu0 0.0
    %4182 = vmatpush.xpose.msra.mxu0 0.0
    %4183 = vmatpush.xpose.msra.mxu0 0.0
    %4184 = vmatpush.xpose.msra.mxu0 0.0
    %4185 = vmatpush.xpose.msra.mxu0 0.0
    %4186 = vmatpush.xpose.msra.mxu0 0.0
    %4187 = vmatpush.xpose.msra.mxu0 0.0
    %4188 = vmatpush.xpose.msra.mxu0 0.0
    %4189 = vmatpush.xpose.msra.mxu0 0.0
    %4190 = vmatpush.xpose.msra.mxu0 %v482
    %4191 = vmatpush.xpose.msra.mxu0 %v226
    %4192 = vmatmul.f32.gmra.mxu0 %v845
    %v4193 = vpop.f32.mrf.mxu0
    %v4194 = vadd.f32 %v4174, %v4193
    %4195 = vdwg.mxu0
    %4196 = vmatpush.xpose.msra.mxu0 0.0
    %4197 = vmatpush.xpose.msra.mxu0 0.0
    %4198 = vmatpush.xpose.msra.mxu0 0.0
    %4199 = vmatpush.xpose.msra.mxu0 0.0
    %4200 = vmatpush.xpose.msra.mxu0 0.0
    %4201 = vmatpush.xpose.msra.mxu0 0.0
    %4202 = vmatpush.xpose.msra.mxu0 0.0
    %4203 = vmatpush.xpose.msra.mxu0 0.0
    %4204 = vmatpush.xpose.msra.mxu0 0.0
    %4205 = vmatpush.xpose.msra.mxu0 0.0
    %4206 = vmatpush.xpose.msra.mxu0 0.0
    %4207 = vmatpush.xpose.msra.mxu0 0.0
    %4208 = vmatpush.xpose.msra.mxu0 0.0
    %4209 = vmatpush.xpose.msra.mxu0 0.0
    %4210 = vmatpush.xpose.msra.mxu0 %v483
    %4211 = vmatpush.xpose.msra.mxu0 %v227
    %4212 = vmatmul.f32.gmra.mxu0 %v846
    %v4213 = vpop.f32.mrf.mxu0
    %v4214 = vadd.f32 %v4194, %v4213
    %4215 = vdwg.mxu0
    %4216 = vmatpush.xpose.msra.mxu0 0.0
    %4217 = vmatpush.xpose.msra.mxu0 0.0
    %4218 = vmatpush.xpose.msra.mxu0 0.0
    %4219 = vmatpush.xpose.msra.mxu0 0.0
    %4220 = vmatpush.xpose.msra.mxu0 0.0
    %4221 = vmatpush.xpose.msra.mxu0 0.0
    %4222 = vmatpush.xpose.msra.mxu0 0.0
    %4223 = vmatpush.xpose.msra.mxu0 0.0
    %4224 = vmatpush.xpose.msra.mxu0 0.0
    %4225 = vmatpush.xpose.msra.mxu0 0.0
    %4226 = vmatpush.xpose.msra.mxu0 0.0
    %4227 = vmatpush.xpose.msra.mxu0 0.0
    %4228 = vmatpush.xpose.msra.mxu0 0.0
    %4229 = vmatpush.xpose.msra.mxu0 0.0
    %4230 = vmatpush.xpose.msra.mxu0 %v484
    %4231 = vmatpush.xpose.msra.mxu0 %v228
    %4232 = vmatmul.f32.gmra.mxu0 %v847
    %v4233 = vpop.f32.mrf.mxu0
    %v4234 = vadd.f32 %v4214, %v4233
    %4235 = vdwg.mxu0
    %4236 = vmatpush.xpose.msra.mxu0 0.0
    %4237 = vmatpush.xpose.msra.mxu0 0.0
    %4238 = vmatpush.xpose.msra.mxu0 0.0
    %4239 = vmatpush.xpose.msra.mxu0 0.0
    %4240 = vmatpush.xpose.msra.mxu0 0.0
    %4241 = vmatpush.xpose.msra.mxu0 0.0
    %4242 = vmatpush.xpose.msra.mxu0 0.0
    %4243 = vmatpush.xpose.msra.mxu0 0.0
    %4244 = vmatpush.xpose.msra.mxu0 0.0
    %4245 = vmatpush.xpose.msra.mxu0 0.0
    %4246 = vmatpush.xpose.msra.mxu0 0.0
    %4247 = vmatpush.xpose.msra.mxu0 0.0
    %4248 = vmatpush.xpose.msra.mxu0 0.0
    %4249 = vmatpush.xpose.msra.mxu0 0.0
    %4250 = vmatpush.xpose.msra.mxu0 %v485
    %4251 = vmatpush.xpose.msra.mxu0 %v229
    %4252 = vmatmul.f32.gmra.mxu0 %v848
    %v4253 = vpop.f32.mrf.mxu0
    %v4254 = vadd.f32 %v4234, %v4253
    %4255 = vdwg.mxu0
    %4256 = vmatpush.xpose.msra.mxu0 0.0
    %4257 = vmatpush.xpose.msra.mxu0 0.0
    %4258 = vmatpush.xpose.msra.mxu0 0.0
    %4259 = vmatpush.xpose.msra.mxu0 0.0
    %4260 = vmatpush.xpose.msra.mxu0 0.0
    %4261 = vmatpush.xpose.msra.mxu0 0.0
    %4262 = vmatpush.xpose.msra.mxu0 0.0
    %4263 = vmatpush.xpose.msra.mxu0 0.0
    %4264 = vmatpush.xpose.msra.mxu0 0.0
    %4265 = vmatpush.xpose.msra.mxu0 0.0
    %4266 = vmatpush.xpose.msra.mxu0 0.0
    %4267 = vmatpush.xpose.msra.mxu0 0.0
    %4268 = vmatpush.xpose.msra.mxu0 0.0
    %4269 = vmatpush.xpose.msra.mxu0 0.0
    %4270 = vmatpush.xpose.msra.mxu0 %v486
    %4271 = vmatpush.xpose.msra.mxu0 %v230
    %4272 = vmatmul.f32.gmra.mxu0 %v849
    %v4273 = vpop.f32.mrf.mxu0
    %v4274 = vadd.f32 %v4254, %v4273
    %4275 = vdwg.mxu0
    %4276 = vmatpush.xpose.msra.mxu0 0.0
    %4277 = vmatpush.xpose.msra.mxu0 0.0
    %4278 = vmatpush.xpose.msra.mxu0 0.0
    %4279 = vmatpush.xpose.msra.mxu0 0.0
    %4280 = vmatpush.xpose.msra.mxu0 0.0
    %4281 = vmatpush.xpose.msra.mxu0 0.0
    %4282 = vmatpush.xpose.msra.mxu0 0.0
    %4283 = vmatpush.xpose.msra.mxu0 0.0
    %4284 = vmatpush.xpose.msra.mxu0 0.0
    %4285 = vmatpush.xpose.msra.mxu0 0.0
    %4286 = vmatpush.xpose.msra.mxu0 0.0
    %4287 = vmatpush.xpose.msra.mxu0 0.0
    %4288 = vmatpush.xpose.msra.mxu0 0.0
    %4289 = vmatpush.xpose.msra.mxu0 0.0
    %4290 = vmatpush.xpose.msra.mxu0 %v487
    %4291 = vmatpush.xpose.msra.mxu0 %v231
    %4292 = vmatmul.f32.gmra.mxu0 %v852
    %v4293 = vpop.f32.mrf.mxu0
    %v4294 = vadd.f32 %v4274, %v4293
    %4295 = vdwg.mxu0
    %4296 = vmatpush.xpose.msra.mxu0 0.0
    %4297 = vmatpush.xpose.msra.mxu0 0.0
    %4298 = vmatpush.xpose.msra.mxu0 0.0
    %4299 = vmatpush.xpose.msra.mxu0 0.0
    %4300 = vmatpush.xpose.msra.mxu0 0.0
    %4301 = vmatpush.xpose.msra.mxu0 0.0
    %4302 = vmatpush.xpose.msra.mxu0 0.0
    %4303 = vmatpush.xpose.msra.mxu0 0.0
    %4304 = vmatpush.xpose.msra.mxu0 0.0
    %4305 = vmatpush.xpose.msra.mxu0 0.0
    %4306 = vmatpush.xpose.msra.mxu0 0.0
    %4307 = vmatpush.xpose.msra.mxu0 0.0
    %4308 = vmatpush.xpose.msra.mxu0 0.0
    %4309 = vmatpush.xpose.msra.mxu0 0.0
    %4310 = vmatpush.xpose.msra.mxu0 %v488
    %4311 = vmatpush.xpose.msra.mxu0 %v232
    %4312 = vmatmul.f32.gmra.mxu0 %v853
    %v4313 = vpop.f32.mrf.mxu0
    %v4314 = vadd.f32 %v4294, %v4313
    %4315 = vdwg.mxu0
    %4316 = vmatpush.xpose.msra.mxu0 0.0
    %4317 = vmatpush.xpose.msra.mxu0 0.0
    %4318 = vmatpush.xpose.msra.mxu0 0.0
    %4319 = vmatpush.xpose.msra.mxu0 0.0
    %4320 = vmatpush.xpose.msra.mxu0 0.0
    %4321 = vmatpush.xpose.msra.mxu0 0.0
    %4322 = vmatpush.xpose.msra.mxu0 0.0
    %4323 = vmatpush.xpose.msra.mxu0 0.0
    %4324 = vmatpush.xpose.msra.mxu0 0.0
    %4325 = vmatpush.xpose.msra.mxu0 0.0
    %4326 = vmatpush.xpose.msra.mxu0 0.0
    %4327 = vmatpush.xpose.msra.mxu0 0.0
    %4328 = vmatpush.xpose.msra.mxu0 0.0
    %4329 = vmatpush.xpose.msra.mxu0 0.0
    %4330 = vmatpush.xpose.msra.mxu0 %v489
    %4331 = vmatpush.xpose.msra.mxu0 %v233
    %4332 = vmatmul.f32.gmra.mxu0 %v854
    %v4333 = vpop.f32.mrf.mxu0
    %v4334 = vadd.f32 %v4314, %v4333
    %4335 = vdwg.mxu0
    %4336 = vmatpush.xpose.msra.mxu0 0.0
    %4337 = vmatpush.xpose.msra.mxu0 0.0
    %4338 = vmatpush.xpose.msra.mxu0 0.0
    %4339 = vmatpush.xpose.msra.mxu0 0.0
    %4340 = vmatpush.xpose.msra.mxu0 0.0
    %4341 = vmatpush.xpose.msra.mxu0 0.0
    %4342 = vmatpush.xpose.msra.mxu0 0.0
    %4343 = vmatpush.xpose.msra.mxu0 0.0
    %4344 = vmatpush.xpose.msra.mxu0 0.0
    %4345 = vmatpush.xpose.msra.mxu0 0.0
    %4346 = vmatpush.xpose.msra.mxu0 0.0
    %4347 = vmatpush.xpose.msra.mxu0 0.0
    %4348 = vmatpush.xpose.msra.mxu0 0.0
    %4349 = vmatpush.xpose.msra.mxu0 0.0
    %4350 = vmatpush.xpose.msra.mxu0 %v490
    %4351 = vmatpush.xpose.msra.mxu0 %v234
    %4352 = vmatmul.f32.gmra.mxu0 %v855
    %v4353 = vpop.f32.mrf.mxu0
    %v4354 = vadd.f32 %v4334, %v4353
    %4355 = vdwg.mxu0
    %4356 = vmatpush.xpose.msra.mxu0 0.0
    %4357 = vmatpush.xpose.msra.mxu0 0.0
    %4358 = vmatpush.xpose.msra.mxu0 0.0
    %4359 = vmatpush.xpose.msra.mxu0 0.0
    %4360 = vmatpush.xpose.msra.mxu0 0.0
    %4361 = vmatpush.xpose.msra.mxu0 0.0
    %4362 = vmatpush.xpose.msra.mxu0 0.0
    %4363 = vmatpush.xpose.msra.mxu0 0.0
    %4364 = vmatpush.xpose.msra.mxu0 0.0
    %4365 = vmatpush.xpose.msra.mxu0 0.0
    %4366 = vmatpush.xpose.msra.mxu0 0.0
    %4367 = vmatpush.xpose.msra.mxu0 0.0
    %4368 = vmatpush.xpose.msra.mxu0 0.0
    %4369 = vmatpush.xpose.msra.mxu0 0.0
    %4370 = vmatpush.xpose.msra.mxu0 %v491
    %4371 = vmatpush.xpose.msra.mxu0 %v235
    %4372 = vmatmul.f32.gmra.mxu0 %v856
    %v4373 = vpop.f32.mrf.mxu0
    %v4374 = vadd.f32 %v4354, %v4373
    %4375 = vdwg.mxu0
    %4376 = vmatpush.xpose.msra.mxu0 0.0
    %4377 = vmatpush.xpose.msra.mxu0 0.0
    %4378 = vmatpush.xpose.msra.mxu0 0.0
    %4379 = vmatpush.xpose.msra.mxu0 0.0
    %4380 = vmatpush.xpose.msra.mxu0 0.0
    %4381 = vmatpush.xpose.msra.mxu0 0.0
    %4382 = vmatpush.xpose.msra.mxu0 0.0
    %4383 = vmatpush.xpose.msra.mxu0 0.0
    %4384 = vmatpush.xpose.msra.mxu0 0.0
    %4385 = vmatpush.xpose.msra.mxu0 0.0
    %4386 = vmatpush.xpose.msra.mxu0 0.0
    %4387 = vmatpush.xpose.msra.mxu0 0.0
    %4388 = vmatpush.xpose.msra.mxu0 0.0
    %4389 = vmatpush.xpose.msra.mxu0 0.0
    %4390 = vmatpush.xpose.msra.mxu0 %v492
    %4391 = vmatpush.xpose.msra.mxu0 %v236
    %4392 = vmatmul.f32.gmra.mxu0 %v857
    %v4393 = vpop.f32.mrf.mxu0
    %v4394 = vadd.f32 %v4374, %v4393
    %4395 = vdwg.mxu0
    %4396 = vmatpush.xpose.msra.mxu0 0.0
    %4397 = vmatpush.xpose.msra.mxu0 0.0
    %4398 = vmatpush.xpose.msra.mxu0 0.0
    %4399 = vmatpush.xpose.msra.mxu0 0.0
    %4400 = vmatpush.xpose.msra.mxu0 0.0
    %4401 = vmatpush.xpose.msra.mxu0 0.0
    %4402 = vmatpush.xpose.msra.mxu0 0.0
    %4403 = vmatpush.xpose.msra.mxu0 0.0
    %4404 = vmatpush.xpose.msra.mxu0 0.0
    %4405 = vmatpush.xpose.msra.mxu0 0.0
    %4406 = vmatpush.xpose.msra.mxu0 0.0
    %4407 = vmatpush.xpose.msra.mxu0 0.0
    %4408 = vmatpush.xpose.msra.mxu0 0.0
    %4409 = vmatpush.xpose.msra.mxu0 0.0
    %4410 = vmatpush.xpose.msra.mxu0 %v493
    %4411 = vmatpush.xpose.msra.mxu0 %v237
    %4412 = vmatmul.f32.gmra.mxu0 %v858
    %v4413 = vpop.f32.mrf.mxu0
    %v4414 = vadd.f32 %v4394, %v4413
    %4415 = vdwg.mxu0
    %4416 = vmatpush.xpose.msra.mxu0 0.0
    %4417 = vmatpush.xpose.msra.mxu0 0.0
    %4418 = vmatpush.xpose.msra.mxu0 0.0
    %4419 = vmatpush.xpose.msra.mxu0 0.0
    %4420 = vmatpush.xpose.msra.mxu0 0.0
    %4421 = vmatpush.xpose.msra.mxu0 0.0
    %4422 = vmatpush.xpose.msra.mxu0 0.0
    %4423 = vmatpush.xpose.msra.mxu0 0.0
    %4424 = vmatpush.xpose.msra.mxu0 0.0
    %4425 = vmatpush.xpose.msra.mxu0 0.0
    %4426 = vmatpush.xpose.msra.mxu0 0.0
    %4427 = vmatpush.xpose.msra.mxu0 0.0
    %4428 = vmatpush.xpose.msra.mxu0 0.0
    %4429 = vmatpush.xpose.msra.mxu0 0.0
    %4430 = vmatpush.xpose.msra.mxu0 %v494
    %4431 = vmatpush.xpose.msra.mxu0 %v238
    %4432 = vmatmul.f32.gmra.mxu0 %v859
    %v4433 = vpop.f32.mrf.mxu0
    %v4434 = vadd.f32 %v4414, %v4433
    %4435 = vdwg.mxu0
    %4436 = vmatpush.xpose.msra.mxu0 0.0
    %4437 = vmatpush.xpose.msra.mxu0 0.0
    %4438 = vmatpush.xpose.msra.mxu0 0.0
    %4439 = vmatpush.xpose.msra.mxu0 0.0
    %4440 = vmatpush.xpose.msra.mxu0 0.0
    %4441 = vmatpush.xpose.msra.mxu0 0.0
    %4442 = vmatpush.xpose.msra.mxu0 0.0
    %4443 = vmatpush.xpose.msra.mxu0 0.0
    %4444 = vmatpush.xpose.msra.mxu0 0.0
    %4445 = vmatpush.xpose.msra.mxu0 0.0
    %4446 = vmatpush.xpose.msra.mxu0 0.0
    %4447 = vmatpush.xpose.msra.mxu0 0.0
    %4448 = vmatpush.xpose.msra.mxu0 0.0
    %4449 = vmatpush.xpose.msra.mxu0 0.0
    %4450 = vmatpush.xpose.msra.mxu0 %v495
    %4451 = vmatpush.xpose.msra.mxu0 %v239
    %4452 = vmatmul.f32.gmra.mxu0 %v862
    %v4453 = vpop.f32.mrf.mxu0
    %v4454 = vadd.f32 %v4434, %v4453
    %4455 = vdwg.mxu0
    %4456 = vmatpush.xpose.msra.mxu0 0.0
    %4457 = vmatpush.xpose.msra.mxu0 0.0
    %4458 = vmatpush.xpose.msra.mxu0 0.0
    %4459 = vmatpush.xpose.msra.mxu0 0.0
    %4460 = vmatpush.xpose.msra.mxu0 0.0
    %4461 = vmatpush.xpose.msra.mxu0 0.0
    %4462 = vmatpush.xpose.msra.mxu0 0.0
    %4463 = vmatpush.xpose.msra.mxu0 0.0
    %4464 = vmatpush.xpose.msra.mxu0 0.0
    %4465 = vmatpush.xpose.msra.mxu0 0.0
    %4466 = vmatpush.xpose.msra.mxu0 0.0
    %4467 = vmatpush.xpose.msra.mxu0 0.0
    %4468 = vmatpush.xpose.msra.mxu0 0.0
    %4469 = vmatpush.xpose.msra.mxu0 0.0
    %4470 = vmatpush.xpose.msra.mxu0 %v496
    %4471 = vmatpush.xpose.msra.mxu0 %v240
    %4472 = vmatmul.f32.gmra.mxu0 %v863
    %v4473 = vpop.f32.mrf.mxu0
    %v4474 = vadd.f32 %v4454, %v4473
    %4475 = vdwg.mxu0
    %4476 = vmatpush.xpose.msra.mxu0 0.0
    %4477 = vmatpush.xpose.msra.mxu0 0.0
    %4478 = vmatpush.xpose.msra.mxu0 0.0
    %4479 = vmatpush.xpose.msra.mxu0 0.0
    %4480 = vmatpush.xpose.msra.mxu0 0.0
    %4481 = vmatpush.xpose.msra.mxu0 0.0
    %4482 = vmatpush.xpose.msra.mxu0 0.0
    %4483 = vmatpush.xpose.msra.mxu0 0.0
    %4484 = vmatpush.xpose.msra.mxu0 0.0
    %4485 = vmatpush.xpose.msra.mxu0 0.0
    %4486 = vmatpush.xpose.msra.mxu0 0.0
    %4487 = vmatpush.xpose.msra.mxu0 0.0
    %4488 = vmatpush.xpose.msra.mxu0 0.0
    %4489 = vmatpush.xpose.msra.mxu0 0.0
    %4490 = vmatpush.xpose.msra.mxu0 %v497
    %4491 = vmatpush.xpose.msra.mxu0 %v241
    %4492 = vmatmul.f32.gmra.mxu0 %v864
    %v4493 = vpop.f32.mrf.mxu0
    %v4494 = vadd.f32 %v4474, %v4493
    %4495 = vdwg.mxu0
    %4496 = vmatpush.xpose.msra.mxu0 0.0
    %4497 = vmatpush.xpose.msra.mxu0 0.0
    %4498 = vmatpush.xpose.msra.mxu0 0.0
    %4499 = vmatpush.xpose.msra.mxu0 0.0
    %4500 = vmatpush.xpose.msra.mxu0 0.0
    %4501 = vmatpush.xpose.msra.mxu0 0.0
    %4502 = vmatpush.xpose.msra.mxu0 0.0
    %4503 = vmatpush.xpose.msra.mxu0 0.0
    %4504 = vmatpush.xpose.msra.mxu0 0.0
    %4505 = vmatpush.xpose.msra.mxu0 0.0
    %4506 = vmatpush.xpose.msra.mxu0 0.0
    %4507 = vmatpush.xpose.msra.mxu0 0.0
    %4508 = vmatpush.xpose.msra.mxu0 0.0
    %4509 = vmatpush.xpose.msra.mxu0 0.0
    %4510 = vmatpush.xpose.msra.mxu0 %v498
    %4511 = vmatpush.xpose.msra.mxu0 %v242
    %4512 = vmatmul.f32.gmra.mxu0 %v865
    %v4513 = vpop.f32.mrf.mxu0
    %v4514 = vadd.f32 %v4494, %v4513
    %4515 = vdwg.mxu0
    %4516 = vmatpush.xpose.msra.mxu0 0.0
    %4517 = vmatpush.xpose.msra.mxu0 0.0
    %4518 = vmatpush.xpose.msra.mxu0 0.0
    %4519 = vmatpush.xpose.msra.mxu0 0.0
    %4520 = vmatpush.xpose.msra.mxu0 0.0
    %4521 = vmatpush.xpose.msra.mxu0 0.0
    %4522 = vmatpush.xpose.msra.mxu0 0.0
    %4523 = vmatpush.xpose.msra.mxu0 0.0
    %4524 = vmatpush.xpose.msra.mxu0 0.0
    %4525 = vmatpush.xpose.msra.mxu0 0.0
    %4526 = vmatpush.xpose.msra.mxu0 0.0
    %4527 = vmatpush.xpose.msra.mxu0 0.0
    %4528 = vmatpush.xpose.msra.mxu0 0.0
    %4529 = vmatpush.xpose.msra.mxu0 0.0
    %4530 = vmatpush.xpose.msra.mxu0 %v499
    %4531 = vmatpush.xpose.msra.mxu0 %v243
    %4532 = vmatmul.f32.gmra.mxu0 %v866
    %v4533 = vpop.f32.mrf.mxu0
    %v4534 = vadd.f32 %v4514, %v4533
    %4535 = vdwg.mxu0
    %4536 = vmatpush.xpose.msra.mxu0 0.0
    %4537 = vmatpush.xpose.msra.mxu0 0.0
    %4538 = vmatpush.xpose.msra.mxu0 0.0
    %4539 = vmatpush.xpose.msra.mxu0 0.0
    %4540 = vmatpush.xpose.msra.mxu0 0.0
    %4541 = vmatpush.xpose.msra.mxu0 0.0
    %4542 = vmatpush.xpose.msra.mxu0 0.0
    %4543 = vmatpush.xpose.msra.mxu0 0.0
    %4544 = vmatpush.xpose.msra.mxu0 0.0
    %4545 = vmatpush.xpose.msra.mxu0 0.0
    %4546 = vmatpush.xpose.msra.mxu0 0.0
    %4547 = vmatpush.xpose.msra.mxu0 0.0
    %4548 = vmatpush.xpose.msra.mxu0 0.0
    %4549 = vmatpush.xpose.msra.mxu0 0.0
    %4550 = vmatpush.xpose.msra.mxu0 %v500
    %4551 = vmatpush.xpose.msra.mxu0 %v244
    %4552 = vmatmul.f32.gmra.mxu0 %v867
    %v4553 = vpop.f32.mrf.mxu0
    %v4554 = vadd.f32 %v4534, %v4553
    %4555 = vdwg.mxu0
    %4556 = vmatpush.xpose.msra.mxu0 0.0
    %4557 = vmatpush.xpose.msra.mxu0 0.0
    %4558 = vmatpush.xpose.msra.mxu0 0.0
    %4559 = vmatpush.xpose.msra.mxu0 0.0
    %4560 = vmatpush.xpose.msra.mxu0 0.0
    %4561 = vmatpush.xpose.msra.mxu0 0.0
    %4562 = vmatpush.xpose.msra.mxu0 0.0
    %4563 = vmatpush.xpose.msra.mxu0 0.0
    %4564 = vmatpush.xpose.msra.mxu0 0.0
    %4565 = vmatpush.xpose.msra.mxu0 0.0
    %4566 = vmatpush.xpose.msra.mxu0 0.0
    %4567 = vmatpush.xpose.msra.mxu0 0.0
    %4568 = vmatpush.xpose.msra.mxu0 0.0
    %4569 = vmatpush.xpose.msra.mxu0 0.0
    %4570 = vmatpush.xpose.msra.mxu0 %v501
    %4571 = vmatpush.xpose.msra.mxu0 %v245
    %4572 = vmatmul.f32.gmra.mxu0 %v868
    %v4573 = vpop.f32.mrf.mxu0
    %v4574 = vadd.f32 %v4554, %v4573
    %4575 = vdwg.mxu0
    %4576 = vmatpush.xpose.msra.mxu0 0.0
    %4577 = vmatpush.xpose.msra.mxu0 0.0
    %4578 = vmatpush.xpose.msra.mxu0 0.0
    %4579 = vmatpush.xpose.msra.mxu0 0.0
    %4580 = vmatpush.xpose.msra.mxu0 0.0
    %4581 = vmatpush.xpose.msra.mxu0 0.0
    %4582 = vmatpush.xpose.msra.mxu0 0.0
    %4583 = vmatpush.xpose.msra.mxu0 0.0
    %4584 = vmatpush.xpose.msra.mxu0 0.0
    %4585 = vmatpush.xpose.msra.mxu0 0.0
    %4586 = vmatpush.xpose.msra.mxu0 0.0
    %4587 = vmatpush.xpose.msra.mxu0 0.0
    %4588 = vmatpush.xpose.msra.mxu0 0.0
    %4589 = vmatpush.xpose.msra.mxu0 0.0
    %4590 = vmatpush.xpose.msra.mxu0 %v502
    %4591 = vmatpush.xpose.msra.mxu0 %v246
    %4592 = vmatmul.f32.gmra.mxu0 %v869
    %v4593 = vpop.f32.mrf.mxu0
    %v4594 = vadd.f32 %v4574, %v4593
    %4595 = vdwg.mxu0
    %4596 = vmatpush.xpose.msra.mxu0 0.0
    %4597 = vmatpush.xpose.msra.mxu0 0.0
    %4598 = vmatpush.xpose.msra.mxu0 0.0
    %4599 = vmatpush.xpose.msra.mxu0 0.0
    %4600 = vmatpush.xpose.msra.mxu0 0.0
    %4601 = vmatpush.xpose.msra.mxu0 0.0
    %4602 = vmatpush.xpose.msra.mxu0 0.0
    %4603 = vmatpush.xpose.msra.mxu0 0.0
    %4604 = vmatpush.xpose.msra.mxu0 0.0
    %4605 = vmatpush.xpose.msra.mxu0 0.0
    %4606 = vmatpush.xpose.msra.mxu0 0.0
    %4607 = vmatpush.xpose.msra.mxu0 0.0
    %4608 = vmatpush.xpose.msra.mxu0 0.0
    %4609 = vmatpush.xpose.msra.mxu0 0.0
    %4610 = vmatpush.xpose.msra.mxu0 %v503
    %4611 = vmatpush.xpose.msra.mxu0 %v247
    %4612 = vmatmul.f32.gmra.mxu0 %v872
    %v4613 = vpop.f32.mrf.mxu0
    %v4614 = vadd.f32 %v4594, %v4613
    %4615 = vdwg.mxu0
    %4616 = vmatpush.xpose.msra.mxu0 0.0
    %4617 = vmatpush.xpose.msra.mxu0 0.0
    %4618 = vmatpush.xpose.msra.mxu0 0.0
    %4619 = vmatpush.xpose.msra.mxu0 0.0
    %4620 = vmatpush.xpose.msra.mxu0 0.0
    %4621 = vmatpush.xpose.msra.mxu0 0.0
    %4622 = vmatpush.xpose.msra.mxu0 0.0
    %4623 = vmatpush.xpose.msra.mxu0 0.0
    %4624 = vmatpush.xpose.msra.mxu0 0.0
    %4625 = vmatpush.xpose.msra.mxu0 0.0
    %4626 = vmatpush.xpose.msra.mxu0 0.0
    %4627 = vmatpush.xpose.msra.mxu0 0.0
    %4628 = vmatpush.xpose.msra.mxu0 0.0
    %4629 = vmatpush.xpose.msra.mxu0 0.0
    %4630 = vmatpush.xpose.msra.mxu0 %v504
    %4631 = vmatpush.xpose.msra.mxu0 %v248
    %4632 = vmatmul.f32.gmra.mxu0 %v873
    %v4633 = vpop.f32.mrf.mxu0
    %v4634 = vadd.f32 %v4614, %v4633
    %4635 = vdwg.mxu0
    %4636 = vmatpush.xpose.msra.mxu0 0.0
    %4637 = vmatpush.xpose.msra.mxu0 0.0
    %4638 = vmatpush.xpose.msra.mxu0 0.0
    %4639 = vmatpush.xpose.msra.mxu0 0.0
    %4640 = vmatpush.xpose.msra.mxu0 0.0
    %4641 = vmatpush.xpose.msra.mxu0 0.0
    %4642 = vmatpush.xpose.msra.mxu0 0.0
    %4643 = vmatpush.xpose.msra.mxu0 0.0
    %4644 = vmatpush.xpose.msra.mxu0 0.0
    %4645 = vmatpush.xpose.msra.mxu0 0.0
    %4646 = vmatpush.xpose.msra.mxu0 0.0
    %4647 = vmatpush.xpose.msra.mxu0 0.0
    %4648 = vmatpush.xpose.msra.mxu0 0.0
    %4649 = vmatpush.xpose.msra.mxu0 0.0
    %4650 = vmatpush.xpose.msra.mxu0 %v505
    %4651 = vmatpush.xpose.msra.mxu0 %v249
    %4652 = vmatmul.f32.gmra.mxu0 %v874
    %v4653 = vpop.f32.mrf.mxu0
    %v4654 = vadd.f32 %v4634, %v4653
    %4655 = vdwg.mxu0
    %4656 = vmatpush.xpose.msra.mxu0 0.0
    %4657 = vmatpush.xpose.msra.mxu0 0.0
    %4658 = vmatpush.xpose.msra.mxu0 0.0
    %4659 = vmatpush.xpose.msra.mxu0 0.0
    %4660 = vmatpush.xpose.msra.mxu0 0.0
    %4661 = vmatpush.xpose.msra.mxu0 0.0
    %4662 = vmatpush.xpose.msra.mxu0 0.0
    %4663 = vmatpush.xpose.msra.mxu0 0.0
    %4664 = vmatpush.xpose.msra.mxu0 0.0
    %4665 = vmatpush.xpose.msra.mxu0 0.0
    %4666 = vmatpush.xpose.msra.mxu0 0.0
    %4667 = vmatpush.xpose.msra.mxu0 0.0
    %4668 = vmatpush.xpose.msra.mxu0 0.0
    %4669 = vmatpush.xpose.msra.mxu0 0.0
    %4670 = vmatpush.xpose.msra.mxu0 %v506
    %4671 = vmatpush.xpose.msra.mxu0 %v250
    %4672 = vmatmul.f32.gmra.mxu0 %v875
    %v4673 = vpop.f32.mrf.mxu0
    %v4674 = vadd.f32 %v4654, %v4673
    %4675 = vdwg.mxu0
    %4676 = vmatpush.xpose.msra.mxu0 0.0
    %4677 = vmatpush.xpose.msra.mxu0 0.0
    %4678 = vmatpush.xpose.msra.mxu0 0.0
    %4679 = vmatpush.xpose.msra.mxu0 0.0
    %4680 = vmatpush.xpose.msra.mxu0 0.0
    %4681 = vmatpush.xpose.msra.mxu0 0.0
    %4682 = vmatpush.xpose.msra.mxu0 0.0
    %4683 = vmatpush.xpose.msra.mxu0 0.0
    %4684 = vmatpush.xpose.msra.mxu0 0.0
    %4685 = vmatpush.xpose.msra.mxu0 0.0
    %4686 = vmatpush.xpose.msra.mxu0 0.0
    %4687 = vmatpush.xpose.msra.mxu0 0.0
    %4688 = vmatpush.xpose.msra.mxu0 0.0
    %4689 = vmatpush.xpose.msra.mxu0 0.0
    %4690 = vmatpush.xpose.msra.mxu0 %v507
    %4691 = vmatpush.xpose.msra.mxu0 %v251
    %4692 = vmatmul.f32.gmra.mxu0 %v876
    %v4693 = vpop.f32.mrf.mxu0
    %v4694 = vadd.f32 %v4674, %v4693
    %4695 = vdwg.mxu0
    %4696 = vmatpush.xpose.msra.mxu0 0.0
    %4697 = vmatpush.xpose.msra.mxu0 0.0
    %4698 = vmatpush.xpose.msra.mxu0 0.0
    %4699 = vmatpush.xpose.msra.mxu0 0.0
    %4700 = vmatpush.xpose.msra.mxu0 0.0
    %4701 = vmatpush.xpose.msra.mxu0 0.0
    %4702 = vmatpush.xpose.msra.mxu0 0.0
    %4703 = vmatpush.xpose.msra.mxu0 0.0
    %4704 = vmatpush.xpose.msra.mxu0 0.0
    %4705 = vmatpush.xpose.msra.mxu0 0.0
    %4706 = vmatpush.xpose.msra.mxu0 0.0
    %4707 = vmatpush.xpose.msra.mxu0 0.0
    %4708 = vmatpush.xpose.msra.mxu0 0.0
    %4709 = vmatpush.xpose.msra.mxu0 0.0
    %4710 = vmatpush.xpose.msra.mxu0 %v508
    %4711 = vmatpush.xpose.msra.mxu0 %v252
    %4712 = vmatmul.f32.gmra.mxu0 %v877
    %v4713 = vpop.f32.mrf.mxu0
    %v4714 = vadd.f32 %v4694, %v4713
    %4715 = vdwg.mxu0
    %4716 = vmatpush.xpose.msra.mxu0 0.0
    %4717 = vmatpush.xpose.msra.mxu0 0.0
    %4718 = vmatpush.xpose.msra.mxu0 0.0
    %4719 = vmatpush.xpose.msra.mxu0 0.0
    %4720 = vmatpush.xpose.msra.mxu0 0.0
    %4721 = vmatpush.xpose.msra.mxu0 0.0
    %4722 = vmatpush.xpose.msra.mxu0 0.0
    %4723 = vmatpush.xpose.msra.mxu0 0.0
    %4724 = vmatpush.xpose.msra.mxu0 0.0
    %4725 = vmatpush.xpose.msra.mxu0 0.0
    %4726 = vmatpush.xpose.msra.mxu0 0.0
    %4727 = vmatpush.xpose.msra.mxu0 0.0
    %4728 = vmatpush.xpose.msra.mxu0 0.0
    %4729 = vmatpush.xpose.msra.mxu0 0.0
    %4730 = vmatpush.xpose.msra.mxu0 %v509
    %4731 = vmatpush.xpose.msra.mxu0 %v253
    %4732 = vmatmul.f32.gmra.mxu0 %v878
    %v4733 = vpop.f32.mrf.mxu0
    %v4734 = vadd.f32 %v4714, %v4733
    %4735 = vdwg.mxu0
    %4736 = vmatpush.xpose.msra.mxu0 0.0
    %4737 = vmatpush.xpose.msra.mxu0 0.0
    %4738 = vmatpush.xpose.msra.mxu0 0.0
    %4739 = vmatpush.xpose.msra.mxu0 0.0
    %4740 = vmatpush.xpose.msra.mxu0 0.0
    %4741 = vmatpush.xpose.msra.mxu0 0.0
    %4742 = vmatpush.xpose.msra.mxu0 0.0
    %4743 = vmatpush.xpose.msra.mxu0 0.0
    %4744 = vmatpush.xpose.msra.mxu0 0.0
    %4745 = vmatpush.xpose.msra.mxu0 0.0
    %4746 = vmatpush.xpose.msra.mxu0 0.0
    %4747 = vmatpush.xpose.msra.mxu0 0.0
    %4748 = vmatpush.xpose.msra.mxu0 0.0
    %4749 = vmatpush.xpose.msra.mxu0 0.0
    %4750 = vmatpush.xpose.msra.mxu0 %v510
    %4751 = vmatpush.xpose.msra.mxu0 %v254
    %4752 = vmatmul.f32.gmra.mxu0 %v879
    %v4753 = vpop.f32.mrf.mxu0
    %v4754 = vadd.f32 %v4734, %v4753
    %4755 = vdwg.mxu0
    %4756 = vmatpush.xpose.msra.mxu0 0.0
    %4757 = vmatpush.xpose.msra.mxu0 0.0
    %4758 = vmatpush.xpose.msra.mxu0 0.0
    %4759 = vmatpush.xpose.msra.mxu0 0.0
    %4760 = vmatpush.xpose.msra.mxu0 0.0
    %4761 = vmatpush.xpose.msra.mxu0 0.0
    %4762 = vmatpush.xpose.msra.mxu0 0.0
    %4763 = vmatpush.xpose.msra.mxu0 0.0
    %4764 = vmatpush.xpose.msra.mxu0 0.0
    %4765 = vmatpush.xpose.msra.mxu0 0.0
    %4766 = vmatpush.xpose.msra.mxu0 0.0
    %4767 = vmatpush.xpose.msra.mxu0 0.0
    %4768 = vmatpush.xpose.msra.mxu0 0.0
    %4769 = vmatpush.xpose.msra.mxu0 0.0
    %4770 = vmatpush.xpose.msra.mxu0 %v511
    %4771 = vmatpush.xpose.msra.mxu0 %v255
    %4772 = vmatmul.f32.gmra.mxu0 %v882
    %v4773 = vpop.f32.mrf.mxu0
    %v4774 = vadd.f32 %v4754, %v4773
    %4775 = vdwg.mxu0
    %4776 = vmatpush.xpose.msra.mxu0 0.0
    %4777 = vmatpush.xpose.msra.mxu0 0.0
    %4778 = vmatpush.xpose.msra.mxu0 0.0
    %4779 = vmatpush.xpose.msra.mxu0 0.0
    %4780 = vmatpush.xpose.msra.mxu0 0.0
    %4781 = vmatpush.xpose.msra.mxu0 0.0
    %4782 = vmatpush.xpose.msra.mxu0 0.0
    %4783 = vmatpush.xpose.msra.mxu0 0.0
    %4784 = vmatpush.xpose.msra.mxu0 0.0
    %4785 = vmatpush.xpose.msra.mxu0 0.0
    %4786 = vmatpush.xpose.msra.mxu0 0.0
    %4787 = vmatpush.xpose.msra.mxu0 0.0
    %4788 = vmatpush.xpose.msra.mxu0 0.0
    %4789 = vmatpush.xpose.msra.mxu0 0.0
    %4790 = vmatpush.xpose.msra.mxu0 %v512
    %4791 = vmatpush.xpose.msra.mxu0 %v256
    %4792 = vmatmul.f32.gmra.mxu0 %v883
    %v4793 = vpop.f32.mrf.mxu0
    %v4794 = vadd.f32 %v4774, %v4793
    %4795 = vdwg.mxu0
    %4796 = vmatpush.xpose.msra.mxu0 0.0
    %4797 = vmatpush.xpose.msra.mxu0 0.0
    %4798 = vmatpush.xpose.msra.mxu0 0.0
    %4799 = vmatpush.xpose.msra.mxu0 0.0
    %4800 = vmatpush.xpose.msra.mxu0 0.0
    %4801 = vmatpush.xpose.msra.mxu0 0.0
    %4802 = vmatpush.xpose.msra.mxu0 0.0
    %4803 = vmatpush.xpose.msra.mxu0 0.0
    %4804 = vmatpush.xpose.msra.mxu0 0.0
    %4805 = vmatpush.xpose.msra.mxu0 0.0
    %4806 = vmatpush.xpose.msra.mxu0 0.0
    %4807 = vmatpush.xpose.msra.mxu0 0.0
    %4808 = vmatpush.xpose.msra.mxu0 0.0
    %4809 = vmatpush.xpose.msra.mxu0 0.0
    %4810 = vmatpush.xpose.msra.mxu0 %v513
    %4811 = vmatpush.xpose.msra.mxu0 %v257
    %4812 = vmatmul.f32.gmra.mxu0 %v884
    %v4813 = vpop.f32.mrf.mxu0
    %v4814 = vadd.f32 %v4794, %v4813
    %4815 = vdwg.mxu0
    %4816 = vmatpush.xpose.msra.mxu0 0.0
    %4817 = vmatpush.xpose.msra.mxu0 0.0
    %4818 = vmatpush.xpose.msra.mxu0 0.0
    %4819 = vmatpush.xpose.msra.mxu0 0.0
    %4820 = vmatpush.xpose.msra.mxu0 0.0
    %4821 = vmatpush.xpose.msra.mxu0 0.0
    %4822 = vmatpush.xpose.msra.mxu0 0.0
    %4823 = vmatpush.xpose.msra.mxu0 0.0
    %4824 = vmatpush.xpose.msra.mxu0 0.0
    %4825 = vmatpush.xpose.msra.mxu0 0.0
    %4826 = vmatpush.xpose.msra.mxu0 0.0
    %4827 = vmatpush.xpose.msra.mxu0 0.0
    %4828 = vmatpush.xpose.msra.mxu0 0.0
    %4829 = vmatpush.xpose.msra.mxu0 0.0
    %4830 = vmatpush.xpose.msra.mxu0 %v514
    %4831 = vmatpush.xpose.msra.mxu0 %v258
    %4832 = vmatmul.f32.gmra.mxu0 %v885
    %v4833 = vpop.f32.mrf.mxu0
    %v4834 = vadd.f32 %v4814, %v4833
    %4835 = vdwg.mxu0
    %4836 = vmatpush.xpose.msra.mxu0 0.0
    %4837 = vmatpush.xpose.msra.mxu0 0.0
    %4838 = vmatpush.xpose.msra.mxu0 0.0
    %4839 = vmatpush.xpose.msra.mxu0 0.0
    %4840 = vmatpush.xpose.msra.mxu0 0.0
    %4841 = vmatpush.xpose.msra.mxu0 0.0
    %4842 = vmatpush.xpose.msra.mxu0 0.0
    %4843 = vmatpush.xpose.msra.mxu0 0.0
    %4844 = vmatpush.xpose.msra.mxu0 0.0
    %4845 = vmatpush.xpose.msra.mxu0 0.0
    %4846 = vmatpush.xpose.msra.mxu0 0.0
    %4847 = vmatpush.xpose.msra.mxu0 0.0
    %4848 = vmatpush.xpose.msra.mxu0 0.0
    %4849 = vmatpush.xpose.msra.mxu0 0.0
    %4850 = vmatpush.xpose.msra.mxu0 %v515
    %4851 = vmatpush.xpose.msra.mxu0 %v259
    %4852 = vmatmul.f32.gmra.mxu0 %v886
    %v4853 = vpop.f32.mrf.mxu0
    %v4854 = vadd.f32 %v4834, %v4853
    %4855 = vdwg.mxu0
    %4856 = vmatpush.xpose.msra.mxu0 0.0
    %4857 = vmatpush.xpose.msra.mxu0 0.0
    %4858 = vmatpush.xpose.msra.mxu0 0.0
    %4859 = vmatpush.xpose.msra.mxu0 0.0
    %4860 = vmatpush.xpose.msra.mxu0 0.0
    %4861 = vmatpush.xpose.msra.mxu0 0.0
    %4862 = vmatpush.xpose.msra.mxu0 0.0
    %4863 = vmatpush.xpose.msra.mxu0 0.0
    %4864 = vmatpush.xpose.msra.mxu0 0.0
    %4865 = vmatpush.xpose.msra.mxu0 0.0
    %4866 = vmatpush.xpose.msra.mxu0 0.0
    %4867 = vmatpush.xpose.msra.mxu0 0.0
    %4868 = vmatpush.xpose.msra.mxu0 0.0
    %4869 = vmatpush.xpose.msra.mxu0 0.0
    %4870 = vmatpush.xpose.msra.mxu0 %v516
    %4871 = vmatpush.xpose.msra.mxu0 %v260
    %4872 = vmatmul.f32.gmra.mxu0 %v887
    %v4873 = vpop.f32.mrf.mxu0
    %v4874 = vadd.f32 %v4854, %v4873
    %4875 = vdwg.mxu0
    %4876 = vmatpush.xpose.msra.mxu0 0.0
    %4877 = vmatpush.xpose.msra.mxu0 0.0
    %4878 = vmatpush.xpose.msra.mxu0 0.0
    %4879 = vmatpush.xpose.msra.mxu0 0.0
    %4880 = vmatpush.xpose.msra.mxu0 0.0
    %4881 = vmatpush.xpose.msra.mxu0 0.0
    %4882 = vmatpush.xpose.msra.mxu0 0.0
    %4883 = vmatpush.xpose.msra.mxu0 0.0
    %4884 = vmatpush.xpose.msra.mxu0 0.0
    %4885 = vmatpush.xpose.msra.mxu0 0.0
    %4886 = vmatpush.xpose.msra.mxu0 0.0
    %4887 = vmatpush.xpose.msra.mxu0 0.0
    %4888 = vmatpush.xpose.msra.mxu0 0.0
    %4889 = vmatpush.xpose.msra.mxu0 0.0
    %4890 = vmatpush.xpose.msra.mxu0 %v517
    %4891 = vmatpush.xpose.msra.mxu0 %v261
    %4892 = vmatmul.f32.gmra.mxu0 %v888
    %v4893 = vpop.f32.mrf.mxu0
    %v4894 = vadd.f32 %v4874, %v4893
    %4895 = vdwg.mxu0
    %4896 = vmatpush.xpose.msra.mxu0 0.0
    %4897 = vmatpush.xpose.msra.mxu0 0.0
    %4898 = vmatpush.xpose.msra.mxu0 0.0
    %4899 = vmatpush.xpose.msra.mxu0 0.0
    %4900 = vmatpush.xpose.msra.mxu0 0.0
    %4901 = vmatpush.xpose.msra.mxu0 0.0
    %4902 = vmatpush.xpose.msra.mxu0 0.0
    %4903 = vmatpush.xpose.msra.mxu0 0.0
    %4904 = vmatpush.xpose.msra.mxu0 0.0
    %4905 = vmatpush.xpose.msra.mxu0 0.0
    %4906 = vmatpush.xpose.msra.mxu0 0.0
    %4907 = vmatpush.xpose.msra.mxu0 0.0
    %4908 = vmatpush.xpose.msra.mxu0 0.0
    %4909 = vmatpush.xpose.msra.mxu0 0.0
    %4910 = vmatpush.xpose.msra.mxu0 %v518
    %4911 = vmatpush.xpose.msra.mxu0 %v262
    %4912 = vmatmul.f32.gmra.mxu0 %v889
    %v4913 = vpop.f32.mrf.mxu0
    %v4914 = vadd.f32 %v4894, %v4913
    %4915 = vdwg.mxu0
    %4916 = vmatpush.xpose.msra.mxu0 0.0
    %4917 = vmatpush.xpose.msra.mxu0 0.0
    %4918 = vmatpush.xpose.msra.mxu0 0.0
    %4919 = vmatpush.xpose.msra.mxu0 0.0
    %4920 = vmatpush.xpose.msra.mxu0 0.0
    %4921 = vmatpush.xpose.msra.mxu0 0.0
    %4922 = vmatpush.xpose.msra.mxu0 0.0
    %4923 = vmatpush.xpose.msra.mxu0 0.0
    %4924 = vmatpush.xpose.msra.mxu0 0.0
    %4925 = vmatpush.xpose.msra.mxu0 0.0
    %4926 = vmatpush.xpose.msra.mxu0 0.0
    %4927 = vmatpush.xpose.msra.mxu0 0.0
    %4928 = vmatpush.xpose.msra.mxu0 0.0
    %4929 = vmatpush.xpose.msra.mxu0 0.0
    %4930 = vmatpush.xpose.msra.mxu0 %v519
    %4931 = vmatpush.xpose.msra.mxu0 %v263
    %4932 = vmatmul.f32.gmra.mxu0 %v892
    %v4933 = vpop.f32.mrf.mxu0
    %v4934 = vadd.f32 %v4914, %v4933
    %4935 = vdwg.mxu0
    %4936 = vmatpush.xpose.msra.mxu0 0.0
    %4937 = vmatpush.xpose.msra.mxu0 0.0
    %4938 = vmatpush.xpose.msra.mxu0 0.0
    %4939 = vmatpush.xpose.msra.mxu0 0.0
    %4940 = vmatpush.xpose.msra.mxu0 0.0
    %4941 = vmatpush.xpose.msra.mxu0 0.0
    %4942 = vmatpush.xpose.msra.mxu0 0.0
    %4943 = vmatpush.xpose.msra.mxu0 0.0
    %4944 = vmatpush.xpose.msra.mxu0 0.0
    %4945 = vmatpush.xpose.msra.mxu0 0.0
    %4946 = vmatpush.xpose.msra.mxu0 0.0
    %4947 = vmatpush.xpose.msra.mxu0 0.0
    %4948 = vmatpush.xpose.msra.mxu0 0.0
    %4949 = vmatpush.xpose.msra.mxu0 0.0
    %4950 = vmatpush.xpose.msra.mxu0 %v520
    %4951 = vmatpush.xpose.msra.mxu0 %v264
    %4952 = vmatmul.f32.gmra.mxu0 %v893
    %v4953 = vpop.f32.mrf.mxu0
    %v4954 = vadd.f32 %v4934, %v4953
    %4955 = vdwg.mxu0
    %4956 = vmatpush.xpose.msra.mxu0 0.0
    %4957 = vmatpush.xpose.msra.mxu0 0.0
    %4958 = vmatpush.xpose.msra.mxu0 0.0
    %4959 = vmatpush.xpose.msra.mxu0 0.0
    %4960 = vmatpush.xpose.msra.mxu0 0.0
    %4961 = vmatpush.xpose.msra.mxu0 0.0
    %4962 = vmatpush.xpose.msra.mxu0 0.0
    %4963 = vmatpush.xpose.msra.mxu0 0.0
    %4964 = vmatpush.xpose.msra.mxu0 0.0
    %4965 = vmatpush.xpose.msra.mxu0 0.0
    %4966 = vmatpush.xpose.msra.mxu0 0.0
    %4967 = vmatpush.xpose.msra.mxu0 0.0
    %4968 = vmatpush.xpose.msra.mxu0 0.0
    %4969 = vmatpush.xpose.msra.mxu0 0.0
    %4970 = vmatpush.xpose.msra.mxu0 %v521
    %4971 = vmatpush.xpose.msra.mxu0 %v265
    %4972 = vmatmul.f32.gmra.mxu0 %v894
    %v4973 = vpop.f32.mrf.mxu0
    %v4974 = vadd.f32 %v4954, %v4973
    %4975 = vdwg.mxu0
    %4976 = vmatpush.xpose.msra.mxu0 0.0
    %4977 = vmatpush.xpose.msra.mxu0 0.0
    %4978 = vmatpush.xpose.msra.mxu0 0.0
    %4979 = vmatpush.xpose.msra.mxu0 0.0
    %4980 = vmatpush.xpose.msra.mxu0 0.0
    %4981 = vmatpush.xpose.msra.mxu0 0.0
    %4982 = vmatpush.xpose.msra.mxu0 0.0
    %4983 = vmatpush.xpose.msra.mxu0 0.0
    %4984 = vmatpush.xpose.msra.mxu0 0.0
    %4985 = vmatpush.xpose.msra.mxu0 0.0
    %4986 = vmatpush.xpose.msra.mxu0 0.0
    %4987 = vmatpush.xpose.msra.mxu0 0.0
    %4988 = vmatpush.xpose.msra.mxu0 0.0
    %4989 = vmatpush.xpose.msra.mxu0 0.0
    %4990 = vmatpush.xpose.msra.mxu0 %v522
    %4991 = vmatpush.xpose.msra.mxu0 %v266
    %4992 = vmatmul.f32.gmra.mxu0 %v895
    %v4993 = vpop.f32.mrf.mxu0
    %v4994 = vadd.f32 %v4974, %v4993
    %4995 = vdwg.mxu0
    %4996 = vmatpush.xpose.msra.mxu0 0.0
    %4997 = vmatpush.xpose.msra.mxu0 0.0
    %4998 = vmatpush.xpose.msra.mxu0 0.0
    %4999 = vmatpush.xpose.msra.mxu0 0.0
    %5000 = vmatpush.xpose.msra.mxu0 0.0
    %5001 = vmatpush.xpose.msra.mxu0 0.0
    %5002 = vmatpush.xpose.msra.mxu0 0.0
    %5003 = vmatpush.xpose.msra.mxu0 0.0
    %5004 = vmatpush.xpose.msra.mxu0 0.0
    %5005 = vmatpush.xpose.msra.mxu0 0.0
    %5006 = vmatpush.xpose.msra.mxu0 0.0
    %5007 = vmatpush.xpose.msra.mxu0 0.0
    %5008 = vmatpush.xpose.msra.mxu0 0.0
    %5009 = vmatpush.xpose.msra.mxu0 0.0
    %5010 = vmatpush.xpose.msra.mxu0 %v523
    %5011 = vmatpush.xpose.msra.mxu0 %v267
    %5012 = vmatmul.f32.gmra.mxu0 %v896
    %v5013 = vpop.f32.mrf.mxu0
    %v5014 = vadd.f32 %v4994, %v5013
    %5015 = vdwg.mxu0
    %5016 = vmatpush.xpose.msra.mxu0 0.0
    %5017 = vmatpush.xpose.msra.mxu0 0.0
    %5018 = vmatpush.xpose.msra.mxu0 0.0
    %5019 = vmatpush.xpose.msra.mxu0 0.0
    %5020 = vmatpush.xpose.msra.mxu0 0.0
    %5021 = vmatpush.xpose.msra.mxu0 0.0
    %5022 = vmatpush.xpose.msra.mxu0 0.0
    %5023 = vmatpush.xpose.msra.mxu0 0.0
    %5024 = vmatpush.xpose.msra.mxu0 0.0
    %5025 = vmatpush.xpose.msra.mxu0 0.0
    %5026 = vmatpush.xpose.msra.mxu0 0.0
    %5027 = vmatpush.xpose.msra.mxu0 0.0
    %5028 = vmatpush.xpose.msra.mxu0 0.0
    %5029 = vmatpush.xpose.msra.mxu0 0.0
    %5030 = vmatpush.xpose.msra.mxu0 %v524
    %5031 = vmatpush.xpose.msra.mxu0 %v268
    %5032 = vmatmul.f32.gmra.mxu0 %v897
    %v5033 = vpop.f32.mrf.mxu0
    %v5034 = vadd.f32 %v5014, %v5033
    %5035 = vdwg.mxu0
    %5036 = vmatpush.xpose.msra.mxu0 0.0
    %5037 = vmatpush.xpose.msra.mxu0 0.0
    %5038 = vmatpush.xpose.msra.mxu0 0.0
    %5039 = vmatpush.xpose.msra.mxu0 0.0
    %5040 = vmatpush.xpose.msra.mxu0 0.0
    %5041 = vmatpush.xpose.msra.mxu0 0.0
    %5042 = vmatpush.xpose.msra.mxu0 0.0
    %5043 = vmatpush.xpose.msra.mxu0 0.0
    %5044 = vmatpush.xpose.msra.mxu0 0.0
    %5045 = vmatpush.xpose.msra.mxu0 0.0
    %5046 = vmatpush.xpose.msra.mxu0 0.0
    %5047 = vmatpush.xpose.msra.mxu0 0.0
    %5048 = vmatpush.xpose.msra.mxu0 0.0
    %5049 = vmatpush.xpose.msra.mxu0 0.0
    %5050 = vmatpush.xpose.msra.mxu0 %v525
    %5051 = vmatpush.xpose.msra.mxu0 %v269
    %5052 = vmatmul.f32.gmra.mxu0 %v898
    %v5053 = vpop.f32.mrf.mxu0
    %v5054 = vadd.f32 %v5034, %v5053
    %5055 = vdwg.mxu0
    %5056 = vmatpush.xpose.msra.mxu0 0.0
    %5057 = vmatpush.xpose.msra.mxu0 0.0
    %5058 = vmatpush.xpose.msra.mxu0 0.0
    %5059 = vmatpush.xpose.msra.mxu0 0.0
    %5060 = vmatpush.xpose.msra.mxu0 0.0
    %5061 = vmatpush.xpose.msra.mxu0 0.0
    %5062 = vmatpush.xpose.msra.mxu0 0.0
    %5063 = vmatpush.xpose.msra.mxu0 0.0
    %5064 = vmatpush.xpose.msra.mxu0 0.0
    %5065 = vmatpush.xpose.msra.mxu0 0.0
    %5066 = vmatpush.xpose.msra.mxu0 0.0
    %5067 = vmatpush.xpose.msra.mxu0 0.0
    %5068 = vmatpush.xpose.msra.mxu0 0.0
    %5069 = vmatpush.xpose.msra.mxu0 0.0
    %5070 = vmatpush.xpose.msra.mxu0 %v526
    %5071 = vmatpush.xpose.msra.mxu0 %v270
    %5072 = vmatmul.f32.gmra.mxu0 %v899
    %v5073 = vpop.f32.mrf.mxu0
    %v5074 = vadd.f32 %v5054, %v5073
    %5075 = vdwg.mxu0
    %5076 = vmatpush.xpose.msra.mxu0 0.0
    %5077 = vmatpush.xpose.msra.mxu0 0.0
    %5078 = vmatpush.xpose.msra.mxu0 0.0
    %5079 = vmatpush.xpose.msra.mxu0 0.0
    %5080 = vmatpush.xpose.msra.mxu0 0.0
    %5081 = vmatpush.xpose.msra.mxu0 0.0
    %5082 = vmatpush.xpose.msra.mxu0 0.0
    %5083 = vmatpush.xpose.msra.mxu0 0.0
    %5084 = vmatpush.xpose.msra.mxu0 0.0
    %5085 = vmatpush.xpose.msra.mxu0 0.0
    %5086 = vmatpush.xpose.msra.mxu0 0.0
    %5087 = vmatpush.xpose.msra.mxu0 0.0
    %5088 = vmatpush.xpose.msra.mxu0 0.0
    %5089 = vmatpush.xpose.msra.mxu0 0.0
    %5090 = vmatpush.xpose.msra.mxu0 %v527
    %5091 = vmatpush.xpose.msra.mxu0 %v271
    %5092 = vmatmul.f32.gmra.mxu0 %v902
    %v5093 = vpop.f32.mrf.mxu0
    %v5094 = vadd.f32 %v5074, %v5093
    %5095 = vdwg.mxu0
    %5096 = vmatpush.xpose.msra.mxu0 0.0
    %5097 = vmatpush.xpose.msra.mxu0 0.0
    %5098 = vmatpush.xpose.msra.mxu0 0.0
    %5099 = vmatpush.xpose.msra.mxu0 0.0
    %5100 = vmatpush.xpose.msra.mxu0 0.0
    %5101 = vmatpush.xpose.msra.mxu0 0.0
    %5102 = vmatpush.xpose.msra.mxu0 0.0
    %5103 = vmatpush.xpose.msra.mxu0 0.0
    %5104 = vmatpush.xpose.msra.mxu0 0.0
    %5105 = vmatpush.xpose.msra.mxu0 0.0
    %5106 = vmatpush.xpose.msra.mxu0 0.0
    %5107 = vmatpush.xpose.msra.mxu0 0.0
    %5108 = vmatpush.xpose.msra.mxu0 0.0
    %5109 = vmatpush.xpose.msra.mxu0 0.0
    %5110 = vmatpush.xpose.msra.mxu0 %v528
    %5111 = vmatpush.xpose.msra.mxu0 %v272
    %5112 = vmatmul.f32.gmra.mxu0 %v903
    %v5113 = vpop.f32.mrf.mxu0
    %v5114 = vadd.f32 %v5094, %v5113
    %5115 = vdwg.mxu0
    %5116 = vmatpush.xpose.msra.mxu0 0.0
    %5117 = vmatpush.xpose.msra.mxu0 0.0
    %5118 = vmatpush.xpose.msra.mxu0 0.0
    %5119 = vmatpush.xpose.msra.mxu0 0.0
    %5120 = vmatpush.xpose.msra.mxu0 0.0
    %5121 = vmatpush.xpose.msra.mxu0 0.0
    %5122 = vmatpush.xpose.msra.mxu0 0.0
    %5123 = vmatpush.xpose.msra.mxu0 0.0
    %5124 = vmatpush.xpose.msra.mxu0 0.0
    %5125 = vmatpush.xpose.msra.mxu0 0.0
    %5126 = vmatpush.xpose.msra.mxu0 0.0
    %5127 = vmatpush.xpose.msra.mxu0 0.0
    %5128 = vmatpush.xpose.msra.mxu0 0.0
    %5129 = vmatpush.xpose.msra.mxu0 0.0
    %5130 = vmatpush.xpose.msra.mxu0 %v529
    %5131 = vmatpush.xpose.msra.mxu0 %v273
    %5132 = vmatmul.f32.gmra.mxu0 %v904
    %v5133 = vpop.f32.mrf.mxu0
    %v5134 = vadd.f32 %v5114, %v5133
    %5135 = vdwg.mxu0
    %5136 = vmatpush.xpose.msra.mxu0 0.0
    %5137 = vmatpush.xpose.msra.mxu0 0.0
    %5138 = vmatpush.xpose.msra.mxu0 0.0
    %5139 = vmatpush.xpose.msra.mxu0 0.0
    %5140 = vmatpush.xpose.msra.mxu0 0.0
    %5141 = vmatpush.xpose.msra.mxu0 0.0
    %5142 = vmatpush.xpose.msra.mxu0 0.0
    %5143 = vmatpush.xpose.msra.mxu0 0.0
    %5144 = vmatpush.xpose.msra.mxu0 0.0
    %5145 = vmatpush.xpose.msra.mxu0 0.0
    %5146 = vmatpush.xpose.msra.mxu0 0.0
    %5147 = vmatpush.xpose.msra.mxu0 0.0
    %5148 = vmatpush.xpose.msra.mxu0 0.0
    %5149 = vmatpush.xpose.msra.mxu0 0.0
    %5150 = vmatpush.xpose.msra.mxu0 %v530
    %5151 = vmatpush.xpose.msra.mxu0 %v274
    %5152 = vmatmul.f32.gmra.mxu0 %v905
    %v5153 = vpop.f32.mrf.mxu0
    %v5154 = vadd.f32 %v5134, %v5153
    %5155 = vdwg.mxu0
    %5156 = vmatpush.xpose.msra.mxu0 0.0
    %5157 = vmatpush.xpose.msra.mxu0 0.0
    %5158 = vmatpush.xpose.msra.mxu0 0.0
    %5159 = vmatpush.xpose.msra.mxu0 0.0
    %5160 = vmatpush.xpose.msra.mxu0 0.0
    %5161 = vmatpush.xpose.msra.mxu0 0.0
    %5162 = vmatpush.xpose.msra.mxu0 0.0
    %5163 = vmatpush.xpose.msra.mxu0 0.0
    %5164 = vmatpush.xpose.msra.mxu0 0.0
    %5165 = vmatpush.xpose.msra.mxu0 0.0
    %5166 = vmatpush.xpose.msra.mxu0 0.0
    %5167 = vmatpush.xpose.msra.mxu0 0.0
    %5168 = vmatpush.xpose.msra.mxu0 0.0
    %5169 = vmatpush.xpose.msra.mxu0 0.0
    %5170 = vmatpush.xpose.msra.mxu0 %v531
    %5171 = vmatpush.xpose.msra.mxu0 %v275
    %5172 = vmatmul.f32.gmra.mxu0 %v906
    %v5173 = vpop.f32.mrf.mxu0
    %v5174 = vadd.f32 %v5154, %v5173
    %5175 = vdwg.mxu0
    %5176 = vmatpush.xpose.msra.mxu0 0.0
    %5177 = vmatpush.xpose.msra.mxu0 0.0
    %5178 = vmatpush.xpose.msra.mxu0 0.0
    %5179 = vmatpush.xpose.msra.mxu0 0.0
    %5180 = vmatpush.xpose.msra.mxu0 0.0
    %5181 = vmatpush.xpose.msra.mxu0 0.0
    %5182 = vmatpush.xpose.msra.mxu0 0.0
    %5183 = vmatpush.xpose.msra.mxu0 0.0
    %5184 = vmatpush.xpose.msra.mxu0 0.0
    %5185 = vmatpush.xpose.msra.mxu0 0.0
    %5186 = vmatpush.xpose.msra.mxu0 0.0
    %5187 = vmatpush.xpose.msra.mxu0 0.0
    %5188 = vmatpush.xpose.msra.mxu0 0.0
    %5189 = vmatpush.xpose.msra.mxu0 0.0
    %5190 = vmatpush.xpose.msra.mxu0 %v532
    %5191 = vmatpush.xpose.msra.mxu0 %v276
    %5192 = vmatmul.f32.gmra.mxu0 %v907
    %v5193 = vpop.f32.mrf.mxu0
    %v5194 = vadd.f32 %v5174, %v5193
    %5195 = vdwg.mxu0
    %5196 = vmatpush.xpose.msra.mxu0 0.0
    %5197 = vmatpush.xpose.msra.mxu0 0.0
    %5198 = vmatpush.xpose.msra.mxu0 0.0
    %5199 = vmatpush.xpose.msra.mxu0 0.0
    %5200 = vmatpush.xpose.msra.mxu0 0.0
    %5201 = vmatpush.xpose.msra.mxu0 0.0
    %5202 = vmatpush.xpose.msra.mxu0 0.0
    %5203 = vmatpush.xpose.msra.mxu0 0.0
    %5204 = vmatpush.xpose.msra.mxu0 0.0
    %5205 = vmatpush.xpose.msra.mxu0 0.0
    %5206 = vmatpush.xpose.msra.mxu0 0.0
    %5207 = vmatpush.xpose.msra.mxu0 0.0
    %5208 = vmatpush.xpose.msra.mxu0 0.0
    %5209 = vmatpush.xpose.msra.mxu0 0.0
    %5210 = vmatpush.xpose.msra.mxu0 %v533
    %5211 = vmatpush.xpose.msra.mxu0 %v277
    %5212 = vmatmul.f32.gmra.mxu0 %v908
    %v5213 = vpop.f32.mrf.mxu0
    %v5214 = vadd.f32 %v5194, %v5213
    %5215 = vdwg.mxu0
    %5216 = vmatpush.xpose.msra.mxu0 0.0
    %5217 = vmatpush.xpose.msra.mxu0 0.0
    %5218 = vmatpush.xpose.msra.mxu0 0.0
    %5219 = vmatpush.xpose.msra.mxu0 0.0
    %5220 = vmatpush.xpose.msra.mxu0 0.0
    %5221 = vmatpush.xpose.msra.mxu0 0.0
    %5222 = vmatpush.xpose.msra.mxu0 0.0
    %5223 = vmatpush.xpose.msra.mxu0 0.0
    %5224 = vmatpush.xpose.msra.mxu0 0.0
    %5225 = vmatpush.xpose.msra.mxu0 0.0
    %5226 = vmatpush.xpose.msra.mxu0 0.0
    %5227 = vmatpush.xpose.msra.mxu0 0.0
    %5228 = vmatpush.xpose.msra.mxu0 0.0
    %5229 = vmatpush.xpose.msra.mxu0 0.0
    %5230 = vmatpush.xpose.msra.mxu0 %v534
    %5231 = vmatpush.xpose.msra.mxu0 %v278
    %5232 = vmatmul.f32.gmra.mxu0 %v909
    %v5233 = vpop.f32.mrf.mxu0
    %v5234 = vadd.f32 %v5214, %v5233
    %5235 = vdwg.mxu0
    %5236 = vmatpush.xpose.msra.mxu0 0.0
    %5237 = vmatpush.xpose.msra.mxu0 0.0
    %5238 = vmatpush.xpose.msra.mxu0 0.0
    %5239 = vmatpush.xpose.msra.mxu0 0.0
    %5240 = vmatpush.xpose.msra.mxu0 0.0
    %5241 = vmatpush.xpose.msra.mxu0 0.0
    %5242 = vmatpush.xpose.msra.mxu0 0.0
    %5243 = vmatpush.xpose.msra.mxu0 0.0
    %5244 = vmatpush.xpose.msra.mxu0 0.0
    %5245 = vmatpush.xpose.msra.mxu0 0.0
    %5246 = vmatpush.xpose.msra.mxu0 0.0
    %5247 = vmatpush.xpose.msra.mxu0 0.0
    %5248 = vmatpush.xpose.msra.mxu0 0.0
    %5249 = vmatpush.xpose.msra.mxu0 0.0
    %5250 = vmatpush.xpose.msra.mxu0 %v535
    %5251 = vmatpush.xpose.msra.mxu0 %v279
    %5252 = vmatmul.f32.gmra.mxu0 %v912
    %v5253 = vpop.f32.mrf.mxu0
    %v5254 = vadd.f32 %v5234, %v5253
    %5255 = vdwg.mxu0
    %5256 = vmatpush.xpose.msra.mxu0 0.0
    %5257 = vmatpush.xpose.msra.mxu0 0.0
    %5258 = vmatpush.xpose.msra.mxu0 0.0
    %5259 = vmatpush.xpose.msra.mxu0 0.0
    %5260 = vmatpush.xpose.msra.mxu0 0.0
    %5261 = vmatpush.xpose.msra.mxu0 0.0
    %5262 = vmatpush.xpose.msra.mxu0 0.0
    %5263 = vmatpush.xpose.msra.mxu0 0.0
    %5264 = vmatpush.xpose.msra.mxu0 0.0
    %5265 = vmatpush.xpose.msra.mxu0 0.0
    %5266 = vmatpush.xpose.msra.mxu0 0.0
    %5267 = vmatpush.xpose.msra.mxu0 0.0
    %5268 = vmatpush.xpose.msra.mxu0 0.0
    %5269 = vmatpush.xpose.msra.mxu0 0.0
    %5270 = vmatpush.xpose.msra.mxu0 %v536
    %5271 = vmatpush.xpose.msra.mxu0 %v280
    %5272 = vmatmul.f32.gmra.mxu0 %v913
    %v5273 = vpop.f32.mrf.mxu0
    %v5274 = vadd.f32 %v5254, %v5273
    %5275 = vdwg.mxu0
    %5276 = vmatpush.xpose.msra.mxu0 0.0
    %5277 = vmatpush.xpose.msra.mxu0 0.0
    %5278 = vmatpush.xpose.msra.mxu0 0.0
    %5279 = vmatpush.xpose.msra.mxu0 0.0
    %5280 = vmatpush.xpose.msra.mxu0 0.0
    %5281 = vmatpush.xpose.msra.mxu0 0.0
    %5282 = vmatpush.xpose.msra.mxu0 0.0
    %5283 = vmatpush.xpose.msra.mxu0 0.0
    %5284 = vmatpush.xpose.msra.mxu0 0.0
    %5285 = vmatpush.xpose.msra.mxu0 0.0
    %5286 = vmatpush.xpose.msra.mxu0 0.0
    %5287 = vmatpush.xpose.msra.mxu0 0.0
    %5288 = vmatpush.xpose.msra.mxu0 0.0
    %5289 = vmatpush.xpose.msra.mxu0 0.0
    %5290 = vmatpush.xpose.msra.mxu0 %v537
    %5291 = vmatpush.xpose.msra.mxu0 %v281
    %5292 = vmatmul.f32.gmra.mxu0 %v914
    %v5293 = vpop.f32.mrf.mxu0
    %v5294 = vadd.f32 %v5274, %v5293
    %5295 = vdwg.mxu0
    %5296 = vmatpush.xpose.msra.mxu0 0.0
    %5297 = vmatpush.xpose.msra.mxu0 0.0
    %5298 = vmatpush.xpose.msra.mxu0 0.0
    %5299 = vmatpush.xpose.msra.mxu0 0.0
    %5300 = vmatpush.xpose.msra.mxu0 0.0
    %5301 = vmatpush.xpose.msra.mxu0 0.0
    %5302 = vmatpush.xpose.msra.mxu0 0.0
    %5303 = vmatpush.xpose.msra.mxu0 0.0
    %5304 = vmatpush.xpose.msra.mxu0 0.0
    %5305 = vmatpush.xpose.msra.mxu0 0.0
    %5306 = vmatpush.xpose.msra.mxu0 0.0
    %5307 = vmatpush.xpose.msra.mxu0 0.0
    %5308 = vmatpush.xpose.msra.mxu0 0.0
    %5309 = vmatpush.xpose.msra.mxu0 0.0
    %5310 = vmatpush.xpose.msra.mxu0 %v538
    %5311 = vmatpush.xpose.msra.mxu0 %v282
    %5312 = vmatmul.f32.gmra.mxu0 %v915
    %v5313 = vpop.f32.mrf.mxu0
    %v5314 = vadd.f32 %v5294, %v5313
    %5315 = vdwg.mxu0
    %5316 = vmatpush.xpose.msra.mxu0 0.0
    %5317 = vmatpush.xpose.msra.mxu0 0.0
    %5318 = vmatpush.xpose.msra.mxu0 0.0
    %5319 = vmatpush.xpose.msra.mxu0 0.0
    %5320 = vmatpush.xpose.msra.mxu0 0.0
    %5321 = vmatpush.xpose.msra.mxu0 0.0
    %5322 = vmatpush.xpose.msra.mxu0 0.0
    %5323 = vmatpush.xpose.msra.mxu0 0.0
    %5324 = vmatpush.xpose.msra.mxu0 0.0
    %5325 = vmatpush.xpose.msra.mxu0 0.0
    %5326 = vmatpush.xpose.msra.mxu0 0.0
    %5327 = vmatpush.xpose.msra.mxu0 0.0
    %5328 = vmatpush.xpose.msra.mxu0 0.0
    %5329 = vmatpush.xpose.msra.mxu0 0.0
    %5330 = vmatpush.xpose.msra.mxu0 %v539
    %5331 = vmatpush.xpose.msra.mxu0 %v283
    %5332 = vmatmul.f32.gmra.mxu0 %v916
    %v5333 = vpop.f32.mrf.mxu0
    %v5334 = vadd.f32 %v5314, %v5333
    %5335 = vdwg.mxu0
    %5336 = vmatpush.xpose.msra.mxu0 0.0
    %5337 = vmatpush.xpose.msra.mxu0 0.0
    %5338 = vmatpush.xpose.msra.mxu0 0.0
    %5339 = vmatpush.xpose.msra.mxu0 0.0
    %5340 = vmatpush.xpose.msra.mxu0 0.0
    %5341 = vmatpush.xpose.msra.mxu0 0.0
    %5342 = vmatpush.xpose.msra.mxu0 0.0
    %5343 = vmatpush.xpose.msra.mxu0 0.0
    %5344 = vmatpush.xpose.msra.mxu0 0.0
    %5345 = vmatpush.xpose.msra.mxu0 0.0
    %5346 = vmatpush.xpose.msra.mxu0 0.0
    %5347 = vmatpush.xpose.msra.mxu0 0.0
    %5348 = vmatpush.xpose.msra.mxu0 0.0
    %5349 = vmatpush.xpose.msra.mxu0 0.0
    %5350 = vmatpush.xpose.msra.mxu0 %v540
    %5351 = vmatpush.xpose.msra.mxu0 %v284
    %5352 = vmatmul.f32.gmra.mxu0 %v917
    %v5353 = vpop.f32.mrf.mxu0
    %v5354 = vadd.f32 %v5334, %v5353
    %5355 = vdwg.mxu0
    %5356 = vmatpush.xpose.msra.mxu0 0.0
    %5357 = vmatpush.xpose.msra.mxu0 0.0
    %5358 = vmatpush.xpose.msra.mxu0 0.0
    %5359 = vmatpush.xpose.msra.mxu0 0.0
    %5360 = vmatpush.xpose.msra.mxu0 0.0
    %5361 = vmatpush.xpose.msra.mxu0 0.0
    %5362 = vmatpush.xpose.msra.mxu0 0.0
    %5363 = vmatpush.xpose.msra.mxu0 0.0
    %5364 = vmatpush.xpose.msra.mxu0 0.0
    %5365 = vmatpush.xpose.msra.mxu0 0.0
    %5366 = vmatpush.xpose.msra.mxu0 0.0
    %5367 = vmatpush.xpose.msra.mxu0 0.0
    %5368 = vmatpush.xpose.msra.mxu0 0.0
    %5369 = vmatpush.xpose.msra.mxu0 0.0
    %5370 = vmatpush.xpose.msra.mxu0 %v541
    %5371 = vmatpush.xpose.msra.mxu0 %v285
    %5372 = vmatmul.f32.gmra.mxu0 %v918
    %v5373 = vpop.f32.mrf.mxu0
    %v5374 = vadd.f32 %v5354, %v5373
    %5375 = vdwg.mxu0
    %5376 = vmatpush.xpose.msra.mxu0 0.0
    %5377 = vmatpush.xpose.msra.mxu0 0.0
    %5378 = vmatpush.xpose.msra.mxu0 0.0
    %5379 = vmatpush.xpose.msra.mxu0 0.0
    %5380 = vmatpush.xpose.msra.mxu0 0.0
    %5381 = vmatpush.xpose.msra.mxu0 0.0
    %5382 = vmatpush.xpose.msra.mxu0 0.0
    %5383 = vmatpush.xpose.msra.mxu0 0.0
    %5384 = vmatpush.xpose.msra.mxu0 0.0
    %5385 = vmatpush.xpose.msra.mxu0 0.0
    %5386 = vmatpush.xpose.msra.mxu0 0.0
    %5387 = vmatpush.xpose.msra.mxu0 0.0
    %5388 = vmatpush.xpose.msra.mxu0 0.0
    %5389 = vmatpush.xpose.msra.mxu0 0.0
    %5390 = vmatpush.xpose.msra.mxu0 %v542
    %5391 = vmatpush.xpose.msra.mxu0 %v286
    %5392 = vmatmul.f32.gmra.mxu0 %v919
    %v5393 = vpop.f32.mrf.mxu0
    %v5394 = vadd.f32 %v5374, %v5393
    %5395 = vdwg.mxu0
    %5396 = vmatpush.xpose.msra.mxu0 0.0
    %5397 = vmatpush.xpose.msra.mxu0 0.0
    %5398 = vmatpush.xpose.msra.mxu0 0.0
    %5399 = vmatpush.xpose.msra.mxu0 0.0
    %5400 = vmatpush.xpose.msra.mxu0 0.0
    %5401 = vmatpush.xpose.msra.mxu0 0.0
    %5402 = vmatpush.xpose.msra.mxu0 0.0
    %5403 = vmatpush.xpose.msra.mxu0 0.0
    %5404 = vmatpush.xpose.msra.mxu0 0.0
    %5405 = vmatpush.xpose.msra.mxu0 0.0
    %5406 = vmatpush.xpose.msra.mxu0 0.0
    %5407 = vmatpush.xpose.msra.mxu0 0.0
    %5408 = vmatpush.xpose.msra.mxu0 0.0
    %5409 = vmatpush.xpose.msra.mxu0 0.0
    %5410 = vmatpush.xpose.msra.mxu0 %v543
    %5411 = vmatpush.xpose.msra.mxu0 %v287
    %5412 = vmatmul.f32.gmra.mxu0 %v922
    %v5413 = vpop.f32.mrf.mxu0
    %v5414 = vadd.f32 %v5394, %v5413
    %5415 = vdwg.mxu0
    %5416 = vmatpush.xpose.msra.mxu0 0.0
    %5417 = vmatpush.xpose.msra.mxu0 0.0
    %5418 = vmatpush.xpose.msra.mxu0 0.0
    %5419 = vmatpush.xpose.msra.mxu0 0.0
    %5420 = vmatpush.xpose.msra.mxu0 0.0
    %5421 = vmatpush.xpose.msra.mxu0 0.0
    %5422 = vmatpush.xpose.msra.mxu0 0.0
    %5423 = vmatpush.xpose.msra.mxu0 0.0
    %5424 = vmatpush.xpose.msra.mxu0 0.0
    %5425 = vmatpush.xpose.msra.mxu0 0.0
    %5426 = vmatpush.xpose.msra.mxu0 0.0
    %5427 = vmatpush.xpose.msra.mxu0 0.0
    %5428 = vmatpush.xpose.msra.mxu0 0.0
    %5429 = vmatpush.xpose.msra.mxu0 0.0
    %5430 = vmatpush.xpose.msra.mxu0 %v544
    %5431 = vmatpush.xpose.msra.mxu0 %v288
    %5432 = vmatmul.f32.gmra.mxu0 %v923
    %v5433 = vpop.f32.mrf.mxu0
    %v5434 = vadd.f32 %v5414, %v5433
    %5435 = vdwg.mxu0
    %5436 = vmatpush.xpose.msra.mxu0 0.0
    %5437 = vmatpush.xpose.msra.mxu0 0.0
    %5438 = vmatpush.xpose.msra.mxu0 0.0
    %5439 = vmatpush.xpose.msra.mxu0 0.0
    %5440 = vmatpush.xpose.msra.mxu0 0.0
    %5441 = vmatpush.xpose.msra.mxu0 0.0
    %5442 = vmatpush.xpose.msra.mxu0 0.0
    %5443 = vmatpush.xpose.msra.mxu0 0.0
    %5444 = vmatpush.xpose.msra.mxu0 0.0
    %5445 = vmatpush.xpose.msra.mxu0 0.0
    %5446 = vmatpush.xpose.msra.mxu0 0.0
    %5447 = vmatpush.xpose.msra.mxu0 0.0
    %5448 = vmatpush.xpose.msra.mxu0 0.0
    %5449 = vmatpush.xpose.msra.mxu0 0.0
    %5450 = vmatpush.xpose.msra.mxu0 %v545
    %5451 = vmatpush.xpose.msra.mxu0 %v289
    %5452 = vmatmul.f32.gmra.mxu0 %v924
    %v5453 = vpop.f32.mrf.mxu0
    %v5454 = vadd.f32 %v5434, %v5453
    %5455 = vdwg.mxu0
    %5456 = vmatpush.xpose.msra.mxu0 0.0
    %5457 = vmatpush.xpose.msra.mxu0 0.0
    %5458 = vmatpush.xpose.msra.mxu0 0.0
    %5459 = vmatpush.xpose.msra.mxu0 0.0
    %5460 = vmatpush.xpose.msra.mxu0 0.0
    %5461 = vmatpush.xpose.msra.mxu0 0.0
    %5462 = vmatpush.xpose.msra.mxu0 0.0
    %5463 = vmatpush.xpose.msra.mxu0 0.0
    %5464 = vmatpush.xpose.msra.mxu0 0.0
    %5465 = vmatpush.xpose.msra.mxu0 0.0
    %5466 = vmatpush.xpose.msra.mxu0 0.0
    %5467 = vmatpush.xpose.msra.mxu0 0.0
    %5468 = vmatpush.xpose.msra.mxu0 0.0
    %5469 = vmatpush.xpose.msra.mxu0 0.0
    %5470 = vmatpush.xpose.msra.mxu0 %v546
    %5471 = vmatpush.xpose.msra.mxu0 %v290
    %5472 = vmatmul.f32.gmra.mxu0 %v925
    %v5473 = vpop.f32.mrf.mxu0
    %v5474 = vadd.f32 %v5454, %v5473
    %5475 = vdwg.mxu0
    %5476 = vmatpush.xpose.msra.mxu0 0.0
    %5477 = vmatpush.xpose.msra.mxu0 0.0
    %5478 = vmatpush.xpose.msra.mxu0 0.0
    %5479 = vmatpush.xpose.msra.mxu0 0.0
    %5480 = vmatpush.xpose.msra.mxu0 0.0
    %5481 = vmatpush.xpose.msra.mxu0 0.0
    %5482 = vmatpush.xpose.msra.mxu0 0.0
    %5483 = vmatpush.xpose.msra.mxu0 0.0
    %5484 = vmatpush.xpose.msra.mxu0 0.0
    %5485 = vmatpush.xpose.msra.mxu0 0.0
    %5486 = vmatpush.xpose.msra.mxu0 0.0
    %5487 = vmatpush.xpose.msra.mxu0 0.0
    %5488 = vmatpush.xpose.msra.mxu0 0.0
    %5489 = vmatpush.xpose.msra.mxu0 0.0
    %5490 = vmatpush.xpose.msra.mxu0 %v547
    %5491 = vmatpush.xpose.msra.mxu0 %v291
    %5492 = vmatmul.f32.gmra.mxu0 %v926
    %v5493 = vpop.f32.mrf.mxu0
    %v5494 = vadd.f32 %v5474, %v5493
    %5495 = vdwg.mxu0
    %5496 = vmatpush.xpose.msra.mxu0 0.0
    %5497 = vmatpush.xpose.msra.mxu0 0.0
    %5498 = vmatpush.xpose.msra.mxu0 0.0
    %5499 = vmatpush.xpose.msra.mxu0 0.0
    %5500 = vmatpush.xpose.msra.mxu0 0.0
    %5501 = vmatpush.xpose.msra.mxu0 0.0
    %5502 = vmatpush.xpose.msra.mxu0 0.0
    %5503 = vmatpush.xpose.msra.mxu0 0.0
    %5504 = vmatpush.xpose.msra.mxu0 0.0
    %5505 = vmatpush.xpose.msra.mxu0 0.0
    %5506 = vmatpush.xpose.msra.mxu0 0.0
    %5507 = vmatpush.xpose.msra.mxu0 0.0
    %5508 = vmatpush.xpose.msra.mxu0 0.0
    %5509 = vmatpush.xpose.msra.mxu0 0.0
    %5510 = vmatpush.xpose.msra.mxu0 %v548
    %5511 = vmatpush.xpose.msra.mxu0 %v292
    %5512 = vmatmul.f32.gmra.mxu0 %v927
    %v5513 = vpop.f32.mrf.mxu0
    %v5514 = vadd.f32 %v5494, %v5513
    %5515 = vdwg.mxu0
    %5516 = vmatpush.xpose.msra.mxu0 0.0
    %5517 = vmatpush.xpose.msra.mxu0 0.0
    %5518 = vmatpush.xpose.msra.mxu0 0.0
    %5519 = vmatpush.xpose.msra.mxu0 0.0
    %5520 = vmatpush.xpose.msra.mxu0 0.0
    %5521 = vmatpush.xpose.msra.mxu0 0.0
    %5522 = vmatpush.xpose.msra.mxu0 0.0
    %5523 = vmatpush.xpose.msra.mxu0 0.0
    %5524 = vmatpush.xpose.msra.mxu0 0.0
    %5525 = vmatpush.xpose.msra.mxu0 0.0
    %5526 = vmatpush.xpose.msra.mxu0 0.0
    %5527 = vmatpush.xpose.msra.mxu0 0.0
    %5528 = vmatpush.xpose.msra.mxu0 0.0
    %5529 = vmatpush.xpose.msra.mxu0 0.0
    %5530 = vmatpush.xpose.msra.mxu0 %v549
    %5531 = vmatpush.xpose.msra.mxu0 %v293
    %5532 = vmatmul.f32.gmra.mxu0 %v928
    %v5533 = vpop.f32.mrf.mxu0
    %v5534 = vadd.f32 %v5514, %v5533
    %5535 = vdwg.mxu0
    %5536 = vmatpush.xpose.msra.mxu0 0.0
    %5537 = vmatpush.xpose.msra.mxu0 0.0
    %5538 = vmatpush.xpose.msra.mxu0 0.0
    %5539 = vmatpush.xpose.msra.mxu0 0.0
    %5540 = vmatpush.xpose.msra.mxu0 0.0
    %5541 = vmatpush.xpose.msra.mxu0 0.0
    %5542 = vmatpush.xpose.msra.mxu0 0.0
    %5543 = vmatpush.xpose.msra.mxu0 0.0
    %5544 = vmatpush.xpose.msra.mxu0 0.0
    %5545 = vmatpush.xpose.msra.mxu0 0.0
    %5546 = vmatpush.xpose.msra.mxu0 0.0
    %5547 = vmatpush.xpose.msra.mxu0 0.0
    %5548 = vmatpush.xpose.msra.mxu0 0.0
    %5549 = vmatpush.xpose.msra.mxu0 0.0
    %5550 = vmatpush.xpose.msra.mxu0 %v550
    %5551 = vmatpush.xpose.msra.mxu0 %v294
    %5552 = vmatmul.f32.gmra.mxu0 %v929
    %v5553 = vpop.f32.mrf.mxu0
    %v5554 = vadd.f32 %v5534, %v5553
    %5555 = vdwg.mxu0
    %5556 = vmatpush.xpose.msra.mxu0 0.0
    %5557 = vmatpush.xpose.msra.mxu0 0.0
    %5558 = vmatpush.xpose.msra.mxu0 0.0
    %5559 = vmatpush.xpose.msra.mxu0 0.0
    %5560 = vmatpush.xpose.msra.mxu0 0.0
    %5561 = vmatpush.xpose.msra.mxu0 0.0
    %5562 = vmatpush.xpose.msra.mxu0 0.0
    %5563 = vmatpush.xpose.msra.mxu0 0.0
    %5564 = vmatpush.xpose.msra.mxu0 0.0
    %5565 = vmatpush.xpose.msra.mxu0 0.0
    %5566 = vmatpush.xpose.msra.mxu0 0.0
    %5567 = vmatpush.xpose.msra.mxu0 0.0
    %5568 = vmatpush.xpose.msra.mxu0 0.0
    %5569 = vmatpush.xpose.msra.mxu0 0.0
    %5570 = vmatpush.xpose.msra.mxu0 %v551
    %5571 = vmatpush.xpose.msra.mxu0 %v295
    %5572 = vmatmul.f32.gmra.mxu0 %v932
    %v5573 = vpop.f32.mrf.mxu0
    %v5574 = vadd.f32 %v5554, %v5573
    %5575 = vdwg.mxu0
    %5576 = vmatpush.xpose.msra.mxu0 0.0
    %5577 = vmatpush.xpose.msra.mxu0 0.0
    %5578 = vmatpush.xpose.msra.mxu0 0.0
    %5579 = vmatpush.xpose.msra.mxu0 0.0
    %5580 = vmatpush.xpose.msra.mxu0 0.0
    %5581 = vmatpush.xpose.msra.mxu0 0.0
    %5582 = vmatpush.xpose.msra.mxu0 0.0
    %5583 = vmatpush.xpose.msra.mxu0 0.0
    %5584 = vmatpush.xpose.msra.mxu0 0.0
    %5585 = vmatpush.xpose.msra.mxu0 0.0
    %5586 = vmatpush.xpose.msra.mxu0 0.0
    %5587 = vmatpush.xpose.msra.mxu0 0.0
    %5588 = vmatpush.xpose.msra.mxu0 0.0
    %5589 = vmatpush.xpose.msra.mxu0 0.0
    %5590 = vmatpush.xpose.msra.mxu0 %v552
    %5591 = vmatpush.xpose.msra.mxu0 %v296
    %5592 = vmatmul.f32.gmra.mxu0 %v933
    %v5593 = vpop.f32.mrf.mxu0
    %v5594 = vadd.f32 %v5574, %v5593
    %5595 = vdwg.mxu0
    %5596 = vmatpush.xpose.msra.mxu0 0.0
    %5597 = vmatpush.xpose.msra.mxu0 0.0
    %5598 = vmatpush.xpose.msra.mxu0 0.0
    %5599 = vmatpush.xpose.msra.mxu0 0.0
    %5600 = vmatpush.xpose.msra.mxu0 0.0
    %5601 = vmatpush.xpose.msra.mxu0 0.0
    %5602 = vmatpush.xpose.msra.mxu0 0.0
    %5603 = vmatpush.xpose.msra.mxu0 0.0
    %5604 = vmatpush.xpose.msra.mxu0 0.0
    %5605 = vmatpush.xpose.msra.mxu0 0.0
    %5606 = vmatpush.xpose.msra.mxu0 0.0
    %5607 = vmatpush.xpose.msra.mxu0 0.0
    %5608 = vmatpush.xpose.msra.mxu0 0.0
    %5609 = vmatpush.xpose.msra.mxu0 0.0
    %5610 = vmatpush.xpose.msra.mxu0 %v553
    %5611 = vmatpush.xpose.msra.mxu0 %v297
    %5612 = vmatmul.f32.gmra.mxu0 %v934
    %v5613 = vpop.f32.mrf.mxu0
    %v5614 = vadd.f32 %v5594, %v5613
    %5615 = vdwg.mxu0
    %5616 = vmatpush.xpose.msra.mxu0 0.0
    %5617 = vmatpush.xpose.msra.mxu0 0.0
    %5618 = vmatpush.xpose.msra.mxu0 0.0
    %5619 = vmatpush.xpose.msra.mxu0 0.0
    %5620 = vmatpush.xpose.msra.mxu0 0.0
    %5621 = vmatpush.xpose.msra.mxu0 0.0
    %5622 = vmatpush.xpose.msra.mxu0 0.0
    %5623 = vmatpush.xpose.msra.mxu0 0.0
    %5624 = vmatpush.xpose.msra.mxu0 0.0
    %5625 = vmatpush.xpose.msra.mxu0 0.0
    %5626 = vmatpush.xpose.msra.mxu0 0.0
    %5627 = vmatpush.xpose.msra.mxu0 0.0
    %5628 = vmatpush.xpose.msra.mxu0 0.0
    %5629 = vmatpush.xpose.msra.mxu0 0.0
    %5630 = vmatpush.xpose.msra.mxu0 %v554
    %5631 = vmatpush.xpose.msra.mxu0 %v298
    %5632 = vmatmul.f32.gmra.mxu0 %v935
    %v5633 = vpop.f32.mrf.mxu0
    %v5634 = vadd.f32 %v5614, %v5633
    %5635 = vdwg.mxu0
    %5636 = vmatpush.xpose.msra.mxu0 0.0
    %5637 = vmatpush.xpose.msra.mxu0 0.0
    %5638 = vmatpush.xpose.msra.mxu0 0.0
    %5639 = vmatpush.xpose.msra.mxu0 0.0
    %5640 = vmatpush.xpose.msra.mxu0 0.0
    %5641 = vmatpush.xpose.msra.mxu0 0.0
    %5642 = vmatpush.xpose.msra.mxu0 0.0
    %5643 = vmatpush.xpose.msra.mxu0 0.0
    %5644 = vmatpush.xpose.msra.mxu0 0.0
    %5645 = vmatpush.xpose.msra.mxu0 0.0
    %5646 = vmatpush.xpose.msra.mxu0 0.0
    %5647 = vmatpush.xpose.msra.mxu0 0.0
    %5648 = vmatpush.xpose.msra.mxu0 0.0
    %5649 = vmatpush.xpose.msra.mxu0 0.0
    %5650 = vmatpush.xpose.msra.mxu0 %v555
    %5651 = vmatpush.xpose.msra.mxu0 %v299
    %5652 = vmatmul.f32.gmra.mxu0 %v936
    %v5653 = vpop.f32.mrf.mxu0
    %v5654 = vadd.f32 %v5634, %v5653
    %5655 = vdwg.mxu0
    %5656 = vmatpush.xpose.msra.mxu0 0.0
    %5657 = vmatpush.xpose.msra.mxu0 0.0
    %5658 = vmatpush.xpose.msra.mxu0 0.0
    %5659 = vmatpush.xpose.msra.mxu0 0.0
    %5660 = vmatpush.xpose.msra.mxu0 0.0
    %5661 = vmatpush.xpose.msra.mxu0 0.0
    %5662 = vmatpush.xpose.msra.mxu0 0.0
    %5663 = vmatpush.xpose.msra.mxu0 0.0
    %5664 = vmatpush.xpose.msra.mxu0 0.0
    %5665 = vmatpush.xpose.msra.mxu0 0.0
    %5666 = vmatpush.xpose.msra.mxu0 0.0
    %5667 = vmatpush.xpose.msra.mxu0 0.0
    %5668 = vmatpush.xpose.msra.mxu0 0.0
    %5669 = vmatpush.xpose.msra.mxu0 0.0
    %5670 = vmatpush.xpose.msra.mxu0 %v556
    %5671 = vmatpush.xpose.msra.mxu0 %v300
    %5672 = vmatmul.f32.gmra.mxu0 %v937
    %v5673 = vpop.f32.mrf.mxu0
    %v5674 = vadd.f32 %v5654, %v5673
    %5675 = vdwg.mxu0
    %5676 = vmatpush.xpose.msra.mxu0 0.0
    %5677 = vmatpush.xpose.msra.mxu0 0.0
    %5678 = vmatpush.xpose.msra.mxu0 0.0
    %5679 = vmatpush.xpose.msra.mxu0 0.0
    %5680 = vmatpush.xpose.msra.mxu0 0.0
    %5681 = vmatpush.xpose.msra.mxu0 0.0
    %5682 = vmatpush.xpose.msra.mxu0 0.0
    %5683 = vmatpush.xpose.msra.mxu0 0.0
    %5684 = vmatpush.xpose.msra.mxu0 0.0
    %5685 = vmatpush.xpose.msra.mxu0 0.0
    %5686 = vmatpush.xpose.msra.mxu0 0.0
    %5687 = vmatpush.xpose.msra.mxu0 0.0
    %5688 = vmatpush.xpose.msra.mxu0 0.0
    %5689 = vmatpush.xpose.msra.mxu0 0.0
    %5690 = vmatpush.xpose.msra.mxu0 %v557
    %5691 = vmatpush.xpose.msra.mxu0 %v301
    %5692 = vmatmul.f32.gmra.mxu0 %v938
    %v5693 = vpop.f32.mrf.mxu0
    %v5694 = vadd.f32 %v5674, %v5693
    %5695 = vdwg.mxu0
    %5696 = vmatpush.xpose.msra.mxu0 0.0
    %5697 = vmatpush.xpose.msra.mxu0 0.0
    %5698 = vmatpush.xpose.msra.mxu0 0.0
    %5699 = vmatpush.xpose.msra.mxu0 0.0
    %5700 = vmatpush.xpose.msra.mxu0 0.0
    %5701 = vmatpush.xpose.msra.mxu0 0.0
    %5702 = vmatpush.xpose.msra.mxu0 0.0
    %5703 = vmatpush.xpose.msra.mxu0 0.0
    %5704 = vmatpush.xpose.msra.mxu0 0.0
    %5705 = vmatpush.xpose.msra.mxu0 0.0
    %5706 = vmatpush.xpose.msra.mxu0 0.0
    %5707 = vmatpush.xpose.msra.mxu0 0.0
    %5708 = vmatpush.xpose.msra.mxu0 0.0
    %5709 = vmatpush.xpose.msra.mxu0 0.0
    %5710 = vmatpush.xpose.msra.mxu0 %v558
    %5711 = vmatpush.xpose.msra.mxu0 %v302
    %5712 = vmatmul.f32.gmra.mxu0 %v939
    %v5713 = vpop.f32.mrf.mxu0
    %v5714 = vadd.f32 %v5694, %v5713
    %5715 = vdwg.mxu0
    %5716 = vmatpush.xpose.msra.mxu0 0.0
    %5717 = vmatpush.xpose.msra.mxu0 0.0
    %5718 = vmatpush.xpose.msra.mxu0 0.0
    %5719 = vmatpush.xpose.msra.mxu0 0.0
    %5720 = vmatpush.xpose.msra.mxu0 0.0
    %5721 = vmatpush.xpose.msra.mxu0 0.0
    %5722 = vmatpush.xpose.msra.mxu0 0.0
    %5723 = vmatpush.xpose.msra.mxu0 0.0
    %5724 = vmatpush.xpose.msra.mxu0 0.0
    %5725 = vmatpush.xpose.msra.mxu0 0.0
    %5726 = vmatpush.xpose.msra.mxu0 0.0
    %5727 = vmatpush.xpose.msra.mxu0 0.0
    %5728 = vmatpush.xpose.msra.mxu0 0.0
    %5729 = vmatpush.xpose.msra.mxu0 0.0
    %5730 = vmatpush.xpose.msra.mxu0 %v559
    %5731 = vmatpush.xpose.msra.mxu0 %v303
    %5732 = vmatmul.f32.gmra.mxu0 %v942
    %v5733 = vpop.f32.mrf.mxu0
    %v5734 = vadd.f32 %v5714, %v5733
    %5735 = vdwg.mxu0
    %5736 = vmatpush.xpose.msra.mxu0 0.0
    %5737 = vmatpush.xpose.msra.mxu0 0.0
    %5738 = vmatpush.xpose.msra.mxu0 0.0
    %5739 = vmatpush.xpose.msra.mxu0 0.0
    %5740 = vmatpush.xpose.msra.mxu0 0.0
    %5741 = vmatpush.xpose.msra.mxu0 0.0
    %5742 = vmatpush.xpose.msra.mxu0 0.0
    %5743 = vmatpush.xpose.msra.mxu0 0.0
    %5744 = vmatpush.xpose.msra.mxu0 0.0
    %5745 = vmatpush.xpose.msra.mxu0 0.0
    %5746 = vmatpush.xpose.msra.mxu0 0.0
    %5747 = vmatpush.xpose.msra.mxu0 0.0
    %5748 = vmatpush.xpose.msra.mxu0 0.0
    %5749 = vmatpush.xpose.msra.mxu0 0.0
    %5750 = vmatpush.xpose.msra.mxu0 %v560
    %5751 = vmatpush.xpose.msra.mxu0 %v304
    %5752 = vmatmul.f32.gmra.mxu0 %v943
    %v5753 = vpop.f32.mrf.mxu0
    %v5754 = vadd.f32 %v5734, %v5753
    %5755 = vdwg.mxu0
    %5756 = vmatpush.xpose.msra.mxu0 0.0
    %5757 = vmatpush.xpose.msra.mxu0 0.0
    %5758 = vmatpush.xpose.msra.mxu0 0.0
    %5759 = vmatpush.xpose.msra.mxu0 0.0
    %5760 = vmatpush.xpose.msra.mxu0 0.0
    %5761 = vmatpush.xpose.msra.mxu0 0.0
    %5762 = vmatpush.xpose.msra.mxu0 0.0
    %5763 = vmatpush.xpose.msra.mxu0 0.0
    %5764 = vmatpush.xpose.msra.mxu0 0.0
    %5765 = vmatpush.xpose.msra.mxu0 0.0
    %5766 = vmatpush.xpose.msra.mxu0 0.0
    %5767 = vmatpush.xpose.msra.mxu0 0.0
    %5768 = vmatpush.xpose.msra.mxu0 0.0
    %5769 = vmatpush.xpose.msra.mxu0 0.0
    %5770 = vmatpush.xpose.msra.mxu0 %v561
    %5771 = vmatpush.xpose.msra.mxu0 %v305
    %5772 = vmatmul.f32.gmra.mxu0 %v944
    %v5773 = vpop.f32.mrf.mxu0
    %v5774 = vadd.f32 %v5754, %v5773
    %5775 = vdwg.mxu0
    %5776 = vmatpush.xpose.msra.mxu0 0.0
    %5777 = vmatpush.xpose.msra.mxu0 0.0
    %5778 = vmatpush.xpose.msra.mxu0 0.0
    %5779 = vmatpush.xpose.msra.mxu0 0.0
    %5780 = vmatpush.xpose.msra.mxu0 0.0
    %5781 = vmatpush.xpose.msra.mxu0 0.0
    %5782 = vmatpush.xpose.msra.mxu0 0.0
    %5783 = vmatpush.xpose.msra.mxu0 0.0
    %5784 = vmatpush.xpose.msra.mxu0 0.0
    %5785 = vmatpush.xpose.msra.mxu0 0.0
    %5786 = vmatpush.xpose.msra.mxu0 0.0
    %5787 = vmatpush.xpose.msra.mxu0 0.0
    %5788 = vmatpush.xpose.msra.mxu0 0.0
    %5789 = vmatpush.xpose.msra.mxu0 0.0
    %5790 = vmatpush.xpose.msra.mxu0 %v562
    %5791 = vmatpush.xpose.msra.mxu0 %v306
    %5792 = vmatmul.f32.gmra.mxu0 %v945
    %v5793 = vpop.f32.mrf.mxu0
    %v5794 = vadd.f32 %v5774, %v5793
    %5795 = vdwg.mxu0
    %5796 = vmatpush.xpose.msra.mxu0 0.0
    %5797 = vmatpush.xpose.msra.mxu0 0.0
    %5798 = vmatpush.xpose.msra.mxu0 0.0
    %5799 = vmatpush.xpose.msra.mxu0 0.0
    %5800 = vmatpush.xpose.msra.mxu0 0.0
    %5801 = vmatpush.xpose.msra.mxu0 0.0
    %5802 = vmatpush.xpose.msra.mxu0 0.0
    %5803 = vmatpush.xpose.msra.mxu0 0.0
    %5804 = vmatpush.xpose.msra.mxu0 0.0
    %5805 = vmatpush.xpose.msra.mxu0 0.0
    %5806 = vmatpush.xpose.msra.mxu0 0.0
    %5807 = vmatpush.xpose.msra.mxu0 0.0
    %5808 = vmatpush.xpose.msra.mxu0 0.0
    %5809 = vmatpush.xpose.msra.mxu0 0.0
    %5810 = vmatpush.xpose.msra.mxu0 %v563
    %5811 = vmatpush.xpose.msra.mxu0 %v307
    %5812 = vmatmul.f32.gmra.mxu0 %v946
    %v5813 = vpop.f32.mrf.mxu0
    %v5814 = vadd.f32 %v5794, %v5813
    %5815 = vdwg.mxu0
    %5816 = vmatpush.xpose.msra.mxu0 0.0
    %5817 = vmatpush.xpose.msra.mxu0 0.0
    %5818 = vmatpush.xpose.msra.mxu0 0.0
    %5819 = vmatpush.xpose.msra.mxu0 0.0
    %5820 = vmatpush.xpose.msra.mxu0 0.0
    %5821 = vmatpush.xpose.msra.mxu0 0.0
    %5822 = vmatpush.xpose.msra.mxu0 0.0
    %5823 = vmatpush.xpose.msra.mxu0 0.0
    %5824 = vmatpush.xpose.msra.mxu0 0.0
    %5825 = vmatpush.xpose.msra.mxu0 0.0
    %5826 = vmatpush.xpose.msra.mxu0 0.0
    %5827 = vmatpush.xpose.msra.mxu0 0.0
    %5828 = vmatpush.xpose.msra.mxu0 0.0
    %5829 = vmatpush.xpose.msra.mxu0 0.0
    %5830 = vmatpush.xpose.msra.mxu0 %v564
    %5831 = vmatpush.xpose.msra.mxu0 %v308
    %5832 = vmatmul.f32.gmra.mxu0 %v947
    %v5833 = vpop.f32.mrf.mxu0
    %v5834 = vadd.f32 %v5814, %v5833
    %5835 = vdwg.mxu0
    %5836 = vmatpush.xpose.msra.mxu0 0.0
    %5837 = vmatpush.xpose.msra.mxu0 0.0
    %5838 = vmatpush.xpose.msra.mxu0 0.0
    %5839 = vmatpush.xpose.msra.mxu0 0.0
    %5840 = vmatpush.xpose.msra.mxu0 0.0
    %5841 = vmatpush.xpose.msra.mxu0 0.0
    %5842 = vmatpush.xpose.msra.mxu0 0.0
    %5843 = vmatpush.xpose.msra.mxu0 0.0
    %5844 = vmatpush.xpose.msra.mxu0 0.0
    %5845 = vmatpush.xpose.msra.mxu0 0.0
    %5846 = vmatpush.xpose.msra.mxu0 0.0
    %5847 = vmatpush.xpose.msra.mxu0 0.0
    %5848 = vmatpush.xpose.msra.mxu0 0.0
    %5849 = vmatpush.xpose.msra.mxu0 0.0
    %5850 = vmatpush.xpose.msra.mxu0 %v565
    %5851 = vmatpush.xpose.msra.mxu0 %v309
    %5852 = vmatmul.f32.gmra.mxu0 %v948
    %v5853 = vpop.f32.mrf.mxu0
    %v5854 = vadd.f32 %v5834, %v5853
    %5855 = vdwg.mxu0
    %5856 = vmatpush.xpose.msra.mxu0 0.0
    %5857 = vmatpush.xpose.msra.mxu0 0.0
    %5858 = vmatpush.xpose.msra.mxu0 0.0
    %5859 = vmatpush.xpose.msra.mxu0 0.0
    %5860 = vmatpush.xpose.msra.mxu0 0.0
    %5861 = vmatpush.xpose.msra.mxu0 0.0
    %5862 = vmatpush.xpose.msra.mxu0 0.0
    %5863 = vmatpush.xpose.msra.mxu0 0.0
    %5864 = vmatpush.xpose.msra.mxu0 0.0
    %5865 = vmatpush.xpose.msra.mxu0 0.0
    %5866 = vmatpush.xpose.msra.mxu0 0.0
    %5867 = vmatpush.xpose.msra.mxu0 0.0
    %5868 = vmatpush.xpose.msra.mxu0 0.0
    %5869 = vmatpush.xpose.msra.mxu0 0.0
    %5870 = vmatpush.xpose.msra.mxu0 %v566
    %5871 = vmatpush.xpose.msra.mxu0 %v310
    %5872 = vmatmul.f32.gmra.mxu0 %v949
    %v5873 = vpop.f32.mrf.mxu0
    %v5874 = vadd.f32 %v5854, %v5873
    %5875 = vdwg.mxu0
    %5876 = vmatpush.xpose.msra.mxu0 0.0
    %5877 = vmatpush.xpose.msra.mxu0 0.0
    %5878 = vmatpush.xpose.msra.mxu0 0.0
    %5879 = vmatpush.xpose.msra.mxu0 0.0
    %5880 = vmatpush.xpose.msra.mxu0 0.0
    %5881 = vmatpush.xpose.msra.mxu0 0.0
    %5882 = vmatpush.xpose.msra.mxu0 0.0
    %5883 = vmatpush.xpose.msra.mxu0 0.0
    %5884 = vmatpush.xpose.msra.mxu0 0.0
    %5885 = vmatpush.xpose.msra.mxu0 0.0
    %5886 = vmatpush.xpose.msra.mxu0 0.0
    %5887 = vmatpush.xpose.msra.mxu0 0.0
    %5888 = vmatpush.xpose.msra.mxu0 0.0
    %5889 = vmatpush.xpose.msra.mxu0 0.0
    %5890 = vmatpush.xpose.msra.mxu0 %v567
    %5891 = vmatpush.xpose.msra.mxu0 %v311
    %5892 = vmatmul.f32.gmra.mxu0 %v952
    %v5893 = vpop.f32.mrf.mxu0
    %v5894 = vadd.f32 %v5874, %v5893
    %5895 = vdwg.mxu0
    %5896 = vmatpush.xpose.msra.mxu0 0.0
    %5897 = vmatpush.xpose.msra.mxu0 0.0
    %5898 = vmatpush.xpose.msra.mxu0 0.0
    %5899 = vmatpush.xpose.msra.mxu0 0.0
    %5900 = vmatpush.xpose.msra.mxu0 0.0
    %5901 = vmatpush.xpose.msra.mxu0 0.0
    %5902 = vmatpush.xpose.msra.mxu0 0.0
    %5903 = vmatpush.xpose.msra.mxu0 0.0
    %5904 = vmatpush.xpose.msra.mxu0 0.0
    %5905 = vmatpush.xpose.msra.mxu0 0.0
    %5906 = vmatpush.xpose.msra.mxu0 0.0
    %5907 = vmatpush.xpose.msra.mxu0 0.0
    %5908 = vmatpush.xpose.msra.mxu0 0.0
    %5909 = vmatpush.xpose.msra.mxu0 0.0
    %5910 = vmatpush.xpose.msra.mxu0 %v568
    %5911 = vmatpush.xpose.msra.mxu0 %v312
    %5912 = vmatmul.f32.gmra.mxu0 %v953
    %v5913 = vpop.f32.mrf.mxu0
    %v5914 = vadd.f32 %v5894, %v5913
    %5915 = vdwg.mxu0
    %5916 = vmatpush.xpose.msra.mxu0 0.0
    %5917 = vmatpush.xpose.msra.mxu0 0.0
    %5918 = vmatpush.xpose.msra.mxu0 0.0
    %5919 = vmatpush.xpose.msra.mxu0 0.0
    %5920 = vmatpush.xpose.msra.mxu0 0.0
    %5921 = vmatpush.xpose.msra.mxu0 0.0
    %5922 = vmatpush.xpose.msra.mxu0 0.0
    %5923 = vmatpush.xpose.msra.mxu0 0.0
    %5924 = vmatpush.xpose.msra.mxu0 0.0
    %5925 = vmatpush.xpose.msra.mxu0 0.0
    %5926 = vmatpush.xpose.msra.mxu0 0.0
    %5927 = vmatpush.xpose.msra.mxu0 0.0
    %5928 = vmatpush.xpose.msra.mxu0 0.0
    %5929 = vmatpush.xpose.msra.mxu0 0.0
    %5930 = vmatpush.xpose.msra.mxu0 %v569
    %5931 = vmatpush.xpose.msra.mxu0 %v313
    %5932 = vmatmul.f32.gmra.mxu0 %v954
    %v5933 = vpop.f32.mrf.mxu0
    %v5934 = vadd.f32 %v5914, %v5933
    %5935 = vdwg.mxu0
    %5936 = vmatpush.xpose.msra.mxu0 0.0
    %5937 = vmatpush.xpose.msra.mxu0 0.0
    %5938 = vmatpush.xpose.msra.mxu0 0.0
    %5939 = vmatpush.xpose.msra.mxu0 0.0
    %5940 = vmatpush.xpose.msra.mxu0 0.0
    %5941 = vmatpush.xpose.msra.mxu0 0.0
    %5942 = vmatpush.xpose.msra.mxu0 0.0
    %5943 = vmatpush.xpose.msra.mxu0 0.0
    %5944 = vmatpush.xpose.msra.mxu0 0.0
    %5945 = vmatpush.xpose.msra.mxu0 0.0
    %5946 = vmatpush.xpose.msra.mxu0 0.0
    %5947 = vmatpush.xpose.msra.mxu0 0.0
    %5948 = vmatpush.xpose.msra.mxu0 0.0
    %5949 = vmatpush.xpose.msra.mxu0 0.0
    %5950 = vmatpush.xpose.msra.mxu0 %v570
    %5951 = vmatpush.xpose.msra.mxu0 %v314
    %5952 = vmatmul.f32.gmra.mxu0 %v955
    %v5953 = vpop.f32.mrf.mxu0
    %v5954 = vadd.f32 %v5934, %v5953
    %5955 = vdwg.mxu0
    %5956 = vmatpush.xpose.msra.mxu0 0.0
    %5957 = vmatpush.xpose.msra.mxu0 0.0
    %5958 = vmatpush.xpose.msra.mxu0 0.0
    %5959 = vmatpush.xpose.msra.mxu0 0.0
    %5960 = vmatpush.xpose.msra.mxu0 0.0
    %5961 = vmatpush.xpose.msra.mxu0 0.0
    %5962 = vmatpush.xpose.msra.mxu0 0.0
    %5963 = vmatpush.xpose.msra.mxu0 0.0
    %5964 = vmatpush.xpose.msra.mxu0 0.0
    %5965 = vmatpush.xpose.msra.mxu0 0.0
    %5966 = vmatpush.xpose.msra.mxu0 0.0
    %5967 = vmatpush.xpose.msra.mxu0 0.0
    %5968 = vmatpush.xpose.msra.mxu0 0.0
    %5969 = vmatpush.xpose.msra.mxu0 0.0
    %5970 = vmatpush.xpose.msra.mxu0 %v571
    %5971 = vmatpush.xpose.msra.mxu0 %v315
    %5972 = vmatmul.f32.gmra.mxu0 %v956
    %v5973 = vpop.f32.mrf.mxu0
    %v5974 = vadd.f32 %v5954, %v5973
    %5975 = vdwg.mxu0
    %5976 = vmatpush.xpose.msra.mxu0 0.0
    %5977 = vmatpush.xpose.msra.mxu0 0.0
    %5978 = vmatpush.xpose.msra.mxu0 0.0
    %5979 = vmatpush.xpose.msra.mxu0 0.0
    %5980 = vmatpush.xpose.msra.mxu0 0.0
    %5981 = vmatpush.xpose.msra.mxu0 0.0
    %5982 = vmatpush.xpose.msra.mxu0 0.0
    %5983 = vmatpush.xpose.msra.mxu0 0.0
    %5984 = vmatpush.xpose.msra.mxu0 0.0
    %5985 = vmatpush.xpose.msra.mxu0 0.0
    %5986 = vmatpush.xpose.msra.mxu0 0.0
    %5987 = vmatpush.xpose.msra.mxu0 0.0
    %5988 = vmatpush.xpose.msra.mxu0 0.0
    %5989 = vmatpush.xpose.msra.mxu0 0.0
    %5990 = vmatpush.xpose.msra.mxu0 %v572
    %5991 = vmatpush.xpose.msra.mxu0 %v316
    %5992 = vmatmul.f32.gmra.mxu0 %v957
    %v5993 = vpop.f32.mrf.mxu0
    %v5994 = vadd.f32 %v5974, %v5993
    %5995 = vdwg.mxu0
    %5996 = vmatpush.xpose.msra.mxu0 0.0
    %5997 = vmatpush.xpose.msra.mxu0 0.0
    %5998 = vmatpush.xpose.msra.mxu0 0.0
    %5999 = vmatpush.xpose.msra.mxu0 0.0
    %6000 = vmatpush.xpose.msra.mxu0 0.0
    %6001 = vmatpush.xpose.msra.mxu0 0.0
    %6002 = vmatpush.xpose.msra.mxu0 0.0
    %6003 = vmatpush.xpose.msra.mxu0 0.0
    %6004 = vmatpush.xpose.msra.mxu0 0.0
    %6005 = vmatpush.xpose.msra.mxu0 0.0
    %6006 = vmatpush.xpose.msra.mxu0 0.0
    %6007 = vmatpush.xpose.msra.mxu0 0.0
    %6008 = vmatpush.xpose.msra.mxu0 0.0
    %6009 = vmatpush.xpose.msra.mxu0 0.0
    %6010 = vmatpush.xpose.msra.mxu0 %v573
    %6011 = vmatpush.xpose.msra.mxu0 %v317
    %6012 = vmatmul.f32.gmra.mxu0 %v958
    %v6013 = vpop.f32.mrf.mxu0
    %v6014 = vadd.f32 %v5994, %v6013
    %6015 = vdwg.mxu0
    %6016 = vmatpush.xpose.msra.mxu0 0.0
    %6017 = vmatpush.xpose.msra.mxu0 0.0
    %6018 = vmatpush.xpose.msra.mxu0 0.0
    %6019 = vmatpush.xpose.msra.mxu0 0.0
    %6020 = vmatpush.xpose.msra.mxu0 0.0
    %6021 = vmatpush.xpose.msra.mxu0 0.0
    %6022 = vmatpush.xpose.msra.mxu0 0.0
    %6023 = vmatpush.xpose.msra.mxu0 0.0
    %6024 = vmatpush.xpose.msra.mxu0 0.0
    %6025 = vmatpush.xpose.msra.mxu0 0.0
    %6026 = vmatpush.xpose.msra.mxu0 0.0
    %6027 = vmatpush.xpose.msra.mxu0 0.0
    %6028 = vmatpush.xpose.msra.mxu0 0.0
    %6029 = vmatpush.xpose.msra.mxu0 0.0
    %6030 = vmatpush.xpose.msra.mxu0 %v574
    %6031 = vmatpush.xpose.msra.mxu0 %v318
    %6032 = vmatmul.f32.gmra.mxu0 %v959
    %v6033 = vpop.f32.mrf.mxu0
    %v6034 = vadd.f32 %v6014, %v6033
    %6035 = vdwg.mxu0
    %6036 = vmatpush.xpose.msra.mxu0 0.0
    %6037 = vmatpush.xpose.msra.mxu0 0.0
    %6038 = vmatpush.xpose.msra.mxu0 0.0
    %6039 = vmatpush.xpose.msra.mxu0 0.0
    %6040 = vmatpush.xpose.msra.mxu0 0.0
    %6041 = vmatpush.xpose.msra.mxu0 0.0
    %6042 = vmatpush.xpose.msra.mxu0 0.0
    %6043 = vmatpush.xpose.msra.mxu0 0.0
    %6044 = vmatpush.xpose.msra.mxu0 0.0
    %6045 = vmatpush.xpose.msra.mxu0 0.0
    %6046 = vmatpush.xpose.msra.mxu0 0.0
    %6047 = vmatpush.xpose.msra.mxu0 0.0
    %6048 = vmatpush.xpose.msra.mxu0 0.0
    %6049 = vmatpush.xpose.msra.mxu0 0.0
    %6050 = vmatpush.xpose.msra.mxu0 %v575
    %6051 = vmatpush.xpose.msra.mxu0 %v319
    %6052 = vmatmul.f32.gmra.mxu0 %v962
    %v6053 = vpop.f32.mrf.mxu0
    %v6054 = vadd.f32 %v6034, %v6053
    %6055 = vdwg.mxu0
    %6056 = vmatpush.xpose.msra.mxu0 0.0
    %6057 = vmatpush.xpose.msra.mxu0 0.0
    %6058 = vmatpush.xpose.msra.mxu0 0.0
    %6059 = vmatpush.xpose.msra.mxu0 0.0
    %6060 = vmatpush.xpose.msra.mxu0 0.0
    %6061 = vmatpush.xpose.msra.mxu0 0.0
    %6062 = vmatpush.xpose.msra.mxu0 0.0
    %6063 = vmatpush.xpose.msra.mxu0 0.0
    %6064 = vmatpush.xpose.msra.mxu0 0.0
    %6065 = vmatpush.xpose.msra.mxu0 0.0
    %6066 = vmatpush.xpose.msra.mxu0 0.0
    %6067 = vmatpush.xpose.msra.mxu0 0.0
    %6068 = vmatpush.xpose.msra.mxu0 0.0
    %6069 = vmatpush.xpose.msra.mxu0 0.0
    %6070 = vmatpush.xpose.msra.mxu0 %v576
    %6071 = vmatpush.xpose.msra.mxu0 %v320
    %6072 = vmatmul.f32.gmra.mxu0 %v963
    %v6073 = vpop.f32.mrf.mxu0
    %v6074 = vadd.f32 %v6054, %v6073
    %6075 = vdwg.mxu0
    %6076 = vmatpush.xpose.msra.mxu0 0.0
    %6077 = vmatpush.xpose.msra.mxu0 0.0
    %6078 = vmatpush.xpose.msra.mxu0 0.0
    %6079 = vmatpush.xpose.msra.mxu0 0.0
    %6080 = vmatpush.xpose.msra.mxu0 0.0
    %6081 = vmatpush.xpose.msra.mxu0 0.0
    %6082 = vmatpush.xpose.msra.mxu0 0.0
    %6083 = vmatpush.xpose.msra.mxu0 0.0
    %6084 = vmatpush.xpose.msra.mxu0 0.0
    %6085 = vmatpush.xpose.msra.mxu0 0.0
    %6086 = vmatpush.xpose.msra.mxu0 0.0
    %6087 = vmatpush.xpose.msra.mxu0 0.0
    %6088 = vmatpush.xpose.msra.mxu0 0.0
    %6089 = vmatpush.xpose.msra.mxu0 0.0
    %6090 = vmatpush.xpose.msra.mxu0 %v577
    %6091 = vmatpush.xpose.msra.mxu0 %v321
    %6092 = vmatmul.f32.gmra.mxu0 %v964
    %v6093 = vpop.f32.mrf.mxu0
    %v6094 = vadd.f32 %v6074, %v6093
    %6095 = vdwg.mxu0
    %6096 = vmatpush.xpose.msra.mxu0 0.0
    %6097 = vmatpush.xpose.msra.mxu0 0.0
    %6098 = vmatpush.xpose.msra.mxu0 0.0
    %6099 = vmatpush.xpose.msra.mxu0 0.0
    %6100 = vmatpush.xpose.msra.mxu0 0.0
    %6101 = vmatpush.xpose.msra.mxu0 0.0
    %6102 = vmatpush.xpose.msra.mxu0 0.0
    %6103 = vmatpush.xpose.msra.mxu0 0.0
    %6104 = vmatpush.xpose.msra.mxu0 0.0
    %6105 = vmatpush.xpose.msra.mxu0 0.0
    %6106 = vmatpush.xpose.msra.mxu0 0.0
    %6107 = vmatpush.xpose.msra.mxu0 0.0
    %6108 = vmatpush.xpose.msra.mxu0 0.0
    %6109 = vmatpush.xpose.msra.mxu0 0.0
    %6110 = vmatpush.xpose.msra.mxu0 %v578
    %6111 = vmatpush.xpose.msra.mxu0 %v322
    %6112 = vmatmul.f32.gmra.mxu0 %v965
    %v6113 = vpop.f32.mrf.mxu0
    %v6114 = vadd.f32 %v6094, %v6113
    %6115 = vdwg.mxu0
    %6116 = vmatpush.xpose.msra.mxu0 0.0
    %6117 = vmatpush.xpose.msra.mxu0 0.0
    %6118 = vmatpush.xpose.msra.mxu0 0.0
    %6119 = vmatpush.xpose.msra.mxu0 0.0
    %6120 = vmatpush.xpose.msra.mxu0 0.0
    %6121 = vmatpush.xpose.msra.mxu0 0.0
    %6122 = vmatpush.xpose.msra.mxu0 0.0
    %6123 = vmatpush.xpose.msra.mxu0 0.0
    %6124 = vmatpush.xpose.msra.mxu0 0.0
    %6125 = vmatpush.xpose.msra.mxu0 0.0
    %6126 = vmatpush.xpose.msra.mxu0 0.0
    %6127 = vmatpush.xpose.msra.mxu0 0.0
    %6128 = vmatpush.xpose.msra.mxu0 0.0
    %6129 = vmatpush.xpose.msra.mxu0 0.0
    %6130 = vmatpush.xpose.msra.mxu0 %v579
    %6131 = vmatpush.xpose.msra.mxu0 %v323
    %6132 = vmatmul.f32.gmra.mxu0 %v966
    %v6133 = vpop.f32.mrf.mxu0
    %v6134 = vadd.f32 %v6114, %v6133
    %6135 = vdwg.mxu0
    %6136 = vmatpush.xpose.msra.mxu0 0.0
    %6137 = vmatpush.xpose.msra.mxu0 0.0
    %6138 = vmatpush.xpose.msra.mxu0 0.0
    %6139 = vmatpush.xpose.msra.mxu0 0.0
    %6140 = vmatpush.xpose.msra.mxu0 0.0
    %6141 = vmatpush.xpose.msra.mxu0 0.0
    %6142 = vmatpush.xpose.msra.mxu0 0.0
    %6143 = vmatpush.xpose.msra.mxu0 0.0
    %6144 = vmatpush.xpose.msra.mxu0 0.0
    %6145 = vmatpush.xpose.msra.mxu0 0.0
    %6146 = vmatpush.xpose.msra.mxu0 0.0
    %6147 = vmatpush.xpose.msra.mxu0 0.0
    %6148 = vmatpush.xpose.msra.mxu0 0.0
    %6149 = vmatpush.xpose.msra.mxu0 0.0
    %6150 = vmatpush.xpose.msra.mxu0 %v580
    %6151 = vmatpush.xpose.msra.mxu0 %v324
    %6152 = vmatmul.f32.gmra.mxu0 %v967
    %v6153 = vpop.f32.mrf.mxu0
    %v6154 = vadd.f32 %v6134, %v6153
    %6155 = vdwg.mxu0
    %6156 = vmatpush.xpose.msra.mxu0 0.0
    %6157 = vmatpush.xpose.msra.mxu0 0.0
    %6158 = vmatpush.xpose.msra.mxu0 0.0
    %6159 = vmatpush.xpose.msra.mxu0 0.0
    %6160 = vmatpush.xpose.msra.mxu0 0.0
    %6161 = vmatpush.xpose.msra.mxu0 0.0
    %6162 = vmatpush.xpose.msra.mxu0 0.0
    %6163 = vmatpush.xpose.msra.mxu0 0.0
    %6164 = vmatpush.xpose.msra.mxu0 0.0
    %6165 = vmatpush.xpose.msra.mxu0 0.0
    %6166 = vmatpush.xpose.msra.mxu0 0.0
    %6167 = vmatpush.xpose.msra.mxu0 0.0
    %6168 = vmatpush.xpose.msra.mxu0 0.0
    %6169 = vmatpush.xpose.msra.mxu0 0.0
    %6170 = vmatpush.xpose.msra.mxu0 %v581
    %6171 = vmatpush.xpose.msra.mxu0 %v325
    %6172 = vmatmul.f32.gmra.mxu0 %v968
    %v6173 = vpop.f32.mrf.mxu0
    %v6174 = vadd.f32 %v6154, %v6173
    %6175 = vdwg.mxu0
    %6176 = vmatpush.xpose.msra.mxu0 0.0
    %6177 = vmatpush.xpose.msra.mxu0 0.0
    %6178 = vmatpush.xpose.msra.mxu0 0.0
    %6179 = vmatpush.xpose.msra.mxu0 0.0
    %6180 = vmatpush.xpose.msra.mxu0 0.0
    %6181 = vmatpush.xpose.msra.mxu0 0.0
    %6182 = vmatpush.xpose.msra.mxu0 0.0
    %6183 = vmatpush.xpose.msra.mxu0 0.0
    %6184 = vmatpush.xpose.msra.mxu0 0.0
    %6185 = vmatpush.xpose.msra.mxu0 0.0
    %6186 = vmatpush.xpose.msra.mxu0 0.0
    %6187 = vmatpush.xpose.msra.mxu0 0.0
    %6188 = vmatpush.xpose.msra.mxu0 0.0
    %6189 = vmatpush.xpose.msra.mxu0 0.0
    %6190 = vmatpush.xpose.msra.mxu0 %v582
    %6191 = vmatpush.xpose.msra.mxu0 %v326
    %6192 = vmatmul.f32.gmra.mxu0 %v969
    %v6193 = vpop.f32.mrf.mxu0
    %v6194 = vadd.f32 %v6174, %v6193
    %6195 = vdwg.mxu0
    %6196 = vmatpush.xpose.msra.mxu0 0.0
    %6197 = vmatpush.xpose.msra.mxu0 0.0
    %6198 = vmatpush.xpose.msra.mxu0 0.0
    %6199 = vmatpush.xpose.msra.mxu0 0.0
    %6200 = vmatpush.xpose.msra.mxu0 0.0
    %6201 = vmatpush.xpose.msra.mxu0 0.0
    %6202 = vmatpush.xpose.msra.mxu0 0.0
    %6203 = vmatpush.xpose.msra.mxu0 0.0
    %6204 = vmatpush.xpose.msra.mxu0 0.0
    %6205 = vmatpush.xpose.msra.mxu0 0.0
    %6206 = vmatpush.xpose.msra.mxu0 0.0
    %6207 = vmatpush.xpose.msra.mxu0 0.0
    %6208 = vmatpush.xpose.msra.mxu0 0.0
    %6209 = vmatpush.xpose.msra.mxu0 0.0
    %6210 = vmatpush.xpose.msra.mxu0 %v583
    %6211 = vmatpush.xpose.msra.mxu0 %v327
    %6212 = vmatmul.f32.gmra.mxu0 %v972
    %v6213 = vpop.f32.mrf.mxu0
    %v6214 = vadd.f32 %v6194, %v6213
    %6215 = vdwg.mxu0
    %6216 = vmatpush.xpose.msra.mxu0 0.0
    %6217 = vmatpush.xpose.msra.mxu0 0.0
    %6218 = vmatpush.xpose.msra.mxu0 0.0
    %6219 = vmatpush.xpose.msra.mxu0 0.0
    %6220 = vmatpush.xpose.msra.mxu0 0.0
    %6221 = vmatpush.xpose.msra.mxu0 0.0
    %6222 = vmatpush.xpose.msra.mxu0 0.0
    %6223 = vmatpush.xpose.msra.mxu0 0.0
    %6224 = vmatpush.xpose.msra.mxu0 0.0
    %6225 = vmatpush.xpose.msra.mxu0 0.0
    %6226 = vmatpush.xpose.msra.mxu0 0.0
    %6227 = vmatpush.xpose.msra.mxu0 0.0
    %6228 = vmatpush.xpose.msra.mxu0 0.0
    %6229 = vmatpush.xpose.msra.mxu0 0.0
    %6230 = vmatpush.xpose.msra.mxu0 %v584
    %6231 = vmatpush.xpose.msra.mxu0 %v328
    %6232 = vmatmul.f32.gmra.mxu0 %v973
    %v6233 = vpop.f32.mrf.mxu0
    %v6234 = vadd.f32 %v6214, %v6233
    %6235 = vdwg.mxu0
    %6236 = vmatpush.xpose.msra.mxu0 0.0
    %6237 = vmatpush.xpose.msra.mxu0 0.0
    %6238 = vmatpush.xpose.msra.mxu0 0.0
    %6239 = vmatpush.xpose.msra.mxu0 0.0
    %6240 = vmatpush.xpose.msra.mxu0 0.0
    %6241 = vmatpush.xpose.msra.mxu0 0.0
    %6242 = vmatpush.xpose.msra.mxu0 0.0
    %6243 = vmatpush.xpose.msra.mxu0 0.0
    %6244 = vmatpush.xpose.msra.mxu0 0.0
    %6245 = vmatpush.xpose.msra.mxu0 0.0
    %6246 = vmatpush.xpose.msra.mxu0 0.0
    %6247 = vmatpush.xpose.msra.mxu0 0.0
    %6248 = vmatpush.xpose.msra.mxu0 0.0
    %6249 = vmatpush.xpose.msra.mxu0 0.0
    %6250 = vmatpush.xpose.msra.mxu0 %v585
    %6251 = vmatpush.xpose.msra.mxu0 %v329
    %6252 = vmatmul.f32.gmra.mxu0 %v974
    %v6253 = vpop.f32.mrf.mxu0
    %v6254 = vadd.f32 %v6234, %v6253
    %6255 = vdwg.mxu0
    %6256 = vmatpush.xpose.msra.mxu0 0.0
    %6257 = vmatpush.xpose.msra.mxu0 0.0
    %6258 = vmatpush.xpose.msra.mxu0 0.0
    %6259 = vmatpush.xpose.msra.mxu0 0.0
    %6260 = vmatpush.xpose.msra.mxu0 0.0
    %6261 = vmatpush.xpose.msra.mxu0 0.0
    %6262 = vmatpush.xpose.msra.mxu0 0.0
    %6263 = vmatpush.xpose.msra.mxu0 0.0
    %6264 = vmatpush.xpose.msra.mxu0 0.0
    %6265 = vmatpush.xpose.msra.mxu0 0.0
    %6266 = vmatpush.xpose.msra.mxu0 0.0
    %6267 = vmatpush.xpose.msra.mxu0 0.0
    %6268 = vmatpush.xpose.msra.mxu0 0.0
    %6269 = vmatpush.xpose.msra.mxu0 0.0
    %6270 = vmatpush.xpose.msra.mxu0 %v586
    %6271 = vmatpush.xpose.msra.mxu0 %v330
    %6272 = vmatmul.f32.gmra.mxu0 %v975
    %v6273 = vpop.f32.mrf.mxu0
    %v6274 = vadd.f32 %v6254, %v6273
    %6275 = vdwg.mxu0
    %6276 = vmatpush.xpose.msra.mxu0 0.0
    %6277 = vmatpush.xpose.msra.mxu0 0.0
    %6278 = vmatpush.xpose.msra.mxu0 0.0
    %6279 = vmatpush.xpose.msra.mxu0 0.0
    %6280 = vmatpush.xpose.msra.mxu0 0.0
    %6281 = vmatpush.xpose.msra.mxu0 0.0
    %6282 = vmatpush.xpose.msra.mxu0 0.0
    %6283 = vmatpush.xpose.msra.mxu0 0.0
    %6284 = vmatpush.xpose.msra.mxu0 0.0
    %6285 = vmatpush.xpose.msra.mxu0 0.0
    %6286 = vmatpush.xpose.msra.mxu0 0.0
    %6287 = vmatpush.xpose.msra.mxu0 0.0
    %6288 = vmatpush.xpose.msra.mxu0 0.0
    %6289 = vmatpush.xpose.msra.mxu0 0.0
    %6290 = vmatpush.xpose.msra.mxu0 %v587
    %6291 = vmatpush.xpose.msra.mxu0 %v331
    %6292 = vmatmul.f32.gmra.mxu0 %v976
    %v6293 = vpop.f32.mrf.mxu0
    %v6294 = vadd.f32 %v6274, %v6293
    %6295 = vdwg.mxu0
    %6296 = vmatpush.xpose.msra.mxu0 0.0
    %6297 = vmatpush.xpose.msra.mxu0 0.0
    %6298 = vmatpush.xpose.msra.mxu0 0.0
    %6299 = vmatpush.xpose.msra.mxu0 0.0
    %6300 = vmatpush.xpose.msra.mxu0 0.0
    %6301 = vmatpush.xpose.msra.mxu0 0.0
    %6302 = vmatpush.xpose.msra.mxu0 0.0
    %6303 = vmatpush.xpose.msra.mxu0 0.0
    %6304 = vmatpush.xpose.msra.mxu0 0.0
    %6305 = vmatpush.xpose.msra.mxu0 0.0
    %6306 = vmatpush.xpose.msra.mxu0 0.0
    %6307 = vmatpush.xpose.msra.mxu0 0.0
    %6308 = vmatpush.xpose.msra.mxu0 0.0
    %6309 = vmatpush.xpose.msra.mxu0 0.0
    %6310 = vmatpush.xpose.msra.mxu0 %v588
    %6311 = vmatpush.xpose.msra.mxu0 %v332
    %6312 = vmatmul.f32.gmra.mxu0 %v977
    %v6313 = vpop.f32.mrf.mxu0
    %v6314 = vadd.f32 %v6294, %v6313
    %6315 = vdwg.mxu0
    %6316 = vmatpush.xpose.msra.mxu0 0.0
    %6317 = vmatpush.xpose.msra.mxu0 0.0
    %6318 = vmatpush.xpose.msra.mxu0 0.0
    %6319 = vmatpush.xpose.msra.mxu0 0.0
    %6320 = vmatpush.xpose.msra.mxu0 0.0
    %6321 = vmatpush.xpose.msra.mxu0 0.0
    %6322 = vmatpush.xpose.msra.mxu0 0.0
    %6323 = vmatpush.xpose.msra.mxu0 0.0
    %6324 = vmatpush.xpose.msra.mxu0 0.0
    %6325 = vmatpush.xpose.msra.mxu0 0.0
    %6326 = vmatpush.xpose.msra.mxu0 0.0
    %6327 = vmatpush.xpose.msra.mxu0 0.0
    %6328 = vmatpush.xpose.msra.mxu0 0.0
    %6329 = vmatpush.xpose.msra.mxu0 0.0
    %6330 = vmatpush.xpose.msra.mxu0 %v589
    %6331 = vmatpush.xpose.msra.mxu0 %v333
    %6332 = vmatmul.f32.gmra.mxu0 %v978
    %v6333 = vpop.f32.mrf.mxu0
    %v6334 = vadd.f32 %v6314, %v6333
    %6335 = vdwg.mxu0
    %6336 = vmatpush.xpose.msra.mxu0 0.0
    %6337 = vmatpush.xpose.msra.mxu0 0.0
    %6338 = vmatpush.xpose.msra.mxu0 0.0
    %6339 = vmatpush.xpose.msra.mxu0 0.0
    %6340 = vmatpush.xpose.msra.mxu0 0.0
    %6341 = vmatpush.xpose.msra.mxu0 0.0
    %6342 = vmatpush.xpose.msra.mxu0 0.0
    %6343 = vmatpush.xpose.msra.mxu0 0.0
    %6344 = vmatpush.xpose.msra.mxu0 0.0
    %6345 = vmatpush.xpose.msra.mxu0 0.0
    %6346 = vmatpush.xpose.msra.mxu0 0.0
    %6347 = vmatpush.xpose.msra.mxu0 0.0
    %6348 = vmatpush.xpose.msra.mxu0 0.0
    %6349 = vmatpush.xpose.msra.mxu0 0.0
    %6350 = vmatpush.xpose.msra.mxu0 %v590
    %6351 = vmatpush.xpose.msra.mxu0 %v334
    %6352 = vmatmul.f32.gmra.mxu0 %v979
    %v6353 = vpop.f32.mrf.mxu0
    %v6354 = vadd.f32 %v6334, %v6353
    %6355 = vdwg.mxu0
    %vm6356 = vcmask 74752
    %6357 = vst.msk [vmem:[#allocation2] sm:$0x3] %vm6356, %v6354
    // Predicated region
    $region14: #{victim_model_forward.3} parent=1 // pred_check
      _
    $region15: #{victim_model_forward.3} parent=1 // pred_check_branch
      %6359 = sbr.rel (0) target = $region17
    $region16: #{victim_model_forward.3} parent=1 // pred_region
      %6361 = vsyncadd [#allocation3], 0
      %s6363 = sshll.u32 [#allocation2], 4
      %s6364 = int_to_ptr.vmem [resolvable:$true] %s6363
      %s6365 = sshll.u32 %s3, 4
      %s6366 = int_to_ptr.hbm [resolvable:$true] %s6365
      %6368 = dma.vmem_to_hbm [thread:$0]  %s6364, 32, %s6366, [#allocation3]
    $region17: #{victim_model_forward.3} parent=1 // pred_fallthru
      _
    // Predicated region
    $region18: #{victim_model_forward.3} parent=1 // pred_check
      _
    $region19: #{victim_model_forward.3} parent=1 // pred_check_branch
      %6370 = sbr.rel (0) target = $region21
    $region20: #{victim_model_forward.3} parent=1 // pred_region
      %6372 = dma.done [#allocation3], 32
    $region21: #{victim_model_forward.3} parent=1 // pred_fallthru
      _
    %6373 = vsyncpa [#allocation3], 1

</llo_original>
